<compile_context>
chip_gen: v7x
topology: tpu7x:2x2x1
jax: 0.10.0
libtpu: 0.0.40
codegen_flags: <defaults>
</compile_context>

<pallas_src>
import functools

import jax
import jax.numpy as jnp
from jax import lax
from jax.experimental import pallas as pl
from jax.experimental.pallas import tpu as pltpu

MXU_DTYPE = jnp.bfloat16   # MXU operand dtype; accumulation is always f32
LANE = 128


def _round_up(x, m):
    return ((x + m - 1) // m) * m


def _apply_act(y, act):
    if act == "none":
        return y
    if act == "relu":
        return jnp.maximum(y, 0.0)
    if act == "leaky_relu":
        return jnp.where(y >= 0.0, y, 0.2 * y)
    if act == "sigmoid":
        return 1.0 / (1.0 + jnp.exp(-y))
    if act == "tanh":
        return jnp.tanh(y)
    raise ValueError(act)


# -------------- fused conv layer: matmul + bias + BatchNorm + act --------------

def _fused_layer_kernel(a_ref, w_ref, b_ref, o_ref, *, act, use_bn, eps):
    # a: (M, K) bf16 patches; w: (K, Cp) bf16; b: (1, Cp) f32; o: (M, Cp) f32.
    y = jnp.dot(a_ref[...], w_ref[...], preferred_element_type=jnp.float32)
    y = y + b_ref[...]
    if use_bn:
        # Training-mode batch stats over rows (== N*H*W), single pass.
        inv_m = 1.0 / y.shape[0]
        mean = jnp.sum(y, axis=0, keepdims=True) * inv_m
        mean_sq = jnp.sum(y * y, axis=0, keepdims=True) * inv_m
        var = mean_sq - mean * mean
        y = (y - mean) * lax.rsqrt(var + eps)
    o_ref[...] = _apply_act(y, act).astype(o_ref.dtype)


def fused_matmul_bn_act(a, w, b, *, act, use_bn, eps=1e-5):
    """act(BN?(a @ w + b)); a:(M,K), w:(K,C), b:(C,). One full-VMEM block.
    Cout is zero-padded to a multiple of 128 so the output store is lane-dense;
    padded channels are all-zero so BN/act leave them harmless (sliced off)."""
    M, K = a.shape
    C = w.shape[1]
    Cp = _round_up(C, LANE)
    w_p = jnp.pad(w, ((0, 0), (0, Cp - C))).astype(MXU_DTYPE)
    b_p = jnp.pad(b, (0, Cp - C)).reshape(1, Cp).astype(jnp.float32)
    out = pl.pallas_call(
        functools.partial(_fused_layer_kernel, act=act, use_bn=use_bn, eps=eps),
        out_shape=jax.ShapeDtypeStruct((M, Cp), jnp.float32),
        in_specs=[pl.BlockSpec(memory_space=pltpu.MemorySpace.VMEM)] * 3,
        out_specs=pl.BlockSpec(memory_space=pltpu.MemorySpace.VMEM),
    )(a.astype(MXU_DTYPE), w_p, b_p)
    return out[:, :C]


# ------------------------------ conv layer glue --------------------------------

def im2col_nhwc(x, k, stride, pad):
    """(B, H, W, C) -> ((B*OH*OW, k*k*C), OH, OW). Pure slicing/stacking (XLA glue).
    # TODO(synk): gather the 4x4 patches inside the kernel (index_map / manual DMA)
    # to avoid materializing the patch matrix in HBM."""
    B, H, W, C = x.shape
    xp = jnp.pad(x, ((0, 0), (pad, pad), (pad, pad), (0, 0)))
    OH = (H + 2 * pad - k) // stride + 1
    OW = (W + 2 * pad - k) // stride + 1
    cols = []
    for ki in range(k):
        for kj in range(k):
            cols.append(xp[:, ki:ki + stride * OH:stride, kj:kj + stride * OW:stride, :])
    patches = jnp.stack(cols, axis=3)                  # (B, OH, OW, k*k, C)
    return patches.reshape(B * OH * OW, k * k * C), OH, OW


def conv2d_fused(x, w, b, stride, pad, *, act, use_bn):
    """x: (B,H,W,Cin) NHWC; w: torch layout (Cout, Cin, k, k)."""
    Cout, Cin, k, _ = w.shape
    B = x.shape[0]
    patches, OH, OW = im2col_nhwc(x, k, stride, pad)
    wm = jnp.transpose(w, (2, 3, 1, 0)).reshape(k * k * Cin, Cout)
    y = fused_matmul_bn_act(patches, wm, b, act=act, use_bn=use_bn)
    return y.reshape(B, OH, OW, Cout)


def conv_transpose2d_fused(x, w, b, stride, pad, *, act, use_bn):
    """x: (B,H,W,Cin) NHWC; w: torch layout (Cin, Cout, k, k).
    Lowered as zero-dilation + flipped-kernel stride-1 conv.
    # TODO(synk): sub-pixel (stride^2 phase) decomposition would skip the 75%
    # structural zeros in the dilated patches; skipped since these layers are
    # launch/layout bound, not FLOP bound, at these sizes."""
    Cin, Cout, k, _ = w.shape
    B, H, W, _ = x.shape
    if stride > 1:
        Hd, Wd = (H - 1) * stride + 1, (W - 1) * stride + 1
        xd = jnp.zeros((B, Hd, Wd, Cin), x.dtype).at[:, ::stride, ::stride, :].set(x)
    else:
        xd = x
    wm = jnp.flip(w, axis=(2, 3)).transpose(2, 3, 0, 1).reshape(k * k * Cin, Cout)
    patches, OH, OW = im2col_nhwc(xd, k, 1, k - 1 - pad)
    y = fused_matmul_bn_act(patches, wm, b, act=act, use_bn=use_bn)
    return y.reshape(B, OH, OW, Cout)


# ------------------------ grammar unroll (single kernel) ------------------------

def _hard_one_hot(z):
    """one_hot(argmax(z, -1)) with first-index tie-break; VPU/XLU ops only."""
    n = z.shape[-1]
    m = jnp.max(z, axis=-1, keepdims=True)
    col = lax.broadcasted_iota(jnp.int32, z.shape, 1)
    idx = jnp.min(jnp.where(z >= m, col, n), axis=-1, keepdims=True)
    return (col == idx).astype(jnp.float32)


def _grammar_kernel(logits_ref, gmat_ref, gumb_ref, o_ref):
    # logits: (B, N); gmat: (N, N); gumb: (T, B, N); o: (B, N).
    n = logits_ref.shape[1]
    T = gumb_ref.shape[0]
    oh0 = _hard_one_hot(logits_ref[...] + gumb_ref[0])

    def step(t, oh):
        nonterm = oh[:, n - 1:n] == 0.0            # (B, 1): last symbol not emitted
        g_logits = jnp.dot(oh, gmat_ref[...], preferred_element_type=jnp.float32)
        new = _hard_one_hot(g_logits + gumb_ref[t])
        return jnp.where(jnp.broadcast_to(nonterm, oh.shape), new, oh)

    o_ref[...] = lax.fori_loop(1, T, step, oh0, unroll=True)


def grammar_unroll(logits, gmat, gumbel):
    """Whole DifferentiableGrammar unroll (hard gumbel-softmax forward values)."""
    B, N = logits.shape
    return pl.pallas_call(
        _grammar_kernel,
        out_shape=jax.ShapeDtypeStruct((B, N), jnp.float32),
        in_specs=[pl.BlockSpec(memory_space=pltpu.MemorySpace.VMEM)] * 3,
        out_specs=pl.BlockSpec(memory_space=pltpu.MemorySpace.VMEM),
    )(logits.astype(jnp.float32), gmat.astype(jnp.float32), gumbel.astype(jnp.float32))


# ------------------------------- LSTM (gate-packed) -----------------------------

def _lstm_kernel(x_ref, wih_ref, whh_ref, o_ref, h_ref, c_ref):
    # x: (T, N); wih: (N, 4*Hp); whh: (Hp, 4*Hp); o: (T, Hp); h/c scratch (1, Hp).
    # Gate order matches torch.nn.LSTM (i, f, g, o); biases are zeroed in the
    # torch __init__ so they are omitted.  One fused (1, 4*Hp) gate matmul per
    # step; Hp = hidden padded to 128 so gate slices and output stores are
    # lane-dense.  Padded hidden lanes stay exactly zero (zero weight columns).
    T = x_ref.shape[0]
    HP = h_ref.shape[1]
    h_ref[...] = jnp.zeros_like(h_ref)
    c_ref[...] = jnp.zeros_like(c_ref)

    def sigmoid(v):
        return 1.0 / (1.0 + jnp.exp(-v))

    def step(t, carry):
        x_t = x_ref[pl.ds(t, 1), :]                                  # (1, N)
        gates = (jnp.dot(x_t, wih_ref[...], preferred_element_type=jnp.float32)
                 + jnp.dot(h_ref[...], whh_ref[...], preferred_element_type=jnp.float32))
        i_g = sigmoid(gates[:, 0:HP])
        f_g = sigmoid(gates[:, HP:2 * HP])
        g_g = jnp.tanh(gates[:, 2 * HP:3 * HP])
        o_g = sigmoid(gates[:, 3 * HP:4 * HP])
        c = f_g * c_ref[...] + i_g * g_g
        h_new = o_g * jnp.tanh(c)
        c_ref[...] = c
        h_ref[...] = h_new
        o_ref[pl.ds(t, 1), :] = h_new
        return carry

    lax.fori_loop(0, T, step, 0, unroll=True)


def lstm_forward(x_seq, wih_packed, whh_packed):
    """Single-layer LSTM over x_seq (T, N), zero initial state; returns (T, Hp)."""
    T = x_seq.shape[0]
    HP = whh_packed.shape[0]
    return pl.pallas_call(
        _lstm_kernel,
        out_shape=jax.ShapeDtypeStruct((T, HP), jnp.float32),
        in_specs=[pl.BlockSpec(memory_space=pltpu.MemorySpace.VMEM)] * 3,
        out_specs=pl.BlockSpec(memory_space=pltpu.MemorySpace.VMEM),
        scratch_shapes=[pltpu.VMEM((1, HP), jnp.float32),
                        pltpu.VMEM((1, HP), jnp.float32)],
    )(x_seq.astype(jnp.float32),
      wih_packed.astype(jnp.float32),
      whh_packed.astype(jnp.float32))


# --------------------------- parameters / forward -------------------------------

def pack_lstm_weights(wih, whh, hidden, hp):
    """torch (4H, N)/(4H, H) stacked [i,f,g,o] -> packed (N, 4*Hp)/(Hp, 4*Hp)."""
    ih_blocks, hh_blocks = [], []
    for g in range(4):
        wi = wih[g * hidden:(g + 1) * hidden, :].T                   # (N, H)
        ih_blocks.append(jnp.pad(wi, ((0, 0), (0, hp - hidden))))
        wh = whh[g * hidden:(g + 1) * hidden, :].T                   # (H, H)
        hh_blocks.append(jnp.pad(wh, ((0, hp - hidden), (0, hp - hidden))))
    return jnp.concatenate(ih_blocks, axis=1), jnp.concatenate(hh_blocks, axis=1)


def init_params(key, num_filters, output_dim, N, lstm_hidden):
    ks = jax.random.split(key, 32)
    params = {}

    # Encoder: Conv2d(std 0.02, bias 0), filters reversed as in the torch code.
    enc_filters = num_filters[::-1]
    convs = []
    cin = 1
    for i, cf in enumerate(enc_filters):
        w = 0.02 * jax.random.normal(ks[i], (cf, cin, 4, 4), jnp.float32)
        convs.append((w, jnp.zeros((cf,), jnp.float32)))
        cin = cf
    params["enc_convs"] = convs
    params["enc_out_w"] = 0.02 * jax.random.normal(ks[8], (N, cin, 4, 4), jnp.float32)
    params["enc_out_b"] = jnp.zeros((N,), jnp.float32)

    # Grammar + LSTM (xavier_uniform on the stacked (4H, *) torch matrices).
    params["grammar_mat"] = jnp.ones((N, N), jnp.float32) / float(N)
    H = lstm_hidden
    HP = _round_up(H, LANE)
    a_ih = (6.0 / (N + 4 * H)) ** 0.5
    a_hh = (6.0 / (H + 4 * H)) ** 0.5
    wih = jax.random.uniform(ks[9], (4 * H, N), jnp.float32, -a_ih, a_ih)
    whh = jax.random.uniform(ks[10], (4 * H, H), jnp.float32, -a_hh, a_hh)
    params["wih_packed"], params["whh_packed"] = pack_lstm_weights(wih, whh, H, HP)

    # Decoder: ConvTranspose2d(std 0.02, bias 0).
    deconvs = []
    cin = H
    for i, cf in enumerate(num_filters):
        w = 0.02 * jax.random.normal(ks[11 + i], (cin, cf, 4, 4), jnp.float32)
        deconvs.append((w, jnp.zeros((cf,), jnp.float32)))
        cin = cf
    params["deconvs"] = deconvs
    params["dec_out_w"] = 0.02 * jax.random.normal(ks[20], (cin, output_dim, 4, 4), jnp.float32)
    params["dec_out_b"] = jnp.zeros((output_dim,), jnp.float32)
    return params


def generator_forward(params, x, key, *, N, max_seq_length, lstm_hidden, output_dim):
    del output_dim  # implied by params["dec_out_w"]
    B = x.shape[0]
    h = jnp.transpose(x, (0, 2, 3, 1))                  # NCHW -> NHWC once

    # ----- Encoder: conv(k4,s2,p1) [+BN] + LeakyReLU stack, then conv(k4,s1,p0) + Sigmoid
    for i, (w, b) in enumerate(params["enc_convs"]):
        h = conv2d_fused(h, w, b, 2, 1, act="leaky_relu", use_bn=(i != 0))
    y = conv2d_fused(h, params["enc_out_w"], params["enc_out_b"], 1, 0,
                     act="sigmoid", use_bn=False)
    logits = y.reshape(B, N)                            # spatial is 1x1

    # ----- DifferentiableGrammar: single kernel over the whole unroll.
    gumbel = jax.random.gumbel(key, (max_seq_length, B, N), jnp.float32)
    one_hot = grammar_unroll(logits, params["grammar_mat"], gumbel)

    # torch feeds the (T, B, N) sequence to a batch_first LSTM and keeps x[T-1],
    # i.e. the per-timestep hidden states of the *last* grammar state, with the
    # original batch axis acting as time.  Batch items are independent, so this
    # equals running the LSTM on sequence[T-1] alone -> (B, H).
    lstm_out = lstm_forward(one_hot, params["wih_packed"], params["whh_packed"])
    lstm_out = lstm_out[:, :lstm_hidden]

    # ----- Decoder: deconv + BN + ReLU stack, then deconv + Tanh
    h = lstm_out.reshape(B, 1, 1, lstm_hidden)
    for i, (w, b) in enumerate(params["deconvs"]):
        stride, pad = (1, 0) if i == 0 else (2, 1)
        h = conv_transpose2d_fused(h, w, b, stride, pad, act="relu", use_bn=True)
    out = conv_transpose2d_fused(h, params["dec_out_w"], params["dec_out_b"], 2, 1,
                                 act="tanh", use_bn=False)
    return jnp.transpose(out, (0, 3, 1, 2))             # NHWC -> NCHW to match torch


# ---------------------------------- main ----------------------------------------

if __name__ == "__main__":
    # Small, shape-consistent config (original defaults need encoder_out == N).
    B = 2
    num_filters = [32, 16, 8]       # decoder filters; encoder uses reversed [8, 16, 32]
    output_dim = 1
    N = 16                          # grammar alphabet == encoder output dim
    max_seq_length = 6
    lstm_hidden = 32
    img = 32                        # 3 stride-2 convs: 32 -> 16 -> 8 -> 4, then k4 conv -> 1x1

    root = jax.random.PRNGKey(0)
    k_params, k_input, k_gumbel = jax.random.split(root, 3)

    params = init_params(k_params, num_filters, output_dim, N, lstm_hidden)
    x = jax.random.normal(k_input, (B, 1, img, img), jnp.float32)

    fwd = jax.jit(functools.partial(
        generator_forward, N=N, max_seq_length=max_seq_length,
        lstm_hidden=lstm_hidden, output_dim=output_dim))
    out = jax.block_until_ready(fwd(params, x, k_gumbel))

    assert out.shape == (B, output_dim, img, img), out.shape
    assert bool(jnp.all(jnp.isfinite(out)))
    print("KERNEL_OK")
</pallas_src>

<mosaic_0001>
module attributes {stable_mosaic.version = 11 : i64} {
  func.func @_fused_layer_kernel(%arg0: memref<512x16xbf16, #tpu.memory_space<vmem>>, %arg1: memref<16x128xbf16, #tpu.memory_space<vmem>>, %arg2: memref<1x128xf32, #tpu.memory_space<vmem>>, %arg3: memref<512x128xf32, #tpu.memory_space<vmem>>) attributes {dimension_semantics = [], scalar_prefetch = 0 : i64, scratch_operands = 0 : i64, tpu.core_type = #tpu.core_type<tc>} {
    %c0 = arith.constant 0 : index
    %c0_0 = arith.constant 0 : index
    %0 = vector.load %arg0[%c0, %c0_0] : memref<512x16xbf16, #tpu.memory_space<vmem>>, vector<512x16xbf16>
    %c0_1 = arith.constant 0 : index
    %c0_2 = arith.constant 0 : index
    %1 = vector.load %arg1[%c0_1, %c0_2] : memref<16x128xbf16, #tpu.memory_space<vmem>>, vector<16x128xbf16>
    %cst = arith.constant dense<0.000000e+00> : vector<512x128xf32>
    %2 = tpu.matmul %0, %1, %cst {dimension_numbers = #tpu.dot_dimension_numbers<[1], [0], [0], [1], [0, 0, 1, 1], [], []>} : vector<512x16xbf16>, vector<16x128xbf16>, vector<512x128xf32> -> vector<512x128xf32>
    %c0_3 = arith.constant 0 : index
    %c0_4 = arith.constant 0 : index
    %3 = vector.load %arg2[%c0_3, %c0_4] : memref<1x128xf32, #tpu.memory_space<vmem>>, vector<1x128xf32>
    %4 = vector.broadcast %3 : vector<1x128xf32> to vector<512x128xf32>
    %5 = arith.addf %2, %4 : vector<512x128xf32>
    %cst_5 = arith.constant 0.000000e+00 : f32
    %6 = vector.broadcast %cst_5 : f32 to vector<512x128xf32>
    %7 = arith.cmpf oge, %5, %6 : vector<512x128xf32>
    %cst_6 = arith.constant 2.000000e-01 : f32
    %8 = vector.broadcast %cst_6 : f32 to vector<512x128xf32>
    %9 = arith.mulf %8, %5 : vector<512x128xf32>
    %10 = arith.select %7, %5, %9 : vector<512x128xi1>, vector<512x128xf32>
    %c0_7 = arith.constant 0 : index
    %c0_8 = arith.constant 0 : index
    %11 = vector.load %arg3[%c0_7, %c0_8] : memref<512x128xf32, #tpu.memory_space<vmem>>, vector<512x128xf32>
    tpu.vector_store %arg3[%c0_7, %c0_8], %10 {strides = array<i32>} : memref<512x128xf32, #tpu.memory_space<vmem>>, vector<512x128xf32>,
    return
  }
}

module attributes {stable_mosaic.version = 11 : i64} {
  func.func @_fused_layer_kernel(%arg0: memref<128x128xbf16, #tpu.memory_space<vmem>>, %arg1: memref<128x128xbf16, #tpu.memory_space<vmem>>, %arg2: memref<1x128xf32, #tpu.memory_space<vmem>>, %arg3: memref<128x128xf32, #tpu.memory_space<vmem>>) attributes {dimension_semantics = [], scalar_prefetch = 0 : i64, scratch_operands = 0 : i64, tpu.core_type = #tpu.core_type<tc>} {
    %c0 = arith.constant 0 : index
    %c0_0 = arith.constant 0 : index
    %0 = vector.load %arg0[%c0, %c0_0] : memref<128x128xbf16, #tpu.memory_space<vmem>>, vector<128x128xbf16>
    %c0_1 = arith.constant 0 : index
    %c0_2 = arith.constant 0 : index
    %1 = vector.load %arg1[%c0_1, %c0_2] : memref<128x128xbf16, #tpu.memory_space<vmem>>, vector<128x128xbf16>
    %cst = arith.constant dense<0.000000e+00> : vector<128x128xf32>
    %2 = tpu.matmul %0, %1, %cst {dimension_numbers = #tpu.dot_dimension_numbers<[1], [0], [0], [1], [0, 0, 1, 1], [], []>} : vector<128x128xbf16>, vector<128x128xbf16>, vector<128x128xf32> -> vector<128x128xf32>
    %c0_3 = arith.constant 0 : index
    %c0_4 = arith.constant 0 : index
    %3 = vector.load %arg2[%c0_3, %c0_4] : memref<1x128xf32, #tpu.memory_space<vmem>>, vector<1x128xf32>
    %4 = vector.broadcast %3 : vector<1x128xf32> to vector<128x128xf32>
    %5 = arith.addf %2, %4 : vector<128x128xf32>
    %cst_5 = arith.constant dense<0.000000e+00> : vector<128xf32>
    %6 = vector.multi_reduction <add>, %5, %cst_5 [0] : vector<128x128xf32> to vector<128xf32>
    %7 = vector.shape_cast %6 : vector<128xf32> to vector<1x128xf32>
    %cst_6 = arith.constant 7.812500e-03 : f32
    %8 = vector.broadcast %cst_6 : f32 to vector<1x128xf32>
    %9 = arith.mulf %7, %8 : vector<1x128xf32>
    %10 = arith.mulf %5, %5 : vector<128x128xf32>
    %cst_7 = arith.constant dense<0.000000e+00> : vector<128xf32>
    %11 = vector.multi_reduction <add>, %10, %cst_7 [0] : vector<128x128xf32> to vector<128xf32>
    %12 = vector.shape_cast %11 : vector<128xf32> to vector<1x128xf32>
    %cst_8 = arith.constant 7.812500e-03 : f32
    %13 = vector.broadcast %cst_8 : f32 to vector<1x128xf32>
    %14 = arith.mulf %12, %13 : vector<1x128xf32>
    %15 = arith.mulf %9, %9 : vector<1x128xf32>
    %16 = arith.subf %14, %15 : vector<1x128xf32>
    %17 = vector.broadcast %9 : vector<1x128xf32> to vector<128x128xf32>
    %18 = arith.subf %5, %17 : vector<128x128xf32>
    %cst_9 = arith.constant 9.99999974E-6 : f32
    %19 = vector.broadcast %cst_9 : f32 to vector<1x128xf32>
    %20 = arith.addf %16, %19 : vector<1x128xf32>
    %21 = math.rsqrt %20 : vector<1x128xf32>
    %22 = vector.broadcast %21 : vector<1x128xf32> to vector<128x128xf32>
    %23 = arith.mulf %18, %22 : vector<128x128xf32>
    %cst_10 = arith.constant 0.000000e+00 : f32
    %24 = vector.broadcast %cst_10 : f32 to vector<128x128xf32>
    %25 = arith.cmpf oge, %23, %24 : vector<128x128xf32>
    %cst_11 = arith.constant 2.000000e-01 : f32
    %26 = vector.broadcast %cst_11 : f32 to vector<128x128xf32>
    %27 = arith.mulf %26, %23 : vector<128x128xf32>
    %28 = arith.select %25, %23, %27 : vector<128x128xi1>, vector<128x128xf32>
    %c0_12 = arith.constant 0 : index
    %c0_13 = arith.constant 0 : index
    %29 = vector.load %arg3[%c0_12, %c0_13] : memref<128x128xf32, #tpu.memory_space<vmem>>, vector<128x128xf32>
    tpu.vector_store %arg3[%c0_12, %c0_13], %28 {strides = array<i32>} : memref<128x128xf32, #tpu.memory_space<vmem>>, vector<128x128xf32>,
    return
  }
}

module attributes {stable_mosaic.version = 11 : i64} {
  func.func @_fused_layer_kernel(%arg0: memref<32x256xbf16, #tpu.memory_space<vmem>>, %arg1: memref<256x128xbf16, #tpu.memory_space<vmem>>, %arg2: memref<1x128xf32, #tpu.memory_space<vmem>>, %arg3: memref<32x128xf32, #tpu.memory_space<vmem>>) attributes {dimension_semantics = [], scalar_prefetch = 0 : i64, scratch_operands = 0 : i64, tpu.core_type = #tpu.core_type<tc>} {
    %c0 = arith.constant 0 : index
    %c0_0 = arith.constant 0 : index
    %0 = vector.load %arg0[%c0, %c0_0] : memref<32x256xbf16, #tpu.memory_space<vmem>>, vector<32x256xbf16>
    %c0_1 = arith.constant 0 : index
    %c0_2 = arith.constant 0 : index
    %1 = vector.load %arg1[%c0_1, %c0_2] : memref<256x128xbf16, #tpu.memory_space<vmem>>, vector<256x128xbf16>
    %cst = arith.constant dense<0.000000e+00> : vector<32x128xf32>
    %2 = tpu.matmul %0, %1, %cst {dimension_numbers = #tpu.dot_dimension_numbers<[1], [0], [0], [1], [0, 0, 1, 1], [], []>} : vector<32x256xbf16>, vector<256x128xbf16>, vector<32x128xf32> -> vector<32x128xf32>
    %c0_3 = arith.constant 0 : index
    %c0_4 = arith.constant 0 : index
    %3 = vector.load %arg2[%c0_3, %c0_4] : memref<1x128xf32, #tpu.memory_space<vmem>>, vector<1x128xf32>
    %4 = vector.broadcast %3 : vector<1x128xf32> to vector<32x128xf32>
    %5 = arith.addf %2, %4 : vector<32x128xf32>
    %cst_5 = arith.constant dense<0.000000e+00> : vector<128xf32>
    %6 = vector.multi_reduction <add>, %5, %cst_5 [0] : vector<32x128xf32> to vector<128xf32>
    %7 = vector.shape_cast %6 : vector<128xf32> to vector<1x128xf32>
    %cst_6 = arith.constant 3.125000e-02 : f32
    %8 = vector.broadcast %cst_6 : f32 to vector<1x128xf32>
    %9 = arith.mulf %7, %8 : vector<1x128xf32>
    %10 = arith.mulf %5, %5 : vector<32x128xf32>
    %cst_7 = arith.constant dense<0.000000e+00> : vector<128xf32>
    %11 = vector.multi_reduction <add>, %10, %cst_7 [0] : vector<32x128xf32> to vector<128xf32>
    %12 = vector.shape_cast %11 : vector<128xf32> to vector<1x128xf32>
    %cst_8 = arith.constant 3.125000e-02 : f32
    %13 = vector.broadcast %cst_8 : f32 to vector<1x128xf32>
    %14 = arith.mulf %12, %13 : vector<1x128xf32>
    %15 = arith.mulf %9, %9 : vector<1x128xf32>
    %16 = arith.subf %14, %15 : vector<1x128xf32>
    %17 = vector.broadcast %9 : vector<1x128xf32> to vector<32x128xf32>
    %18 = arith.subf %5, %17 : vector<32x128xf32>
    %cst_9 = arith.constant 9.99999974E-6 : f32
    %19 = vector.broadcast %cst_9 : f32 to vector<1x128xf32>
    %20 = arith.addf %16, %19 : vector<1x128xf32>
    %21 = math.rsqrt %20 : vector<1x128xf32>
    %22 = vector.broadcast %21 : vector<1x128xf32> to vector<32x128xf32>
    %23 = arith.mulf %18, %22 : vector<32x128xf32>
    %cst_10 = arith.constant 0.000000e+00 : f32
    %24 = vector.broadcast %cst_10 : f32 to vector<32x128xf32>
    %25 = arith.cmpf oge, %23, %24 : vector<32x128xf32>
    %cst_11 = arith.constant 2.000000e-01 : f32
    %26 = vector.broadcast %cst_11 : f32 to vector<32x128xf32>
    %27 = arith.mulf %26, %23 : vector<32x128xf32>
    %28 = arith.select %25, %23, %27 : vector<32x128xi1>, vector<32x128xf32>
    %c0_12 = arith.constant 0 : index
    %c0_13 = arith.constant 0 : index
    %29 = vector.load %arg3[%c0_12, %c0_13] : memref<32x128xf32, #tpu.memory_space<vmem>>, vector<32x128xf32>
    tpu.vector_store %arg3[%c0_12, %c0_13], %28 {strides = array<i32>} : memref<32x128xf32, #tpu.memory_space<vmem>>, vector<32x128xf32>,
    return
  }
}

module attributes {stable_mosaic.version = 11 : i64} {
  func.func @_fused_layer_kernel(%arg0: memref<2x512xbf16, #tpu.memory_space<vmem>>, %arg1: memref<512x128xbf16, #tpu.memory_space<vmem>>, %arg2: memref<1x128xf32, #tpu.memory_space<vmem>>, %arg3: memref<2x128xf32, #tpu.memory_space<vmem>>) attributes {dimension_semantics = [], scalar_prefetch = 0 : i64, scratch_operands = 0 : i64, tpu.core_type = #tpu.core_type<tc>} {
    %c0 = arith.constant 0 : index
    %c0_0 = arith.constant 0 : index
    %0 = vector.load %arg0[%c0, %c0_0] : memref<2x512xbf16, #tpu.memory_space<vmem>>, vector<2x512xbf16>
    %c0_1 = arith.constant 0 : index
    %c0_2 = arith.constant 0 : index
    %1 = vector.load %arg1[%c0_1, %c0_2] : memref<512x128xbf16, #tpu.memory_space<vmem>>, vector<512x128xbf16>
    %cst = arith.constant dense<0.000000e+00> : vector<2x128xf32>
    %2 = tpu.matmul %0, %1, %cst {dimension_numbers = #tpu.dot_dimension_numbers<[1], [0], [0], [1], [0, 0, 1, 1], [], []>} : vector<2x512xbf16>, vector<512x128xbf16>, vector<2x128xf32> -> vector<2x128xf32>
    %c0_3 = arith.constant 0 : index
    %c0_4 = arith.constant 0 : index
    %3 = vector.load %arg2[%c0_3, %c0_4] : memref<1x128xf32, #tpu.memory_space<vmem>>, vector<1x128xf32>
    %4 = vector.broadcast %3 : vector<1x128xf32> to vector<2x128xf32>
    %5 = arith.addf %2, %4 : vector<2x128xf32>
    %cst_5 = arith.constant 0.000000e+00 : f32
    %6 = vector.broadcast %cst_5 : f32 to vector<2x128xf32>
    %7 = arith.subf %6, %5 : vector<2x128xf32>
    %8 = math.exp %7 : vector<2x128xf32>
    %cst_6 = arith.constant 1.000000e+00 : f32
    %9 = vector.broadcast %cst_6 : f32 to vector<2x128xf32>
    %10 = arith.addf %9, %8 : vector<2x128xf32>
    %cst_7 = arith.constant 1.000000e+00 : f32
    %11 = vector.broadcast %cst_7 : f32 to vector<2x128xf32>
    %12 = arith.divf %11, %10 : vector<2x128xf32>
    %c0_8 = arith.constant 0 : index
    %c0_9 = arith.constant 0 : index
    %13 = vector.load %arg3[%c0_8, %c0_9] : memref<2x128xf32, #tpu.memory_space<vmem>>, vector<2x128xf32>
    tpu.vector_store %arg3[%c0_8, %c0_9], %12 {strides = array<i32>} : memref<2x128xf32, #tpu.memory_space<vmem>>, vector<2x128xf32>,
    return
  }
}

module attributes {stable_mosaic.version = 11 : i64} {
  func.func @_grammar_kernel(%arg0: memref<2x16xf32, #tpu.memory_space<vmem>>, %arg1: memref<16x16xf32, #tpu.memory_space<vmem>>, %arg2: memref<6x2x16xf32, #tpu.memory_space<vmem>>, %arg3: memref<2x16xf32, #tpu.memory_space<vmem>>) attributes {dimension_semantics = [], scalar_prefetch = 0 : i64, scratch_operands = 0 : i64, tpu.core_type = #tpu.core_type<tc>} {
    %c0 = arith.constant 0 : index
    %c0_0 = arith.constant 0 : index
    %0 = vector.load %arg0[%c0, %c0_0] : memref<2x16xf32, #tpu.memory_space<vmem>>, vector<2x16xf32>
    %c0_1 = arith.constant 0 : index
    %c0_2 = arith.constant 0 : index
    %c0_3 = arith.constant 0 : index
    %1 = vector.load %arg2[%c0_1, %c0_2, %c0_3] : memref<6x2x16xf32, #tpu.memory_space<vmem>>, vector<1x2x16xf32>
    %2 = vector.shape_cast %1 : vector<1x2x16xf32> to vector<2x16xf32>
    %3 = arith.addf %0, %2 : vector<2x16xf32>
    %cst = arith.constant dense<0xFF800000> : vector<2xf32>
    %4 = vector.multi_reduction <maximumf>, %3, %cst [1] : vector<2x16xf32> to vector<2xf32>
    %5 = vector.shape_cast %4 : vector<2xf32> to vector<2x1xf32>
    %6 = tpu.iota {dimensions = array<i32: 1>} : vector<2x16xi32>
    %7 = vector.broadcast %5 : vector<2x1xf32> to vector<2x16xf32>
    %8 = arith.cmpf oge, %3, %7 : vector<2x16xf32>
    %c16_i32 = arith.constant 16 : i32
    %9 = vector.broadcast %c16_i32 : i32 to vector<2x16xi32>
    %10 = arith.select %8, %6, %9 : vector<2x16xi1>, vector<2x16xi32>
    %cst_4 = arith.constant dense<2147483647> : vector<2xi32>
    %11 = vector.multi_reduction <minsi>, %10, %cst_4 [1] : vector<2x16xi32> to vector<2xi32>
    %12 = vector.shape_cast %11 : vector<2xi32> to vector<2x1xi32>
    %13 = vector.broadcast %12 : vector<2x1xi32> to vector<2x16xi32>
    %14 = arith.cmpi eq, %6, %13 : vector<2x16xi32>
    %15 = arith.extui %14 : vector<2x16xi1> to vector<2x16xi32>
    %16 = arith.sitofp %15 : vector<2x16xi32> to vector<2x16xf32>
    %c1_i32 = arith.constant 1 : i32
    %17 = vector.extract_strided_slice %16 {offsets = [0, 15], sizes = [2, 1], strides = [1, 1]} : vector<2x16xf32> to vector<2x1xf32>
    %cst_5 = arith.constant 0.000000e+00 : f32
    %18 = vector.broadcast %cst_5 : f32 to vector<2x1xf32>
    %19 = arith.cmpf oeq, %17, %18 : vector<2x1xf32>
    %c0_6 = arith.constant 0 : index
    %c0_7 = arith.constant 0 : index
    %20 = vector.load %arg1[%c0_6, %c0_7] : memref<16x16xf32, #tpu.memory_space<vmem>>, vector<16x16xf32>
    %cst_8 = arith.constant dense<0.000000e+00> : vector<2x16xf32>
    %21 = tpu.matmul %16, %20, %cst_8 {dimension_numbers = #tpu.dot_dimension_numbers<[1], [0], [0], [1], [0, 0, 1, 1], [], []>} : vector<2x16xf32>, vector<16x16xf32>, vector<2x16xf32> -> vector<2x16xf32>
    %22 = arith.index_cast %c1_i32 : i32 to index
    %c0_9 = arith.constant 0 : index
    %c0_10 = arith.constant 0 : index
    %23 = vector.load %arg2[%22, %c0_9, %c0_10] : memref<6x2x16xf32, #tpu.memory_space<vmem>>, vector<1x2x16xf32>
    %24 = vector.shape_cast %23 : vector<1x2x16xf32> to vector<2x16xf32>
    %25 = arith.addf %21, %24 : vector<2x16xf32>
    %cst_11 = arith.constant dense<0xFF800000> : vector<2xf32>
    %26 = vector.multi_reduction <maximumf>, %25, %cst_11 [1] : vector<2x16xf32> to vector<2xf32>
    %27 = vector.shape_cast %26 : vector<2xf32> to vector<2x1xf32>
    %28 = tpu.iota {dimensions = array<i32: 1>} : vector<2x16xi32>
    %29 = vector.broadcast %27 : vector<2x1xf32> to vector<2x16xf32>
    %30 = arith.cmpf oge, %25, %29 : vector<2x16xf32>
    %c16_i32_12 = arith.constant 16 : i32
    %31 = vector.broadcast %c16_i32_12 : i32 to vector<2x16xi32>
    %32 = arith.select %30, %28, %31 : vector<2x16xi1>, vector<2x16xi32>
    %cst_13 = arith.constant dense<2147483647> : vector<2xi32>
    %33 = vector.multi_reduction <minsi>, %32, %cst_13 [1] : vector<2x16xi32> to vector<2xi32>
    %34 = vector.shape_cast %33 : vector<2xi32> to vector<2x1xi32>
    %35 = vector.broadcast %34 : vector<2x1xi32> to vector<2x16xi32>
    %36 = arith.cmpi eq, %28, %35 : vector<2x16xi32>
    %37 = arith.extui %36 : vector<2x16xi1> to vector<2x16xi32>
    %38 = arith.sitofp %37 : vector<2x16xi32> to vector<2x16xf32>
    %39 = vector.shape_cast %19 : vector<2x1xi1> to vector<2x1xi1>
    %40 = vector.broadcast %39 : vector<2x1xi1> to vector<2x16xi1>
    %41 = arith.select %40, %38, %16 : vector<2x16xi1>, vector<2x16xf32>
    %c2_i32 = arith.constant 2 : i32
    %42 = vector.extract_strided_slice %41 {offsets = [0, 15], sizes = [2, 1], strides = [1, 1]} : vector<2x16xf32> to vector<2x1xf32>
    %cst_14 = arith.constant 0.000000e+00 : f32
    %43 = vector.broadcast %cst_14 : f32 to vector<2x1xf32>
    %44 = arith.cmpf oeq, %42, %43 : vector<2x1xf32>
    %c0_15 = arith.constant 0 : index
    %c0_16 = arith.constant 0 : index
    %45 = vector.load %arg1[%c0_15, %c0_16] : memref<16x16xf32, #tpu.memory_space<vmem>>, vector<16x16xf32>
    %cst_17 = arith.constant dense<0.000000e+00> : vector<2x16xf32>
    %46 = tpu.matmul %41, %45, %cst_17 {dimension_numbers = #tpu.dot_dimension_numbers<[1], [0], [0], [1], [0, 0, 1, 1], [], []>} : vector<2x16xf32>, vector<16x16xf32>, vector<2x16xf32> -> vector<2x16xf32>
    %47 = arith.index_cast %c2_i32 : i32 to index
    %c0_18 = arith.constant 0 : index
    %c0_19 = arith.constant 0 : index
    %48 = vector.load %arg2[%47, %c0_18, %c0_19] : memref<6x2x16xf32, #tpu.memory_space<vmem>>, vector<1x2x16xf32>
    %49 = vector.shape_cast %48 : vector<1x2x16xf32> to vector<2x16xf32>
    %50 = arith.addf %46, %49 : vector<2x16xf32>
    %cst_20 = arith.constant dense<0xFF800000> : vector<2xf32>
    %51 = vector.multi_reduction <maximumf>, %50, %cst_20 [1] : vector<2x16xf32> to vector<2xf32>
    %52 = vector.shape_cast %51 : vector<2xf32> to vector<2x1xf32>
    %53 = tpu.iota {dimensions = array<i32: 1>} : vector<2x16xi32>
    %54 = vector.broadcast %52 : vector<2x1xf32> to vector<2x16xf32>
    %55 = arith.cmpf oge, %50, %54 : vector<2x16xf32>
    %c16_i32_21 = arith.constant 16 : i32
    %56 = vector.broadcast %c16_i32_21 : i32 to vector<2x16xi32>
    %57 = arith.select %55, %53, %56 : vector<2x16xi1>, vector<2x16xi32>
    %cst_22 = arith.constant dense<2147483647> : vector<2xi32>
    %58 = vector.multi_reduction <minsi>, %57, %cst_22 [1] : vector<2x16xi32> to vector<2xi32>
    %59 = vector.shape_cast %58 : vector<2xi32> to vector<2x1xi32>
    %60 = vector.broadcast %59 : vector<2x1xi32> to vector<2x16xi32>
    %61 = arith.cmpi eq, %53, %60 : vector<2x16xi32>
    %62 = arith.extui %61 : vector<2x16xi1> to vector<2x16xi32>
    %63 = arith.sitofp %62 : vector<2x16xi32> to vector<2x16xf32>
    %64 = vector.shape_cast %44 : vector<2x1xi1> to vector<2x1xi1>
    %65 = vector.broadcast %64 : vector<2x1xi1> to vector<2x16xi1>
    %66 = arith.select %65, %63, %41 : vector<2x16xi1>, vector<2x16xf32>
    %c3_i32 = arith.constant 3 : i32
    %67 = vector.extract_strided_slice %66 {offsets = [0, 15], sizes = [2, 1], strides = [1, 1]} : vector<2x16xf32> to vector<2x1xf32>
    %cst_23 = arith.constant 0.000000e+00 : f32
    %68 = vector.broadcast %cst_23 : f32 to vector<2x1xf32>
    %69 = arith.cmpf oeq, %67, %68 : vector<2x1xf32>
    %c0_24 = arith.constant 0 : index
    %c0_25 = arith.constant 0 : index
    %70 = vector.load %arg1[%c0_24, %c0_25] : memref<16x16xf32, #tpu.memory_space<vmem>>, vector<16x16xf32>
    %cst_26 = arith.constant dense<0.000000e+00> : vector<2x16xf32>
    %71 = tpu.matmul %66, %70, %cst_26 {dimension_numbers = #tpu.dot_dimension_numbers<[1], [0], [0], [1], [0, 0, 1, 1], [], []>} : vector<2x16xf32>, vector<16x16xf32>, vector<2x16xf32> -> vector<2x16xf32>
    %72 = arith.index_cast %c3_i32 : i32 to index
    %c0_27 = arith.constant 0 : index
    %c0_28 = arith.constant 0 : index
    %73 = vector.load %arg2[%72, %c0_27, %c0_28] : memref<6x2x16xf32, #tpu.memory_space<vmem>>, vector<1x2x16xf32>
    %74 = vector.shape_cast %73 : vector<1x2x16xf32> to vector<2x16xf32>
    %75 = arith.addf %71, %74 : vector<2x16xf32>
    %cst_29 = arith.constant dense<0xFF800000> : vector<2xf32>
    %76 = vector.multi_reduction <maximumf>, %75, %cst_29 [1] : vector<2x16xf32> to vector<2xf32>
    %77 = vector.shape_cast %76 : vector<2xf32> to vector<2x1xf32>
    %78 = tpu.iota {dimensions = array<i32: 1>} : vector<2x16xi32>
    %79 = vector.broadcast %77 : vector<2x1xf32> to vector<2x16xf32>
    %80 = arith.cmpf oge, %75, %79 : vector<2x16xf32>
    %c16_i32_30 = arith.constant 16 : i32
    %81 = vector.broadcast %c16_i32_30 : i32 to vector<2x16xi32>
    %82 = arith.select %80, %78, %81 : vector<2x16xi1>, vector<2x16xi32>
    %cst_31 = arith.constant dense<2147483647> : vector<2xi32>
    %83 = vector.multi_reduction <minsi>, %82, %cst_31 [1] : vector<2x16xi32> to vector<2xi32>
    %84 = vector.shape_cast %83 : vector<2xi32> to vector<2x1xi32>
    %85 = vector.broadcast %84 : vector<2x1xi32> to vector<2x16xi32>
    %86 = arith.cmpi eq, %78, %85 : vector<2x16xi32>
    %87 = arith.extui %86 : vector<2x16xi1> to vector<2x16xi32>
    %88 = arith.sitofp %87 : vector<2x16xi32> to vector<2x16xf32>
    %89 = vector.shape_cast %69 : vector<2x1xi1> to vector<2x1xi1>
    %90 = vector.broadcast %89 : vector<2x1xi1> to vector<2x16xi1>
    %91 = arith.select %90, %88, %66 : vector<2x16xi1>, vector<2x16xf32>
    %c4_i32 = arith.constant 4 : i32
    %92 = vector.extract_strided_slice %91 {offsets = [0, 15], sizes = [2, 1], strides = [1, 1]} : vector<2x16xf32> to vector<2x1xf32>
    %cst_32 = arith.constant 0.000000e+00 : f32
    %93 = vector.broadcast %cst_32 : f32 to vector<2x1xf32>
    %94 = arith.cmpf oeq, %92, %93 : vector<2x1xf32>
    %c0_33 = arith.constant 0 : index
    %c0_34 = arith.constant 0 : index
    %95 = vector.load %arg1[%c0_33, %c0_34] : memref<16x16xf32, #tpu.memory_space<vmem>>, vector<16x16xf32>
    %cst_35 = arith.constant dense<0.000000e+00> : vector<2x16xf32>
    %96 = tpu.matmul %91, %95, %cst_35 {dimension_numbers = #tpu.dot_dimension_numbers<[1], [0], [0], [1], [0, 0, 1, 1], [], []>} : vector<2x16xf32>, vector<16x16xf32>, vector<2x16xf32> -> vector<2x16xf32>
    %97 = arith.index_cast %c4_i32 : i32 to index
    %c0_36 = arith.constant 0 : index
    %c0_37 = arith.constant 0 : index
    %98 = vector.load %arg2[%97, %c0_36, %c0_37] : memref<6x2x16xf32, #tpu.memory_space<vmem>>, vector<1x2x16xf32>
    %99 = vector.shape_cast %98 : vector<1x2x16xf32> to vector<2x16xf32>
    %100 = arith.addf %96, %99 : vector<2x16xf32>
    %cst_38 = arith.constant dense<0xFF800000> : vector<2xf32>
    %101 = vector.multi_reduction <maximumf>, %100, %cst_38 [1] : vector<2x16xf32> to vector<2xf32>
    %102 = vector.shape_cast %101 : vector<2xf32> to vector<2x1xf32>
    %103 = tpu.iota {dimensions = array<i32: 1>} : vector<2x16xi32>
    %104 = vector.broadcast %102 : vector<2x1xf32> to vector<2x16xf32>
    %105 = arith.cmpf oge, %100, %104 : vector<2x16xf32>
    %c16_i32_39 = arith.constant 16 : i32
    %106 = vector.broadcast %c16_i32_39 : i32 to vector<2x16xi32>
    %107 = arith.select %105, %103, %106 : vector<2x16xi1>, vector<2x16xi32>
    %cst_40 = arith.constant dense<2147483647> : vector<2xi32>
    %108 = vector.multi_reduction <minsi>, %107, %cst_40 [1] : vector<2x16xi32> to vector<2xi32>
    %109 = vector.shape_cast %108 : vector<2xi32> to vector<2x1xi32>
    %110 = vector.broadcast %109 : vector<2x1xi32> to vector<2x16xi32>
    %111 = arith.cmpi eq, %103, %110 : vector<2x16xi32>
    %112 = arith.extui %111 : vector<2x16xi1> to vector<2x16xi32>
    %113 = arith.sitofp %112 : vector<2x16xi32> to vector<2x16xf32>
    %114 = vector.shape_cast %94 : vector<2x1xi1> to vector<2x1xi1>
    %115 = vector.broadcast %114 : vector<2x1xi1> to vector<2x16xi1>
    %116 = arith.select %115, %113, %91 : vector<2x16xi1>, vector<2x16xf32>
    %c5_i32 = arith.constant 5 : i32
    %117 = vector.extract_strided_slice %116 {offsets = [0, 15], sizes = [2, 1], strides = [1, 1]} : vector<2x16xf32> to vector<2x1xf32>
    %cst_41 = arith.constant 0.000000e+00 : f32
    %118 = vector.broadcast %cst_41 : f32 to vector<2x1xf32>
    %119 = arith.cmpf oeq, %117, %118 : vector<2x1xf32>
    %c0_42 = arith.constant 0 : index
    %c0_43 = arith.constant 0 : index
    %120 = vector.load %arg1[%c0_42, %c0_43] : memref<16x16xf32, #tpu.memory_space<vmem>>, vector<16x16xf32>
    %cst_44 = arith.constant dense<0.000000e+00> : vector<2x16xf32>
    %121 = tpu.matmul %116, %120, %cst_44 {dimension_numbers = #tpu.dot_dimension_numbers<[1], [0], [0], [1], [0, 0, 1, 1], [], []>} : vector<2x16xf32>, vector<16x16xf32>, vector<2x16xf32> -> vector<2x16xf32>
    %122 = arith.index_cast %c5_i32 : i32 to index
    %c0_45 = arith.constant 0 : index
    %c0_46 = arith.constant 0 : index
    %123 = vector.load %arg2[%122, %c0_45, %c0_46] : memref<6x2x16xf32, #tpu.memory_space<vmem>>, vector<1x2x16xf32>
    %124 = vector.shape_cast %123 : vector<1x2x16xf32> to vector<2x16xf32>
    %125 = arith.addf %121, %124 : vector<2x16xf32>
    %cst_47 = arith.constant dense<0xFF800000> : vector<2xf32>
    %126 = vector.multi_reduction <maximumf>, %125, %cst_47 [1] : vector<2x16xf32> to vector<2xf32>
    %127 = vector.shape_cast %126 : vector<2xf32> to vector<2x1xf32>
    %128 = tpu.iota {dimensions = array<i32: 1>} : vector<2x16xi32>
    %129 = vector.broadcast %127 : vector<2x1xf32> to vector<2x16xf32>
    %130 = arith.cmpf oge, %125, %129 : vector<2x16xf32>
    %c16_i32_48 = arith.constant 16 : i32
    %131 = vector.broadcast %c16_i32_48 : i32 to vector<2x16xi32>
    %132 = arith.select %130, %128, %131 : vector<2x16xi1>, vector<2x16xi32>
    %cst_49 = arith.constant dense<2147483647> : vector<2xi32>
    %133 = vector.multi_reduction <minsi>, %132, %cst_49 [1] : vector<2x16xi32> to vector<2xi32>
    %134 = vector.shape_cast %133 : vector<2xi32> to vector<2x1xi32>
    %135 = vector.broadcast %134 : vector<2x1xi32> to vector<2x16xi32>
    %136 = arith.cmpi eq, %128, %135 : vector<2x16xi32>
    %137 = arith.extui %136 : vector<2x16xi1> to vector<2x16xi32>
    %138 = arith.sitofp %137 : vector<2x16xi32> to vector<2x16xf32>
    %139 = vector.shape_cast %119 : vector<2x1xi1> to vector<2x1xi1>
    %140 = vector.broadcast %139 : vector<2x1xi1> to vector<2x16xi1>
    %141 = arith.select %140, %138, %116 : vector<2x16xi1>, vector<2x16xf32>
    %c5_i32_50 = arith.constant 5 : i32
    %c0_51 = arith.constant 0 : index
    %c0_52 = arith.constant 0 : index
    %142 = vector.load %arg3[%c0_51, %c0_52] : memref<2x16xf32, #tpu.memory_space<vmem>>, vector<2x16xf32>
    tpu.vector_store %arg3[%c0_51, %c0_52], %141 {strides = array<i32>} : memref<2x16xf32, #tpu.memory_space<vmem>>, vector<2x16xf32>,
    return
  }
}

module attributes {stable_mosaic.version = 11 : i64} {
  func.func @_lstm_kernel(%arg0: memref<2x16xf32, #tpu.memory_space<vmem>>, %arg1: memref<16x512xf32, #tpu.memory_space<vmem>>, %arg2: memref<128x512xf32, #tpu.memory_space<vmem>>, %arg3: memref<2x128xf32, #tpu.memory_space<vmem>>, %arg4: memref<1x128xf32, #tpu.memory_space<vmem>>, %arg5: memref<1x128xf32, #tpu.memory_space<vmem>>) attributes {dimension_semantics = [], scalar_prefetch = 0 : i64, scratch_operands = 2 : i64, tpu.core_type = #tpu.core_type<tc>} {
    %cst = arith.constant 0.000000e+00 : f32
    %0 = vector.broadcast %cst : f32 to vector<1x128xf32>
    %c0 = arith.constant 0 : index
    %c0_0 = arith.constant 0 : index
    %1 = vector.load %arg4[%c0, %c0_0] : memref<1x128xf32, #tpu.memory_space<vmem>>, vector<1x128xf32>
    tpu.vector_store %arg4[%c0, %c0_0], %0 {strides = array<i32>} : memref<1x128xf32, #tpu.memory_space<vmem>>, vector<1x128xf32>,
    %cst_1 = arith.constant 0.000000e+00 : f32
    %2 = vector.broadcast %cst_1 : f32 to vector<1x128xf32>
    %c0_2 = arith.constant 0 : index
    %c0_3 = arith.constant 0 : index
    %3 = vector.load %arg5[%c0_2, %c0_3] : memref<1x128xf32, #tpu.memory_space<vmem>>, vector<1x128xf32>
    tpu.vector_store %arg5[%c0_2, %c0_3], %2 {strides = array<i32>} : memref<1x128xf32, #tpu.memory_space<vmem>>, vector<1x128xf32>,
    %c0_i32 = arith.constant 0 : i32
    %4 = arith.index_cast %c0_i32 : i32 to index
    %c0_4 = arith.constant 0 : index
    %5 = vector.load %arg0[%4, %c0_4] : memref<2x16xf32, #tpu.memory_space<vmem>>, vector<1x16xf32>
    %c0_5 = arith.constant 0 : index
    %c0_6 = arith.constant 0 : index
    %6 = vector.load %arg1[%c0_5, %c0_6] : memref<16x512xf32, #tpu.memory_space<vmem>>, vector<16x512xf32>
    %cst_7 = arith.constant dense<0.000000e+00> : vector<1x512xf32>
    %7 = tpu.matmul %5, %6, %cst_7 {dimension_numbers = #tpu.dot_dimension_numbers<[1], [0], [0], [1], [0, 0, 1, 1], [], []>} : vector<1x16xf32>, vector<16x512xf32>, vector<1x512xf32> -> vector<1x512xf32>
    %c0_8 = arith.constant 0 : index
    %c0_9 = arith.constant 0 : index
    %8 = vector.load %arg4[%c0_8, %c0_9] : memref<1x128xf32, #tpu.memory_space<vmem>>, vector<1x128xf32>
    %c0_10 = arith.constant 0 : index
    %c0_11 = arith.constant 0 : index
    %9 = vector.load %arg2[%c0_10, %c0_11] : memref<128x512xf32, #tpu.memory_space<vmem>>, vector<128x512xf32>
    %cst_12 = arith.constant dense<0.000000e+00> : vector<1x512xf32>
    %10 = tpu.matmul %8, %9, %cst_12 {dimension_numbers = #tpu.dot_dimension_numbers<[1], [0], [0], [1], [0, 0, 1, 1], [], []>} : vector<1x128xf32>, vector<128x512xf32>, vector<1x512xf32> -> vector<1x512xf32>
    %11 = arith.addf %7, %10 : vector<1x512xf32>
    %12 = vector.extract_strided_slice %11 {offsets = [0, 0], sizes = [1, 128], strides = [1, 1]} : vector<1x512xf32> to vector<1x128xf32>
    %cst_13 = arith.constant 0.000000e+00 : f32
    %13 = vector.broadcast %cst_13 : f32 to vector<1x128xf32>
    %14 = arith.subf %13, %12 : vector<1x128xf32>
    %15 = math.exp %14 : vector<1x128xf32>
    %cst_14 = arith.constant 1.000000e+00 : f32
    %16 = vector.broadcast %cst_14 : f32 to vector<1x128xf32>
    %17 = arith.addf %16, %15 : vector<1x128xf32>
    %cst_15 = arith.constant 1.000000e+00 : f32
    %18 = vector.broadcast %cst_15 : f32 to vector<1x128xf32>
    %19 = arith.divf %18, %17 : vector<1x128xf32>
    %20 = vector.extract_strided_slice %11 {offsets = [0, 128], sizes = [1, 128], strides = [1, 1]} : vector<1x512xf32> to vector<1x128xf32>
    %cst_16 = arith.constant 0.000000e+00 : f32
    %21 = vector.broadcast %cst_16 : f32 to vector<1x128xf32>
    %22 = arith.subf %21, %20 : vector<1x128xf32>
    %23 = math.exp %22 : vector<1x128xf32>
    %cst_17 = arith.constant 1.000000e+00 : f32
    %24 = vector.broadcast %cst_17 : f32 to vector<1x128xf32>
    %25 = arith.addf %24, %23 : vector<1x128xf32>
    %cst_18 = arith.constant 1.000000e+00 : f32
    %26 = vector.broadcast %cst_18 : f32 to vector<1x128xf32>
    %27 = arith.divf %26, %25 : vector<1x128xf32>
    %28 = vector.extract_strided_slice %11 {offsets = [0, 256], sizes = [1, 128], strides = [1, 1]} : vector<1x512xf32> to vector<1x128xf32>
    %29 = math.tanh %28 : vector<1x128xf32>
    %30 = vector.extract_strided_slice %11 {offsets = [0, 384], sizes = [1, 128], strides = [1, 1]} : vector<1x512xf32> to vector<1x128xf32>
    %cst_19 = arith.constant 0.000000e+00 : f32
    %31 = vector.broadcast %cst_19 : f32 to vector<1x128xf32>
    %32 = arith.subf %31, %30 : vector<1x128xf32>
    %33 = math.exp %32 : vector<1x128xf32>
    %cst_20 = arith.constant 1.000000e+00 : f32
    %34 = vector.broadcast %cst_20 : f32 to vector<1x128xf32>
    %35 = arith.addf %34, %33 : vector<1x128xf32>
    %cst_21 = arith.constant 1.000000e+00 : f32
    %36 = vector.broadcast %cst_21 : f32 to vector<1x128xf32>
    %37 = arith.divf %36, %35 : vector<1x128xf32>
    %c0_22 = arith.constant 0 : index
    %c0_23 = arith.constant 0 : index
    %38 = vector.load %arg5[%c0_22, %c0_23] : memref<1x128xf32, #tpu.memory_space<vmem>>, vector<1x128xf32>
    %39 = arith.mulf %27, %38 : vector<1x128xf32>
    %40 = arith.mulf %19, %29 : vector<1x128xf32>
    %41 = arith.addf %39, %40 : vector<1x128xf32>
    %42 = math.tanh %41 : vector<1x128xf32>
    %43 = arith.mulf %37, %42 : vector<1x128xf32>
    %c0_24 = arith.constant 0 : index
    %c0_25 = arith.constant 0 : index
    %44 = vector.load %arg5[%c0_24, %c0_25] : memref<1x128xf32, #tpu.memory_space<vmem>>, vector<1x128xf32>
    tpu.vector_store %arg5[%c0_24, %c0_25], %41 {strides = array<i32>} : memref<1x128xf32, #tpu.memory_space<vmem>>, vector<1x128xf32>,
    %c0_26 = arith.constant 0 : index
    %c0_27 = arith.constant 0 : index
    %45 = vector.load %arg4[%c0_26, %c0_27] : memref<1x128xf32, #tpu.memory_space<vmem>>, vector<1x128xf32>
    tpu.vector_store %arg4[%c0_26, %c0_27], %43 {strides = array<i32>} : memref<1x128xf32, #tpu.memory_space<vmem>>, vector<1x128xf32>,
    %46 = arith.index_cast %c0_i32 : i32 to index
    %c0_28 = arith.constant 0 : index
    %47 = vector.load %arg3[%46, %c0_28] : memref<2x128xf32, #tpu.memory_space<vmem>>, vector<1x128xf32>
    tpu.vector_store %arg3[%46, %c0_28], %43 {strides = array<i32>} : memref<2x128xf32, #tpu.memory_space<vmem>>, vector<1x128xf32>,
    %c1_i32 = arith.constant 1 : i32
    %48 = arith.index_cast %c1_i32 : i32 to index
    %c0_29 = arith.constant 0 : index
    %49 = vector.load %arg0[%48, %c0_29] : memref<2x16xf32, #tpu.memory_space<vmem>>, vector<1x16xf32>
    %c0_30 = arith.constant 0 : index
    %c0_31 = arith.constant 0 : index
    %50 = vector.load %arg1[%c0_30, %c0_31] : memref<16x512xf32, #tpu.memory_space<vmem>>, vector<16x512xf32>
    %cst_32 = arith.constant dense<0.000000e+00> : vector<1x512xf32>
    %51 = tpu.matmul %49, %50, %cst_32 {dimension_numbers = #tpu.dot_dimension_numbers<[1], [0], [0], [1], [0, 0, 1, 1], [], []>} : vector<1x16xf32>, vector<16x512xf32>, vector<1x512xf32> -> vector<1x512xf32>
    %c0_33 = arith.constant 0 : index
    %c0_34 = arith.constant 0 : index
    %52 = vector.load %arg4[%c0_33, %c0_34] : memref<1x128xf32, #tpu.memory_space<vmem>>, vector<1x128xf32>
    %c0_35 = arith.constant 0 : index
    %c0_36 = arith.constant 0 : index
    %53 = vector.load %arg2[%c0_35, %c0_36] : memref<128x512xf32, #tpu.memory_space<vmem>>, vector<128x512xf32>
    %cst_37 = arith.constant dense<0.000000e+00> : vector<1x512xf32>
    %54 = tpu.matmul %52, %53, %cst_37 {dimension_numbers = #tpu.dot_dimension_numbers<[1], [0], [0], [1], [0, 0, 1, 1], [], []>} : vector<1x128xf32>, vector<128x512xf32>, vector<1x512xf32> -> vector<1x512xf32>
    %55 = arith.addf %51, %54 : vector<1x512xf32>
    %56 = vector.extract_strided_slice %55 {offsets = [0, 0], sizes = [1, 128], strides = [1, 1]} : vector<1x512xf32> to vector<1x128xf32>
    %cst_38 = arith.constant 0.000000e+00 : f32
    %57 = vector.broadcast %cst_38 : f32 to vector<1x128xf32>
    %58 = arith.subf %57, %56 : vector<1x128xf32>
    %59 = math.exp %58 : vector<1x128xf32>
    %cst_39 = arith.constant 1.000000e+00 : f32
    %60 = vector.broadcast %cst_39 : f32 to vector<1x128xf32>
    %61 = arith.addf %60, %59 : vector<1x128xf32>
    %cst_40 = arith.constant 1.000000e+00 : f32
    %62 = vector.broadcast %cst_40 : f32 to vector<1x128xf32>
    %63 = arith.divf %62, %61 : vector<1x128xf32>
    %64 = vector.extract_strided_slice %55 {offsets = [0, 128], sizes = [1, 128], strides = [1, 1]} : vector<1x512xf32> to vector<1x128xf32>
    %cst_41 = arith.constant 0.000000e+00 : f32
    %65 = vector.broadcast %cst_41 : f32 to vector<1x128xf32>
    %66 = arith.subf %65, %64 : vector<1x128xf32>
    %67 = math.exp %66 : vector<1x128xf32>
    %cst_42 = arith.constant 1.000000e+00 : f32
    %68 = vector.broadcast %cst_42 : f32 to vector<1x128xf32>
    %69 = arith.addf %68, %67 : vector<1x128xf32>
    %cst_43 = arith.constant 1.000000e+00 : f32
    %70 = vector.broadcast %cst_43 : f32 to vector<1x128xf32>
    %71 = arith.divf %70, %69 : vector<1x128xf32>
    %72 = vector.extract_strided_slice %55 {offsets = [0, 256], sizes = [1, 128], strides = [1, 1]} : vector<1x512xf32> to vector<1x128xf32>
    %73 = math.tanh %72 : vector<1x128xf32>
    %74 = vector.extract_strided_slice %55 {offsets = [0, 384], sizes = [1, 128], strides = [1, 1]} : vector<1x512xf32> to vector<1x128xf32>
    %cst_44 = arith.constant 0.000000e+00 : f32
    %75 = vector.broadcast %cst_44 : f32 to vector<1x128xf32>
    %76 = arith.subf %75, %74 : vector<1x128xf32>
    %77 = math.exp %76 : vector<1x128xf32>
    %cst_45 = arith.constant 1.000000e+00 : f32
    %78 = vector.broadcast %cst_45 : f32 to vector<1x128xf32>
    %79 = arith.addf %78, %77 : vector<1x128xf32>
    %cst_46 = arith.constant 1.000000e+00 : f32
    %80 = vector.broadcast %cst_46 : f32 to vector<1x128xf32>
    %81 = arith.divf %80, %79 : vector<1x128xf32>
    %c0_47 = arith.constant 0 : index
    %c0_48 = arith.constant 0 : index
    %82 = vector.load %arg5[%c0_47, %c0_48] : memref<1x128xf32, #tpu.memory_space<vmem>>, vector<1x128xf32>
    %83 = arith.mulf %71, %82 : vector<1x128xf32>
    %84 = arith.mulf %63, %73 : vector<1x128xf32>
    %85 = arith.addf %83, %84 : vector<1x128xf32>
    %86 = math.tanh %85 : vector<1x128xf32>
    %87 = arith.mulf %81, %86 : vector<1x128xf32>
    %c0_49 = arith.constant 0 : index
    %c0_50 = arith.constant 0 : index
    %88 = vector.load %arg5[%c0_49, %c0_50] : memref<1x128xf32, #tpu.memory_space<vmem>>, vector<1x128xf32>
    tpu.vector_store %arg5[%c0_49, %c0_50], %85 {strides = array<i32>} : memref<1x128xf32, #tpu.memory_space<vmem>>, vector<1x128xf32>,
    %c0_51 = arith.constant 0 : index
    %c0_52 = arith.constant 0 : index
    %89 = vector.load %arg4[%c0_51, %c0_52] : memref<1x128xf32, #tpu.memory_space<vmem>>, vector<1x128xf32>
    tpu.vector_store %arg4[%c0_51, %c0_52], %87 {strides = array<i32>} : memref<1x128xf32, #tpu.memory_space<vmem>>, vector<1x128xf32>,
    %90 = arith.index_cast %c1_i32 : i32 to index
    %c0_53 = arith.constant 0 : index
    %91 = vector.load %arg3[%90, %c0_53] : memref<2x128xf32, #tpu.memory_space<vmem>>, vector<1x128xf32>
    tpu.vector_store %arg3[%90, %c0_53], %87 {strides = array<i32>} : memref<2x128xf32, #tpu.memory_space<vmem>>, vector<1x128xf32>,
    %c2_i32 = arith.constant 2 : i32
    return
  }
}

module attributes {stable_mosaic.version = 11 : i64} {
  func.func @_fused_layer_kernel(%arg0: memref<32x512xbf16, #tpu.memory_space<vmem>>, %arg1: memref<512x128xbf16, #tpu.memory_space<vmem>>, %arg2: memref<1x128xf32, #tpu.memory_space<vmem>>, %arg3: memref<32x128xf32, #tpu.memory_space<vmem>>) attributes {dimension_semantics = [], scalar_prefetch = 0 : i64, scratch_operands = 0 : i64, tpu.core_type = #tpu.core_type<tc>} {
    %c0 = arith.constant 0 : index
    %c0_0 = arith.constant 0 : index
    %0 = vector.load %arg0[%c0, %c0_0] : memref<32x512xbf16, #tpu.memory_space<vmem>>, vector<32x512xbf16>
    %c0_1 = arith.constant 0 : index
    %c0_2 = arith.constant 0 : index
    %1 = vector.load %arg1[%c0_1, %c0_2] : memref<512x128xbf16, #tpu.memory_space<vmem>>, vector<512x128xbf16>
    %cst = arith.constant dense<0.000000e+00> : vector<32x128xf32>
    %2 = tpu.matmul %0, %1, %cst {dimension_numbers = #tpu.dot_dimension_numbers<[1], [0], [0], [1], [0, 0, 1, 1], [], []>} : vector<32x512xbf16>, vector<512x128xbf16>, vector<32x128xf32> -> vector<32x128xf32>
    %c0_3 = arith.constant 0 : index
    %c0_4 = arith.constant 0 : index
    %3 = vector.load %arg2[%c0_3, %c0_4] : memref<1x128xf32, #tpu.memory_space<vmem>>, vector<1x128xf32>
    %4 = vector.broadcast %3 : vector<1x128xf32> to vector<32x128xf32>
    %5 = arith.addf %2, %4 : vector<32x128xf32>
    %cst_5 = arith.constant dense<0.000000e+00> : vector<128xf32>
    %6 = vector.multi_reduction <add>, %5, %cst_5 [0] : vector<32x128xf32> to vector<128xf32>
    %7 = vector.shape_cast %6 : vector<128xf32> to vector<1x128xf32>
    %cst_6 = arith.constant 3.125000e-02 : f32
    %8 = vector.broadcast %cst_6 : f32 to vector<1x128xf32>
    %9 = arith.mulf %7, %8 : vector<1x128xf32>
    %10 = arith.mulf %5, %5 : vector<32x128xf32>
    %cst_7 = arith.constant dense<0.000000e+00> : vector<128xf32>
    %11 = vector.multi_reduction <add>, %10, %cst_7 [0] : vector<32x128xf32> to vector<128xf32>
    %12 = vector.shape_cast %11 : vector<128xf32> to vector<1x128xf32>
    %cst_8 = arith.constant 3.125000e-02 : f32
    %13 = vector.broadcast %cst_8 : f32 to vector<1x128xf32>
    %14 = arith.mulf %12, %13 : vector<1x128xf32>
    %15 = arith.mulf %9, %9 : vector<1x128xf32>
    %16 = arith.subf %14, %15 : vector<1x128xf32>
    %17 = vector.broadcast %9 : vector<1x128xf32> to vector<32x128xf32>
    %18 = arith.subf %5, %17 : vector<32x128xf32>
    %cst_9 = arith.constant 9.99999974E-6 : f32
    %19 = vector.broadcast %cst_9 : f32 to vector<1x128xf32>
    %20 = arith.addf %16, %19 : vector<1x128xf32>
    %21 = math.rsqrt %20 : vector<1x128xf32>
    %22 = vector.broadcast %21 : vector<1x128xf32> to vector<32x128xf32>
    %23 = arith.mulf %18, %22 : vector<32x128xf32>
    %cst_10 = arith.constant 0.000000e+00 : f32
    %24 = vector.broadcast %cst_10 : f32 to vector<32x128xf32>
    %25 = arith.maximumf %23, %24 : vector<32x128xf32>
    %c0_11 = arith.constant 0 : index
    %c0_12 = arith.constant 0 : index
    %26 = vector.load %arg3[%c0_11, %c0_12] : memref<32x128xf32, #tpu.memory_space<vmem>>, vector<32x128xf32>
    tpu.vector_store %arg3[%c0_11, %c0_12], %25 {strides = array<i32>} : memref<32x128xf32, #tpu.memory_space<vmem>>, vector<32x128xf32>,
    return
  }
}

module attributes {stable_mosaic.version = 11 : i64} {
  func.func @_fused_layer_kernel(%arg0: memref<128x512xbf16, #tpu.memory_space<vmem>>, %arg1: memref<512x128xbf16, #tpu.memory_space<vmem>>, %arg2: memref<1x128xf32, #tpu.memory_space<vmem>>, %arg3: memref<128x128xf32, #tpu.memory_space<vmem>>) attributes {dimension_semantics = [], scalar_prefetch = 0 : i64, scratch_operands = 0 : i64, tpu.core_type = #tpu.core_type<tc>} {
    %c0 = arith.constant 0 : index
    %c0_0 = arith.constant 0 : index
    %0 = vector.load %arg0[%c0, %c0_0] : memref<128x512xbf16, #tpu.memory_space<vmem>>, vector<128x512xbf16>
    %c0_1 = arith.constant 0 : index
    %c0_2 = arith.constant 0 : index
    %1 = vector.load %arg1[%c0_1, %c0_2] : memref<512x128xbf16, #tpu.memory_space<vmem>>, vector<512x128xbf16>
    %cst = arith.constant dense<0.000000e+00> : vector<128x128xf32>
    %2 = tpu.matmul %0, %1, %cst {dimension_numbers = #tpu.dot_dimension_numbers<[1], [0], [0], [1], [0, 0, 1, 1], [], []>} : vector<128x512xbf16>, vector<512x128xbf16>, vector<128x128xf32> -> vector<128x128xf32>
    %c0_3 = arith.constant 0 : index
    %c0_4 = arith.constant 0 : index
    %3 = vector.load %arg2[%c0_3, %c0_4] : memref<1x128xf32, #tpu.memory_space<vmem>>, vector<1x128xf32>
    %4 = vector.broadcast %3 : vector<1x128xf32> to vector<128x128xf32>
    %5 = arith.addf %2, %4 : vector<128x128xf32>
    %cst_5 = arith.constant dense<0.000000e+00> : vector<128xf32>
    %6 = vector.multi_reduction <add>, %5, %cst_5 [0] : vector<128x128xf32> to vector<128xf32>
    %7 = vector.shape_cast %6 : vector<128xf32> to vector<1x128xf32>
    %cst_6 = arith.constant 7.812500e-03 : f32
    %8 = vector.broadcast %cst_6 : f32 to vector<1x128xf32>
    %9 = arith.mulf %7, %8 : vector<1x128xf32>
    %10 = arith.mulf %5, %5 : vector<128x128xf32>
    %cst_7 = arith.constant dense<0.000000e+00> : vector<128xf32>
    %11 = vector.multi_reduction <add>, %10, %cst_7 [0] : vector<128x128xf32> to vector<128xf32>
    %12 = vector.shape_cast %11 : vector<128xf32> to vector<1x128xf32>
    %cst_8 = arith.constant 7.812500e-03 : f32
    %13 = vector.broadcast %cst_8 : f32 to vector<1x128xf32>
    %14 = arith.mulf %12, %13 : vector<1x128xf32>
    %15 = arith.mulf %9, %9 : vector<1x128xf32>
    %16 = arith.subf %14, %15 : vector<1x128xf32>
    %17 = vector.broadcast %9 : vector<1x128xf32> to vector<128x128xf32>
    %18 = arith.subf %5, %17 : vector<128x128xf32>
    %cst_9 = arith.constant 9.99999974E-6 : f32
    %19 = vector.broadcast %cst_9 : f32 to vector<1x128xf32>
    %20 = arith.addf %16, %19 : vector<1x128xf32>
    %21 = math.rsqrt %20 : vector<1x128xf32>
    %22 = vector.broadcast %21 : vector<1x128xf32> to vector<128x128xf32>
    %23 = arith.mulf %18, %22 : vector<128x128xf32>
    %cst_10 = arith.constant 0.000000e+00 : f32
    %24 = vector.broadcast %cst_10 : f32 to vector<128x128xf32>
    %25 = arith.maximumf %23, %24 : vector<128x128xf32>
    %c0_11 = arith.constant 0 : index
    %c0_12 = arith.constant 0 : index
    %26 = vector.load %arg3[%c0_11, %c0_12] : memref<128x128xf32, #tpu.memory_space<vmem>>, vector<128x128xf32>
    tpu.vector_store %arg3[%c0_11, %c0_12], %25 {strides = array<i32>} : memref<128x128xf32, #tpu.memory_space<vmem>>, vector<128x128xf32>,
    return
  }
}

module attributes {stable_mosaic.version = 11 : i64} {
  func.func @_fused_layer_kernel(%arg0: memref<512x256xbf16, #tpu.memory_space<vmem>>, %arg1: memref<256x128xbf16, #tpu.memory_space<vmem>>, %arg2: memref<1x128xf32, #tpu.memory_space<vmem>>, %arg3: memref<512x128xf32, #tpu.memory_space<vmem>>) attributes {dimension_semantics = [], scalar_prefetch = 0 : i64, scratch_operands = 0 : i64, tpu.core_type = #tpu.core_type<tc>} {
    %c0 = arith.constant 0 : index
    %c0_0 = arith.constant 0 : index
    %0 = vector.load %arg0[%c0, %c0_0] : memref<512x256xbf16, #tpu.memory_space<vmem>>, vector<512x256xbf16>
    %c0_1 = arith.constant 0 : index
    %c0_2 = arith.constant 0 : index
    %1 = vector.load %arg1[%c0_1, %c0_2] : memref<256x128xbf16, #tpu.memory_space<vmem>>, vector<256x128xbf16>
    %cst = arith.constant dense<0.000000e+00> : vector<512x128xf32>
    %2 = tpu.matmul %0, %1, %cst {dimension_numbers = #tpu.dot_dimension_numbers<[1], [0], [0], [1], [0, 0, 1, 1], [], []>} : vector<512x256xbf16>, vector<256x128xbf16>, vector<512x128xf32> -> vector<512x128xf32>
    %c0_3 = arith.constant 0 : index
    %c0_4 = arith.constant 0 : index
    %3 = vector.load %arg2[%c0_3, %c0_4] : memref<1x128xf32, #tpu.memory_space<vmem>>, vector<1x128xf32>
    %4 = vector.broadcast %3 : vector<1x128xf32> to vector<512x128xf32>
    %5 = arith.addf %2, %4 : vector<512x128xf32>
    %cst_5 = arith.constant dense<0.000000e+00> : vector<128xf32>
    %6 = vector.multi_reduction <add>, %5, %cst_5 [0] : vector<512x128xf32> to vector<128xf32>
    %7 = vector.shape_cast %6 : vector<128xf32> to vector<1x128xf32>
    %cst_6 = arith.constant 0.001953125 : f32
    %8 = vector.broadcast %cst_6 : f32 to vector<1x128xf32>
    %9 = arith.mulf %7, %8 : vector<1x128xf32>
    %10 = arith.mulf %5, %5 : vector<512x128xf32>
    %cst_7 = arith.constant dense<0.000000e+00> : vector<128xf32>
    %11 = vector.multi_reduction <add>, %10, %cst_7 [0] : vector<512x128xf32> to vector<128xf32>
    %12 = vector.shape_cast %11 : vector<128xf32> to vector<1x128xf32>
    %cst_8 = arith.constant 0.001953125 : f32
    %13 = vector.broadcast %cst_8 : f32 to vector<1x128xf32>
    %14 = arith.mulf %12, %13 : vector<1x128xf32>
    %15 = arith.mulf %9, %9 : vector<1x128xf32>
    %16 = arith.subf %14, %15 : vector<1x128xf32>
    %17 = vector.broadcast %9 : vector<1x128xf32> to vector<512x128xf32>
    %18 = arith.subf %5, %17 : vector<512x128xf32>
    %cst_9 = arith.constant 9.99999974E-6 : f32
    %19 = vector.broadcast %cst_9 : f32 to vector<1x128xf32>
    %20 = arith.addf %16, %19 : vector<1x128xf32>
    %21 = math.rsqrt %20 : vector<1x128xf32>
    %22 = vector.broadcast %21 : vector<1x128xf32> to vector<512x128xf32>
    %23 = arith.mulf %18, %22 : vector<512x128xf32>
    %cst_10 = arith.constant 0.000000e+00 : f32
    %24 = vector.broadcast %cst_10 : f32 to vector<512x128xf32>
    %25 = arith.maximumf %23, %24 : vector<512x128xf32>
    %c0_11 = arith.constant 0 : index
    %c0_12 = arith.constant 0 : index
    %26 = vector.load %arg3[%c0_11, %c0_12] : memref<512x128xf32, #tpu.memory_space<vmem>>, vector<512x128xf32>
    tpu.vector_store %arg3[%c0_11, %c0_12], %25 {strides = array<i32>} : memref<512x128xf32, #tpu.memory_space<vmem>>, vector<512x128xf32>,
    return
  }
}

module attributes {stable_mosaic.version = 11 : i64} {
  func.func @_fused_layer_kernel(%arg0: memref<2048x128xbf16, #tpu.memory_space<vmem>>, %arg1: memref<128x128xbf16, #tpu.memory_space<vmem>>, %arg2: memref<1x128xf32, #tpu.memory_space<vmem>>, %arg3: memref<2048x128xf32, #tpu.memory_space<vmem>>) attributes {dimension_semantics = [], scalar_prefetch = 0 : i64, scratch_operands = 0 : i64, tpu.core_type = #tpu.core_type<tc>} {
    %c0 = arith.constant 0 : index
    %c0_0 = arith.constant 0 : index
    %0 = vector.load %arg0[%c0, %c0_0] : memref<2048x128xbf16, #tpu.memory_space<vmem>>, vector<2048x128xbf16>
    %c0_1 = arith.constant 0 : index
    %c0_2 = arith.constant 0 : index
    %1 = vector.load %arg1[%c0_1, %c0_2] : memref<128x128xbf16, #tpu.memory_space<vmem>>, vector<128x128xbf16>
    %cst = arith.constant dense<0.000000e+00> : vector<2048x128xf32>
    %2 = tpu.matmul %0, %1, %cst {dimension_numbers = #tpu.dot_dimension_numbers<[1], [0], [0], [1], [0, 0, 1, 1], [], []>} : vector<2048x128xbf16>, vector<128x128xbf16>, vector<2048x128xf32> -> vector<2048x128xf32>
    %c0_3 = arith.constant 0 : index
    %c0_4 = arith.constant 0 : index
    %3 = vector.load %arg2[%c0_3, %c0_4] : memref<1x128xf32, #tpu.memory_space<vmem>>, vector<1x128xf32>
    %4 = vector.broadcast %3 : vector<1x128xf32> to vector<2048x128xf32>
    %5 = arith.addf %2, %4 : vector<2048x128xf32>
    %6 = math.tanh %5 : vector<2048x128xf32>
    %c0_5 = arith.constant 0 : index
    %c0_6 = arith.constant 0 : index
    %7 = vector.load %arg3[%c0_5, %c0_6] : memref<2048x128xf32, #tpu.memory_space<vmem>>, vector<2048x128xf32>
    tpu.vector_store %arg3[%c0_5, %c0_6], %6 {strides = array<i32>} : memref<2048x128xf32, #tpu.memory_space<vmem>>, vector<2048x128xf32>,
    return
  }
}

</mosaic_0001>

<llo_original>
// kernel: generator_forward.10
$region0: #{generator_forward.10}
  #allocation0 [shape = 'u32[]', space=smem, size = 0x4, offset = 0x4, fixed_abs, tag = 'smem constant byte address 0x4 - core index']
  #allocation1 [shape = 'u32[144,128]{1,0:T(1,128)}', space=vmem, size = 0x12000, scoped, tag = 'internal scratch']
  %s0 = inlined_call_operand.vmem [shape: bf16[512,16], index: 0, kind: input, shape index: {}]
  %s1 = inlined_call_operand.vmem [shape: bf16[16,128], index: 1, kind: input, shape index: {}]
  %s2 = inlined_call_operand.vmem [shape: f32[1,128], index: 2, kind: input, shape index: {}]
  %s3 = inlined_call_operand.vmem [shape: f32[512,128], index: 3, kind: output, shape index: {}]
  %s4 = sld [smem:[#allocation0]]
  $region22: #{generator_forward.10} parent=0
    _
  %s6 = ssub.s32 1, %s4
  %s7 = scalar_select 0, %s6, %s4
  // Predicated region
  $region2: #{generator_forward.10} parent=0 // pred_check
    _
  $region3: #{generator_forward.10} parent=0 // pred_check_branch
    %9 = sbr.rel (0) target = $region5
  $region4: #{generator_forward.10} parent=0 // pred_region
    _
  $region5: #{generator_forward.10} parent=0 // pred_fallthru
    _
  // Predicated region
  $region6: #{generator_forward.10} parent=0 // pred_check
    _
  $region7: #{generator_forward.10} parent=0 // pred_check_branch
    %11 = sbr.rel (0) target = $region9
  $region8: #{generator_forward.10} parent=0 // pred_region
    _
  $region9: #{generator_forward.10} parent=0 // pred_fallthru
    _
  // Predicated region
  $region10: #{generator_forward.10} parent=0 // pred_check
    _
  $region11: #{generator_forward.10} parent=0 // pred_check_branch
    %13 = sbr.rel (0) target = $region13
  $region12: #{generator_forward.10} parent=0 // pred_region
    _
  $region13: #{generator_forward.10} parent=0 // pred_fallthru
    _
  %v15 = vld [vmem:[%s0] sm:$0xf]
  %v16 = vld [vmem:[%s0 + $0x4] sm:$0xf]
  %v17 = vld [vmem:[%s0 + $0x8] sm:$0xf]
  %v18 = vld [vmem:[%s0 + $0xc] sm:$0xf]
  %v19 = vld [vmem:[%s0 + $0x10] sm:$0xf]
  %v20 = vld [vmem:[%s0 + $0x14] sm:$0xf]
  %v21 = vld [vmem:[%s0 + $0x18] sm:$0xf]
  %v22 = vld [vmem:[%s0 + $0x1c] sm:$0xf]
  %v23 = vld [vmem:[%s0 + $0x20] sm:$0xf]
  %v24 = vld [vmem:[%s0 + $0x24] sm:$0xf]
  %v25 = vld [vmem:[%s0 + $0x28] sm:$0xf]
  %v26 = vld [vmem:[%s0 + $0x2c] sm:$0xf]
  %v27 = vld [vmem:[%s0 + $0x30] sm:$0xf]
  %v28 = vld [vmem:[%s0 + $0x34] sm:$0xf]
  %v29 = vld [vmem:[%s0 + $0x38] sm:$0xf]
  %v30 = vld [vmem:[%s0 + $0x3c] sm:$0xf]
  %v31 = vld [vmem:[%s0 + $0x40] sm:$0xf]
  %v32 = vld [vmem:[%s0 + $0x44] sm:$0xf]
  %v33 = vld [vmem:[%s0 + $0x48] sm:$0xf]
  %v34 = vld [vmem:[%s0 + $0x4c] sm:$0xf]
  %v35 = vld [vmem:[%s0 + $0x50] sm:$0xf]
  %v36 = vld [vmem:[%s0 + $0x54] sm:$0xf]
  %v37 = vld [vmem:[%s0 + $0x58] sm:$0xf]
  %v38 = vld [vmem:[%s0 + $0x5c] sm:$0xf]
  %v39 = vld [vmem:[%s0 + $0x60] sm:$0xf]
  %v40 = vld [vmem:[%s0 + $0x64] sm:$0xf]
  %v41 = vld [vmem:[%s0 + $0x68] sm:$0xf]
  %v42 = vld [vmem:[%s0 + $0x6c] sm:$0xf]
  %v43 = vld [vmem:[%s0 + $0x70] sm:$0xf]
  %v44 = vld [vmem:[%s0 + $0x74] sm:$0xf]
  %v45 = vld [vmem:[%s0 + $0x78] sm:$0xf]
  %v46 = vld [vmem:[%s0 + $0x7c] sm:$0xf]
  %v47 = vld [vmem:[%s0 + $0x80] sm:$0xf]
  %v48 = vld [vmem:[%s0 + $0x84] sm:$0xf]
  %v49 = vld [vmem:[%s0 + $0x88] sm:$0xf]
  %v50 = vld [vmem:[%s0 + $0x8c] sm:$0xf]
  %v51 = vld [vmem:[%s0 + $0x90] sm:$0xf]
  %v52 = vld [vmem:[%s0 + $0x94] sm:$0xf]
  %v53 = vld [vmem:[%s0 + $0x98] sm:$0xf]
  %v54 = vld [vmem:[%s0 + $0x9c] sm:$0xf]
  %v55 = vld [vmem:[%s0 + $0xa0] sm:$0xf]
  %v56 = vld [vmem:[%s0 + $0xa4] sm:$0xf]
  %v57 = vld [vmem:[%s0 + $0xa8] sm:$0xf]
  %v58 = vld [vmem:[%s0 + $0xac] sm:$0xf]
  %v59 = vld [vmem:[%s0 + $0xb0] sm:$0xf]
  %v60 = vld [vmem:[%s0 + $0xb4] sm:$0xf]
  %v61 = vld [vmem:[%s0 + $0xb8] sm:$0xf]
  %v62 = vld [vmem:[%s0 + $0xbc] sm:$0xf]
  %v63 = vld [vmem:[%s0 + $0xc0] sm:$0xf]
  %v64 = vld [vmem:[%s0 + $0xc4] sm:$0xf]
  %v65 = vld [vmem:[%s0 + $0xc8] sm:$0xf]
  %v66 = vld [vmem:[%s0 + $0xcc] sm:$0xf]
  %v67 = vld [vmem:[%s0 + $0xd0] sm:$0xf]
  %v68 = vld [vmem:[%s0 + $0xd4] sm:$0xf]
  %v69 = vld [vmem:[%s0 + $0xd8] sm:$0xf]
  %v70 = vld [vmem:[%s0 + $0xdc] sm:$0xf]
  %v71 = vld [vmem:[%s0 + $0xe0] sm:$0xf]
  %v72 = vld [vmem:[%s0 + $0xe4] sm:$0xf]
  %v73 = vld [vmem:[%s0 + $0xe8] sm:$0xf]
  %v74 = vld [vmem:[%s0 + $0xec] sm:$0xf]
  %v75 = vld [vmem:[%s0 + $0xf0] sm:$0xf]
  %v76 = vld [vmem:[%s0 + $0xf4] sm:$0xf]
  %v77 = vld [vmem:[%s0 + $0xf8] sm:$0xf]
  %v78 = vld [vmem:[%s0 + $0xfc] sm:$0xf]
  %v79 = vld [vmem:[%s1] sm:$0xf]
  %v80 = vld [vmem:[%s1 + $0x4] sm:$0xf]
  %v81 = vld [vmem:[%s2] sm:$0x1]
  %v83 = vlaneseq
  %v84 = vshrl.u32 %v83, 7
  %v85 = vsub.s32 0, %v84
  %v86 = vrot.slane %v81, %v85
  %v152 = vunpack.c.l.b16 %v15
  %v153 = vunpack.c.l.b16 %v16
  %v154 = vunpack.c.l.b16 %v17
  %v155 = vunpack.c.l.b16 %v18
  %v156 = vunpack.c.l.b16 %v19
  %v157 = vunpack.c.l.b16 %v20
  %v158 = vunpack.c.l.b16 %v21
  %v159 = vunpack.c.l.b16 %v22
  %v160 = vunpack.c.l.b16 %v23
  %v161 = vunpack.c.l.b16 %v24
  %v162 = vunpack.c.l.b16 %v25
  %v163 = vunpack.c.l.b16 %v26
  %v164 = vunpack.c.l.b16 %v27
  %v165 = vunpack.c.l.b16 %v28
  %v166 = vunpack.c.l.b16 %v29
  %v167 = vunpack.c.l.b16 %v30
  %v168 = vunpack.c.l.b16 %v31
  %v169 = vunpack.c.l.b16 %v32
  %v170 = vunpack.c.l.b16 %v33
  %v171 = vunpack.c.l.b16 %v34
  %v172 = vunpack.c.l.b16 %v35
  %v173 = vunpack.c.l.b16 %v36
  %v174 = vunpack.c.l.b16 %v37
  %v175 = vunpack.c.l.b16 %v38
  %v176 = vunpack.c.l.b16 %v39
  %v177 = vunpack.c.l.b16 %v40
  %v178 = vunpack.c.l.b16 %v41
  %v179 = vunpack.c.l.b16 %v42
  %v180 = vunpack.c.l.b16 %v43
  %v181 = vunpack.c.l.b16 %v44
  %v182 = vunpack.c.l.b16 %v45
  %v183 = vunpack.c.l.b16 %v46
  %v184 = vunpack.c.l.b16 %v47
  %v185 = vunpack.c.l.b16 %v48
  %v186 = vunpack.c.l.b16 %v49
  %v187 = vunpack.c.l.b16 %v50
  %v188 = vunpack.c.l.b16 %v51
  %v189 = vunpack.c.l.b16 %v52
  %v190 = vunpack.c.l.b16 %v53
  %v191 = vunpack.c.l.b16 %v54
  %v192 = vunpack.c.l.b16 %v55
  %v193 = vunpack.c.l.b16 %v56
  %v194 = vunpack.c.l.b16 %v57
  %v195 = vunpack.c.l.b16 %v58
  %v196 = vunpack.c.l.b16 %v59
  %v197 = vunpack.c.l.b16 %v60
  %v198 = vunpack.c.l.b16 %v61
  %v199 = vunpack.c.l.b16 %v62
  %v200 = vunpack.c.l.b16 %v63
  %v201 = vunpack.c.l.b16 %v64
  %v202 = vunpack.c.l.b16 %v65
  %v203 = vunpack.c.l.b16 %v66
  %v204 = vunpack.c.l.b16 %v67
  %v205 = vunpack.c.l.b16 %v68
  %v206 = vunpack.c.l.b16 %v69
  %v207 = vunpack.c.l.b16 %v70
  %v208 = vunpack.c.l.b16 %v71
  %v209 = vunpack.c.l.b16 %v72
  %v210 = vunpack.c.l.b16 %v73
  %v211 = vunpack.c.l.b16 %v74
  %v212 = vunpack.c.l.b16 %v75
  %v213 = vunpack.c.l.b16 %v76
  %v214 = vunpack.c.l.b16 %v77
  %v215 = vunpack.c.l.b16 %v78
  %v216 = vpack.c.b16 %v153, %v152
  %v217 = vpack.c.b16 %v155, %v154
  %v218 = vpack.c.b16 %v157, %v156
  %v219 = vpack.c.b16 %v159, %v158
  %v220 = vpack.c.b16 %v161, %v160
  %v221 = vpack.c.b16 %v163, %v162
  %v222 = vpack.c.b16 %v165, %v164
  %v223 = vpack.c.b16 %v167, %v166
  %v224 = vpack.c.b16 %v169, %v168
  %v225 = vpack.c.b16 %v171, %v170
  %v226 = vpack.c.b16 %v173, %v172
  %v227 = vpack.c.b16 %v175, %v174
  %v228 = vpack.c.b16 %v177, %v176
  %v229 = vpack.c.b16 %v179, %v178
  %v230 = vpack.c.b16 %v181, %v180
  %v231 = vpack.c.b16 %v183, %v182
  %v232 = vpack.c.b16 %v185, %v184
  %v233 = vpack.c.b16 %v187, %v186
  %v234 = vpack.c.b16 %v189, %v188
  %v235 = vpack.c.b16 %v191, %v190
  %v236 = vpack.c.b16 %v193, %v192
  %v237 = vpack.c.b16 %v195, %v194
  %v238 = vpack.c.b16 %v197, %v196
  %v239 = vpack.c.b16 %v199, %v198
  %v240 = vpack.c.b16 %v201, %v200
  %v241 = vpack.c.b16 %v203, %v202
  %v242 = vpack.c.b16 %v205, %v204
  %v243 = vpack.c.b16 %v207, %v206
  %v244 = vpack.c.b16 %v209, %v208
  %v245 = vpack.c.b16 %v211, %v210
  %v246 = vpack.c.b16 %v213, %v212
  %v247 = vpack.c.b16 %v215, %v214
  %v250 = vunpack.c.l.b16 %v79
  %v251 = vunpack.c.l.b16 %v80
  %v252 = vpack.c.b16 %v251, %v250
  %vm254 = vcmask 130048
  %v256 = vsel %vm254, %v216, 0
  %v259 = vsel %vm254, %v217, 0
  %v262 = vsel %vm254, %v218, 0
  %v265 = vsel %vm254, %v219, 0
  %v268 = vsel %vm254, %v220, 0
  %v271 = vsel %vm254, %v221, 0
  %v274 = vsel %vm254, %v222, 0
  %v277 = vsel %vm254, %v223, 0
  %v280 = vsel %vm254, %v224, 0
  %v283 = vsel %vm254, %v225, 0
  %v286 = vsel %vm254, %v226, 0
  %v289 = vsel %vm254, %v227, 0
  %v292 = vsel %vm254, %v228, 0
  %v295 = vsel %vm254, %v229, 0
  %v298 = vsel %vm254, %v230, 0
  %v301 = vsel %vm254, %v231, 0
  %v304 = vsel %vm254, %v232, 0
  %v307 = vsel %vm254, %v233, 0
  %v310 = vsel %vm254, %v234, 0
  %v313 = vsel %vm254, %v235, 0
  %v316 = vsel %vm254, %v236, 0
  %v319 = vsel %vm254, %v237, 0
  %v322 = vsel %vm254, %v238, 0
  %v325 = vsel %vm254, %v239, 0
  %v328 = vsel %vm254, %v240, 0
  %v331 = vsel %vm254, %v241, 0
  %v334 = vsel %vm254, %v242, 0
  %v337 = vsel %vm254, %v243, 0
  %v340 = vsel %vm254, %v244, 0
  %v343 = vsel %vm254, %v245, 0
  %v346 = vsel %vm254, %v246, 0
  %v349 = vsel %vm254, %v247, 0
  %351 = vmatprep.subr.bf16.mxu0 0
  %352 = vmatpush1.bf16.msra.mxu0 %v252
  %353 = vmatprep.subr.bf16.mxu0 0
  %354 = vmatpush1.bf16.msra.mxu0 0
  %355 = vmatprep.subr.bf16.mxu0 0
  %356 = vmatpush1.bf16.msra.mxu0 0
  %357 = vmatprep.subr.bf16.mxu0 0
  %358 = vmatpush1.bf16.msra.mxu0 0
  %359 = vmatprep.subr.bf16.mxu0 0
  %360 = vmatpush1.bf16.msra.mxu0 0
  %361 = vmatprep.subr.bf16.mxu0 0
  %362 = vmatpush1.bf16.msra.mxu0 0
  %363 = vmatprep.subr.bf16.mxu0 0
  %364 = vmatpush1.bf16.msra.mxu0 0
  %365 = vmatprep.subr.bf16.mxu0 0
  %366 = vmatpush1.bf16.msra.mxu0 0
  %367 = vmatprep.subr.bf16.mxu0 0
  %368 = vmatpush1.bf16.msra.mxu0 0
  %369 = vmatprep.subr.bf16.mxu0 0
  %370 = vmatpush1.bf16.msra.mxu0 0
  %371 = vmatprep.subr.bf16.mxu0 0
  %372 = vmatpush1.bf16.msra.mxu0 0
  %373 = vmatprep.subr.bf16.mxu0 0
  %374 = vmatpush1.bf16.msra.mxu0 0
  %375 = vmatprep.subr.bf16.mxu0 0
  %376 = vmatpush1.bf16.msra.mxu0 0
  %377 = vmatprep.subr.bf16.mxu0 0
  %378 = vmatpush1.bf16.msra.mxu0 0
  %379 = vmatprep.subr.bf16.mxu0 0
  %380 = vmatpush1.bf16.msra.mxu0 0
  %381 = vmatprep.subr.bf16.mxu0 0
  %382 = vmatpush1.bf16.msra.mxu0 0
  %383 = vmatprep.mubr.bf16.mxu0 0
  %384 = vmatmul.mubr.bf16.gmra.mrb[0].mxu0 %v256
  %v385 = vpop.f32.mrb[0].mxu0
  %v386 = vadd.f32 %v86, %v385
  %v387 = vpop.f32.mrb[0].mxu0
  %v388 = vpop.f32.mrb[0].mxu0
  %v389 = vadd.f32 %v86, %v388
  %v390 = vpop.f32.mrb[0].mxu0
  %391 = vmatprep.mubr.bf16.mxu0 0
  %392 = vmatmul.mubr.bf16.gmra.mrb[0].mxu0 %v259
  %v393 = vpop.f32.mrb[0].mxu0
  %v394 = vadd.f32 %v86, %v393
  %v395 = vpop.f32.mrb[0].mxu0
  %v396 = vpop.f32.mrb[0].mxu0
  %v397 = vadd.f32 %v86, %v396
  %v398 = vpop.f32.mrb[0].mxu0
  %399 = vmatprep.mubr.bf16.mxu0 0
  %400 = vmatmul.mubr.bf16.gmra.mrb[0].mxu0 %v262
  %v401 = vpop.f32.mrb[0].mxu0
  %v402 = vadd.f32 %v86, %v401
  %v403 = vpop.f32.mrb[0].mxu0
  %v404 = vpop.f32.mrb[0].mxu0
  %v405 = vadd.f32 %v86, %v404
  %v406 = vpop.f32.mrb[0].mxu0
  %407 = vmatprep.mubr.bf16.mxu0 0
  %408 = vmatmul.mubr.bf16.gmra.mrb[0].mxu0 %v265
  %v409 = vpop.f32.mrb[0].mxu0
  %v410 = vadd.f32 %v86, %v409
  %v411 = vpop.f32.mrb[0].mxu0
  %v412 = vpop.f32.mrb[0].mxu0
  %v413 = vadd.f32 %v86, %v412
  %v414 = vpop.f32.mrb[0].mxu0
  %415 = vmatprep.mubr.bf16.mxu0 0
  %416 = vmatmul.mubr.bf16.gmra.mrb[0].mxu0 %v268
  %v417 = vpop.f32.mrb[0].mxu0
  %v418 = vadd.f32 %v86, %v417
  %v419 = vpop.f32.mrb[0].mxu0
  %v420 = vpop.f32.mrb[0].mxu0
  %v421 = vadd.f32 %v86, %v420
  %v422 = vpop.f32.mrb[0].mxu0
  %423 = vmatprep.mubr.bf16.mxu0 0
  %424 = vmatmul.mubr.bf16.gmra.mrb[0].mxu0 %v271
  %v425 = vpop.f32.mrb[0].mxu0
  %v426 = vadd.f32 %v86, %v425
  %v427 = vpop.f32.mrb[0].mxu0
  %v428 = vpop.f32.mrb[0].mxu0
  %v429 = vadd.f32 %v86, %v428
  %v430 = vpop.f32.mrb[0].mxu0
  %431 = vmatprep.mubr.bf16.mxu0 0
  %432 = vmatmul.mubr.bf16.gmra.mrb[0].mxu0 %v274
  %v433 = vpop.f32.mrb[0].mxu0
  %v434 = vadd.f32 %v86, %v433
  %v435 = vpop.f32.mrb[0].mxu0
  %v436 = vpop.f32.mrb[0].mxu0
  %v437 = vadd.f32 %v86, %v436
  %v438 = vpop.f32.mrb[0].mxu0
  %439 = vmatprep.mubr.bf16.mxu0 0
  %440 = vmatmul.mubr.bf16.gmra.mrb[0].mxu0 %v277
  %v441 = vpop.f32.mrb[0].mxu0
  %v442 = vadd.f32 %v86, %v441
  %v443 = vpop.f32.mrb[0].mxu0
  %v444 = vpop.f32.mrb[0].mxu0
  %v445 = vadd.f32 %v86, %v444
  %v446 = vpop.f32.mrb[0].mxu0
  %447 = vmatprep.mubr.bf16.mxu0 0
  %448 = vmatmul.mubr.bf16.gmra.mrb[0].mxu0 %v280
  %v449 = vpop.f32.mrb[0].mxu0
  %v450 = vadd.f32 %v86, %v449
  %v451 = vpop.f32.mrb[0].mxu0
  %v452 = vpop.f32.mrb[0].mxu0
  %v453 = vadd.f32 %v86, %v452
  %v454 = vpop.f32.mrb[0].mxu0
  %455 = vmatprep.mubr.bf16.mxu0 0
  %456 = vmatmul.mubr.bf16.gmra.mrb[0].mxu0 %v283
  %v457 = vpop.f32.mrb[0].mxu0
  %v458 = vadd.f32 %v86, %v457
  %v459 = vpop.f32.mrb[0].mxu0
  %v460 = vpop.f32.mrb[0].mxu0
  %v461 = vadd.f32 %v86, %v460
  %v462 = vpop.f32.mrb[0].mxu0
  %463 = vmatprep.mubr.bf16.mxu0 0
  %464 = vmatmul.mubr.bf16.gmra.mrb[0].mxu0 %v286
  %v465 = vpop.f32.mrb[0].mxu0
  %v466 = vadd.f32 %v86, %v465
  %v467 = vpop.f32.mrb[0].mxu0
  %v468 = vpop.f32.mrb[0].mxu0
  %v469 = vadd.f32 %v86, %v468
  %v470 = vpop.f32.mrb[0].mxu0
  %471 = vmatprep.mubr.bf16.mxu0 0
  %472 = vmatmul.mubr.bf16.gmra.mrb[0].mxu0 %v289
  %v473 = vpop.f32.mrb[0].mxu0
  %v474 = vadd.f32 %v86, %v473
  %v475 = vpop.f32.mrb[0].mxu0
  %v476 = vpop.f32.mrb[0].mxu0
  %v477 = vadd.f32 %v86, %v476
  %v478 = vpop.f32.mrb[0].mxu0
  %479 = vmatprep.mubr.bf16.mxu0 0
  %480 = vmatmul.mubr.bf16.gmra.mrb[0].mxu0 %v292
  %v481 = vpop.f32.mrb[0].mxu0
  %v482 = vadd.f32 %v86, %v481
  %v483 = vpop.f32.mrb[0].mxu0
  %v484 = vpop.f32.mrb[0].mxu0
  %v485 = vadd.f32 %v86, %v484
  %v486 = vpop.f32.mrb[0].mxu0
  %487 = vmatprep.mubr.bf16.mxu0 0
  %488 = vmatmul.mubr.bf16.gmra.mrb[0].mxu0 %v295
  %v489 = vpop.f32.mrb[0].mxu0
  %v490 = vadd.f32 %v86, %v489
  %v491 = vpop.f32.mrb[0].mxu0
  %v492 = vpop.f32.mrb[0].mxu0
  %v493 = vadd.f32 %v86, %v492
  %v494 = vpop.f32.mrb[0].mxu0
  %495 = vmatprep.mubr.bf16.mxu0 0
  %496 = vmatmul.mubr.bf16.gmra.mrb[0].mxu0 %v298
  %v497 = vpop.f32.mrb[0].mxu0
  %v498 = vadd.f32 %v86, %v497
  %v499 = vpop.f32.mrb[0].mxu0
  %v500 = vpop.f32.mrb[0].mxu0
  %v501 = vadd.f32 %v86, %v500
  %v502 = vpop.f32.mrb[0].mxu0
  %503 = vmatprep.mubr.bf16.mxu0 0
  %504 = vmatmul.mubr.bf16.gmra.mrb[0].mxu0 %v301
  %v505 = vpop.f32.mrb[0].mxu0
  %v506 = vadd.f32 %v86, %v505
  %v507 = vpop.f32.mrb[0].mxu0
  %v508 = vpop.f32.mrb[0].mxu0
  %v509 = vadd.f32 %v86, %v508
  %v510 = vpop.f32.mrb[0].mxu0
  %511 = vmatprep.mubr.bf16.mxu0 0
  %512 = vmatmul.mubr.bf16.gmra.mrb[0].mxu0 %v304
  %v513 = vpop.f32.mrb[0].mxu0
  %v514 = vadd.f32 %v86, %v513
  %v515 = vpop.f32.mrb[0].mxu0
  %v516 = vpop.f32.mrb[0].mxu0
  %v517 = vadd.f32 %v86, %v516
  %v518 = vpop.f32.mrb[0].mxu0
  %519 = vmatprep.mubr.bf16.mxu0 0
  %520 = vmatmul.mubr.bf16.gmra.mrb[0].mxu0 %v307
  %v521 = vpop.f32.mrb[0].mxu0
  %v522 = vadd.f32 %v86, %v521
  %v523 = vpop.f32.mrb[0].mxu0
  %v524 = vpop.f32.mrb[0].mxu0
  %v525 = vadd.f32 %v86, %v524
  %v526 = vpop.f32.mrb[0].mxu0
  %527 = vmatprep.mubr.bf16.mxu0 0
  %528 = vmatmul.mubr.bf16.gmra.mrb[0].mxu0 %v310
  %v529 = vpop.f32.mrb[0].mxu0
  %v530 = vadd.f32 %v86, %v529
  %v531 = vpop.f32.mrb[0].mxu0
  %v532 = vpop.f32.mrb[0].mxu0
  %v533 = vadd.f32 %v86, %v532
  %v534 = vpop.f32.mrb[0].mxu0
  %535 = vmatprep.mubr.bf16.mxu0 0
  %536 = vmatmul.mubr.bf16.gmra.mrb[0].mxu0 %v313
  %v537 = vpop.f32.mrb[0].mxu0
  %v538 = vadd.f32 %v86, %v537
  %v539 = vpop.f32.mrb[0].mxu0
  %v540 = vpop.f32.mrb[0].mxu0
  %v541 = vadd.f32 %v86, %v540
  %v542 = vpop.f32.mrb[0].mxu0
  %543 = vmatprep.mubr.bf16.mxu0 0
  %544 = vmatmul.mubr.bf16.gmra.mrb[0].mxu0 %v316
  %v545 = vpop.f32.mrb[0].mxu0
  %v546 = vadd.f32 %v86, %v545
  %v547 = vpop.f32.mrb[0].mxu0
  %v548 = vpop.f32.mrb[0].mxu0
  %v549 = vadd.f32 %v86, %v548
  %v550 = vpop.f32.mrb[0].mxu0
  %551 = vmatprep.mubr.bf16.mxu0 0
  %552 = vmatmul.mubr.bf16.gmra.mrb[0].mxu0 %v319
  %v553 = vpop.f32.mrb[0].mxu0
  %v554 = vadd.f32 %v86, %v553
  %v555 = vpop.f32.mrb[0].mxu0
  %v556 = vpop.f32.mrb[0].mxu0
  %v557 = vadd.f32 %v86, %v556
  %v558 = vpop.f32.mrb[0].mxu0
  %559 = vmatprep.mubr.bf16.mxu0 0
  %560 = vmatmul.mubr.bf16.gmra.mrb[0].mxu0 %v322
  %v561 = vpop.f32.mrb[0].mxu0
  %v562 = vadd.f32 %v86, %v561
  %v563 = vpop.f32.mrb[0].mxu0
  %v564 = vpop.f32.mrb[0].mxu0
  %v565 = vadd.f32 %v86, %v564
  %v566 = vpop.f32.mrb[0].mxu0
  %567 = vmatprep.mubr.bf16.mxu0 0
  %568 = vmatmul.mubr.bf16.gmra.mrb[0].mxu0 %v325
  %v569 = vpop.f32.mrb[0].mxu0
  %v570 = vadd.f32 %v86, %v569
  %v571 = vpop.f32.mrb[0].mxu0
  %v572 = vpop.f32.mrb[0].mxu0
  %v573 = vadd.f32 %v86, %v572
  %v574 = vpop.f32.mrb[0].mxu0
  %575 = vmatprep.mubr.bf16.mxu0 0
  %576 = vmatmul.mubr.bf16.gmra.mrb[0].mxu0 %v328
  %v577 = vpop.f32.mrb[0].mxu0
  %v578 = vadd.f32 %v86, %v577
  %v579 = vpop.f32.mrb[0].mxu0
  %v580 = vpop.f32.mrb[0].mxu0
  %v581 = vadd.f32 %v86, %v580
  %v582 = vpop.f32.mrb[0].mxu0
  %583 = vmatprep.mubr.bf16.mxu0 0
  %584 = vmatmul.mubr.bf16.gmra.mrb[0].mxu0 %v331
  %v585 = vpop.f32.mrb[0].mxu0
  %v586 = vadd.f32 %v86, %v585
  %v587 = vpop.f32.mrb[0].mxu0
  %v588 = vpop.f32.mrb[0].mxu0
  %v589 = vadd.f32 %v86, %v588
  %v590 = vpop.f32.mrb[0].mxu0
  %591 = vmatprep.mubr.bf16.mxu0 0
  %592 = vmatmul.mubr.bf16.gmra.mrb[0].mxu0 %v334
  %v593 = vpop.f32.mrb[0].mxu0
  %v594 = vadd.f32 %v86, %v593
  %v595 = vpop.f32.mrb[0].mxu0
  %v596 = vpop.f32.mrb[0].mxu0
  %v597 = vadd.f32 %v86, %v596
  %v598 = vpop.f32.mrb[0].mxu0
  %599 = vmatprep.mubr.bf16.mxu0 0
  %600 = vmatmul.mubr.bf16.gmra.mrb[0].mxu0 %v337
  %v601 = vpop.f32.mrb[0].mxu0
  %v602 = vadd.f32 %v86, %v601
  %v603 = vpop.f32.mrb[0].mxu0
  %v604 = vpop.f32.mrb[0].mxu0
  %v605 = vadd.f32 %v86, %v604
  %v606 = vpop.f32.mrb[0].mxu0
  %607 = vmatprep.mubr.bf16.mxu0 0
  %608 = vmatmul.mubr.bf16.gmra.mrb[0].mxu0 %v340
  %v609 = vpop.f32.mrb[0].mxu0
  %v610 = vadd.f32 %v86, %v609
  %v611 = vpop.f32.mrb[0].mxu0
  %v612 = vpop.f32.mrb[0].mxu0
  %v613 = vadd.f32 %v86, %v612
  %v614 = vpop.f32.mrb[0].mxu0
  %615 = vmatprep.mubr.bf16.mxu0 0
  %616 = vmatmul.mubr.bf16.gmra.mrb[0].mxu0 %v343
  %v617 = vpop.f32.mrb[0].mxu0
  %v618 = vadd.f32 %v86, %v617
  %v619 = vpop.f32.mrb[0].mxu0
  %v620 = vpop.f32.mrb[0].mxu0
  %v621 = vadd.f32 %v86, %v620
  %v622 = vpop.f32.mrb[0].mxu0
  %623 = vmatprep.mubr.bf16.mxu0 0
  %624 = vmatmul.mubr.bf16.gmra.mrb[0].mxu0 %v346
  %v625 = vpop.f32.mrb[0].mxu0
  %v626 = vadd.f32 %v86, %v625
  %v627 = vpop.f32.mrb[0].mxu0
  %v628 = vpop.f32.mrb[0].mxu0
  %v629 = vadd.f32 %v86, %v628
  %v630 = vpop.f32.mrb[0].mxu0
  %631 = vmatprep.mubr.bf16.mxu0 0
  %632 = vmatmul.mubr.bf16.gmra.mrb[0].mxu0 %v349
  %v633 = vpop.f32.mrb[0].mxu0
  %v634 = vadd.f32 %v86, %v633
  %v635 = vpop.f32.mrb[0].mxu0
  %v636 = vpop.f32.mrb[0].mxu0
  %v637 = vadd.f32 %v86, %v636
  %v638 = vpop.f32.mrb[0].mxu0
  %639 = vdwg.mxu0
  %vm640 = vcmp.ge.f32.partialorder %v386, 0.0
  %vm641 = vcmp.ge.f32.partialorder %v389, 0.0
  %vm642 = vcmp.ge.f32.partialorder %v394, 0.0
  %vm643 = vcmp.ge.f32.partialorder %v397, 0.0
  %vm644 = vcmp.ge.f32.partialorder %v402, 0.0
  %vm645 = vcmp.ge.f32.partialorder %v405, 0.0
  %vm646 = vcmp.ge.f32.partialorder %v410, 0.0
  %vm647 = vcmp.ge.f32.partialorder %v413, 0.0
  %vm648 = vcmp.ge.f32.partialorder %v418, 0.0
  %vm649 = vcmp.ge.f32.partialorder %v421, 0.0
  %vm650 = vcmp.ge.f32.partialorder %v426, 0.0
  %vm651 = vcmp.ge.f32.partialorder %v429, 0.0
  %vm652 = vcmp.ge.f32.partialorder %v434, 0.0
  %vm653 = vcmp.ge.f32.partialorder %v437, 0.0
  %vm654 = vcmp.ge.f32.partialorder %v442, 0.0
  %vm655 = vcmp.ge.f32.partialorder %v445, 0.0
  %vm656 = vcmp.ge.f32.partialorder %v450, 0.0
  %vm657 = vcmp.ge.f32.partialorder %v453, 0.0
  %vm658 = vcmp.ge.f32.partialorder %v458, 0.0
  %vm659 = vcmp.ge.f32.partialorder %v461, 0.0
  %vm660 = vcmp.ge.f32.partialorder %v466, 0.0
  %vm661 = vcmp.ge.f32.partialorder %v469, 0.0
  %vm662 = vcmp.ge.f32.partialorder %v474, 0.0
  %vm663 = vcmp.ge.f32.partialorder %v477, 0.0
  %vm664 = vcmp.ge.f32.partialorder %v482, 0.0
  %vm665 = vcmp.ge.f32.partialorder %v485, 0.0
  %vm666 = vcmp.ge.f32.partialorder %v490, 0.0
  %vm667 = vcmp.ge.f32.partialorder %v493, 0.0
  %vm668 = vcmp.ge.f32.partialorder %v498, 0.0
  %vm669 = vcmp.ge.f32.partialorder %v501, 0.0
  %vm670 = vcmp.ge.f32.partialorder %v506, 0.0
  %vm671 = vcmp.ge.f32.partialorder %v509, 0.0
  %vm672 = vcmp.ge.f32.partialorder %v514, 0.0
  %vm673 = vcmp.ge.f32.partialorder %v517, 0.0
  %vm674 = vcmp.ge.f32.partialorder %v522, 0.0
  %vm675 = vcmp.ge.f32.partialorder %v525, 0.0
  %vm676 = vcmp.ge.f32.partialorder %v530, 0.0
  %vm677 = vcmp.ge.f32.partialorder %v533, 0.0
  %vm678 = vcmp.ge.f32.partialorder %v538, 0.0
  %vm679 = vcmp.ge.f32.partialorder %v541, 0.0
  %vm680 = vcmp.ge.f32.partialorder %v546, 0.0
  %vm681 = vcmp.ge.f32.partialorder %v549, 0.0
  %vm682 = vcmp.ge.f32.partialorder %v554, 0.0
  %vm683 = vcmp.ge.f32.partialorder %v557, 0.0
  %vm684 = vcmp.ge.f32.partialorder %v562, 0.0
  %vm685 = vcmp.ge.f32.partialorder %v565, 0.0
  %vm686 = vcmp.ge.f32.partialorder %v570, 0.0
  %vm687 = vcmp.ge.f32.partialorder %v573, 0.0
  %vm688 = vcmp.ge.f32.partialorder %v578, 0.0
  %vm689 = vcmp.ge.f32.partialorder %v581, 0.0
  %vm690 = vcmp.ge.f32.partialorder %v586, 0.0
  %vm691 = vcmp.ge.f32.partialorder %v589, 0.0
  %vm692 = vcmp.ge.f32.partialorder %v594, 0.0
  %vm693 = vcmp.ge.f32.partialorder %v597, 0.0
  %vm694 = vcmp.ge.f32.partialorder %v602, 0.0
  %vm695 = vcmp.ge.f32.partialorder %v605, 0.0
  %vm696 = vcmp.ge.f32.partialorder %v610, 0.0
  %vm697 = vcmp.ge.f32.partialorder %v613, 0.0
  %vm698 = vcmp.ge.f32.partialorder %v618, 0.0
  %vm699 = vcmp.ge.f32.partialorder %v621, 0.0
  %vm700 = vcmp.ge.f32.partialorder %v626, 0.0
  %vm701 = vcmp.ge.f32.partialorder %v629, 0.0
  %vm702 = vcmp.ge.f32.partialorder %v634, 0.0
  %vm703 = vcmp.ge.f32.partialorder %v637, 0.0
  %v704 = vmul.f32 %v386, 0.2
  %v705 = vmul.f32 %v389, 0.2
  %v706 = vmul.f32 %v394, 0.2
  %v707 = vmul.f32 %v397, 0.2
  %v708 = vmul.f32 %v402, 0.2
  %v709 = vmul.f32 %v405, 0.2
  %v710 = vmul.f32 %v410, 0.2
  %v711 = vmul.f32 %v413, 0.2
  %v712 = vmul.f32 %v418, 0.2
  %v713 = vmul.f32 %v421, 0.2
  %v714 = vmul.f32 %v426, 0.2
  %v715 = vmul.f32 %v429, 0.2
  %v716 = vmul.f32 %v434, 0.2
  %v717 = vmul.f32 %v437, 0.2
  %v718 = vmul.f32 %v442, 0.2
  %v719 = vmul.f32 %v445, 0.2
  %v720 = vmul.f32 %v450, 0.2
  %v721 = vmul.f32 %v453, 0.2
  %v722 = vmul.f32 %v458, 0.2
  %v723 = vmul.f32 %v461, 0.2
  %v724 = vmul.f32 %v466, 0.2
  %v725 = vmul.f32 %v469, 0.2
  %v726 = vmul.f32 %v474, 0.2
  %v727 = vmul.f32 %v477, 0.2
  %v728 = vmul.f32 %v482, 0.2
  %v729 = vmul.f32 %v485, 0.2
  %v730 = vmul.f32 %v490, 0.2
  %v731 = vmul.f32 %v493, 0.2
  %v732 = vmul.f32 %v498, 0.2
  %v733 = vmul.f32 %v501, 0.2
  %v734 = vmul.f32 %v506, 0.2
  %v735 = vmul.f32 %v509, 0.2
  %v736 = vmul.f32 %v514, 0.2
  %v737 = vmul.f32 %v517, 0.2
  %v738 = vmul.f32 %v522, 0.2
  %v739 = vmul.f32 %v525, 0.2
  %v740 = vmul.f32 %v530, 0.2
  %v741 = vmul.f32 %v533, 0.2
  %v742 = vmul.f32 %v538, 0.2
  %v743 = vmul.f32 %v541, 0.2
  %v744 = vmul.f32 %v546, 0.2
  %v745 = vmul.f32 %v549, 0.2
  %v746 = vmul.f32 %v554, 0.2
  %v747 = vmul.f32 %v557, 0.2
  %v748 = vmul.f32 %v562, 0.2
  %v749 = vmul.f32 %v565, 0.2
  %v750 = vmul.f32 %v570, 0.2
  %v751 = vmul.f32 %v573, 0.2
  %v752 = vmul.f32 %v578, 0.2
  %v753 = vmul.f32 %v581, 0.2
  %v754 = vmul.f32 %v586, 0.2
  %v755 = vmul.f32 %v589, 0.2
  %v756 = vmul.f32 %v594, 0.2
  %v757 = vmul.f32 %v597, 0.2
  %v758 = vmul.f32 %v602, 0.2
  %v759 = vmul.f32 %v605, 0.2
  %v760 = vmul.f32 %v610, 0.2
  %v761 = vmul.f32 %v613, 0.2
  %v762 = vmul.f32 %v618, 0.2
  %v763 = vmul.f32 %v621, 0.2
  %v764 = vmul.f32 %v626, 0.2
  %v765 = vmul.f32 %v629, 0.2
  %v766 = vmul.f32 %v634, 0.2
  %v767 = vmul.f32 %v637, 0.2
  %v768 = vsel %vm640, %v386, %v704
  %v769 = vsel %vm641, %v389, %v705
  %v770 = vsel %vm642, %v394, %v706
  %v771 = vsel %vm643, %v397, %v707
  %v772 = vsel %vm644, %v402, %v708
  %v773 = vsel %vm645, %v405, %v709
  %v774 = vsel %vm646, %v410, %v710
  %v775 = vsel %vm647, %v413, %v711
  %v776 = vsel %vm648, %v418, %v712
  %v777 = vsel %vm649, %v421, %v713
  %v778 = vsel %vm650, %v426, %v714
  %v779 = vsel %vm651, %v429, %v715
  %v780 = vsel %vm652, %v434, %v716
  %v781 = vsel %vm653, %v437, %v717
  %v782 = vsel %vm654, %v442, %v718
  %v783 = vsel %vm655, %v445, %v719
  %v784 = vsel %vm656, %v450, %v720
  %v785 = vsel %vm657, %v453, %v721
  %v786 = vsel %vm658, %v458, %v722
  %v787 = vsel %vm659, %v461, %v723
  %v788 = vsel %vm660, %v466, %v724
  %v789 = vsel %vm661, %v469, %v725
  %v790 = vsel %vm662, %v474, %v726
  %v791 = vsel %vm663, %v477, %v727
  %v792 = vsel %vm664, %v482, %v728
  %v793 = vsel %vm665, %v485, %v729
  %v794 = vsel %vm666, %v490, %v730
  %v795 = vsel %vm667, %v493, %v731
  %v796 = vsel %vm668, %v498, %v732
  %v797 = vsel %vm669, %v501, %v733
  %v798 = vsel %vm670, %v506, %v734
  %v799 = vsel %vm671, %v509, %v735
  %v800 = vsel %vm672, %v514, %v736
  %v801 = vsel %vm673, %v517, %v737
  %v802 = vsel %vm674, %v522, %v738
  %v803 = vsel %vm675, %v525, %v739
  %v804 = vsel %vm676, %v530, %v740
  %v805 = vsel %vm677, %v533, %v741
  %v806 = vsel %vm678, %v538, %v742
  %v807 = vsel %vm679, %v541, %v743
  %v808 = vsel %vm680, %v546, %v744
  %v809 = vsel %vm681, %v549, %v745
  %v810 = vsel %vm682, %v554, %v746
  %v811 = vsel %vm683, %v557, %v747
  %v812 = vsel %vm684, %v562, %v748
  %v813 = vsel %vm685, %v565, %v749
  %v814 = vsel %vm686, %v570, %v750
  %v815 = vsel %vm687, %v573, %v751
  %v816 = vsel %vm688, %v578, %v752
  %v817 = vsel %vm689, %v581, %v753
  %v818 = vsel %vm690, %v586, %v754
  %v819 = vsel %vm691, %v589, %v755
  %v820 = vsel %vm692, %v594, %v756
  %v821 = vsel %vm693, %v597, %v757
  %v822 = vsel %vm694, %v602, %v758
  %v823 = vsel %vm695, %v605, %v759
  %v824 = vsel %vm696, %v610, %v760
  %v825 = vsel %vm697, %v613, %v761
  %v826 = vsel %vm698, %v618, %v762
  %v827 = vsel %vm699, %v621, %v763
  %v828 = vsel %vm700, %v626, %v764
  %v829 = vsel %vm701, %v629, %v765
  %v830 = vsel %vm702, %v634, %v766
  %v831 = vsel %vm703, %v637, %v767
  %832 = vst [vmem:[%s3] sm:$0xff] %v768
  %833 = vst [vmem:[%s3 + $0x8] sm:$0xff] %v769
  %834 = vst [vmem:[%s3 + $0x10] sm:$0xff] %v770
  %835 = vst [vmem:[%s3 + $0x18] sm:$0xff] %v771
  %836 = vst [vmem:[%s3 + $0x20] sm:$0xff] %v772
  %837 = vst [vmem:[%s3 + $0x28] sm:$0xff] %v773
  %838 = vst [vmem:[%s3 + $0x30] sm:$0xff] %v774
  %839 = vst [vmem:[%s3 + $0x38] sm:$0xff] %v775
  %840 = vst [vmem:[%s3 + $0x40] sm:$0xff] %v776
  %841 = vst [vmem:[%s3 + $0x48] sm:$0xff] %v777
  %842 = vst [vmem:[%s3 + $0x50] sm:$0xff] %v778
  %843 = vst [vmem:[%s3 + $0x58] sm:$0xff] %v779
  %844 = vst [vmem:[%s3 + $0x60] sm:$0xff] %v780
  %845 = vst [vmem:[%s3 + $0x68] sm:$0xff] %v781
  %846 = vst [vmem:[%s3 + $0x70] sm:$0xff] %v782
  %847 = vst [vmem:[%s3 + $0x78] sm:$0xff] %v783
  %848 = vst [vmem:[%s3 + $0x80] sm:$0xff] %v784
  %849 = vst [vmem:[%s3 + $0x88] sm:$0xff] %v785
  %850 = vst [vmem:[%s3 + $0x90] sm:$0xff] %v786
  %851 = vst [vmem:[%s3 + $0x98] sm:$0xff] %v787
  %852 = vst [vmem:[%s3 + $0xa0] sm:$0xff] %v788
  %853 = vst [vmem:[%s3 + $0xa8] sm:$0xff] %v789
  %854 = vst [vmem:[%s3 + $0xb0] sm:$0xff] %v790
  %855 = vst [vmem:[%s3 + $0xb8] sm:$0xff] %v791
  %856 = vst [vmem:[%s3 + $0xc0] sm:$0xff] %v792
  %857 = vst [vmem:[%s3 + $0xc8] sm:$0xff] %v793
  %858 = vst [vmem:[%s3 + $0xd0] sm:$0xff] %v794
  %859 = vst [vmem:[%s3 + $0xd8] sm:$0xff] %v795
  %860 = vst [vmem:[%s3 + $0xe0] sm:$0xff] %v796
  %861 = vst [vmem:[%s3 + $0xe8] sm:$0xff] %v797
  %862 = vst [vmem:[%s3 + $0xf0] sm:$0xff] %v798
  %863 = vst [vmem:[%s3 + $0xf8] sm:$0xff] %v799
  %864 = vst [vmem:[%s3 + $0x100] sm:$0xff] %v800
  %865 = vst [vmem:[%s3 + $0x108] sm:$0xff] %v801
  %866 = vst [vmem:[%s3 + $0x110] sm:$0xff] %v802
  %867 = vst [vmem:[%s3 + $0x118] sm:$0xff] %v803
  %868 = vst [vmem:[%s3 + $0x120] sm:$0xff] %v804
  %869 = vst [vmem:[%s3 + $0x128] sm:$0xff] %v805
  %870 = vst [vmem:[%s3 + $0x130] sm:$0xff] %v806
  %871 = vst [vmem:[%s3 + $0x138] sm:$0xff] %v807
  %872 = vst [vmem:[%s3 + $0x140] sm:$0xff] %v808
  %873 = vst [vmem:[%s3 + $0x148] sm:$0xff] %v809
  %874 = vst [vmem:[%s3 + $0x150] sm:$0xff] %v810
  %875 = vst [vmem:[%s3 + $0x158] sm:$0xff] %v811
  %876 = vst [vmem:[%s3 + $0x160] sm:$0xff] %v812
  %877 = vst [vmem:[%s3 + $0x168] sm:$0xff] %v813
  %878 = vst [vmem:[%s3 + $0x170] sm:$0xff] %v814
  %879 = vst [vmem:[%s3 + $0x178] sm:$0xff] %v815
  %880 = vst [vmem:[%s3 + $0x180] sm:$0xff] %v816
  %881 = vst [vmem:[%s3 + $0x188] sm:$0xff] %v817
  %882 = vst [vmem:[%s3 + $0x190] sm:$0xff] %v818
  %883 = vst [vmem:[%s3 + $0x198] sm:$0xff] %v819
  %884 = vst [vmem:[%s3 + $0x1a0] sm:$0xff] %v820
  %885 = vst [vmem:[%s3 + $0x1a8] sm:$0xff] %v821
  %886 = vst [vmem:[%s3 + $0x1b0] sm:$0xff] %v822
  %887 = vst [vmem:[%s3 + $0x1b8] sm:$0xff] %v823
  %888 = vst [vmem:[%s3 + $0x1c0] sm:$0xff] %v824
  %889 = vst [vmem:[%s3 + $0x1c8] sm:$0xff] %v825
  %890 = vst [vmem:[%s3 + $0x1d0] sm:$0xff] %v826
  %891 = vst [vmem:[%s3 + $0x1d8] sm:$0xff] %v827
  %892 = vst [vmem:[%s3 + $0x1e0] sm:$0xff] %v828
  %893 = vst [vmem:[%s3 + $0x1e8] sm:$0xff] %v829
  %894 = vst [vmem:[%s3 + $0x1f0] sm:$0xff] %v830
  %895 = vst [vmem:[%s3 + $0x1f8] sm:$0xff] %v831
  // Predicated region
  $region14: #{generator_forward.10} parent=0 // pred_check
    _
  $region15: #{generator_forward.10} parent=0 // pred_check_branch
    %897 = sbr.rel (0) target = $region17
  $region16: #{generator_forward.10} parent=0 // pred_region
    _
  $region17: #{generator_forward.10} parent=0 // pred_fallthru
    _
  // Predicated region
  $region18: #{generator_forward.10} parent=0 // pred_check
    _
  $region19: #{generator_forward.10} parent=0 // pred_check_branch
    %899 = sbr.rel (0) target = $region21
  $region20: #{generator_forward.10} parent=0 // pred_region
    _
  $region21: #{generator_forward.10} parent=0 // pred_fallthru
    _

// kernel: generator_forward.11
$region0: #{generator_forward.11}
  #allocation0 [shape = 'u32[]', space=smem, size = 0x4, offset = 0x4, fixed_abs, tag = 'smem constant byte address 0x4 - core index']
  #allocation1 [shape = 'u32[144,128]{1,0:T(1,128)}', space=vmem, size = 0x12000, scoped, tag = 'internal scratch']
  %s0 = inlined_call_operand.vmem [shape: bf16[128,128], index: 0, kind: input, shape index: {}]
  %s1 = inlined_call_operand.vmem [shape: bf16[128,128], index: 1, kind: input, shape index: {}]
  %s2 = inlined_call_operand.vmem [shape: f32[1,128], index: 2, kind: input, shape index: {}]
  %s3 = inlined_call_operand.vmem [shape: f32[128,128], index: 3, kind: output, shape index: {}]
  %s4 = sld [smem:[#allocation0]]
  $region22: #{generator_forward.11} parent=0
    _
  %s6 = ssub.s32 1, %s4
  %s7 = scalar_select 0, %s6, %s4
  // Predicated region
  $region2: #{generator_forward.11} parent=0 // pred_check
    _
  $region3: #{generator_forward.11} parent=0 // pred_check_branch
    %9 = sbr.rel (0) target = $region5
  $region4: #{generator_forward.11} parent=0 // pred_region
    _
  $region5: #{generator_forward.11} parent=0 // pred_fallthru
    _
  // Predicated region
  $region6: #{generator_forward.11} parent=0 // pred_check
    _
  $region7: #{generator_forward.11} parent=0 // pred_check_branch
    %11 = sbr.rel (0) target = $region9
  $region8: #{generator_forward.11} parent=0 // pred_region
    _
  $region9: #{generator_forward.11} parent=0 // pred_fallthru
    _
  // Predicated region
  $region10: #{generator_forward.11} parent=0 // pred_check
    _
  $region11: #{generator_forward.11} parent=0 // pred_check_branch
    %13 = sbr.rel (0) target = $region13
  $region12: #{generator_forward.11} parent=0 // pred_region
    _
  $region13: #{generator_forward.11} parent=0 // pred_fallthru
    _
  %v15 = vld [vmem:[%s0] sm:$0xf]
  %v16 = vld [vmem:[%s0 + $0x4] sm:$0xf]
  %v17 = vld [vmem:[%s0 + $0x8] sm:$0xf]
  %v18 = vld [vmem:[%s0 + $0xc] sm:$0xf]
  %v19 = vld [vmem:[%s0 + $0x10] sm:$0xf]
  %v20 = vld [vmem:[%s0 + $0x14] sm:$0xf]
  %v21 = vld [vmem:[%s0 + $0x18] sm:$0xf]
  %v22 = vld [vmem:[%s0 + $0x1c] sm:$0xf]
  %v23 = vld [vmem:[%s0 + $0x20] sm:$0xf]
  %v24 = vld [vmem:[%s0 + $0x24] sm:$0xf]
  %v25 = vld [vmem:[%s0 + $0x28] sm:$0xf]
  %v26 = vld [vmem:[%s0 + $0x2c] sm:$0xf]
  %v27 = vld [vmem:[%s0 + $0x30] sm:$0xf]
  %v28 = vld [vmem:[%s0 + $0x34] sm:$0xf]
  %v29 = vld [vmem:[%s0 + $0x38] sm:$0xf]
  %v30 = vld [vmem:[%s0 + $0x3c] sm:$0xf]
  %v31 = vld [vmem:[%s1] sm:$0xf]
  %v32 = vld [vmem:[%s1 + $0x4] sm:$0xf]
  %v33 = vld [vmem:[%s1 + $0x8] sm:$0xf]
  %v34 = vld [vmem:[%s1 + $0xc] sm:$0xf]
  %v35 = vld [vmem:[%s1 + $0x10] sm:$0xf]
  %v36 = vld [vmem:[%s1 + $0x14] sm:$0xf]
  %v37 = vld [vmem:[%s1 + $0x18] sm:$0xf]
  %v38 = vld [vmem:[%s1 + $0x1c] sm:$0xf]
  %v39 = vld [vmem:[%s1 + $0x20] sm:$0xf]
  %v40 = vld [vmem:[%s1 + $0x24] sm:$0xf]
  %v41 = vld [vmem:[%s1 + $0x28] sm:$0xf]
  %v42 = vld [vmem:[%s1 + $0x2c] sm:$0xf]
  %v43 = vld [vmem:[%s1 + $0x30] sm:$0xf]
  %v44 = vld [vmem:[%s1 + $0x34] sm:$0xf]
  %v45 = vld [vmem:[%s1 + $0x38] sm:$0xf]
  %v46 = vld [vmem:[%s1 + $0x3c] sm:$0xf]
  %v47 = vld [vmem:[%s2] sm:$0x1]
  %v49 = vlaneseq
  %v50 = vshrl.u32 %v49, 7
  %v51 = vsub.s32 0, %v50
  %v52 = vrot.slane %v47, %v51
  %v70 = vunpack.c.l.b16 %v15
  %v71 = vunpack.c.l.b16 %v16
  %v72 = vunpack.c.l.b16 %v17
  %v73 = vunpack.c.l.b16 %v18
  %v74 = vunpack.c.l.b16 %v19
  %v75 = vunpack.c.l.b16 %v20
  %v76 = vunpack.c.l.b16 %v21
  %v77 = vunpack.c.l.b16 %v22
  %v78 = vunpack.c.l.b16 %v23
  %v79 = vunpack.c.l.b16 %v24
  %v80 = vunpack.c.l.b16 %v25
  %v81 = vunpack.c.l.b16 %v26
  %v82 = vunpack.c.l.b16 %v27
  %v83 = vunpack.c.l.b16 %v28
  %v84 = vunpack.c.l.b16 %v29
  %v85 = vunpack.c.l.b16 %v30
  %v86 = vpack.c.b16 %v71, %v70
  %v87 = vpack.c.b16 %v73, %v72
  %v88 = vpack.c.b16 %v75, %v74
  %v89 = vpack.c.b16 %v77, %v76
  %v90 = vpack.c.b16 %v79, %v78
  %v91 = vpack.c.b16 %v81, %v80
  %v92 = vpack.c.b16 %v83, %v82
  %v93 = vpack.c.b16 %v85, %v84
  %v118 = vunpack.c.l.b16 %v31
  %v119 = vunpack.c.l.b16 %v32
  %v120 = vunpack.c.l.b16 %v33
  %v121 = vunpack.c.l.b16 %v34
  %v122 = vunpack.c.l.b16 %v35
  %v123 = vunpack.c.l.b16 %v36
  %v124 = vunpack.c.l.b16 %v37
  %v125 = vunpack.c.l.b16 %v38
  %v126 = vunpack.c.l.b16 %v39
  %v127 = vunpack.c.l.b16 %v40
  %v128 = vunpack.c.l.b16 %v41
  %v129 = vunpack.c.l.b16 %v42
  %v130 = vunpack.c.l.b16 %v43
  %v131 = vunpack.c.l.b16 %v44
  %v132 = vunpack.c.l.b16 %v45
  %v133 = vunpack.c.l.b16 %v46
  %v134 = vpack.c.b16 %v119, %v118
  %v135 = vpack.c.b16 %v121, %v120
  %v136 = vpack.c.b16 %v123, %v122
  %v137 = vpack.c.b16 %v125, %v124
  %v138 = vpack.c.b16 %v127, %v126
  %v139 = vpack.c.b16 %v129, %v128
  %v140 = vpack.c.b16 %v131, %v130
  %v141 = vpack.c.b16 %v133, %v132
  %150 = vmatprep.subr.bf16.mxu0 0
  %151 = vmatpush1.bf16.msra.mxu0 %v134
  %152 = vmatprep.subr.bf16.mxu0 0
  %153 = vmatpush1.bf16.msra.mxu0 %v135
  %154 = vmatprep.subr.bf16.mxu0 0
  %155 = vmatpush1.bf16.msra.mxu0 %v136
  %156 = vmatprep.subr.bf16.mxu0 0
  %157 = vmatpush1.bf16.msra.mxu0 %v137
  %158 = vmatprep.subr.bf16.mxu0 0
  %159 = vmatpush1.bf16.msra.mxu0 %v138
  %160 = vmatprep.subr.bf16.mxu0 0
  %161 = vmatpush1.bf16.msra.mxu0 %v139
  %162 = vmatprep.subr.bf16.mxu0 0
  %163 = vmatpush1.bf16.msra.mxu0 %v140
  %164 = vmatprep.subr.bf16.mxu0 0
  %165 = vmatpush1.bf16.msra.mxu0 %v141
  %166 = vmatprep.subr.bf16.mxu0 0
  %167 = vmatpush1.bf16.msra.mxu0 0
  %168 = vmatprep.subr.bf16.mxu0 0
  %169 = vmatpush1.bf16.msra.mxu0 0
  %170 = vmatprep.subr.bf16.mxu0 0
  %171 = vmatpush1.bf16.msra.mxu0 0
  %172 = vmatprep.subr.bf16.mxu0 0
  %173 = vmatpush1.bf16.msra.mxu0 0
  %174 = vmatprep.subr.bf16.mxu0 0
  %175 = vmatpush1.bf16.msra.mxu0 0
  %176 = vmatprep.subr.bf16.mxu0 0
  %177 = vmatpush1.bf16.msra.mxu0 0
  %178 = vmatprep.subr.bf16.mxu0 0
  %179 = vmatpush1.bf16.msra.mxu0 0
  %180 = vmatprep.subr.bf16.mxu0 0
  %181 = vmatpush1.bf16.msra.mxu0 0
  %182 = vmatprep.mubr.bf16.mxu0 0
  %183 = vmatmul.mubr.bf16.gmra.mrb[0].mxu0 %v86
  %v184 = vpop.f32.mrb[0].mxu0
  %v185 = vadd.f32 %v52, %v184
  %v186 = vpop.f32.mrb[0].mxu0
  %v187 = vpop.f32.mrb[0].mxu0
  %v188 = vadd.f32 %v52, %v187
  %v189 = vpop.f32.mrb[0].mxu0
  %190 = vmatprep.mubr.bf16.mxu0 0
  %191 = vmatmul.mubr.bf16.gmra.mrb[0].mxu0 %v87
  %v192 = vpop.f32.mrb[0].mxu0
  %v193 = vadd.f32 %v52, %v192
  %v194 = vpop.f32.mrb[0].mxu0
  %v195 = vpop.f32.mrb[0].mxu0
  %v196 = vadd.f32 %v52, %v195
  %v197 = vpop.f32.mrb[0].mxu0
  %198 = vmatprep.mubr.bf16.mxu0 0
  %199 = vmatmul.mubr.bf16.gmra.mrb[0].mxu0 %v88
  %v200 = vpop.f32.mrb[0].mxu0
  %v201 = vadd.f32 %v52, %v200
  %v202 = vpop.f32.mrb[0].mxu0
  %v203 = vpop.f32.mrb[0].mxu0
  %v204 = vadd.f32 %v52, %v203
  %v205 = vpop.f32.mrb[0].mxu0
  %206 = vmatprep.mubr.bf16.mxu0 0
  %207 = vmatmul.mubr.bf16.gmra.mrb[0].mxu0 %v89
  %v208 = vpop.f32.mrb[0].mxu0
  %v209 = vadd.f32 %v52, %v208
  %v210 = vpop.f32.mrb[0].mxu0
  %v211 = vpop.f32.mrb[0].mxu0
  %v212 = vadd.f32 %v52, %v211
  %v213 = vpop.f32.mrb[0].mxu0
  %214 = vmatprep.mubr.bf16.mxu0 0
  %215 = vmatmul.mubr.bf16.gmra.mrb[0].mxu0 %v90
  %v216 = vpop.f32.mrb[0].mxu0
  %v217 = vadd.f32 %v52, %v216
  %v218 = vpop.f32.mrb[0].mxu0
  %v219 = vpop.f32.mrb[0].mxu0
  %v220 = vadd.f32 %v52, %v219
  %v221 = vpop.f32.mrb[0].mxu0
  %222 = vmatprep.mubr.bf16.mxu0 0
  %223 = vmatmul.mubr.bf16.gmra.mrb[0].mxu0 %v91
  %v224 = vpop.f32.mrb[0].mxu0
  %v225 = vadd.f32 %v52, %v224
  %v226 = vpop.f32.mrb[0].mxu0
  %v227 = vpop.f32.mrb[0].mxu0
  %v228 = vadd.f32 %v52, %v227
  %v229 = vpop.f32.mrb[0].mxu0
  %230 = vmatprep.mubr.bf16.mxu0 0
  %231 = vmatmul.mubr.bf16.gmra.mrb[0].mxu0 %v92
  %v232 = vpop.f32.mrb[0].mxu0
  %v233 = vadd.f32 %v52, %v232
  %v234 = vpop.f32.mrb[0].mxu0
  %v235 = vpop.f32.mrb[0].mxu0
  %v236 = vadd.f32 %v52, %v235
  %v237 = vpop.f32.mrb[0].mxu0
  %238 = vmatprep.mubr.bf16.mxu0 0
  %239 = vmatmul.mubr.bf16.gmra.mrb[0].mxu0 %v93
  %v240 = vpop.f32.mrb[0].mxu0
  %v241 = vadd.f32 %v52, %v240
  %v242 = vpop.f32.mrb[0].mxu0
  %v243 = vpop.f32.mrb[0].mxu0
  %v244 = vadd.f32 %v52, %v243
  %v245 = vpop.f32.mrb[0].mxu0
  %246 = vdwg.mxu0
  %v247 = vadd.f32 %v185, %v188
  %v248 = vadd.f32 %v247, %v193
  %v249 = vadd.f32 %v248, %v196
  %v250 = vadd.f32 %v249, %v201
  %v251 = vadd.f32 %v250, %v204
  %v252 = vadd.f32 %v251, %v209
  %v253 = vadd.f32 %v252, %v212
  %v254 = vadd.f32 %v253, %v217
  %v255 = vadd.f32 %v254, %v220
  %v256 = vadd.f32 %v255, %v225
  %v257 = vadd.f32 %v256, %v228
  %v258 = vadd.f32 %v257, %v233
  %v259 = vadd.f32 %v258, %v236
  %v260 = vadd.f32 %v259, %v241
  %v261 = vadd.f32 %v260, %v244
  %v262 = vrot.slane %v261, 4
  %v263 = vadd.f32 %v261, %v262
  %v264 = vrot.slane %v263, 2
  %v265 = vadd.f32 %v263, %v264
  %v266 = vrot.slane %v265, 1
  %v267 = vadd.f32 %v265, %v266
  %v268 = vmul.f32 %v267, 0.0078125
  %v269 = vmul.f32 %v185, %v185
  %v270 = vmul.f32 %v188, %v188
  %v271 = vmul.f32 %v193, %v193
  %v272 = vmul.f32 %v196, %v196
  %v273 = vmul.f32 %v201, %v201
  %v274 = vmul.f32 %v204, %v204
  %v275 = vmul.f32 %v209, %v209
  %v276 = vmul.f32 %v212, %v212
  %v277 = vmul.f32 %v217, %v217
  %v278 = vmul.f32 %v220, %v220
  %v279 = vmul.f32 %v225, %v225
  %v280 = vmul.f32 %v228, %v228
  %v281 = vmul.f32 %v233, %v233
  %v282 = vmul.f32 %v236, %v236
  %v283 = vmul.f32 %v241, %v241
  %v284 = vmul.f32 %v244, %v244
  %v285 = vadd.f32 %v269, %v270
  %v286 = vadd.f32 %v285, %v271
  %v287 = vadd.f32 %v286, %v272
  %v288 = vadd.f32 %v287, %v273
  %v289 = vadd.f32 %v288, %v274
  %v290 = vadd.f32 %v289, %v275
  %v291 = vadd.f32 %v290, %v276
  %v292 = vadd.f32 %v291, %v277
  %v293 = vadd.f32 %v292, %v278
  %v294 = vadd.f32 %v293, %v279
  %v295 = vadd.f32 %v294, %v280
  %v296 = vadd.f32 %v295, %v281
  %v297 = vadd.f32 %v296, %v282
  %v298 = vadd.f32 %v297, %v283
  %v299 = vadd.f32 %v298, %v284
  %v300 = vrot.slane %v299, 4
  %v301 = vadd.f32 %v299, %v300
  %v302 = vrot.slane %v301, 2
  %v303 = vadd.f32 %v301, %v302
  %v304 = vrot.slane %v303, 1
  %v305 = vadd.f32 %v303, %v304
  %v306 = vmul.f32 %v305, 0.0078125
  %v307 = vmul.f32 %v268, %v268
  %v308 = vsub.f32 %v306, %v307
  %v309 = vsub.f32 %v185, %v268
  %v310 = vsub.f32 %v188, %v268
  %v311 = vsub.f32 %v193, %v268
  %v312 = vsub.f32 %v196, %v268
  %v313 = vsub.f32 %v201, %v268
  %v314 = vsub.f32 %v204, %v268
  %v315 = vsub.f32 %v209, %v268
  %v316 = vsub.f32 %v212, %v268
  %v317 = vsub.f32 %v217, %v268
  %v318 = vsub.f32 %v220, %v268
  %v319 = vsub.f32 %v225, %v268
  %v320 = vsub.f32 %v228, %v268
  %v321 = vsub.f32 %v233, %v268
  %v322 = vsub.f32 %v236, %v268
  %v323 = vsub.f32 %v241, %v268
  %v324 = vsub.f32 %v244, %v268
  %v325 = vadd.f32 %v308, 1e-05
  %v326 = vrsqrt.pop %v325
  %v327 = vmul.f32 %v309, %v326
  %v328 = vmul.f32 %v310, %v326
  %v329 = vmul.f32 %v311, %v326
  %v330 = vmul.f32 %v312, %v326
  %v331 = vmul.f32 %v313, %v326
  %v332 = vmul.f32 %v314, %v326
  %v333 = vmul.f32 %v315, %v326
  %v334 = vmul.f32 %v316, %v326
  %v335 = vmul.f32 %v317, %v326
  %v336 = vmul.f32 %v318, %v326
  %v337 = vmul.f32 %v319, %v326
  %v338 = vmul.f32 %v320, %v326
  %v339 = vmul.f32 %v321, %v326
  %v340 = vmul.f32 %v322, %v326
  %v341 = vmul.f32 %v323, %v326
  %v342 = vmul.f32 %v324, %v326
  %vm343 = vcmp.ge.f32.partialorder %v327, 0.0
  %vm344 = vcmp.ge.f32.partialorder %v328, 0.0
  %vm345 = vcmp.ge.f32.partialorder %v329, 0.0
  %vm346 = vcmp.ge.f32.partialorder %v330, 0.0
  %vm347 = vcmp.ge.f32.partialorder %v331, 0.0
  %vm348 = vcmp.ge.f32.partialorder %v332, 0.0
  %vm349 = vcmp.ge.f32.partialorder %v333, 0.0
  %vm350 = vcmp.ge.f32.partialorder %v334, 0.0
  %vm351 = vcmp.ge.f32.partialorder %v335, 0.0
  %vm352 = vcmp.ge.f32.partialorder %v336, 0.0
  %vm353 = vcmp.ge.f32.partialorder %v337, 0.0
  %vm354 = vcmp.ge.f32.partialorder %v338, 0.0
  %vm355 = vcmp.ge.f32.partialorder %v339, 0.0
  %vm356 = vcmp.ge.f32.partialorder %v340, 0.0
  %vm357 = vcmp.ge.f32.partialorder %v341, 0.0
  %vm358 = vcmp.ge.f32.partialorder %v342, 0.0
  %v359 = vmul.f32 %v327, 0.2
  %v360 = vmul.f32 %v328, 0.2
  %v361 = vmul.f32 %v329, 0.2
  %v362 = vmul.f32 %v330, 0.2
  %v363 = vmul.f32 %v331, 0.2
  %v364 = vmul.f32 %v332, 0.2
  %v365 = vmul.f32 %v333, 0.2
  %v366 = vmul.f32 %v334, 0.2
  %v367 = vmul.f32 %v335, 0.2
  %v368 = vmul.f32 %v336, 0.2
  %v369 = vmul.f32 %v337, 0.2
  %v370 = vmul.f32 %v338, 0.2
  %v371 = vmul.f32 %v339, 0.2
  %v372 = vmul.f32 %v340, 0.2
  %v373 = vmul.f32 %v341, 0.2
  %v374 = vmul.f32 %v342, 0.2
  %v375 = vsel %vm343, %v327, %v359
  %v376 = vsel %vm344, %v328, %v360
  %v377 = vsel %vm345, %v329, %v361
  %v378 = vsel %vm346, %v330, %v362
  %v379 = vsel %vm347, %v331, %v363
  %v380 = vsel %vm348, %v332, %v364
  %v381 = vsel %vm349, %v333, %v365
  %v382 = vsel %vm350, %v334, %v366
  %v383 = vsel %vm351, %v335, %v367
  %v384 = vsel %vm352, %v336, %v368
  %v385 = vsel %vm353, %v337, %v369
  %v386 = vsel %vm354, %v338, %v370
  %v387 = vsel %vm355, %v339, %v371
  %v388 = vsel %vm356, %v340, %v372
  %v389 = vsel %vm357, %v341, %v373
  %v390 = vsel %vm358, %v342, %v374
  %391 = vst [vmem:[%s3] sm:$0xff] %v375
  %392 = vst [vmem:[%s3 + $0x8] sm:$0xff] %v376
  %393 = vst [vmem:[%s3 + $0x10] sm:$0xff] %v377
  %394 = vst [vmem:[%s3 + $0x18] sm:$0xff] %v378
  %395 = vst [vmem:[%s3 + $0x20] sm:$0xff] %v379
  %396 = vst [vmem:[%s3 + $0x28] sm:$0xff] %v380
  %397 = vst [vmem:[%s3 + $0x30] sm:$0xff] %v381
  %398 = vst [vmem:[%s3 + $0x38] sm:$0xff] %v382
  %399 = vst [vmem:[%s3 + $0x40] sm:$0xff] %v383
  %400 = vst [vmem:[%s3 + $0x48] sm:$0xff] %v384
  %401 = vst [vmem:[%s3 + $0x50] sm:$0xff] %v385
  %402 = vst [vmem:[%s3 + $0x58] sm:$0xff] %v386
  %403 = vst [vmem:[%s3 + $0x60] sm:$0xff] %v387
  %404 = vst [vmem:[%s3 + $0x68] sm:$0xff] %v388
  %405 = vst [vmem:[%s3 + $0x70] sm:$0xff] %v389
  %406 = vst [vmem:[%s3 + $0x78] sm:$0xff] %v390
  // Predicated region
  $region14: #{generator_forward.11} parent=0 // pred_check
    _
  $region15: #{generator_forward.11} parent=0 // pred_check_branch
    %408 = sbr.rel (0) target = $region17
  $region16: #{generator_forward.11} parent=0 // pred_region
    _
  $region17: #{generator_forward.11} parent=0 // pred_fallthru
    _
  // Predicated region
  $region18: #{generator_forward.11} parent=0 // pred_check
    _
  $region19: #{generator_forward.11} parent=0 // pred_check_branch
    %410 = sbr.rel (0) target = $region21
  $region20: #{generator_forward.11} parent=0 // pred_region
    _
  $region21: #{generator_forward.11} parent=0 // pred_fallthru
    _

// kernel: generator_forward.12
$region0: #{generator_forward.12}
  #allocation0 [shape = 'u32[]', space=smem, size = 0x4, offset = 0x4, fixed_abs, tag = 'smem constant byte address 0x4 - core index']
  #allocation1 [shape = 'u32[144,128]{1,0:T(1,128)}', space=vmem, size = 0x12000, scoped, tag = 'internal scratch']
  %s0 = inlined_call_operand.vmem [shape: bf16[32,256], index: 0, kind: input, shape index: {}]
  %s1 = inlined_call_operand.vmem [shape: bf16[256,128], index: 1, kind: input, shape index: {}]
  %s2 = inlined_call_operand.vmem [shape: f32[1,128], index: 2, kind: input, shape index: {}]
  %s3 = inlined_call_operand.vmem [shape: f32[32,128], index: 3, kind: output, shape index: {}]
  %s4 = sld [smem:[#allocation0]]
  $region22: #{generator_forward.12} parent=0
    _
  %s6 = ssub.s32 1, %s4
  %s7 = scalar_select 0, %s6, %s4
  // Predicated region
  $region2: #{generator_forward.12} parent=0 // pred_check
    _
  $region3: #{generator_forward.12} parent=0 // pred_check_branch
    %9 = sbr.rel (0) target = $region5
  $region4: #{generator_forward.12} parent=0 // pred_region
    _
  $region5: #{generator_forward.12} parent=0 // pred_fallthru
    _
  // Predicated region
  $region6: #{generator_forward.12} parent=0 // pred_check
    _
  $region7: #{generator_forward.12} parent=0 // pred_check_branch
    %11 = sbr.rel (0) target = $region9
  $region8: #{generator_forward.12} parent=0 // pred_region
    _
  $region9: #{generator_forward.12} parent=0 // pred_fallthru
    _
  // Predicated region
  $region10: #{generator_forward.12} parent=0 // pred_check
    _
  $region11: #{generator_forward.12} parent=0 // pred_check_branch
    %13 = sbr.rel (0) target = $region13
  $region12: #{generator_forward.12} parent=0 // pred_region
    _
  $region13: #{generator_forward.12} parent=0 // pred_fallthru
    _
  %v15 = vld [vmem:[%s0] sm:$0xff]
  %v16 = vld [vmem:[%s0 + $0x8] sm:$0xff]
  %v17 = vld [vmem:[%s0 + $0x10] sm:$0xff]
  %v18 = vld [vmem:[%s0 + $0x18] sm:$0xff]
  %v19 = vld [vmem:[%s1] sm:$0xf]
  %v20 = vld [vmem:[%s1 + $0x4] sm:$0xf]
  %v21 = vld [vmem:[%s1 + $0x8] sm:$0xf]
  %v22 = vld [vmem:[%s1 + $0xc] sm:$0xf]
  %v23 = vld [vmem:[%s1 + $0x10] sm:$0xf]
  %v24 = vld [vmem:[%s1 + $0x14] sm:$0xf]
  %v25 = vld [vmem:[%s1 + $0x18] sm:$0xf]
  %v26 = vld [vmem:[%s1 + $0x1c] sm:$0xf]
  %v27 = vld [vmem:[%s1 + $0x20] sm:$0xf]
  %v28 = vld [vmem:[%s1 + $0x24] sm:$0xf]
  %v29 = vld [vmem:[%s1 + $0x28] sm:$0xf]
  %v30 = vld [vmem:[%s1 + $0x2c] sm:$0xf]
  %v31 = vld [vmem:[%s1 + $0x30] sm:$0xf]
  %v32 = vld [vmem:[%s1 + $0x34] sm:$0xf]
  %v33 = vld [vmem:[%s1 + $0x38] sm:$0xf]
  %v34 = vld [vmem:[%s1 + $0x3c] sm:$0xf]
  %v35 = vld [vmem:[%s1 + $0x40] sm:$0xf]
  %v36 = vld [vmem:[%s1 + $0x44] sm:$0xf]
  %v37 = vld [vmem:[%s1 + $0x48] sm:$0xf]
  %v38 = vld [vmem:[%s1 + $0x4c] sm:$0xf]
  %v39 = vld [vmem:[%s1 + $0x50] sm:$0xf]
  %v40 = vld [vmem:[%s1 + $0x54] sm:$0xf]
  %v41 = vld [vmem:[%s1 + $0x58] sm:$0xf]
  %v42 = vld [vmem:[%s1 + $0x5c] sm:$0xf]
  %v43 = vld [vmem:[%s1 + $0x60] sm:$0xf]
  %v44 = vld [vmem:[%s1 + $0x64] sm:$0xf]
  %v45 = vld [vmem:[%s1 + $0x68] sm:$0xf]
  %v46 = vld [vmem:[%s1 + $0x6c] sm:$0xf]
  %v47 = vld [vmem:[%s1 + $0x70] sm:$0xf]
  %v48 = vld [vmem:[%s1 + $0x74] sm:$0xf]
  %v49 = vld [vmem:[%s1 + $0x78] sm:$0xf]
  %v50 = vld [vmem:[%s1 + $0x7c] sm:$0xf]
  %v51 = vld [vmem:[%s2] sm:$0x1]
  %v53 = vlaneseq
  %v54 = vshrl.u32 %v53, 7
  %v55 = vsub.s32 0, %v54
  %v56 = vrot.slane %v51, %v55
  %v62 = vunpack.c.l.b16 %v15
  %v63 = vunpack.c.h.b16 %v15
  %v64 = vunpack.c.l.b16 %v16
  %v65 = vunpack.c.h.b16 %v16
  %v66 = vunpack.c.l.b16 %v17
  %v67 = vunpack.c.h.b16 %v17
  %v68 = vunpack.c.l.b16 %v18
  %v69 = vunpack.c.h.b16 %v18
  %v70 = vpack.c.b16 %v64, %v62
  %v71 = vpack.c.b16 %v65, %v63
  %v72 = vpack.c.b16 %v68, %v66
  %v73 = vpack.c.b16 %v69, %v67
  %v110 = vunpack.c.l.b16 %v19
  %v111 = vunpack.c.l.b16 %v20
  %v112 = vunpack.c.l.b16 %v21
  %v113 = vunpack.c.l.b16 %v22
  %v114 = vunpack.c.l.b16 %v23
  %v115 = vunpack.c.l.b16 %v24
  %v116 = vunpack.c.l.b16 %v25
  %v117 = vunpack.c.l.b16 %v26
  %v118 = vunpack.c.l.b16 %v27
  %v119 = vunpack.c.l.b16 %v28
  %v120 = vunpack.c.l.b16 %v29
  %v121 = vunpack.c.l.b16 %v30
  %v122 = vunpack.c.l.b16 %v31
  %v123 = vunpack.c.l.b16 %v32
  %v124 = vunpack.c.l.b16 %v33
  %v125 = vunpack.c.l.b16 %v34
  %v126 = vunpack.c.l.b16 %v35
  %v127 = vunpack.c.l.b16 %v36
  %v128 = vunpack.c.l.b16 %v37
  %v129 = vunpack.c.l.b16 %v38
  %v130 = vunpack.c.l.b16 %v39
  %v131 = vunpack.c.l.b16 %v40
  %v132 = vunpack.c.l.b16 %v41
  %v133 = vunpack.c.l.b16 %v42
  %v134 = vunpack.c.l.b16 %v43
  %v135 = vunpack.c.l.b16 %v44
  %v136 = vunpack.c.l.b16 %v45
  %v137 = vunpack.c.l.b16 %v46
  %v138 = vunpack.c.l.b16 %v47
  %v139 = vunpack.c.l.b16 %v48
  %v140 = vunpack.c.l.b16 %v49
  %v141 = vunpack.c.l.b16 %v50
  %v142 = vpack.c.b16 %v111, %v110
  %v143 = vpack.c.b16 %v113, %v112
  %v144 = vpack.c.b16 %v115, %v114
  %v145 = vpack.c.b16 %v117, %v116
  %v146 = vpack.c.b16 %v119, %v118
  %v147 = vpack.c.b16 %v121, %v120
  %v148 = vpack.c.b16 %v123, %v122
  %v149 = vpack.c.b16 %v125, %v124
  %v150 = vpack.c.b16 %v127, %v126
  %v151 = vpack.c.b16 %v129, %v128
  %v152 = vpack.c.b16 %v131, %v130
  %v153 = vpack.c.b16 %v133, %v132
  %v154 = vpack.c.b16 %v135, %v134
  %v155 = vpack.c.b16 %v137, %v136
  %v156 = vpack.c.b16 %v139, %v138
  %v157 = vpack.c.b16 %v141, %v140
  %174 = vmatprep.subr.bf16.mxu0 0
  %175 = vmatpush1.bf16.msra.mxu0 %v142
  %176 = vmatprep.subr.bf16.mxu0 0
  %177 = vmatpush1.bf16.msra.mxu0 %v143
  %178 = vmatprep.subr.bf16.mxu0 0
  %179 = vmatpush1.bf16.msra.mxu0 %v144
  %180 = vmatprep.subr.bf16.mxu0 0
  %181 = vmatpush1.bf16.msra.mxu0 %v145
  %182 = vmatprep.subr.bf16.mxu0 0
  %183 = vmatpush1.bf16.msra.mxu0 %v146
  %184 = vmatprep.subr.bf16.mxu0 0
  %185 = vmatpush1.bf16.msra.mxu0 %v147
  %186 = vmatprep.subr.bf16.mxu0 0
  %187 = vmatpush1.bf16.msra.mxu0 %v148
  %188 = vmatprep.subr.bf16.mxu0 0
  %189 = vmatpush1.bf16.msra.mxu0 %v149
  %190 = vmatprep.subr.bf16.mxu0 0
  %191 = vmatpush1.bf16.msra.mxu0 %v150
  %192 = vmatprep.subr.bf16.mxu0 0
  %193 = vmatpush1.bf16.msra.mxu0 %v151
  %194 = vmatprep.subr.bf16.mxu0 0
  %195 = vmatpush1.bf16.msra.mxu0 %v152
  %196 = vmatprep.subr.bf16.mxu0 0
  %197 = vmatpush1.bf16.msra.mxu0 %v153
  %198 = vmatprep.subr.bf16.mxu0 0
  %199 = vmatpush1.bf16.msra.mxu0 %v154
  %200 = vmatprep.subr.bf16.mxu0 0
  %201 = vmatpush1.bf16.msra.mxu0 %v155
  %202 = vmatprep.subr.bf16.mxu0 0
  %203 = vmatpush1.bf16.msra.mxu0 %v156
  %204 = vmatprep.subr.bf16.mxu0 0
  %205 = vmatpush1.bf16.msra.mxu0 %v157
  %206 = vmatprep.mubr.bf16.mxu0 %v71
  %207 = vmatmul.mubr.bf16.gmra.mrb[0].mxu0 %v70
  %v208 = vpop.f32.mrb[0].mxu0
  %v209 = vadd.f32 %v56, %v208
  %v210 = vpop.f32.mrb[0].mxu0
  %v211 = vpop.f32.mrb[0].mxu0
  %v212 = vadd.f32 %v56, %v211
  %v213 = vpop.f32.mrb[0].mxu0
  %214 = vmatprep.mubr.bf16.mxu0 %v73
  %215 = vmatmul.mubr.bf16.gmra.mrb[0].mxu0 %v72
  %v216 = vpop.f32.mrb[0].mxu0
  %v217 = vadd.f32 %v56, %v216
  %v218 = vpop.f32.mrb[0].mxu0
  %v219 = vpop.f32.mrb[0].mxu0
  %v220 = vadd.f32 %v56, %v219
  %v221 = vpop.f32.mrb[0].mxu0
  %222 = vdwg.mxu0
  %v223 = vadd.f32 %v209, %v212
  %v224 = vadd.f32 %v223, %v217
  %v225 = vadd.f32 %v224, %v220
  %v226 = vrot.slane %v225, 4
  %v227 = vadd.f32 %v225, %v226
  %v228 = vrot.slane %v227, 2
  %v229 = vadd.f32 %v227, %v228
  %v230 = vrot.slane %v229, 1
  %v231 = vadd.f32 %v229, %v230
  %v232 = vmul.f32 %v231, 0.03125
  %v233 = vmul.f32 %v209, %v209
  %v234 = vmul.f32 %v212, %v212
  %v235 = vmul.f32 %v217, %v217
  %v236 = vmul.f32 %v220, %v220
  %v237 = vadd.f32 %v233, %v234
  %v238 = vadd.f32 %v237, %v235
  %v239 = vadd.f32 %v238, %v236
  %v240 = vrot.slane %v239, 4
  %v241 = vadd.f32 %v239, %v240
  %v242 = vrot.slane %v241, 2
  %v243 = vadd.f32 %v241, %v242
  %v244 = vrot.slane %v243, 1
  %v245 = vadd.f32 %v243, %v244
  %v246 = vmul.f32 %v245, 0.03125
  %v247 = vmul.f32 %v232, %v232
  %v248 = vsub.f32 %v246, %v247
  %v249 = vsub.f32 %v209, %v232
  %v250 = vsub.f32 %v212, %v232
  %v251 = vsub.f32 %v217, %v232
  %v252 = vsub.f32 %v220, %v232
  %v253 = vadd.f32 %v248, 1e-05
  %v254 = vrsqrt.pop %v253
  %v255 = vmul.f32 %v249, %v254
  %v256 = vmul.f32 %v250, %v254
  %v257 = vmul.f32 %v251, %v254
  %v258 = vmul.f32 %v252, %v254
  %vm259 = vcmp.ge.f32.partialorder %v255, 0.0
  %vm260 = vcmp.ge.f32.partialorder %v256, 0.0
  %vm261 = vcmp.ge.f32.partialorder %v257, 0.0
  %vm262 = vcmp.ge.f32.partialorder %v258, 0.0
  %v263 = vmul.f32 %v255, 0.2
  %v264 = vmul.f32 %v256, 0.2
  %v265 = vmul.f32 %v257, 0.2
  %v266 = vmul.f32 %v258, 0.2
  %v267 = vsel %vm259, %v255, %v263
  %v268 = vsel %vm260, %v256, %v264
  %v269 = vsel %vm261, %v257, %v265
  %v270 = vsel %vm262, %v258, %v266
  %271 = vst [vmem:[%s3] sm:$0xff] %v267
  %272 = vst [vmem:[%s3 + $0x8] sm:$0xff] %v268
  %273 = vst [vmem:[%s3 + $0x10] sm:$0xff] %v269
  %274 = vst [vmem:[%s3 + $0x18] sm:$0xff] %v270
  // Predicated region
  $region14: #{generator_forward.12} parent=0 // pred_check
    _
  $region15: #{generator_forward.12} parent=0 // pred_check_branch
    %276 = sbr.rel (0) target = $region17
  $region16: #{generator_forward.12} parent=0 // pred_region
    _
  $region17: #{generator_forward.12} parent=0 // pred_fallthru
    _
  // Predicated region
  $region18: #{generator_forward.12} parent=0 // pred_check
    _
  $region19: #{generator_forward.12} parent=0 // pred_check_branch
    %278 = sbr.rel (0) target = $region21
  $region20: #{generator_forward.12} parent=0 // pred_region
    _
  $region21: #{generator_forward.12} parent=0 // pred_fallthru
    _

// kernel: generator_forward.13
$region0: #{generator_forward.13}
  #allocation0 [shape = 'u32[]', space=smem, size = 0x4, offset = 0x4, fixed_abs, tag = 'smem constant byte address 0x4 - core index']
  #allocation1 [shape = 'u32[144,128]{1,0:T(1,128)}', space=vmem, size = 0x12000, scoped, tag = 'internal scratch']
  %s0 = inlined_call_operand.vmem [shape: bf16[2,512], index: 0, kind: input, shape index: {}]
  %s1 = inlined_call_operand.vmem [shape: bf16[512,128], index: 1, kind: input, shape index: {}]
  %s2 = inlined_call_operand.vmem [shape: f32[1,128], index: 2, kind: input, shape index: {}]
  %s3 = inlined_call_operand.vmem [shape: f32[2,128], index: 3, kind: output, shape index: {}]
  %s4 = sld [smem:[#allocation0]]
  $region22: #{generator_forward.13} parent=0
    _
  %s6 = ssub.s32 1, %s4
  %s7 = scalar_select 0, %s6, %s4
  // Predicated region
  $region2: #{generator_forward.13} parent=0 // pred_check
    _
  $region3: #{generator_forward.13} parent=0 // pred_check_branch
    %9 = sbr.rel (0) target = $region5
  $region4: #{generator_forward.13} parent=0 // pred_region
    _
  $region5: #{generator_forward.13} parent=0 // pred_fallthru
    _
  // Predicated region
  $region6: #{generator_forward.13} parent=0 // pred_check
    _
  $region7: #{generator_forward.13} parent=0 // pred_check_branch
    %11 = sbr.rel (0) target = $region9
  $region8: #{generator_forward.13} parent=0 // pred_region
    _
  $region9: #{generator_forward.13} parent=0 // pred_fallthru
    _
  // Predicated region
  $region10: #{generator_forward.13} parent=0 // pred_check
    _
  $region11: #{generator_forward.13} parent=0 // pred_check_branch
    %13 = sbr.rel (0) target = $region13
  $region12: #{generator_forward.13} parent=0 // pred_region
    _
  $region13: #{generator_forward.13} parent=0 // pred_fallthru
    _
  %v15 = vld [vmem:[%s0] sm:$0xf]
  %v16 = vld [vmem:[%s1] sm:$0xf]
  %v17 = vld [vmem:[%s1 + $0x4] sm:$0xf]
  %v18 = vld [vmem:[%s1 + $0x8] sm:$0xf]
  %v19 = vld [vmem:[%s1 + $0xc] sm:$0xf]
  %v20 = vld [vmem:[%s1 + $0x10] sm:$0xf]
  %v21 = vld [vmem:[%s1 + $0x14] sm:$0xf]
  %v22 = vld [vmem:[%s1 + $0x18] sm:$0xf]
  %v23 = vld [vmem:[%s1 + $0x1c] sm:$0xf]
  %v24 = vld [vmem:[%s1 + $0x20] sm:$0xf]
  %v25 = vld [vmem:[%s1 + $0x24] sm:$0xf]
  %v26 = vld [vmem:[%s1 + $0x28] sm:$0xf]
  %v27 = vld [vmem:[%s1 + $0x2c] sm:$0xf]
  %v28 = vld [vmem:[%s1 + $0x30] sm:$0xf]
  %v29 = vld [vmem:[%s1 + $0x34] sm:$0xf]
  %v30 = vld [vmem:[%s1 + $0x38] sm:$0xf]
  %v31 = vld [vmem:[%s1 + $0x3c] sm:$0xf]
  %v32 = vld [vmem:[%s1 + $0x40] sm:$0xf]
  %v33 = vld [vmem:[%s1 + $0x44] sm:$0xf]
  %v34 = vld [vmem:[%s1 + $0x48] sm:$0xf]
  %v35 = vld [vmem:[%s1 + $0x4c] sm:$0xf]
  %v36 = vld [vmem:[%s1 + $0x50] sm:$0xf]
  %v37 = vld [vmem:[%s1 + $0x54] sm:$0xf]
  %v38 = vld [vmem:[%s1 + $0x58] sm:$0xf]
  %v39 = vld [vmem:[%s1 + $0x5c] sm:$0xf]
  %v40 = vld [vmem:[%s1 + $0x60] sm:$0xf]
  %v41 = vld [vmem:[%s1 + $0x64] sm:$0xf]
  %v42 = vld [vmem:[%s1 + $0x68] sm:$0xf]
  %v43 = vld [vmem:[%s1 + $0x6c] sm:$0xf]
  %v44 = vld [vmem:[%s1 + $0x70] sm:$0xf]
  %v45 = vld [vmem:[%s1 + $0x74] sm:$0xf]
  %v46 = vld [vmem:[%s1 + $0x78] sm:$0xf]
  %v47 = vld [vmem:[%s1 + $0x7c] sm:$0xf]
  %v48 = vld [vmem:[%s1 + $0x80] sm:$0xf]
  %v49 = vld [vmem:[%s1 + $0x84] sm:$0xf]
  %v50 = vld [vmem:[%s1 + $0x88] sm:$0xf]
  %v51 = vld [vmem:[%s1 + $0x8c] sm:$0xf]
  %v52 = vld [vmem:[%s1 + $0x90] sm:$0xf]
  %v53 = vld [vmem:[%s1 + $0x94] sm:$0xf]
  %v54 = vld [vmem:[%s1 + $0x98] sm:$0xf]
  %v55 = vld [vmem:[%s1 + $0x9c] sm:$0xf]
  %v56 = vld [vmem:[%s1 + $0xa0] sm:$0xf]
  %v57 = vld [vmem:[%s1 + $0xa4] sm:$0xf]
  %v58 = vld [vmem:[%s1 + $0xa8] sm:$0xf]
  %v59 = vld [vmem:[%s1 + $0xac] sm:$0xf]
  %v60 = vld [vmem:[%s1 + $0xb0] sm:$0xf]
  %v61 = vld [vmem:[%s1 + $0xb4] sm:$0xf]
  %v62 = vld [vmem:[%s1 + $0xb8] sm:$0xf]
  %v63 = vld [vmem:[%s1 + $0xbc] sm:$0xf]
  %v64 = vld [vmem:[%s1 + $0xc0] sm:$0xf]
  %v65 = vld [vmem:[%s1 + $0xc4] sm:$0xf]
  %v66 = vld [vmem:[%s1 + $0xc8] sm:$0xf]
  %v67 = vld [vmem:[%s1 + $0xcc] sm:$0xf]
  %v68 = vld [vmem:[%s1 + $0xd0] sm:$0xf]
  %v69 = vld [vmem:[%s1 + $0xd4] sm:$0xf]
  %v70 = vld [vmem:[%s1 + $0xd8] sm:$0xf]
  %v71 = vld [vmem:[%s1 + $0xdc] sm:$0xf]
  %v72 = vld [vmem:[%s1 + $0xe0] sm:$0xf]
  %v73 = vld [vmem:[%s1 + $0xe4] sm:$0xf]
  %v74 = vld [vmem:[%s1 + $0xe8] sm:$0xf]
  %v75 = vld [vmem:[%s1 + $0xec] sm:$0xf]
  %v76 = vld [vmem:[%s1 + $0xf0] sm:$0xf]
  %v77 = vld [vmem:[%s1 + $0xf4] sm:$0xf]
  %v78 = vld [vmem:[%s1 + $0xf8] sm:$0xf]
  %v79 = vld [vmem:[%s1 + $0xfc] sm:$0xf]
  %v80 = vld [vmem:[%s2] sm:$0x1]
  %v82 = vlaneseq
  %v83 = vshrl.u32 %v82, 7
  %v84 = vsub.s32 0, %v83
  %v85 = vrot.slane %v80, %v84
  %v89 = vunpack.c.l.s4 1966171168
  %v90 = vunpack.c.0.s8 %v89
  %v91 = vlaneseq
  %v92 = vshrl.u32 %v91, 7
  %v93 = vsub.s32 %v90, %v92
  %v94 = vrot.slane %v15, %v93
  %v95 = vcombine.high %v94, %v94
  %v97 = vunpack.c.l.s4 1966171168
  %v98 = vunpack.c.0.s8 %v97
  %v99 = vlaneseq
  %v100 = vshrl.u32 %v99, 7
  %v101 = vsub.s32 %v98, %v100
  %v102 = vrot.slane %v94, %v101
  %v104 = vunpack.c.l.s4 1966171168
  %v105 = vunpack.c.0.s8 %v104
  %v106 = vlaneseq
  %v107 = vshrl.u32 %v106, 7
  %v108 = vsub.s32 %v105, %v107
  %v109 = vrot.slane %v95, %v108
  %v110 = vcombine.high %v102, %v102
  %v111 = vcombine.high %v109, %v109
  %v180 = vunpack.c.l.b16 %v16
  %v181 = vunpack.c.l.b16 %v17
  %v182 = vunpack.c.l.b16 %v18
  %v183 = vunpack.c.l.b16 %v19
  %v184 = vunpack.c.l.b16 %v20
  %v185 = vunpack.c.l.b16 %v21
  %v186 = vunpack.c.l.b16 %v22
  %v187 = vunpack.c.l.b16 %v23
  %v188 = vunpack.c.l.b16 %v24
  %v189 = vunpack.c.l.b16 %v25
  %v190 = vunpack.c.l.b16 %v26
  %v191 = vunpack.c.l.b16 %v27
  %v192 = vunpack.c.l.b16 %v28
  %v193 = vunpack.c.l.b16 %v29
  %v194 = vunpack.c.l.b16 %v30
  %v195 = vunpack.c.l.b16 %v31
  %v196 = vunpack.c.l.b16 %v32
  %v197 = vunpack.c.l.b16 %v33
  %v198 = vunpack.c.l.b16 %v34
  %v199 = vunpack.c.l.b16 %v35
  %v200 = vunpack.c.l.b16 %v36
  %v201 = vunpack.c.l.b16 %v37
  %v202 = vunpack.c.l.b16 %v38
  %v203 = vunpack.c.l.b16 %v39
  %v204 = vunpack.c.l.b16 %v40
  %v205 = vunpack.c.l.b16 %v41
  %v206 = vunpack.c.l.b16 %v42
  %v207 = vunpack.c.l.b16 %v43
  %v208 = vunpack.c.l.b16 %v44
  %v209 = vunpack.c.l.b16 %v45
  %v210 = vunpack.c.l.b16 %v46
  %v211 = vunpack.c.l.b16 %v47
  %v212 = vunpack.c.l.b16 %v48
  %v213 = vunpack.c.l.b16 %v49
  %v214 = vunpack.c.l.b16 %v50
  %v215 = vunpack.c.l.b16 %v51
  %v216 = vunpack.c.l.b16 %v52
  %v217 = vunpack.c.l.b16 %v53
  %v218 = vunpack.c.l.b16 %v54
  %v219 = vunpack.c.l.b16 %v55
  %v220 = vunpack.c.l.b16 %v56
  %v221 = vunpack.c.l.b16 %v57
  %v222 = vunpack.c.l.b16 %v58
  %v223 = vunpack.c.l.b16 %v59
  %v224 = vunpack.c.l.b16 %v60
  %v225 = vunpack.c.l.b16 %v61
  %v226 = vunpack.c.l.b16 %v62
  %v227 = vunpack.c.l.b16 %v63
  %v228 = vunpack.c.l.b16 %v64
  %v229 = vunpack.c.l.b16 %v65
  %v230 = vunpack.c.l.b16 %v66
  %v231 = vunpack.c.l.b16 %v67
  %v232 = vunpack.c.l.b16 %v68
  %v233 = vunpack.c.l.b16 %v69
  %v234 = vunpack.c.l.b16 %v70
  %v235 = vunpack.c.l.b16 %v71
  %v236 = vunpack.c.l.b16 %v72
  %v237 = vunpack.c.l.b16 %v73
  %v238 = vunpack.c.l.b16 %v74
  %v239 = vunpack.c.l.b16 %v75
  %v240 = vunpack.c.l.b16 %v76
  %v241 = vunpack.c.l.b16 %v77
  %v242 = vunpack.c.l.b16 %v78
  %v243 = vunpack.c.l.b16 %v79
  %v244 = vpack.c.b16 %v181, %v180
  %v245 = vpack.c.b16 %v183, %v182
  %v246 = vpack.c.b16 %v185, %v184
  %v247 = vpack.c.b16 %v187, %v186
  %v248 = vpack.c.b16 %v189, %v188
  %v249 = vpack.c.b16 %v191, %v190
  %v250 = vpack.c.b16 %v193, %v192
  %v251 = vpack.c.b16 %v195, %v194
  %v252 = vpack.c.b16 %v197, %v196
  %v253 = vpack.c.b16 %v199, %v198
  %v254 = vpack.c.b16 %v201, %v200
  %v255 = vpack.c.b16 %v203, %v202
  %v256 = vpack.c.b16 %v205, %v204
  %v257 = vpack.c.b16 %v207, %v206
  %v258 = vpack.c.b16 %v209, %v208
  %v259 = vpack.c.b16 %v211, %v210
  %v260 = vpack.c.b16 %v213, %v212
  %v261 = vpack.c.b16 %v215, %v214
  %v262 = vpack.c.b16 %v217, %v216
  %v263 = vpack.c.b16 %v219, %v218
  %v264 = vpack.c.b16 %v221, %v220
  %v265 = vpack.c.b16 %v223, %v222
  %v266 = vpack.c.b16 %v225, %v224
  %v267 = vpack.c.b16 %v227, %v226
  %v268 = vpack.c.b16 %v229, %v228
  %v269 = vpack.c.b16 %v231, %v230
  %v270 = vpack.c.b16 %v233, %v232
  %v271 = vpack.c.b16 %v235, %v234
  %v272 = vpack.c.b16 %v237, %v236
  %v273 = vpack.c.b16 %v239, %v238
  %v274 = vpack.c.b16 %v241, %v240
  %v275 = vpack.c.b16 %v243, %v242
  %308 = vmatprep.subr.bf16.mxu0 0
  %309 = vmatpush1.bf16.msra.mxu0 %v244
  %310 = vmatprep.subr.bf16.mxu0 0
  %311 = vmatpush1.bf16.msra.mxu0 %v245
  %312 = vmatprep.subr.bf16.mxu0 0
  %313 = vmatpush1.bf16.msra.mxu0 %v246
  %314 = vmatprep.subr.bf16.mxu0 0
  %315 = vmatpush1.bf16.msra.mxu0 %v247
  %316 = vmatprep.subr.bf16.mxu0 0
  %317 = vmatpush1.bf16.msra.mxu0 %v248
  %318 = vmatprep.subr.bf16.mxu0 0
  %319 = vmatpush1.bf16.msra.mxu0 %v249
  %320 = vmatprep.subr.bf16.mxu0 0
  %321 = vmatpush1.bf16.msra.mxu0 %v250
  %322 = vmatprep.subr.bf16.mxu0 0
  %323 = vmatpush1.bf16.msra.mxu0 %v251
  %324 = vmatprep.subr.bf16.mxu0 0
  %325 = vmatpush1.bf16.msra.mxu0 %v252
  %326 = vmatprep.subr.bf16.mxu0 0
  %327 = vmatpush1.bf16.msra.mxu0 %v253
  %328 = vmatprep.subr.bf16.mxu0 0
  %329 = vmatpush1.bf16.msra.mxu0 %v254
  %330 = vmatprep.subr.bf16.mxu0 0
  %331 = vmatpush1.bf16.msra.mxu0 %v255
  %332 = vmatprep.subr.bf16.mxu0 0
  %333 = vmatpush1.bf16.msra.mxu0 %v256
  %334 = vmatprep.subr.bf16.mxu0 0
  %335 = vmatpush1.bf16.msra.mxu0 %v257
  %336 = vmatprep.subr.bf16.mxu0 0
  %337 = vmatpush1.bf16.msra.mxu0 %v258
  %338 = vmatprep.subr.bf16.mxu0 0
  %339 = vmatpush1.bf16.msra.mxu0 %v259
  %340 = vmatprep.mubr.bf16.mxu0 %v109
  %341 = vmatmul.mubr.bf16.gmra.mrb[0].mxu0 %v102
  %v342 = vpop.f32.mrb[0].mxu0
  %v343 = vadd.f32 %v85, %v342
  %v344 = vpop.f32.mrb[0].mxu0
  %v345 = vpop.f32.mrb[0].mxu0
  %v346 = vpop.f32.mrb[0].mxu0
  %347 = vdwg.mxu0
  %348 = vmatprep.subr.bf16.mxu0 0
  %349 = vmatpush1.bf16.msra.mxu0 %v260
  %350 = vmatprep.subr.bf16.mxu0 0
  %351 = vmatpush1.bf16.msra.mxu0 %v261
  %352 = vmatprep.subr.bf16.mxu0 0
  %353 = vmatpush1.bf16.msra.mxu0 %v262
  %354 = vmatprep.subr.bf16.mxu0 0
  %355 = vmatpush1.bf16.msra.mxu0 %v263
  %356 = vmatprep.subr.bf16.mxu0 0
  %357 = vmatpush1.bf16.msra.mxu0 %v264
  %358 = vmatprep.subr.bf16.mxu0 0
  %359 = vmatpush1.bf16.msra.mxu0 %v265
  %360 = vmatprep.subr.bf16.mxu0 0
  %361 = vmatpush1.bf16.msra.mxu0 %v266
  %362 = vmatprep.subr.bf16.mxu0 0
  %363 = vmatpush1.bf16.msra.mxu0 %v267
  %364 = vmatprep.subr.bf16.mxu0 0
  %365 = vmatpush1.bf16.msra.mxu0 %v268
  %366 = vmatprep.subr.bf16.mxu0 0
  %367 = vmatpush1.bf16.msra.mxu0 %v269
  %368 = vmatprep.subr.bf16.mxu0 0
  %369 = vmatpush1.bf16.msra.mxu0 %v270
  %370 = vmatprep.subr.bf16.mxu0 0
  %371 = vmatpush1.bf16.msra.mxu0 %v271
  %372 = vmatprep.subr.bf16.mxu0 0
  %373 = vmatpush1.bf16.msra.mxu0 %v272
  %374 = vmatprep.subr.bf16.mxu0 0
  %375 = vmatpush1.bf16.msra.mxu0 %v273
  %376 = vmatprep.subr.bf16.mxu0 0
  %377 = vmatpush1.bf16.msra.mxu0 %v274
  %378 = vmatprep.subr.bf16.mxu0 0
  %379 = vmatpush1.bf16.msra.mxu0 %v275
  %380 = vmatprep.mubr.bf16.mxu0 %v111
  %381 = vmatmul.mubr.bf16.gmra.mrb[0].mxu0 %v110
  %v382 = vpop.f32.mrb[0].mxu0
  %v383 = vadd.f32 %v343, %v382
  %v384 = vpop.f32.mrb[0].mxu0
  %v385 = vpop.f32.mrb[0].mxu0
  %v386 = vpop.f32.mrb[0].mxu0
  %387 = vdwg.mxu0
  %v388 = vsub.f32 0.0, %v383
  %v389 = vmul.f32 %v388, 1.442695
  %v390 = vpow.pop %v389
  %v391 = vadd.f32 %v390, 1.0
  %v392 = vrcp.pop %v391
  %v393 = vmul.f32 1.0, %v392
  %394 = vst [vmem:[%s3] sm:$0x3] %v393
  // Predicated region
  $region14: #{generator_forward.13} parent=0 // pred_check
    _
  $region15: #{generator_forward.13} parent=0 // pred_check_branch
    %396 = sbr.rel (0) target = $region17
  $region16: #{generator_forward.13} parent=0 // pred_region
    _
  $region17: #{generator_forward.13} parent=0 // pred_fallthru
    _
  // Predicated region
  $region18: #{generator_forward.13} parent=0 // pred_check
    _
  $region19: #{generator_forward.13} parent=0 // pred_check_branch
    %398 = sbr.rel (0) target = $region21
  $region20: #{generator_forward.13} parent=0 // pred_region
    _
  $region21: #{generator_forward.13} parent=0 // pred_fallthru
    _

// kernel: generator_forward.14
$region0: #{generator_forward.14}
  #allocation0 [shape = 'u32[]', space=smem, size = 0x4, offset = 0x4, fixed_abs, tag = 'smem constant byte address 0x4 - core index']
  #allocation1 [shape = 'u32[144,128]{1,0:T(1,128)}', space=vmem, size = 0x12000, scoped, tag = 'internal scratch']
  %s0 = inlined_call_operand.vmem [shape: f32[2,16], index: 0, kind: input, shape index: {}]
  %s1 = inlined_call_operand.vmem [shape: f32[16,16], index: 1, kind: input, shape index: {}]
  %s2 = inlined_call_operand.vmem [shape: f32[6,2,16], index: 2, kind: input, shape index: {}]
  %s3 = inlined_call_operand.vmem [shape: f32[2,16], index: 3, kind: output, shape index: {}]
  %s4 = sld [smem:[#allocation0]]
  $region22: #{generator_forward.14} parent=0
    _
  %s6 = ssub.s32 1, %s4
  %s7 = scalar_select 0, %s6, %s4
  // Predicated region
  $region2: #{generator_forward.14} parent=0 // pred_check
    _
  $region3: #{generator_forward.14} parent=0 // pred_check_branch
    %9 = sbr.rel (0) target = $region5
  $region4: #{generator_forward.14} parent=0 // pred_region
    _
  $region5: #{generator_forward.14} parent=0 // pred_fallthru
    _
  // Predicated region
  $region6: #{generator_forward.14} parent=0 // pred_check
    _
  $region7: #{generator_forward.14} parent=0 // pred_check_branch
    %11 = sbr.rel (0) target = $region9
  $region8: #{generator_forward.14} parent=0 // pred_region
    _
  $region9: #{generator_forward.14} parent=0 // pred_fallthru
    _
  // Predicated region
  $region10: #{generator_forward.14} parent=0 // pred_check
    _
  $region11: #{generator_forward.14} parent=0 // pred_check_branch
    %13 = sbr.rel (0) target = $region13
  $region12: #{generator_forward.14} parent=0 // pred_region
    _
  $region13: #{generator_forward.14} parent=0 // pred_fallthru
    _
  %v14 = vld [vmem:[%s0] sm:$0x3]
  %v15 = vld [vmem:[%s2] sm:$0x3]
  %v16 = vadd.f32 %v14, %v15
  %vm17 = vcmask 123904
  %v18 = vsel %vm17, %v16, -inf
  %19 = vmax.xlane.f32.xlu0 %v18
  %v20 = vpop.xlane.xlu0 %19
  %v21 = vlaneseq
  %v22 = vand.u32 %v21, 127
  %vm23 = vcmp.ge.f32.partialorder %v16, %v20
  %v24 = vsel %vm23, %v22, 16
  %v25 = vsel %vm17, %v24, 2147483647
  %v26 = vand.u32 %v25, 65535
  %v27 = vshra.s32 %v25, 16
  %v28 = vcvt.s32.f32 %v26
  %v29 = vcvt.s32.f32 %v27
  %30 = vmin.xlane.f32.xlu0 %v29
  %v31 = vpop.xlane.xlu0 %30
  %vm32 = vcmp.eq.f32.partialorder %v29, %v31
  %v33 = vsel %vm32, %v28, inf
  %34 = vmin.xlane.f32.xlu0 %v33
  %v35 = vpop.xlane.xlu0 %34
  %v36 = vcvt.f32.s32 %v35
  %v37 = vcvt.f32.s32 %v31
  %v38 = vshll.u32 %v37, 16
  %v39 = vadd.s32 %v38, %v36
  %vm40 = vcmp.eq.s32.totalorder %v22, %v39
  %v41 = vsel %vm40, 1, 0
  %v42 = vcvt.s32.f32 %v41
  %vm43 = vcmp.eq.f32.partialorder %v42, 0.0
  %v44 = vld [vmem:[%s1] sm:$0xff]
  %v45 = vld [vmem:[%s1 + $0x8] sm:$0xff]
  %s46 = scalar_lea.vmem %s2, 2
  %v47 = vld [vmem:[%s46] sm:$0x3]
  %vm48 = vcmask 130048
  %v50 = vsel %vm48, %v42, 0
  %52 = vmatprep.subr.mxu0 0.0
  %53 = vmatpush1.msra.mxu0 %v44
  %54 = vmatprep.subr.mxu0 0.0
  %55 = vmatpush1.msra.mxu0 %v45
  %56 = vmatprep.subr.mxu0 0.0
  %57 = vmatpush1.msra.mxu0 0.0
  %58 = vmatprep.subr.mxu0 0.0
  %59 = vmatpush1.msra.mxu0 0.0
  %60 = vmatprep.subr.mxu0 0.0
  %61 = vmatpush1.msra.mxu0 0.0
  %62 = vmatprep.subr.mxu0 0.0
  %63 = vmatpush1.msra.mxu0 0.0
  %64 = vmatprep.subr.mxu0 0.0
  %65 = vmatpush1.msra.mxu0 0.0
  %66 = vmatprep.subr.mxu0 0.0
  %67 = vmatpush1.msra.mxu0 0.0
  %68 = vmatprep.subr.mxu0 0.0
  %69 = vmatpush1.msra.mxu0 0.0
  %70 = vmatprep.subr.mxu0 0.0
  %71 = vmatpush1.msra.mxu0 0.0
  %72 = vmatprep.subr.mxu0 0.0
  %73 = vmatpush1.msra.mxu0 0.0
  %74 = vmatprep.subr.mxu0 0.0
  %75 = vmatpush1.msra.mxu0 0.0
  %76 = vmatprep.subr.mxu0 0.0
  %77 = vmatpush1.msra.mxu0 0.0
  %78 = vmatprep.subr.mxu0 0.0
  %79 = vmatpush1.msra.mxu0 0.0
  %80 = vmatprep.subr.mxu0 0.0
  %81 = vmatpush1.msra.mxu0 0.0
  %82 = vmatprep.subr.mxu0 0.0
  %83 = vmatpush1.msra.mxu0 0.0
  %84 = vmatprep.subr.mxu0 0.0
  %85 = vmatpush1.msra.mxu0 0.0
  %86 = vmatprep.subr.mxu0 0.0
  %87 = vmatpush1.msra.mxu0 0.0
  %88 = vmatprep.subr.mxu0 0.0
  %89 = vmatpush1.msra.mxu0 0.0
  %90 = vmatprep.subr.mxu0 0.0
  %91 = vmatpush1.msra.mxu0 0.0
  %92 = vmatprep.subr.mxu0 0.0
  %93 = vmatpush1.msra.mxu0 0.0
  %94 = vmatprep.subr.mxu0 0.0
  %95 = vmatpush1.msra.mxu0 0.0
  %96 = vmatprep.subr.mxu0 0.0
  %97 = vmatpush1.msra.mxu0 0.0
  %98 = vmatprep.subr.mxu0 0.0
  %99 = vmatpush1.msra.mxu0 0.0
  %100 = vmatprep.subr.mxu0 0.0
  %101 = vmatpush1.msra.mxu0 0.0
  %102 = vmatprep.subr.mxu0 0.0
  %103 = vmatpush1.msra.mxu0 0.0
  %104 = vmatprep.subr.mxu0 0.0
  %105 = vmatpush1.msra.mxu0 0.0
  %106 = vmatprep.subr.mxu0 0.0
  %107 = vmatpush1.msra.mxu0 0.0
  %108 = vmatprep.subr.mxu0 0.0
  %109 = vmatpush1.msra.mxu0 0.0
  %110 = vmatprep.subr.mxu0 0.0
  %111 = vmatpush1.msra.mxu0 0.0
  %112 = vmatprep.subr.mxu0 0.0
  %113 = vmatpush1.msra.mxu0 0.0
  %114 = vmatprep.subr.mxu0 0.0
  %115 = vmatpush1.msra.mxu0 0.0
  %116 = vmatprep.mubr.f32.mxu0 0.0
  %117 = vmatmul.mubr.f32.gmra.mrb[0].mxu0 %v50
  %v118 = vpop.f32.mrb[0].mxu0
  %v119 = vadd.f32 %v47, %v118
  %v120 = vpop.f32.mrb[0].mxu0
  %121 = vdwg.mxu0
  %v122 = vsel %vm17, %v119, -inf
  %123 = vmax.xlane.f32.xlu0 %v122
  %v124 = vpop.xlane.xlu0 %123
  %vm125 = vcmp.ge.f32.partialorder %v119, %v124
  %v126 = vsel %vm125, %v22, 16
  %v127 = vsel %vm17, %v126, 2147483647
  %v128 = vand.u32 %v127, 65535
  %v129 = vshra.s32 %v127, 16
  %v130 = vcvt.s32.f32 %v128
  %v131 = vcvt.s32.f32 %v129
  %132 = vmin.xlane.f32.xlu0 %v131
  %v133 = vpop.xlane.xlu0 %132
  %vm134 = vcmp.eq.f32.partialorder %v131, %v133
  %v135 = vsel %vm134, %v130, inf
  %136 = vmin.xlane.f32.xlu0 %v135
  %v137 = vpop.xlane.xlu0 %136
  %v138 = vcvt.f32.s32 %v137
  %v139 = vcvt.f32.s32 %v133
  %v140 = vshll.u32 %v139, 16
  %v141 = vadd.s32 %v140, %v138
  %vm142 = vcmp.eq.s32.totalorder %v22, %v141
  %v143 = vsel %vm142, 1, 0
  %v144 = vcvt.s32.f32 %v143
  %v145 = vsel %vm43, 1, 0
  %146 = vset.pattern.permute.xlu0 15
  %147 = vperm.xlu0 %146, %v145
  %v148 = vpop.permute.xlu0 %147
  %vm149 = vcmp.eq.s32.totalorder %v148, 1
  %v150 = vsel %vm149, %v144, %v42
  %vm151 = vcmp.eq.f32.partialorder %v150, 0.0
  %s152 = scalar_lea.vmem %s2, 4
  %v153 = vld [vmem:[%s152] sm:$0x3]
  %v155 = vsel %vm48, %v150, 0
  %157 = vmatprep.subr.mxu0 0.0
  %158 = vmatpush1.msra.mxu0 %v44
  %159 = vmatprep.subr.mxu0 0.0
  %160 = vmatpush1.msra.mxu0 %v45
  %161 = vmatprep.subr.mxu0 0.0
  %162 = vmatpush1.msra.mxu0 0.0
  %163 = vmatprep.subr.mxu0 0.0
  %164 = vmatpush1.msra.mxu0 0.0
  %165 = vmatprep.subr.mxu0 0.0
  %166 = vmatpush1.msra.mxu0 0.0
  %167 = vmatprep.subr.mxu0 0.0
  %168 = vmatpush1.msra.mxu0 0.0
  %169 = vmatprep.subr.mxu0 0.0
  %170 = vmatpush1.msra.mxu0 0.0
  %171 = vmatprep.subr.mxu0 0.0
  %172 = vmatpush1.msra.mxu0 0.0
  %173 = vmatprep.subr.mxu0 0.0
  %174 = vmatpush1.msra.mxu0 0.0
  %175 = vmatprep.subr.mxu0 0.0
  %176 = vmatpush1.msra.mxu0 0.0
  %177 = vmatprep.subr.mxu0 0.0
  %178 = vmatpush1.msra.mxu0 0.0
  %179 = vmatprep.subr.mxu0 0.0
  %180 = vmatpush1.msra.mxu0 0.0
  %181 = vmatprep.subr.mxu0 0.0
  %182 = vmatpush1.msra.mxu0 0.0
  %183 = vmatprep.subr.mxu0 0.0
  %184 = vmatpush1.msra.mxu0 0.0
  %185 = vmatprep.subr.mxu0 0.0
  %186 = vmatpush1.msra.mxu0 0.0
  %187 = vmatprep.subr.mxu0 0.0
  %188 = vmatpush1.msra.mxu0 0.0
  %189 = vmatprep.subr.mxu0 0.0
  %190 = vmatpush1.msra.mxu0 0.0
  %191 = vmatprep.subr.mxu0 0.0
  %192 = vmatpush1.msra.mxu0 0.0
  %193 = vmatprep.subr.mxu0 0.0
  %194 = vmatpush1.msra.mxu0 0.0
  %195 = vmatprep.subr.mxu0 0.0
  %196 = vmatpush1.msra.mxu0 0.0
  %197 = vmatprep.subr.mxu0 0.0
  %198 = vmatpush1.msra.mxu0 0.0
  %199 = vmatprep.subr.mxu0 0.0
  %200 = vmatpush1.msra.mxu0 0.0
  %201 = vmatprep.subr.mxu0 0.0
  %202 = vmatpush1.msra.mxu0 0.0
  %203 = vmatprep.subr.mxu0 0.0
  %204 = vmatpush1.msra.mxu0 0.0
  %205 = vmatprep.subr.mxu0 0.0
  %206 = vmatpush1.msra.mxu0 0.0
  %207 = vmatprep.subr.mxu0 0.0
  %208 = vmatpush1.msra.mxu0 0.0
  %209 = vmatprep.subr.mxu0 0.0
  %210 = vmatpush1.msra.mxu0 0.0
  %211 = vmatprep.subr.mxu0 0.0
  %212 = vmatpush1.msra.mxu0 0.0
  %213 = vmatprep.subr.mxu0 0.0
  %214 = vmatpush1.msra.mxu0 0.0
  %215 = vmatprep.subr.mxu0 0.0
  %216 = vmatpush1.msra.mxu0 0.0
  %217 = vmatprep.subr.mxu0 0.0
  %218 = vmatpush1.msra.mxu0 0.0
  %219 = vmatprep.subr.mxu0 0.0
  %220 = vmatpush1.msra.mxu0 0.0
  %221 = vmatprep.mubr.f32.mxu0 0.0
  %222 = vmatmul.mubr.f32.gmra.mrb[0].mxu0 %v155
  %v223 = vpop.f32.mrb[0].mxu0
  %v224 = vadd.f32 %v153, %v223
  %v225 = vpop.f32.mrb[0].mxu0
  %226 = vdwg.mxu0
  %v227 = vsel %vm17, %v224, -inf
  %228 = vmax.xlane.f32.xlu0 %v227
  %v229 = vpop.xlane.xlu0 %228
  %vm230 = vcmp.ge.f32.partialorder %v224, %v229
  %v231 = vsel %vm230, %v22, 16
  %v232 = vsel %vm17, %v231, 2147483647
  %v233 = vand.u32 %v232, 65535
  %v234 = vshra.s32 %v232, 16
  %v235 = vcvt.s32.f32 %v233
  %v236 = vcvt.s32.f32 %v234
  %237 = vmin.xlane.f32.xlu0 %v236
  %v238 = vpop.xlane.xlu0 %237
  %vm239 = vcmp.eq.f32.partialorder %v236, %v238
  %v240 = vsel %vm239, %v235, inf
  %241 = vmin.xlane.f32.xlu0 %v240
  %v242 = vpop.xlane.xlu0 %241
  %v243 = vcvt.f32.s32 %v242
  %v244 = vcvt.f32.s32 %v238
  %v245 = vshll.u32 %v244, 16
  %v246 = vadd.s32 %v245, %v243
  %vm247 = vcmp.eq.s32.totalorder %v22, %v246
  %v248 = vsel %vm247, 1, 0
  %v249 = vcvt.s32.f32 %v248
  %v250 = vsel %vm151, 1, 0
  %251 = vset.pattern.permute.xlu0 15
  %252 = vperm.xlu0 %251, %v250
  %v253 = vpop.permute.xlu0 %252
  %vm254 = vcmp.eq.s32.totalorder %v253, 1
  %v255 = vsel %vm254, %v249, %v150
  %vm256 = vcmp.eq.f32.partialorder %v255, 0.0
  %s257 = scalar_lea.vmem %s2, 6
  %v258 = vld [vmem:[%s257] sm:$0x3]
  %v260 = vsel %vm48, %v255, 0
  %262 = vmatprep.subr.mxu0 0.0
  %263 = vmatpush1.msra.mxu0 %v44
  %264 = vmatprep.subr.mxu0 0.0
  %265 = vmatpush1.msra.mxu0 %v45
  %266 = vmatprep.subr.mxu0 0.0
  %267 = vmatpush1.msra.mxu0 0.0
  %268 = vmatprep.subr.mxu0 0.0
  %269 = vmatpush1.msra.mxu0 0.0
  %270 = vmatprep.subr.mxu0 0.0
  %271 = vmatpush1.msra.mxu0 0.0
  %272 = vmatprep.subr.mxu0 0.0
  %273 = vmatpush1.msra.mxu0 0.0
  %274 = vmatprep.subr.mxu0 0.0
  %275 = vmatpush1.msra.mxu0 0.0
  %276 = vmatprep.subr.mxu0 0.0
  %277 = vmatpush1.msra.mxu0 0.0
  %278 = vmatprep.subr.mxu0 0.0
  %279 = vmatpush1.msra.mxu0 0.0
  %280 = vmatprep.subr.mxu0 0.0
  %281 = vmatpush1.msra.mxu0 0.0
  %282 = vmatprep.subr.mxu0 0.0
  %283 = vmatpush1.msra.mxu0 0.0
  %284 = vmatprep.subr.mxu0 0.0
  %285 = vmatpush1.msra.mxu0 0.0
  %286 = vmatprep.subr.mxu0 0.0
  %287 = vmatpush1.msra.mxu0 0.0
  %288 = vmatprep.subr.mxu0 0.0
  %289 = vmatpush1.msra.mxu0 0.0
  %290 = vmatprep.subr.mxu0 0.0
  %291 = vmatpush1.msra.mxu0 0.0
  %292 = vmatprep.subr.mxu0 0.0
  %293 = vmatpush1.msra.mxu0 0.0
  %294 = vmatprep.subr.mxu0 0.0
  %295 = vmatpush1.msra.mxu0 0.0
  %296 = vmatprep.subr.mxu0 0.0
  %297 = vmatpush1.msra.mxu0 0.0
  %298 = vmatprep.subr.mxu0 0.0
  %299 = vmatpush1.msra.mxu0 0.0
  %300 = vmatprep.subr.mxu0 0.0
  %301 = vmatpush1.msra.mxu0 0.0
  %302 = vmatprep.subr.mxu0 0.0
  %303 = vmatpush1.msra.mxu0 0.0
  %304 = vmatprep.subr.mxu0 0.0
  %305 = vmatpush1.msra.mxu0 0.0
  %306 = vmatprep.subr.mxu0 0.0
  %307 = vmatpush1.msra.mxu0 0.0
  %308 = vmatprep.subr.mxu0 0.0
  %309 = vmatpush1.msra.mxu0 0.0
  %310 = vmatprep.subr.mxu0 0.0
  %311 = vmatpush1.msra.mxu0 0.0
  %312 = vmatprep.subr.mxu0 0.0
  %313 = vmatpush1.msra.mxu0 0.0
  %314 = vmatprep.subr.mxu0 0.0
  %315 = vmatpush1.msra.mxu0 0.0
  %316 = vmatprep.subr.mxu0 0.0
  %317 = vmatpush1.msra.mxu0 0.0
  %318 = vmatprep.subr.mxu0 0.0
  %319 = vmatpush1.msra.mxu0 0.0
  %320 = vmatprep.subr.mxu0 0.0
  %321 = vmatpush1.msra.mxu0 0.0
  %322 = vmatprep.subr.mxu0 0.0
  %323 = vmatpush1.msra.mxu0 0.0
  %324 = vmatprep.subr.mxu0 0.0
  %325 = vmatpush1.msra.mxu0 0.0
  %326 = vmatprep.mubr.f32.mxu0 0.0
  %327 = vmatmul.mubr.f32.gmra.mrb[0].mxu0 %v260
  %v328 = vpop.f32.mrb[0].mxu0
  %v329 = vadd.f32 %v258, %v328
  %v330 = vpop.f32.mrb[0].mxu0
  %331 = vdwg.mxu0
  %v332 = vsel %vm17, %v329, -inf
  %333 = vmax.xlane.f32.xlu0 %v332
  %v334 = vpop.xlane.xlu0 %333
  %vm335 = vcmp.ge.f32.partialorder %v329, %v334
  %v336 = vsel %vm335, %v22, 16
  %v337 = vsel %vm17, %v336, 2147483647
  %v338 = vand.u32 %v337, 65535
  %v339 = vshra.s32 %v337, 16
  %v340 = vcvt.s32.f32 %v338
  %v341 = vcvt.s32.f32 %v339
  %342 = vmin.xlane.f32.xlu0 %v341
  %v343 = vpop.xlane.xlu0 %342
  %vm344 = vcmp.eq.f32.partialorder %v341, %v343
  %v345 = vsel %vm344, %v340, inf
  %346 = vmin.xlane.f32.xlu0 %v345
  %v347 = vpop.xlane.xlu0 %346
  %v348 = vcvt.f32.s32 %v347
  %v349 = vcvt.f32.s32 %v343
  %v350 = vshll.u32 %v349, 16
  %v351 = vadd.s32 %v350, %v348
  %vm352 = vcmp.eq.s32.totalorder %v22, %v351
  %v353 = vsel %vm352, 1, 0
  %v354 = vcvt.s32.f32 %v353
  %v355 = vsel %vm256, 1, 0
  %356 = vset.pattern.permute.xlu0 15
  %357 = vperm.xlu0 %356, %v355
  %v358 = vpop.permute.xlu0 %357
  %vm359 = vcmp.eq.s32.totalorder %v358, 1
  %v360 = vsel %vm359, %v354, %v255
  %vm361 = vcmp.eq.f32.partialorder %v360, 0.0
  %s362 = scalar_lea.vmem %s2, 8
  %v363 = vld [vmem:[%s362] sm:$0x3]
  %v365 = vsel %vm48, %v360, 0
  %367 = vmatprep.subr.mxu0 0.0
  %368 = vmatpush1.msra.mxu0 %v44
  %369 = vmatprep.subr.mxu0 0.0
  %370 = vmatpush1.msra.mxu0 %v45
  %371 = vmatprep.subr.mxu0 0.0
  %372 = vmatpush1.msra.mxu0 0.0
  %373 = vmatprep.subr.mxu0 0.0
  %374 = vmatpush1.msra.mxu0 0.0
  %375 = vmatprep.subr.mxu0 0.0
  %376 = vmatpush1.msra.mxu0 0.0
  %377 = vmatprep.subr.mxu0 0.0
  %378 = vmatpush1.msra.mxu0 0.0
  %379 = vmatprep.subr.mxu0 0.0
  %380 = vmatpush1.msra.mxu0 0.0
  %381 = vmatprep.subr.mxu0 0.0
  %382 = vmatpush1.msra.mxu0 0.0
  %383 = vmatprep.subr.mxu0 0.0
  %384 = vmatpush1.msra.mxu0 0.0
  %385 = vmatprep.subr.mxu0 0.0
  %386 = vmatpush1.msra.mxu0 0.0
  %387 = vmatprep.subr.mxu0 0.0
  %388 = vmatpush1.msra.mxu0 0.0
  %389 = vmatprep.subr.mxu0 0.0
  %390 = vmatpush1.msra.mxu0 0.0
  %391 = vmatprep.subr.mxu0 0.0
  %392 = vmatpush1.msra.mxu0 0.0
  %393 = vmatprep.subr.mxu0 0.0
  %394 = vmatpush1.msra.mxu0 0.0
  %395 = vmatprep.subr.mxu0 0.0
  %396 = vmatpush1.msra.mxu0 0.0
  %397 = vmatprep.subr.mxu0 0.0
  %398 = vmatpush1.msra.mxu0 0.0
  %399 = vmatprep.subr.mxu0 0.0
  %400 = vmatpush1.msra.mxu0 0.0
  %401 = vmatprep.subr.mxu0 0.0
  %402 = vmatpush1.msra.mxu0 0.0
  %403 = vmatprep.subr.mxu0 0.0
  %404 = vmatpush1.msra.mxu0 0.0
  %405 = vmatprep.subr.mxu0 0.0
  %406 = vmatpush1.msra.mxu0 0.0
  %407 = vmatprep.subr.mxu0 0.0
  %408 = vmatpush1.msra.mxu0 0.0
  %409 = vmatprep.subr.mxu0 0.0
  %410 = vmatpush1.msra.mxu0 0.0
  %411 = vmatprep.subr.mxu0 0.0
  %412 = vmatpush1.msra.mxu0 0.0
  %413 = vmatprep.subr.mxu0 0.0
  %414 = vmatpush1.msra.mxu0 0.0
  %415 = vmatprep.subr.mxu0 0.0
  %416 = vmatpush1.msra.mxu0 0.0
  %417 = vmatprep.subr.mxu0 0.0
  %418 = vmatpush1.msra.mxu0 0.0
  %419 = vmatprep.subr.mxu0 0.0
  %420 = vmatpush1.msra.mxu0 0.0
  %421 = vmatprep.subr.mxu0 0.0
  %422 = vmatpush1.msra.mxu0 0.0
  %423 = vmatprep.subr.mxu0 0.0
  %424 = vmatpush1.msra.mxu0 0.0
  %425 = vmatprep.subr.mxu0 0.0
  %426 = vmatpush1.msra.mxu0 0.0
  %427 = vmatprep.subr.mxu0 0.0
  %428 = vmatpush1.msra.mxu0 0.0
  %429 = vmatprep.subr.mxu0 0.0
  %430 = vmatpush1.msra.mxu0 0.0
  %431 = vmatprep.mubr.f32.mxu0 0.0
  %432 = vmatmul.mubr.f32.gmra.mrb[0].mxu0 %v365
  %v433 = vpop.f32.mrb[0].mxu0
  %v434 = vadd.f32 %v363, %v433
  %v435 = vpop.f32.mrb[0].mxu0
  %436 = vdwg.mxu0
  %v437 = vsel %vm17, %v434, -inf
  %438 = vmax.xlane.f32.xlu0 %v437
  %v439 = vpop.xlane.xlu0 %438
  %vm440 = vcmp.ge.f32.partialorder %v434, %v439
  %v441 = vsel %vm440, %v22, 16
  %v442 = vsel %vm17, %v441, 2147483647
  %v443 = vand.u32 %v442, 65535
  %v444 = vshra.s32 %v442, 16
  %v445 = vcvt.s32.f32 %v443
  %v446 = vcvt.s32.f32 %v444
  %447 = vmin.xlane.f32.xlu0 %v446
  %v448 = vpop.xlane.xlu0 %447
  %vm449 = vcmp.eq.f32.partialorder %v446, %v448
  %v450 = vsel %vm449, %v445, inf
  %451 = vmin.xlane.f32.xlu0 %v450
  %v452 = vpop.xlane.xlu0 %451
  %v453 = vcvt.f32.s32 %v452
  %v454 = vcvt.f32.s32 %v448
  %v455 = vshll.u32 %v454, 16
  %v456 = vadd.s32 %v455, %v453
  %vm457 = vcmp.eq.s32.totalorder %v22, %v456
  %v458 = vsel %vm457, 1, 0
  %v459 = vcvt.s32.f32 %v458
  %v460 = vsel %vm361, 1, 0
  %461 = vset.pattern.permute.xlu0 15
  %462 = vperm.xlu0 %461, %v460
  %v463 = vpop.permute.xlu0 %462
  %vm464 = vcmp.eq.s32.totalorder %v463, 1
  %v465 = vsel %vm464, %v459, %v360
  %vm466 = vcmp.eq.f32.partialorder %v465, 0.0
  %s467 = scalar_lea.vmem %s2, 10
  %v468 = vld [vmem:[%s467] sm:$0x3]
  %v470 = vsel %vm48, %v465, 0
  %472 = vmatprep.subr.mxu0 0.0
  %473 = vmatpush1.msra.mxu0 %v44
  %474 = vmatprep.subr.mxu0 0.0
  %475 = vmatpush1.msra.mxu0 %v45
  %476 = vmatprep.subr.mxu0 0.0
  %477 = vmatpush1.msra.mxu0 0.0
  %478 = vmatprep.subr.mxu0 0.0
  %479 = vmatpush1.msra.mxu0 0.0
  %480 = vmatprep.subr.mxu0 0.0
  %481 = vmatpush1.msra.mxu0 0.0
  %482 = vmatprep.subr.mxu0 0.0
  %483 = vmatpush1.msra.mxu0 0.0
  %484 = vmatprep.subr.mxu0 0.0
  %485 = vmatpush1.msra.mxu0 0.0
  %486 = vmatprep.subr.mxu0 0.0
  %487 = vmatpush1.msra.mxu0 0.0
  %488 = vmatprep.subr.mxu0 0.0
  %489 = vmatpush1.msra.mxu0 0.0
  %490 = vmatprep.subr.mxu0 0.0
  %491 = vmatpush1.msra.mxu0 0.0
  %492 = vmatprep.subr.mxu0 0.0
  %493 = vmatpush1.msra.mxu0 0.0
  %494 = vmatprep.subr.mxu0 0.0
  %495 = vmatpush1.msra.mxu0 0.0
  %496 = vmatprep.subr.mxu0 0.0
  %497 = vmatpush1.msra.mxu0 0.0
  %498 = vmatprep.subr.mxu0 0.0
  %499 = vmatpush1.msra.mxu0 0.0
  %500 = vmatprep.subr.mxu0 0.0
  %501 = vmatpush1.msra.mxu0 0.0
  %502 = vmatprep.subr.mxu0 0.0
  %503 = vmatpush1.msra.mxu0 0.0
  %504 = vmatprep.subr.mxu0 0.0
  %505 = vmatpush1.msra.mxu0 0.0
  %506 = vmatprep.subr.mxu0 0.0
  %507 = vmatpush1.msra.mxu0 0.0
  %508 = vmatprep.subr.mxu0 0.0
  %509 = vmatpush1.msra.mxu0 0.0
  %510 = vmatprep.subr.mxu0 0.0
  %511 = vmatpush1.msra.mxu0 0.0
  %512 = vmatprep.subr.mxu0 0.0
  %513 = vmatpush1.msra.mxu0 0.0
  %514 = vmatprep.subr.mxu0 0.0
  %515 = vmatpush1.msra.mxu0 0.0
  %516 = vmatprep.subr.mxu0 0.0
  %517 = vmatpush1.msra.mxu0 0.0
  %518 = vmatprep.subr.mxu0 0.0
  %519 = vmatpush1.msra.mxu0 0.0
  %520 = vmatprep.subr.mxu0 0.0
  %521 = vmatpush1.msra.mxu0 0.0
  %522 = vmatprep.subr.mxu0 0.0
  %523 = vmatpush1.msra.mxu0 0.0
  %524 = vmatprep.subr.mxu0 0.0
  %525 = vmatpush1.msra.mxu0 0.0
  %526 = vmatprep.subr.mxu0 0.0
  %527 = vmatpush1.msra.mxu0 0.0
  %528 = vmatprep.subr.mxu0 0.0
  %529 = vmatpush1.msra.mxu0 0.0
  %530 = vmatprep.subr.mxu0 0.0
  %531 = vmatpush1.msra.mxu0 0.0
  %532 = vmatprep.subr.mxu0 0.0
  %533 = vmatpush1.msra.mxu0 0.0
  %534 = vmatprep.subr.mxu0 0.0
  %535 = vmatpush1.msra.mxu0 0.0
  %536 = vmatprep.mubr.f32.mxu0 0.0
  %537 = vmatmul.mubr.f32.gmra.mrb[0].mxu0 %v470
  %v538 = vpop.f32.mrb[0].mxu0
  %v539 = vadd.f32 %v468, %v538
  %v540 = vpop.f32.mrb[0].mxu0
  %541 = vdwg.mxu0
  %v542 = vsel %vm17, %v539, -inf
  %543 = vmax.xlane.f32.xlu0 %v542
  %v544 = vpop.xlane.xlu0 %543
  %vm545 = vcmp.ge.f32.partialorder %v539, %v544
  %v546 = vsel %vm545, %v22, 16
  %v547 = vsel %vm17, %v546, 2147483647
  %v548 = vand.u32 %v547, 65535
  %v549 = vshra.s32 %v547, 16
  %v550 = vcvt.s32.f32 %v548
  %v551 = vcvt.s32.f32 %v549
  %552 = vmin.xlane.f32.xlu0 %v551
  %v553 = vpop.xlane.xlu0 %552
  %vm554 = vcmp.eq.f32.partialorder %v551, %v553
  %v555 = vsel %vm554, %v550, inf
  %556 = vmin.xlane.f32.xlu0 %v555
  %v557 = vpop.xlane.xlu0 %556
  %v558 = vcvt.f32.s32 %v557
  %v559 = vcvt.f32.s32 %v553
  %v560 = vshll.u32 %v559, 16
  %v561 = vadd.s32 %v560, %v558
  %vm562 = vcmp.eq.s32.totalorder %v22, %v561
  %v563 = vsel %vm562, 1, 0
  %v564 = vcvt.s32.f32 %v563
  %v565 = vsel %vm466, 1, 0
  %566 = vset.pattern.permute.xlu0 15
  %567 = vperm.xlu0 %566, %v565
  %v568 = vpop.permute.xlu0 %567
  %vm569 = vcmp.eq.s32.totalorder %v568, 1
  %v570 = vsel %vm569, %v564, %v465
  %571 = vst.msk [vmem:[%s3] sm:$0x3] %vm17, %v570
  // Predicated region
  $region14: #{generator_forward.14} parent=0 // pred_check
    _
  $region15: #{generator_forward.14} parent=0 // pred_check_branch
    %573 = sbr.rel (0) target = $region17
  $region16: #{generator_forward.14} parent=0 // pred_region
    _
  $region17: #{generator_forward.14} parent=0 // pred_fallthru
    _
  // Predicated region
  $region18: #{generator_forward.14} parent=0 // pred_check
    _
  $region19: #{generator_forward.14} parent=0 // pred_check_branch
    %575 = sbr.rel (0) target = $region21
  $region20: #{generator_forward.14} parent=0 // pred_region
    _
  $region21: #{generator_forward.14} parent=0 // pred_fallthru
    _

// kernel: generator_forward.15
$region0: #{generator_forward.15}
  #allocation0 [shape = 'u32[]', space=smem, size = 0x4, offset = 0x4, fixed_abs, tag = 'smem constant byte address 0x4 - core index']
  #allocation1 [shape = 'u32[144,128]{1,0:T(1,128)}', space=vmem, size = 0x12000, scoped, tag = 'internal scratch']
  #allocation2 [shape = 'f32[1,128]{1,0:T(1,128)}', space=vmem, size = 0x200, scoped, tag = 'scratch operand']
  #allocation3 [shape = 'f32[1,128]{1,0:T(1,128)}', space=vmem, size = 0x200, scoped, tag = 'scratch operand']
  %s0 = inlined_call_operand.vmem [shape: f32[2,16], index: 0, kind: input, shape index: {}]
  %s1 = inlined_call_operand.vmem [shape: f32[16,512], index: 1, kind: input, shape index: {}]
  %s2 = inlined_call_operand.vmem [shape: f32[128,512], index: 2, kind: input, shape index: {}]
  %s3 = inlined_call_operand.vmem [shape: f32[2,128], index: 3, kind: output, shape index: {}]
  %s4 = sld [smem:[#allocation0]]
  $region22: #{generator_forward.15} parent=0
    _
  %s6 = ssub.s32 1, %s4
  %s7 = scalar_select 0, %s6, %s4
  // Predicated region
  $region2: #{generator_forward.15} parent=0 // pred_check
    _
  $region3: #{generator_forward.15} parent=0 // pred_check_branch
    %9 = sbr.rel (0) target = $region5
  $region4: #{generator_forward.15} parent=0 // pred_region
    _
  $region5: #{generator_forward.15} parent=0 // pred_fallthru
    _
  // Predicated region
  $region6: #{generator_forward.15} parent=0 // pred_check
    _
  $region7: #{generator_forward.15} parent=0 // pred_check_branch
    %11 = sbr.rel (0) target = $region9
  $region8: #{generator_forward.15} parent=0 // pred_region
    _
  $region9: #{generator_forward.15} parent=0 // pred_fallthru
    _
  // Predicated region
  $region10: #{generator_forward.15} parent=0 // pred_check
    _
  $region11: #{generator_forward.15} parent=0 // pred_check_branch
    %13 = sbr.rel (0) target = $region13
  $region12: #{generator_forward.15} parent=0 // pred_region
    _
  $region13: #{generator_forward.15} parent=0 // pred_fallthru
    _
  %14 = vst [vmem:[#allocation2] sm:$0x1] 0.0
  %15 = vst [vmem:[#allocation3] sm:$0x1] 0.0
  %v16 = vld [vmem:[%s0] sm:$0x1]
  %v17 = vld [vmem:[%s1] sm:$0xff]
  %v18 = vld [vmem:[%s1 + $0x8] sm:$0xff]
  %v19 = vld [vmem:[%s1 + $0x10] sm:$0xff]
  %v20 = vld [vmem:[%s1 + $0x18] sm:$0xff]
  %v21 = vld [vmem:[%s1 + $0x20] sm:$0xff]
  %v22 = vld [vmem:[%s1 + $0x28] sm:$0xff]
  %v23 = vld [vmem:[%s1 + $0x30] sm:$0xff]
  %v24 = vld [vmem:[%s1 + $0x38] sm:$0xff]
  %v25 = vld [vmem:[#allocation2] sm:$0x1]
  %v26 = vld [vmem:[%s2] sm:$0xff]
  %v27 = vld [vmem:[%s2 + $0x8] sm:$0xff]
  %v28 = vld [vmem:[%s2 + $0x10] sm:$0xff]
  %v29 = vld [vmem:[%s2 + $0x18] sm:$0xff]
  %v30 = vld [vmem:[%s2 + $0x20] sm:$0xff]
  %v31 = vld [vmem:[%s2 + $0x28] sm:$0xff]
  %v32 = vld [vmem:[%s2 + $0x30] sm:$0xff]
  %v33 = vld [vmem:[%s2 + $0x38] sm:$0xff]
  %v34 = vld [vmem:[%s2 + $0x40] sm:$0xff]
  %v35 = vld [vmem:[%s2 + $0x48] sm:$0xff]
  %v36 = vld [vmem:[%s2 + $0x50] sm:$0xff]
  %v37 = vld [vmem:[%s2 + $0x58] sm:$0xff]
  %v38 = vld [vmem:[%s2 + $0x60] sm:$0xff]
  %v39 = vld [vmem:[%s2 + $0x68] sm:$0xff]
  %v40 = vld [vmem:[%s2 + $0x70] sm:$0xff]
  %v41 = vld [vmem:[%s2 + $0x78] sm:$0xff]
  %v42 = vld [vmem:[%s2 + $0x80] sm:$0xff]
  %v43 = vld [vmem:[%s2 + $0x88] sm:$0xff]
  %v44 = vld [vmem:[%s2 + $0x90] sm:$0xff]
  %v45 = vld [vmem:[%s2 + $0x98] sm:$0xff]
  %v46 = vld [vmem:[%s2 + $0xa0] sm:$0xff]
  %v47 = vld [vmem:[%s2 + $0xa8] sm:$0xff]
  %v48 = vld [vmem:[%s2 + $0xb0] sm:$0xff]
  %v49 = vld [vmem:[%s2 + $0xb8] sm:$0xff]
  %v50 = vld [vmem:[%s2 + $0xc0] sm:$0xff]
  %v51 = vld [vmem:[%s2 + $0xc8] sm:$0xff]
  %v52 = vld [vmem:[%s2 + $0xd0] sm:$0xff]
  %v53 = vld [vmem:[%s2 + $0xd8] sm:$0xff]
  %v54 = vld [vmem:[%s2 + $0xe0] sm:$0xff]
  %v55 = vld [vmem:[%s2 + $0xe8] sm:$0xff]
  %v56 = vld [vmem:[%s2 + $0xf0] sm:$0xff]
  %v57 = vld [vmem:[%s2 + $0xf8] sm:$0xff]
  %v58 = vld [vmem:[%s2 + $0x100] sm:$0xff]
  %v59 = vld [vmem:[%s2 + $0x108] sm:$0xff]
  %v60 = vld [vmem:[%s2 + $0x110] sm:$0xff]
  %v61 = vld [vmem:[%s2 + $0x118] sm:$0xff]
  %v62 = vld [vmem:[%s2 + $0x120] sm:$0xff]
  %v63 = vld [vmem:[%s2 + $0x128] sm:$0xff]
  %v64 = vld [vmem:[%s2 + $0x130] sm:$0xff]
  %v65 = vld [vmem:[%s2 + $0x138] sm:$0xff]
  %v66 = vld [vmem:[%s2 + $0x140] sm:$0xff]
  %v67 = vld [vmem:[%s2 + $0x148] sm:$0xff]
  %v68 = vld [vmem:[%s2 + $0x150] sm:$0xff]
  %v69 = vld [vmem:[%s2 + $0x158] sm:$0xff]
  %v70 = vld [vmem:[%s2 + $0x160] sm:$0xff]
  %v71 = vld [vmem:[%s2 + $0x168] sm:$0xff]
  %v72 = vld [vmem:[%s2 + $0x170] sm:$0xff]
  %v73 = vld [vmem:[%s2 + $0x178] sm:$0xff]
  %v74 = vld [vmem:[%s2 + $0x180] sm:$0xff]
  %v75 = vld [vmem:[%s2 + $0x188] sm:$0xff]
  %v76 = vld [vmem:[%s2 + $0x190] sm:$0xff]
  %v77 = vld [vmem:[%s2 + $0x198] sm:$0xff]
  %v78 = vld [vmem:[%s2 + $0x1a0] sm:$0xff]
  %v79 = vld [vmem:[%s2 + $0x1a8] sm:$0xff]
  %v80 = vld [vmem:[%s2 + $0x1b0] sm:$0xff]
  %v81 = vld [vmem:[%s2 + $0x1b8] sm:$0xff]
  %v82 = vld [vmem:[%s2 + $0x1c0] sm:$0xff]
  %v83 = vld [vmem:[%s2 + $0x1c8] sm:$0xff]
  %v84 = vld [vmem:[%s2 + $0x1d0] sm:$0xff]
  %v85 = vld [vmem:[%s2 + $0x1d8] sm:$0xff]
  %v86 = vld [vmem:[%s2 + $0x1e0] sm:$0xff]
  %v87 = vld [vmem:[%s2 + $0x1e8] sm:$0xff]
  %v88 = vld [vmem:[%s2 + $0x1f0] sm:$0xff]
  %v89 = vld [vmem:[%s2 + $0x1f8] sm:$0xff]
  %90 = vmatprep.subr.mxu0 %v27
  %91 = vmatpush1.msra.mxu0 %v26
  %92 = vmatprep.subr.mxu0 %v31
  %93 = vmatpush1.msra.mxu0 %v30
  %94 = vmatprep.subr.mxu0 %v35
  %95 = vmatpush1.msra.mxu0 %v34
  %96 = vmatprep.subr.mxu0 %v39
  %97 = vmatpush1.msra.mxu0 %v38
  %98 = vmatprep.subr.mxu0 %v43
  %99 = vmatpush1.msra.mxu0 %v42
  %100 = vmatprep.subr.mxu0 %v47
  %101 = vmatpush1.msra.mxu0 %v46
  %102 = vmatprep.subr.mxu0 %v51
  %103 = vmatpush1.msra.mxu0 %v50
  %104 = vmatprep.subr.mxu0 %v55
  %105 = vmatpush1.msra.mxu0 %v54
  %106 = vmatprep.subr.mxu0 %v59
  %107 = vmatpush1.msra.mxu0 %v58
  %108 = vmatprep.subr.mxu0 %v63
  %109 = vmatpush1.msra.mxu0 %v62
  %110 = vmatprep.subr.mxu0 %v67
  %111 = vmatpush1.msra.mxu0 %v66
  %112 = vmatprep.subr.mxu0 %v71
  %113 = vmatpush1.msra.mxu0 %v70
  %114 = vmatprep.subr.mxu0 %v75
  %115 = vmatpush1.msra.mxu0 %v74
  %116 = vmatprep.subr.mxu0 %v79
  %117 = vmatpush1.msra.mxu0 %v78
  %118 = vmatprep.subr.mxu0 %v83
  %119 = vmatpush1.msra.mxu0 %v82
  %120 = vmatprep.subr.mxu0 %v87
  %121 = vmatpush1.msra.mxu0 %v86
  %122 = vmatprep.subr.mxu0 0.0
  %123 = vmatpush1.msra.mxu0 0.0
  %124 = vmatprep.subr.mxu0 0.0
  %125 = vmatpush1.msra.mxu0 0.0
  %126 = vmatprep.subr.mxu0 0.0
  %127 = vmatpush1.msra.mxu0 0.0
  %128 = vmatprep.subr.mxu0 0.0
  %129 = vmatpush1.msra.mxu0 0.0
  %130 = vmatprep.subr.mxu0 0.0
  %131 = vmatpush1.msra.mxu0 0.0
  %132 = vmatprep.subr.mxu0 0.0
  %133 = vmatpush1.msra.mxu0 0.0
  %134 = vmatprep.subr.mxu0 0.0
  %135 = vmatpush1.msra.mxu0 0.0
  %136 = vmatprep.subr.mxu0 0.0
  %137 = vmatpush1.msra.mxu0 0.0
  %138 = vmatprep.subr.mxu0 0.0
  %139 = vmatpush1.msra.mxu0 0.0
  %140 = vmatprep.subr.mxu0 0.0
  %141 = vmatpush1.msra.mxu0 0.0
  %142 = vmatprep.subr.mxu0 0.0
  %143 = vmatpush1.msra.mxu0 0.0
  %144 = vmatprep.subr.mxu0 0.0
  %145 = vmatpush1.msra.mxu0 0.0
  %146 = vmatprep.subr.mxu0 0.0
  %147 = vmatpush1.msra.mxu0 0.0
  %148 = vmatprep.subr.mxu0 0.0
  %149 = vmatpush1.msra.mxu0 0.0
  %150 = vmatprep.subr.mxu0 0.0
  %151 = vmatpush1.msra.mxu0 0.0
  %152 = vmatprep.subr.mxu0 0.0
  %153 = vmatpush1.msra.mxu0 0.0
  %154 = vmatprep.mubr.f32.mxu0 0.0
  %155 = vmatmul.mubr.f32.gmra.mrb[0].mxu0 %v25
  %v156 = vpop.f32.mrb[0].mxu0
  %v157 = vadd.f32 0.0, %v156
  %v158 = vpop.f32.mrb[0].mxu0
  %v159 = vadd.f32 0.0, %v158
  %160 = vdwg.mxu0
  %161 = vmatprep.subr.mxu0 %v29
  %162 = vmatpush1.msra.mxu0 %v28
  %163 = vmatprep.subr.mxu0 %v33
  %164 = vmatpush1.msra.mxu0 %v32
  %165 = vmatprep.subr.mxu0 %v37
  %166 = vmatpush1.msra.mxu0 %v36
  %167 = vmatprep.subr.mxu0 %v41
  %168 = vmatpush1.msra.mxu0 %v40
  %169 = vmatprep.subr.mxu0 %v45
  %170 = vmatpush1.msra.mxu0 %v44
  %171 = vmatprep.subr.mxu0 %v49
  %172 = vmatpush1.msra.mxu0 %v48
  %173 = vmatprep.subr.mxu0 %v53
  %174 = vmatpush1.msra.mxu0 %v52
  %175 = vmatprep.subr.mxu0 %v57
  %176 = vmatpush1.msra.mxu0 %v56
  %177 = vmatprep.subr.mxu0 %v61
  %178 = vmatpush1.msra.mxu0 %v60
  %179 = vmatprep.subr.mxu0 %v65
  %180 = vmatpush1.msra.mxu0 %v64
  %181 = vmatprep.subr.mxu0 %v69
  %182 = vmatpush1.msra.mxu0 %v68
  %183 = vmatprep.subr.mxu0 %v73
  %184 = vmatpush1.msra.mxu0 %v72
  %185 = vmatprep.subr.mxu0 %v77
  %186 = vmatpush1.msra.mxu0 %v76
  %187 = vmatprep.subr.mxu0 %v81
  %188 = vmatpush1.msra.mxu0 %v80
  %189 = vmatprep.subr.mxu0 %v85
  %190 = vmatpush1.msra.mxu0 %v84
  %191 = vmatprep.subr.mxu0 %v89
  %192 = vmatpush1.msra.mxu0 %v88
  %193 = vmatprep.subr.mxu0 0.0
  %194 = vmatpush1.msra.mxu0 0.0
  %195 = vmatprep.subr.mxu0 0.0
  %196 = vmatpush1.msra.mxu0 0.0
  %197 = vmatprep.subr.mxu0 0.0
  %198 = vmatpush1.msra.mxu0 0.0
  %199 = vmatprep.subr.mxu0 0.0
  %200 = vmatpush1.msra.mxu0 0.0
  %201 = vmatprep.subr.mxu0 0.0
  %202 = vmatpush1.msra.mxu0 0.0
  %203 = vmatprep.subr.mxu0 0.0
  %204 = vmatpush1.msra.mxu0 0.0
  %205 = vmatprep.subr.mxu0 0.0
  %206 = vmatpush1.msra.mxu0 0.0
  %207 = vmatprep.subr.mxu0 0.0
  %208 = vmatpush1.msra.mxu0 0.0
  %209 = vmatprep.subr.mxu0 0.0
  %210 = vmatpush1.msra.mxu0 0.0
  %211 = vmatprep.subr.mxu0 0.0
  %212 = vmatpush1.msra.mxu0 0.0
  %213 = vmatprep.subr.mxu0 0.0
  %214 = vmatpush1.msra.mxu0 0.0
  %215 = vmatprep.subr.mxu0 0.0
  %216 = vmatpush1.msra.mxu0 0.0
  %217 = vmatprep.subr.mxu0 0.0
  %218 = vmatpush1.msra.mxu0 0.0
  %219 = vmatprep.subr.mxu0 0.0
  %220 = vmatpush1.msra.mxu0 0.0
  %221 = vmatprep.subr.mxu0 0.0
  %222 = vmatpush1.msra.mxu0 0.0
  %223 = vmatprep.subr.mxu0 0.0
  %224 = vmatpush1.msra.mxu0 0.0
  %225 = vmatprep.mubr.f32.mxu0 0.0
  %226 = vmatmul.mubr.f32.gmra.mrb[0].mxu0 %v25
  %v227 = vpop.f32.mrb[0].mxu0
  %v228 = vadd.f32 0.0, %v227
  %v229 = vpop.f32.mrb[0].mxu0
  %v230 = vadd.f32 0.0, %v229
  %231 = vdwg.mxu0
  %vm232 = vcmask 130048
  %v234 = vsel %vm232, %v16, 0
  %236 = vmatprep.subr.mxu0 %v18
  %237 = vmatpush1.msra.mxu0 %v17
  %238 = vmatprep.subr.mxu0 %v22
  %239 = vmatpush1.msra.mxu0 %v21
  %240 = vmatprep.subr.mxu0 0.0
  %241 = vmatpush1.msra.mxu0 0.0
  %242 = vmatprep.subr.mxu0 0.0
  %243 = vmatpush1.msra.mxu0 0.0
  %244 = vmatprep.subr.mxu0 0.0
  %245 = vmatpush1.msra.mxu0 0.0
  %246 = vmatprep.subr.mxu0 0.0
  %247 = vmatpush1.msra.mxu0 0.0
  %248 = vmatprep.subr.mxu0 0.0
  %249 = vmatpush1.msra.mxu0 0.0
  %250 = vmatprep.subr.mxu0 0.0
  %251 = vmatpush1.msra.mxu0 0.0
  %252 = vmatprep.subr.mxu0 0.0
  %253 = vmatpush1.msra.mxu0 0.0
  %254 = vmatprep.subr.mxu0 0.0
  %255 = vmatpush1.msra.mxu0 0.0
  %256 = vmatprep.subr.mxu0 0.0
  %257 = vmatpush1.msra.mxu0 0.0
  %258 = vmatprep.subr.mxu0 0.0
  %259 = vmatpush1.msra.mxu0 0.0
  %260 = vmatprep.subr.mxu0 0.0
  %261 = vmatpush1.msra.mxu0 0.0
  %262 = vmatprep.subr.mxu0 0.0
  %263 = vmatpush1.msra.mxu0 0.0
  %264 = vmatprep.subr.mxu0 0.0
  %265 = vmatpush1.msra.mxu0 0.0
  %266 = vmatprep.subr.mxu0 0.0
  %267 = vmatpush1.msra.mxu0 0.0
  %268 = vmatprep.subr.mxu0 0.0
  %269 = vmatpush1.msra.mxu0 0.0
  %270 = vmatprep.subr.mxu0 0.0
  %271 = vmatpush1.msra.mxu0 0.0
  %272 = vmatprep.subr.mxu0 0.0
  %273 = vmatpush1.msra.mxu0 0.0
  %274 = vmatprep.subr.mxu0 0.0
  %275 = vmatpush1.msra.mxu0 0.0
  %276 = vmatprep.subr.mxu0 0.0
  %277 = vmatpush1.msra.mxu0 0.0
  %278 = vmatprep.subr.mxu0 0.0
  %279 = vmatpush1.msra.mxu0 0.0
  %280 = vmatprep.subr.mxu0 0.0
  %281 = vmatpush1.msra.mxu0 0.0
  %282 = vmatprep.subr.mxu0 0.0
  %283 = vmatpush1.msra.mxu0 0.0
  %284 = vmatprep.subr.mxu0 0.0
  %285 = vmatpush1.msra.mxu0 0.0
  %286 = vmatprep.subr.mxu0 0.0
  %287 = vmatpush1.msra.mxu0 0.0
  %288 = vmatprep.subr.mxu0 0.0
  %289 = vmatpush1.msra.mxu0 0.0
  %290 = vmatprep.subr.mxu0 0.0
  %291 = vmatpush1.msra.mxu0 0.0
  %292 = vmatprep.subr.mxu0 0.0
  %293 = vmatpush1.msra.mxu0 0.0
  %294 = vmatprep.subr.mxu0 0.0
  %295 = vmatpush1.msra.mxu0 0.0
  %296 = vmatprep.subr.mxu0 0.0
  %297 = vmatpush1.msra.mxu0 0.0
  %298 = vmatprep.subr.mxu0 0.0
  %299 = vmatpush1.msra.mxu0 0.0
  %300 = vmatprep.mubr.f32.mxu0 0.0
  %301 = vmatmul.mubr.f32.gmra.mrb[0].mxu0 %v234
  %v302 = vpop.f32.mrb[0].mxu0
  %v303 = vadd.f32 %v157, %v302
  %v304 = vpop.f32.mrb[0].mxu0
  %v305 = vadd.f32 %v159, %v304
  %306 = vdwg.mxu0
  %307 = vmatprep.subr.mxu0 %v20
  %308 = vmatpush1.msra.mxu0 %v19
  %309 = vmatprep.subr.mxu0 %v24
  %310 = vmatpush1.msra.mxu0 %v23
  %311 = vmatprep.subr.mxu0 0.0
  %312 = vmatpush1.msra.mxu0 0.0
  %313 = vmatprep.subr.mxu0 0.0
  %314 = vmatpush1.msra.mxu0 0.0
  %315 = vmatprep.subr.mxu0 0.0
  %316 = vmatpush1.msra.mxu0 0.0
  %317 = vmatprep.subr.mxu0 0.0
  %318 = vmatpush1.msra.mxu0 0.0
  %319 = vmatprep.subr.mxu0 0.0
  %320 = vmatpush1.msra.mxu0 0.0
  %321 = vmatprep.subr.mxu0 0.0
  %322 = vmatpush1.msra.mxu0 0.0
  %323 = vmatprep.subr.mxu0 0.0
  %324 = vmatpush1.msra.mxu0 0.0
  %325 = vmatprep.subr.mxu0 0.0
  %326 = vmatpush1.msra.mxu0 0.0
  %327 = vmatprep.subr.mxu0 0.0
  %328 = vmatpush1.msra.mxu0 0.0
  %329 = vmatprep.subr.mxu0 0.0
  %330 = vmatpush1.msra.mxu0 0.0
  %331 = vmatprep.subr.mxu0 0.0
  %332 = vmatpush1.msra.mxu0 0.0
  %333 = vmatprep.subr.mxu0 0.0
  %334 = vmatpush1.msra.mxu0 0.0
  %335 = vmatprep.subr.mxu0 0.0
  %336 = vmatpush1.msra.mxu0 0.0
  %337 = vmatprep.subr.mxu0 0.0
  %338 = vmatpush1.msra.mxu0 0.0
  %339 = vmatprep.subr.mxu0 0.0
  %340 = vmatpush1.msra.mxu0 0.0
  %341 = vmatprep.subr.mxu0 0.0
  %342 = vmatpush1.msra.mxu0 0.0
  %343 = vmatprep.subr.mxu0 0.0
  %344 = vmatpush1.msra.mxu0 0.0
  %345 = vmatprep.subr.mxu0 0.0
  %346 = vmatpush1.msra.mxu0 0.0
  %347 = vmatprep.subr.mxu0 0.0
  %348 = vmatpush1.msra.mxu0 0.0
  %349 = vmatprep.subr.mxu0 0.0
  %350 = vmatpush1.msra.mxu0 0.0
  %351 = vmatprep.subr.mxu0 0.0
  %352 = vmatpush1.msra.mxu0 0.0
  %353 = vmatprep.subr.mxu0 0.0
  %354 = vmatpush1.msra.mxu0 0.0
  %355 = vmatprep.subr.mxu0 0.0
  %356 = vmatpush1.msra.mxu0 0.0
  %357 = vmatprep.subr.mxu0 0.0
  %358 = vmatpush1.msra.mxu0 0.0
  %359 = vmatprep.subr.mxu0 0.0
  %360 = vmatpush1.msra.mxu0 0.0
  %361 = vmatprep.subr.mxu0 0.0
  %362 = vmatpush1.msra.mxu0 0.0
  %363 = vmatprep.subr.mxu0 0.0
  %364 = vmatpush1.msra.mxu0 0.0
  %365 = vmatprep.subr.mxu0 0.0
  %366 = vmatpush1.msra.mxu0 0.0
  %367 = vmatprep.subr.mxu0 0.0
  %368 = vmatpush1.msra.mxu0 0.0
  %369 = vmatprep.subr.mxu0 0.0
  %370 = vmatpush1.msra.mxu0 0.0
  %371 = vmatprep.mubr.f32.mxu0 0.0
  %372 = vmatmul.mubr.f32.gmra.mrb[0].mxu0 %v234
  %v373 = vpop.f32.mrb[0].mxu0
  %v374 = vadd.f32 %v228, %v373
  %v375 = vpop.f32.mrb[0].mxu0
  %v376 = vadd.f32 %v230, %v375
  %377 = vdwg.mxu0
  %v378 = vsub.f32 0.0, %v303
  %v379 = vmul.f32 %v378, 1.442695
  %v380 = vpow.pop %v379
  %v381 = vadd.f32 %v380, 1.0
  %v382 = vrcp.pop %v381
  %v383 = vmul.f32 1.0, %v382
  %v384 = vsub.f32 0.0, %v305
  %v385 = vmul.f32 %v384, 1.442695
  %v386 = vpow.pop %v385
  %v387 = vadd.f32 %v386, 1.0
  %v388 = vrcp.pop %v387
  %v389 = vmul.f32 1.0, %v388
  %v390 = vtanh.pop %v374
  %v391 = vsub.f32 0.0, %v376
  %v392 = vmul.f32 %v391, 1.442695
  %v393 = vpow.pop %v392
  %v394 = vadd.f32 %v393, 1.0
  %v395 = vrcp.pop %v394
  %v396 = vmul.f32 1.0, %v395
  %v397 = vld [vmem:[#allocation3] sm:$0x1]
  %v398 = vmul.f32 %v389, %v397
  %v399 = vmul.f32 %v383, %v390
  %v400 = vadd.f32 %v398, %v399
  %v401 = vtanh.pop %v400
  %v402 = vmul.f32 %v396, %v401
  %403 = vst [vmem:[#allocation3] sm:$0x1] %v400
  %404 = vst [vmem:[#allocation2] sm:$0x1] %v402
  %405 = vst [vmem:[%s3] sm:$0x1] %v402
  %v406 = vld [vmem:[%s0 + $0x1] sm:$0x1]
  %v407 = vld [vmem:[%s1] sm:$0xff]
  %v408 = vld [vmem:[%s1 + $0x8] sm:$0xff]
  %v409 = vld [vmem:[%s1 + $0x10] sm:$0xff]
  %v410 = vld [vmem:[%s1 + $0x18] sm:$0xff]
  %v411 = vld [vmem:[%s1 + $0x20] sm:$0xff]
  %v412 = vld [vmem:[%s1 + $0x28] sm:$0xff]
  %v413 = vld [vmem:[%s1 + $0x30] sm:$0xff]
  %v414 = vld [vmem:[%s1 + $0x38] sm:$0xff]
  %v415 = vld [vmem:[#allocation2] sm:$0x1]
  %v416 = vld [vmem:[%s2] sm:$0xff]
  %v417 = vld [vmem:[%s2 + $0x8] sm:$0xff]
  %v418 = vld [vmem:[%s2 + $0x10] sm:$0xff]
  %v419 = vld [vmem:[%s2 + $0x18] sm:$0xff]
  %v420 = vld [vmem:[%s2 + $0x20] sm:$0xff]
  %v421 = vld [vmem:[%s2 + $0x28] sm:$0xff]
  %v422 = vld [vmem:[%s2 + $0x30] sm:$0xff]
  %v423 = vld [vmem:[%s2 + $0x38] sm:$0xff]
  %v424 = vld [vmem:[%s2 + $0x40] sm:$0xff]
  %v425 = vld [vmem:[%s2 + $0x48] sm:$0xff]
  %v426 = vld [vmem:[%s2 + $0x50] sm:$0xff]
  %v427 = vld [vmem:[%s2 + $0x58] sm:$0xff]
  %v428 = vld [vmem:[%s2 + $0x60] sm:$0xff]
  %v429 = vld [vmem:[%s2 + $0x68] sm:$0xff]
  %v430 = vld [vmem:[%s2 + $0x70] sm:$0xff]
  %v431 = vld [vmem:[%s2 + $0x78] sm:$0xff]
  %v432 = vld [vmem:[%s2 + $0x80] sm:$0xff]
  %v433 = vld [vmem:[%s2 + $0x88] sm:$0xff]
  %v434 = vld [vmem:[%s2 + $0x90] sm:$0xff]
  %v435 = vld [vmem:[%s2 + $0x98] sm:$0xff]
  %v436 = vld [vmem:[%s2 + $0xa0] sm:$0xff]
  %v437 = vld [vmem:[%s2 + $0xa8] sm:$0xff]
  %v438 = vld [vmem:[%s2 + $0xb0] sm:$0xff]
  %v439 = vld [vmem:[%s2 + $0xb8] sm:$0xff]
  %v440 = vld [vmem:[%s2 + $0xc0] sm:$0xff]
  %v441 = vld [vmem:[%s2 + $0xc8] sm:$0xff]
  %v442 = vld [vmem:[%s2 + $0xd0] sm:$0xff]
  %v443 = vld [vmem:[%s2 + $0xd8] sm:$0xff]
  %v444 = vld [vmem:[%s2 + $0xe0] sm:$0xff]
  %v445 = vld [vmem:[%s2 + $0xe8] sm:$0xff]
  %v446 = vld [vmem:[%s2 + $0xf0] sm:$0xff]
  %v447 = vld [vmem:[%s2 + $0xf8] sm:$0xff]
  %v448 = vld [vmem:[%s2 + $0x100] sm:$0xff]
  %v449 = vld [vmem:[%s2 + $0x108] sm:$0xff]
  %v450 = vld [vmem:[%s2 + $0x110] sm:$0xff]
  %v451 = vld [vmem:[%s2 + $0x118] sm:$0xff]
  %v452 = vld [vmem:[%s2 + $0x120] sm:$0xff]
  %v453 = vld [vmem:[%s2 + $0x128] sm:$0xff]
  %v454 = vld [vmem:[%s2 + $0x130] sm:$0xff]
  %v455 = vld [vmem:[%s2 + $0x138] sm:$0xff]
  %v456 = vld [vmem:[%s2 + $0x140] sm:$0xff]
  %v457 = vld [vmem:[%s2 + $0x148] sm:$0xff]
  %v458 = vld [vmem:[%s2 + $0x150] sm:$0xff]
  %v459 = vld [vmem:[%s2 + $0x158] sm:$0xff]
  %v460 = vld [vmem:[%s2 + $0x160] sm:$0xff]
  %v461 = vld [vmem:[%s2 + $0x168] sm:$0xff]
  %v462 = vld [vmem:[%s2 + $0x170] sm:$0xff]
  %v463 = vld [vmem:[%s2 + $0x178] sm:$0xff]
  %v464 = vld [vmem:[%s2 + $0x180] sm:$0xff]
  %v465 = vld [vmem:[%s2 + $0x188] sm:$0xff]
  %v466 = vld [vmem:[%s2 + $0x190] sm:$0xff]
  %v467 = vld [vmem:[%s2 + $0x198] sm:$0xff]
  %v468 = vld [vmem:[%s2 + $0x1a0] sm:$0xff]
  %v469 = vld [vmem:[%s2 + $0x1a8] sm:$0xff]
  %v470 = vld [vmem:[%s2 + $0x1b0] sm:$0xff]
  %v471 = vld [vmem:[%s2 + $0x1b8] sm:$0xff]
  %v472 = vld [vmem:[%s2 + $0x1c0] sm:$0xff]
  %v473 = vld [vmem:[%s2 + $0x1c8] sm:$0xff]
  %v474 = vld [vmem:[%s2 + $0x1d0] sm:$0xff]
  %v475 = vld [vmem:[%s2 + $0x1d8] sm:$0xff]
  %v476 = vld [vmem:[%s2 + $0x1e0] sm:$0xff]
  %v477 = vld [vmem:[%s2 + $0x1e8] sm:$0xff]
  %v478 = vld [vmem:[%s2 + $0x1f0] sm:$0xff]
  %v479 = vld [vmem:[%s2 + $0x1f8] sm:$0xff]
  %480 = vmatprep.subr.mxu0 %v417
  %481 = vmatpush1.msra.mxu0 %v416
  %482 = vmatprep.subr.mxu0 %v421
  %483 = vmatpush1.msra.mxu0 %v420
  %484 = vmatprep.subr.mxu0 %v425
  %485 = vmatpush1.msra.mxu0 %v424
  %486 = vmatprep.subr.mxu0 %v429
  %487 = vmatpush1.msra.mxu0 %v428
  %488 = vmatprep.subr.mxu0 %v433
  %489 = vmatpush1.msra.mxu0 %v432
  %490 = vmatprep.subr.mxu0 %v437
  %491 = vmatpush1.msra.mxu0 %v436
  %492 = vmatprep.subr.mxu0 %v441
  %493 = vmatpush1.msra.mxu0 %v440
  %494 = vmatprep.subr.mxu0 %v445
  %495 = vmatpush1.msra.mxu0 %v444
  %496 = vmatprep.subr.mxu0 %v449
  %497 = vmatpush1.msra.mxu0 %v448
  %498 = vmatprep.subr.mxu0 %v453
  %499 = vmatpush1.msra.mxu0 %v452
  %500 = vmatprep.subr.mxu0 %v457
  %501 = vmatpush1.msra.mxu0 %v456
  %502 = vmatprep.subr.mxu0 %v461
  %503 = vmatpush1.msra.mxu0 %v460
  %504 = vmatprep.subr.mxu0 %v465
  %505 = vmatpush1.msra.mxu0 %v464
  %506 = vmatprep.subr.mxu0 %v469
  %507 = vmatpush1.msra.mxu0 %v468
  %508 = vmatprep.subr.mxu0 %v473
  %509 = vmatpush1.msra.mxu0 %v472
  %510 = vmatprep.subr.mxu0 %v477
  %511 = vmatpush1.msra.mxu0 %v476
  %512 = vmatprep.subr.mxu0 0.0
  %513 = vmatpush1.msra.mxu0 0.0
  %514 = vmatprep.subr.mxu0 0.0
  %515 = vmatpush1.msra.mxu0 0.0
  %516 = vmatprep.subr.mxu0 0.0
  %517 = vmatpush1.msra.mxu0 0.0
  %518 = vmatprep.subr.mxu0 0.0
  %519 = vmatpush1.msra.mxu0 0.0
  %520 = vmatprep.subr.mxu0 0.0
  %521 = vmatpush1.msra.mxu0 0.0
  %522 = vmatprep.subr.mxu0 0.0
  %523 = vmatpush1.msra.mxu0 0.0
  %524 = vmatprep.subr.mxu0 0.0
  %525 = vmatpush1.msra.mxu0 0.0
  %526 = vmatprep.subr.mxu0 0.0
  %527 = vmatpush1.msra.mxu0 0.0
  %528 = vmatprep.subr.mxu0 0.0
  %529 = vmatpush1.msra.mxu0 0.0
  %530 = vmatprep.subr.mxu0 0.0
  %531 = vmatpush1.msra.mxu0 0.0
  %532 = vmatprep.subr.mxu0 0.0
  %533 = vmatpush1.msra.mxu0 0.0
  %534 = vmatprep.subr.mxu0 0.0
  %535 = vmatpush1.msra.mxu0 0.0
  %536 = vmatprep.subr.mxu0 0.0
  %537 = vmatpush1.msra.mxu0 0.0
  %538 = vmatprep.subr.mxu0 0.0
  %539 = vmatpush1.msra.mxu0 0.0
  %540 = vmatprep.subr.mxu0 0.0
  %541 = vmatpush1.msra.mxu0 0.0
  %542 = vmatprep.subr.mxu0 0.0
  %543 = vmatpush1.msra.mxu0 0.0
  %544 = vmatprep.mubr.f32.mxu0 0.0
  %545 = vmatmul.mubr.f32.gmra.mrb[0].mxu0 %v415
  %v546 = vpop.f32.mrb[0].mxu0
  %v547 = vadd.f32 0.0, %v546
  %v548 = vpop.f32.mrb[0].mxu0
  %v549 = vadd.f32 0.0, %v548
  %550 = vdwg.mxu0
  %551 = vmatprep.subr.mxu0 %v419
  %552 = vmatpush1.msra.mxu0 %v418
  %553 = vmatprep.subr.mxu0 %v423
  %554 = vmatpush1.msra.mxu0 %v422
  %555 = vmatprep.subr.mxu0 %v427
  %556 = vmatpush1.msra.mxu0 %v426
  %557 = vmatprep.subr.mxu0 %v431
  %558 = vmatpush1.msra.mxu0 %v430
  %559 = vmatprep.subr.mxu0 %v435
  %560 = vmatpush1.msra.mxu0 %v434
  %561 = vmatprep.subr.mxu0 %v439
  %562 = vmatpush1.msra.mxu0 %v438
  %563 = vmatprep.subr.mxu0 %v443
  %564 = vmatpush1.msra.mxu0 %v442
  %565 = vmatprep.subr.mxu0 %v447
  %566 = vmatpush1.msra.mxu0 %v446
  %567 = vmatprep.subr.mxu0 %v451
  %568 = vmatpush1.msra.mxu0 %v450
  %569 = vmatprep.subr.mxu0 %v455
  %570 = vmatpush1.msra.mxu0 %v454
  %571 = vmatprep.subr.mxu0 %v459
  %572 = vmatpush1.msra.mxu0 %v458
  %573 = vmatprep.subr.mxu0 %v463
  %574 = vmatpush1.msra.mxu0 %v462
  %575 = vmatprep.subr.mxu0 %v467
  %576 = vmatpush1.msra.mxu0 %v466
  %577 = vmatprep.subr.mxu0 %v471
  %578 = vmatpush1.msra.mxu0 %v470
  %579 = vmatprep.subr.mxu0 %v475
  %580 = vmatpush1.msra.mxu0 %v474
  %581 = vmatprep.subr.mxu0 %v479
  %582 = vmatpush1.msra.mxu0 %v478
  %583 = vmatprep.subr.mxu0 0.0
  %584 = vmatpush1.msra.mxu0 0.0
  %585 = vmatprep.subr.mxu0 0.0
  %586 = vmatpush1.msra.mxu0 0.0
  %587 = vmatprep.subr.mxu0 0.0
  %588 = vmatpush1.msra.mxu0 0.0
  %589 = vmatprep.subr.mxu0 0.0
  %590 = vmatpush1.msra.mxu0 0.0
  %591 = vmatprep.subr.mxu0 0.0
  %592 = vmatpush1.msra.mxu0 0.0
  %593 = vmatprep.subr.mxu0 0.0
  %594 = vmatpush1.msra.mxu0 0.0
  %595 = vmatprep.subr.mxu0 0.0
  %596 = vmatpush1.msra.mxu0 0.0
  %597 = vmatprep.subr.mxu0 0.0
  %598 = vmatpush1.msra.mxu0 0.0
  %599 = vmatprep.subr.mxu0 0.0
  %600 = vmatpush1.msra.mxu0 0.0
  %601 = vmatprep.subr.mxu0 0.0
  %602 = vmatpush1.msra.mxu0 0.0
  %603 = vmatprep.subr.mxu0 0.0
  %604 = vmatpush1.msra.mxu0 0.0
  %605 = vmatprep.subr.mxu0 0.0
  %606 = vmatpush1.msra.mxu0 0.0
  %607 = vmatprep.subr.mxu0 0.0
  %608 = vmatpush1.msra.mxu0 0.0
  %609 = vmatprep.subr.mxu0 0.0
  %610 = vmatpush1.msra.mxu0 0.0
  %611 = vmatprep.subr.mxu0 0.0
  %612 = vmatpush1.msra.mxu0 0.0
  %613 = vmatprep.subr.mxu0 0.0
  %614 = vmatpush1.msra.mxu0 0.0
  %615 = vmatprep.mubr.f32.mxu0 0.0
  %616 = vmatmul.mubr.f32.gmra.mrb[0].mxu0 %v415
  %v617 = vpop.f32.mrb[0].mxu0
  %v618 = vadd.f32 0.0, %v617
  %v619 = vpop.f32.mrb[0].mxu0
  %v620 = vadd.f32 0.0, %v619
  %621 = vdwg.mxu0
  %v623 = vsel %vm232, %v406, 0
  %625 = vmatprep.subr.mxu0 %v408
  %626 = vmatpush1.msra.mxu0 %v407
  %627 = vmatprep.subr.mxu0 %v412
  %628 = vmatpush1.msra.mxu0 %v411
  %629 = vmatprep.subr.mxu0 0.0
  %630 = vmatpush1.msra.mxu0 0.0
  %631 = vmatprep.subr.mxu0 0.0
  %632 = vmatpush1.msra.mxu0 0.0
  %633 = vmatprep.subr.mxu0 0.0
  %634 = vmatpush1.msra.mxu0 0.0
  %635 = vmatprep.subr.mxu0 0.0
  %636 = vmatpush1.msra.mxu0 0.0
  %637 = vmatprep.subr.mxu0 0.0
  %638 = vmatpush1.msra.mxu0 0.0
  %639 = vmatprep.subr.mxu0 0.0
  %640 = vmatpush1.msra.mxu0 0.0
  %641 = vmatprep.subr.mxu0 0.0
  %642 = vmatpush1.msra.mxu0 0.0
  %643 = vmatprep.subr.mxu0 0.0
  %644 = vmatpush1.msra.mxu0 0.0
  %645 = vmatprep.subr.mxu0 0.0
  %646 = vmatpush1.msra.mxu0 0.0
  %647 = vmatprep.subr.mxu0 0.0
  %648 = vmatpush1.msra.mxu0 0.0
  %649 = vmatprep.subr.mxu0 0.0
  %650 = vmatpush1.msra.mxu0 0.0
  %651 = vmatprep.subr.mxu0 0.0
  %652 = vmatpush1.msra.mxu0 0.0
  %653 = vmatprep.subr.mxu0 0.0
  %654 = vmatpush1.msra.mxu0 0.0
  %655 = vmatprep.subr.mxu0 0.0
  %656 = vmatpush1.msra.mxu0 0.0
  %657 = vmatprep.subr.mxu0 0.0
  %658 = vmatpush1.msra.mxu0 0.0
  %659 = vmatprep.subr.mxu0 0.0
  %660 = vmatpush1.msra.mxu0 0.0
  %661 = vmatprep.subr.mxu0 0.0
  %662 = vmatpush1.msra.mxu0 0.0
  %663 = vmatprep.subr.mxu0 0.0
  %664 = vmatpush1.msra.mxu0 0.0
  %665 = vmatprep.subr.mxu0 0.0
  %666 = vmatpush1.msra.mxu0 0.0
  %667 = vmatprep.subr.mxu0 0.0
  %668 = vmatpush1.msra.mxu0 0.0
  %669 = vmatprep.subr.mxu0 0.0
  %670 = vmatpush1.msra.mxu0 0.0
  %671 = vmatprep.subr.mxu0 0.0
  %672 = vmatpush1.msra.mxu0 0.0
  %673 = vmatprep.subr.mxu0 0.0
  %674 = vmatpush1.msra.mxu0 0.0
  %675 = vmatprep.subr.mxu0 0.0
  %676 = vmatpush1.msra.mxu0 0.0
  %677 = vmatprep.subr.mxu0 0.0
  %678 = vmatpush1.msra.mxu0 0.0
  %679 = vmatprep.subr.mxu0 0.0
  %680 = vmatpush1.msra.mxu0 0.0
  %681 = vmatprep.subr.mxu0 0.0
  %682 = vmatpush1.msra.mxu0 0.0
  %683 = vmatprep.subr.mxu0 0.0
  %684 = vmatpush1.msra.mxu0 0.0
  %685 = vmatprep.subr.mxu0 0.0
  %686 = vmatpush1.msra.mxu0 0.0
  %687 = vmatprep.subr.mxu0 0.0
  %688 = vmatpush1.msra.mxu0 0.0
  %689 = vmatprep.mubr.f32.mxu0 0.0
  %690 = vmatmul.mubr.f32.gmra.mrb[0].mxu0 %v623
  %v691 = vpop.f32.mrb[0].mxu0
  %v692 = vadd.f32 %v547, %v691
  %v693 = vpop.f32.mrb[0].mxu0
  %v694 = vadd.f32 %v549, %v693
  %695 = vdwg.mxu0
  %696 = vmatprep.subr.mxu0 %v410
  %697 = vmatpush1.msra.mxu0 %v409
  %698 = vmatprep.subr.mxu0 %v414
  %699 = vmatpush1.msra.mxu0 %v413
  %700 = vmatprep.subr.mxu0 0.0
  %701 = vmatpush1.msra.mxu0 0.0
  %702 = vmatprep.subr.mxu0 0.0
  %703 = vmatpush1.msra.mxu0 0.0
  %704 = vmatprep.subr.mxu0 0.0
  %705 = vmatpush1.msra.mxu0 0.0
  %706 = vmatprep.subr.mxu0 0.0
  %707 = vmatpush1.msra.mxu0 0.0
  %708 = vmatprep.subr.mxu0 0.0
  %709 = vmatpush1.msra.mxu0 0.0
  %710 = vmatprep.subr.mxu0 0.0
  %711 = vmatpush1.msra.mxu0 0.0
  %712 = vmatprep.subr.mxu0 0.0
  %713 = vmatpush1.msra.mxu0 0.0
  %714 = vmatprep.subr.mxu0 0.0
  %715 = vmatpush1.msra.mxu0 0.0
  %716 = vmatprep.subr.mxu0 0.0
  %717 = vmatpush1.msra.mxu0 0.0
  %718 = vmatprep.subr.mxu0 0.0
  %719 = vmatpush1.msra.mxu0 0.0
  %720 = vmatprep.subr.mxu0 0.0
  %721 = vmatpush1.msra.mxu0 0.0
  %722 = vmatprep.subr.mxu0 0.0
  %723 = vmatpush1.msra.mxu0 0.0
  %724 = vmatprep.subr.mxu0 0.0
  %725 = vmatpush1.msra.mxu0 0.0
  %726 = vmatprep.subr.mxu0 0.0
  %727 = vmatpush1.msra.mxu0 0.0
  %728 = vmatprep.subr.mxu0 0.0
  %729 = vmatpush1.msra.mxu0 0.0
  %730 = vmatprep.subr.mxu0 0.0
  %731 = vmatpush1.msra.mxu0 0.0
  %732 = vmatprep.subr.mxu0 0.0
  %733 = vmatpush1.msra.mxu0 0.0
  %734 = vmatprep.subr.mxu0 0.0
  %735 = vmatpush1.msra.mxu0 0.0
  %736 = vmatprep.subr.mxu0 0.0
  %737 = vmatpush1.msra.mxu0 0.0
  %738 = vmatprep.subr.mxu0 0.0
  %739 = vmatpush1.msra.mxu0 0.0
  %740 = vmatprep.subr.mxu0 0.0
  %741 = vmatpush1.msra.mxu0 0.0
  %742 = vmatprep.subr.mxu0 0.0
  %743 = vmatpush1.msra.mxu0 0.0
  %744 = vmatprep.subr.mxu0 0.0
  %745 = vmatpush1.msra.mxu0 0.0
  %746 = vmatprep.subr.mxu0 0.0
  %747 = vmatpush1.msra.mxu0 0.0
  %748 = vmatprep.subr.mxu0 0.0
  %749 = vmatpush1.msra.mxu0 0.0
  %750 = vmatprep.subr.mxu0 0.0
  %751 = vmatpush1.msra.mxu0 0.0
  %752 = vmatprep.subr.mxu0 0.0
  %753 = vmatpush1.msra.mxu0 0.0
  %754 = vmatprep.subr.mxu0 0.0
  %755 = vmatpush1.msra.mxu0 0.0
  %756 = vmatprep.subr.mxu0 0.0
  %757 = vmatpush1.msra.mxu0 0.0
  %758 = vmatprep.subr.mxu0 0.0
  %759 = vmatpush1.msra.mxu0 0.0
  %760 = vmatprep.mubr.f32.mxu0 0.0
  %761 = vmatmul.mubr.f32.gmra.mrb[0].mxu0 %v623
  %v762 = vpop.f32.mrb[0].mxu0
  %v763 = vadd.f32 %v618, %v762
  %v764 = vpop.f32.mrb[0].mxu0
  %v765 = vadd.f32 %v620, %v764
  %766 = vdwg.mxu0
  %v767 = vsub.f32 0.0, %v692
  %v768 = vmul.f32 %v767, 1.442695
  %v769 = vpow.pop %v768
  %v770 = vadd.f32 %v769, 1.0
  %v771 = vrcp.pop %v770
  %v772 = vmul.f32 1.0, %v771
  %v773 = vsub.f32 0.0, %v694
  %v774 = vmul.f32 %v773, 1.442695
  %v775 = vpow.pop %v774
  %v776 = vadd.f32 %v775, 1.0
  %v777 = vrcp.pop %v776
  %v778 = vmul.f32 1.0, %v777
  %v779 = vtanh.pop %v763
  %v780 = vsub.f32 0.0, %v765
  %v781 = vmul.f32 %v780, 1.442695
  %v782 = vpow.pop %v781
  %v783 = vadd.f32 %v782, 1.0
  %v784 = vrcp.pop %v783
  %v785 = vmul.f32 1.0, %v784
  %v786 = vld [vmem:[#allocation3] sm:$0x1]
  %v787 = vmul.f32 %v778, %v786
  %v788 = vmul.f32 %v772, %v779
  %v789 = vadd.f32 %v787, %v788
  %v790 = vtanh.pop %v789
  %v791 = vmul.f32 %v785, %v790
  %792 = vst [vmem:[#allocation3] sm:$0x1] %v789
  %793 = vst [vmem:[#allocation2] sm:$0x1] %v791
  %794 = vst [vmem:[%s3 + $0x1] sm:$0x1] %v791
  // Predicated region
  $region14: #{generator_forward.15} parent=0 // pred_check
    _
  $region15: #{generator_forward.15} parent=0 // pred_check_branch
    %796 = sbr.rel (0) target = $region17
  $region16: #{generator_forward.15} parent=0 // pred_region
    _
  $region17: #{generator_forward.15} parent=0 // pred_fallthru
    _
  // Predicated region
  $region18: #{generator_forward.15} parent=0 // pred_check
    _
  $region19: #{generator_forward.15} parent=0 // pred_check_branch
    %798 = sbr.rel (0) target = $region21
  $region20: #{generator_forward.15} parent=0 // pred_region
    _
  $region21: #{generator_forward.15} parent=0 // pred_fallthru
    _

// kernel: generator_forward.16
$region0: #{generator_forward.16}
  #allocation0 [shape = 'u32[]', space=smem, size = 0x4, offset = 0x4, fixed_abs, tag = 'smem constant byte address 0x4 - core index']
  #allocation1 [shape = 'u32[144,128]{1,0:T(1,128)}', space=vmem, size = 0x12000, scoped, tag = 'internal scratch']
  %s0 = inlined_call_operand.vmem [shape: bf16[32,512], index: 0, kind: input, shape index: {}]
  %s1 = inlined_call_operand.vmem [shape: bf16[512,128], index: 1, kind: input, shape index: {}]
  %s2 = inlined_call_operand.vmem [shape: f32[1,128], index: 2, kind: input, shape index: {}]
  %s3 = inlined_call_operand.vmem [shape: f32[32,128], index: 3, kind: output, shape index: {}]
  %s4 = sld [smem:[#allocation0]]
  $region22: #{generator_forward.16} parent=0
    _
  %s6 = ssub.s32 1, %s4
  %s7 = scalar_select 0, %s6, %s4
  // Predicated region
  $region2: #{generator_forward.16} parent=0 // pred_check
    _
  $region3: #{generator_forward.16} parent=0 // pred_check_branch
    %9 = sbr.rel (0) target = $region5
  $region4: #{generator_forward.16} parent=0 // pred_region
    _
  $region5: #{generator_forward.16} parent=0 // pred_fallthru
    _
  // Predicated region
  $region6: #{generator_forward.16} parent=0 // pred_check
    _
  $region7: #{generator_forward.16} parent=0 // pred_check_branch
    %11 = sbr.rel (0) target = $region9
  $region8: #{generator_forward.16} parent=0 // pred_region
    _
  $region9: #{generator_forward.16} parent=0 // pred_fallthru
    _
  // Predicated region
  $region10: #{generator_forward.16} parent=0 // pred_check
    _
  $region11: #{generator_forward.16} parent=0 // pred_check_branch
    %13 = sbr.rel (0) target = $region13
  $region12: #{generator_forward.16} parent=0 // pred_region
    _
  $region13: #{generator_forward.16} parent=0 // pred_fallthru
    _
  %v15 = vld [vmem:[%s0] sm:$0xff]
  %v16 = vld [vmem:[%s0 + $0x8] sm:$0xff]
  %v17 = vld [vmem:[%s0 + $0x10] sm:$0xff]
  %v18 = vld [vmem:[%s0 + $0x18] sm:$0xff]
  %v19 = vld [vmem:[%s0 + $0x20] sm:$0xff]
  %v20 = vld [vmem:[%s0 + $0x28] sm:$0xff]
  %v21 = vld [vmem:[%s0 + $0x30] sm:$0xff]
  %v22 = vld [vmem:[%s0 + $0x38] sm:$0xff]
  %v23 = vld [vmem:[%s1] sm:$0xf]
  %v24 = vld [vmem:[%s1 + $0x4] sm:$0xf]
  %v25 = vld [vmem:[%s1 + $0x8] sm:$0xf]
  %v26 = vld [vmem:[%s1 + $0xc] sm:$0xf]
  %v27 = vld [vmem:[%s1 + $0x10] sm:$0xf]
  %v28 = vld [vmem:[%s1 + $0x14] sm:$0xf]
  %v29 = vld [vmem:[%s1 + $0x18] sm:$0xf]
  %v30 = vld [vmem:[%s1 + $0x1c] sm:$0xf]
  %v31 = vld [vmem:[%s1 + $0x20] sm:$0xf]
  %v32 = vld [vmem:[%s1 + $0x24] sm:$0xf]
  %v33 = vld [vmem:[%s1 + $0x28] sm:$0xf]
  %v34 = vld [vmem:[%s1 + $0x2c] sm:$0xf]
  %v35 = vld [vmem:[%s1 + $0x30] sm:$0xf]
  %v36 = vld [vmem:[%s1 + $0x34] sm:$0xf]
  %v37 = vld [vmem:[%s1 + $0x38] sm:$0xf]
  %v38 = vld [vmem:[%s1 + $0x3c] sm:$0xf]
  %v39 = vld [vmem:[%s1 + $0x40] sm:$0xf]
  %v40 = vld [vmem:[%s1 + $0x44] sm:$0xf]
  %v41 = vld [vmem:[%s1 + $0x48] sm:$0xf]
  %v42 = vld [vmem:[%s1 + $0x4c] sm:$0xf]
  %v43 = vld [vmem:[%s1 + $0x50] sm:$0xf]
  %v44 = vld [vmem:[%s1 + $0x54] sm:$0xf]
  %v45 = vld [vmem:[%s1 + $0x58] sm:$0xf]
  %v46 = vld [vmem:[%s1 + $0x5c] sm:$0xf]
  %v47 = vld [vmem:[%s1 + $0x60] sm:$0xf]
  %v48 = vld [vmem:[%s1 + $0x64] sm:$0xf]
  %v49 = vld [vmem:[%s1 + $0x68] sm:$0xf]
  %v50 = vld [vmem:[%s1 + $0x6c] sm:$0xf]
  %v51 = vld [vmem:[%s1 + $0x70] sm:$0xf]
  %v52 = vld [vmem:[%s1 + $0x74] sm:$0xf]
  %v53 = vld [vmem:[%s1 + $0x78] sm:$0xf]
  %v54 = vld [vmem:[%s1 + $0x7c] sm:$0xf]
  %v55 = vld [vmem:[%s1 + $0x80] sm:$0xf]
  %v56 = vld [vmem:[%s1 + $0x84] sm:$0xf]
  %v57 = vld [vmem:[%s1 + $0x88] sm:$0xf]
  %v58 = vld [vmem:[%s1 + $0x8c] sm:$0xf]
  %v59 = vld [vmem:[%s1 + $0x90] sm:$0xf]
  %v60 = vld [vmem:[%s1 + $0x94] sm:$0xf]
  %v61 = vld [vmem:[%s1 + $0x98] sm:$0xf]
  %v62 = vld [vmem:[%s1 + $0x9c] sm:$0xf]
  %v63 = vld [vmem:[%s1 + $0xa0] sm:$0xf]
  %v64 = vld [vmem:[%s1 + $0xa4] sm:$0xf]
  %v65 = vld [vmem:[%s1 + $0xa8] sm:$0xf]
  %v66 = vld [vmem:[%s1 + $0xac] sm:$0xf]
  %v67 = vld [vmem:[%s1 + $0xb0] sm:$0xf]
  %v68 = vld [vmem:[%s1 + $0xb4] sm:$0xf]
  %v69 = vld [vmem:[%s1 + $0xb8] sm:$0xf]
  %v70 = vld [vmem:[%s1 + $0xbc] sm:$0xf]
  %v71 = vld [vmem:[%s1 + $0xc0] sm:$0xf]
  %v72 = vld [vmem:[%s1 + $0xc4] sm:$0xf]
  %v73 = vld [vmem:[%s1 + $0xc8] sm:$0xf]
  %v74 = vld [vmem:[%s1 + $0xcc] sm:$0xf]
  %v75 = vld [vmem:[%s1 + $0xd0] sm:$0xf]
  %v76 = vld [vmem:[%s1 + $0xd4] sm:$0xf]
  %v77 = vld [vmem:[%s1 + $0xd8] sm:$0xf]
  %v78 = vld [vmem:[%s1 + $0xdc] sm:$0xf]
  %v79 = vld [vmem:[%s1 + $0xe0] sm:$0xf]
  %v80 = vld [vmem:[%s1 + $0xe4] sm:$0xf]
  %v81 = vld [vmem:[%s1 + $0xe8] sm:$0xf]
  %v82 = vld [vmem:[%s1 + $0xec] sm:$0xf]
  %v83 = vld [vmem:[%s1 + $0xf0] sm:$0xf]
  %v84 = vld [vmem:[%s1 + $0xf4] sm:$0xf]
  %v85 = vld [vmem:[%s1 + $0xf8] sm:$0xf]
  %v86 = vld [vmem:[%s1 + $0xfc] sm:$0xf]
  %v87 = vld [vmem:[%s2] sm:$0x1]
  %v89 = vlaneseq
  %v90 = vshrl.u32 %v89, 7
  %v91 = vsub.s32 0, %v90
  %v92 = vrot.slane %v87, %v91
  %v102 = vunpack.c.l.b16 %v15
  %v103 = vunpack.c.h.b16 %v15
  %v104 = vunpack.c.l.b16 %v16
  %v105 = vunpack.c.h.b16 %v16
  %v106 = vunpack.c.l.b16 %v17
  %v107 = vunpack.c.h.b16 %v17
  %v108 = vunpack.c.l.b16 %v18
  %v109 = vunpack.c.h.b16 %v18
  %v110 = vunpack.c.l.b16 %v19
  %v111 = vunpack.c.h.b16 %v19
  %v112 = vunpack.c.l.b16 %v20
  %v113 = vunpack.c.h.b16 %v20
  %v114 = vunpack.c.l.b16 %v21
  %v115 = vunpack.c.h.b16 %v21
  %v116 = vunpack.c.l.b16 %v22
  %v117 = vunpack.c.h.b16 %v22
  %v118 = vpack.c.b16 %v106, %v102
  %v119 = vpack.c.b16 %v107, %v103
  %v120 = vpack.c.b16 %v108, %v104
  %v121 = vpack.c.b16 %v109, %v105
  %v122 = vpack.c.b16 %v114, %v110
  %v123 = vpack.c.b16 %v115, %v111
  %v124 = vpack.c.b16 %v116, %v112
  %v125 = vpack.c.b16 %v117, %v113
  %v198 = vunpack.c.l.b16 %v23
  %v199 = vunpack.c.l.b16 %v24
  %v200 = vunpack.c.l.b16 %v25
  %v201 = vunpack.c.l.b16 %v26
  %v202 = vunpack.c.l.b16 %v27
  %v203 = vunpack.c.l.b16 %v28
  %v204 = vunpack.c.l.b16 %v29
  %v205 = vunpack.c.l.b16 %v30
  %v206 = vunpack.c.l.b16 %v31
  %v207 = vunpack.c.l.b16 %v32
  %v208 = vunpack.c.l.b16 %v33
  %v209 = vunpack.c.l.b16 %v34
  %v210 = vunpack.c.l.b16 %v35
  %v211 = vunpack.c.l.b16 %v36
  %v212 = vunpack.c.l.b16 %v37
  %v213 = vunpack.c.l.b16 %v38
  %v214 = vunpack.c.l.b16 %v39
  %v215 = vunpack.c.l.b16 %v40
  %v216 = vunpack.c.l.b16 %v41
  %v217 = vunpack.c.l.b16 %v42
  %v218 = vunpack.c.l.b16 %v43
  %v219 = vunpack.c.l.b16 %v44
  %v220 = vunpack.c.l.b16 %v45
  %v221 = vunpack.c.l.b16 %v46
  %v222 = vunpack.c.l.b16 %v47
  %v223 = vunpack.c.l.b16 %v48
  %v224 = vunpack.c.l.b16 %v49
  %v225 = vunpack.c.l.b16 %v50
  %v226 = vunpack.c.l.b16 %v51
  %v227 = vunpack.c.l.b16 %v52
  %v228 = vunpack.c.l.b16 %v53
  %v229 = vunpack.c.l.b16 %v54
  %v230 = vunpack.c.l.b16 %v55
  %v231 = vunpack.c.l.b16 %v56
  %v232 = vunpack.c.l.b16 %v57
  %v233 = vunpack.c.l.b16 %v58
  %v234 = vunpack.c.l.b16 %v59
  %v235 = vunpack.c.l.b16 %v60
  %v236 = vunpack.c.l.b16 %v61
  %v237 = vunpack.c.l.b16 %v62
  %v238 = vunpack.c.l.b16 %v63
  %v239 = vunpack.c.l.b16 %v64
  %v240 = vunpack.c.l.b16 %v65
  %v241 = vunpack.c.l.b16 %v66
  %v242 = vunpack.c.l.b16 %v67
  %v243 = vunpack.c.l.b16 %v68
  %v244 = vunpack.c.l.b16 %v69
  %v245 = vunpack.c.l.b16 %v70
  %v246 = vunpack.c.l.b16 %v71
  %v247 = vunpack.c.l.b16 %v72
  %v248 = vunpack.c.l.b16 %v73
  %v249 = vunpack.c.l.b16 %v74
  %v250 = vunpack.c.l.b16 %v75
  %v251 = vunpack.c.l.b16 %v76
  %v252 = vunpack.c.l.b16 %v77
  %v253 = vunpack.c.l.b16 %v78
  %v254 = vunpack.c.l.b16 %v79
  %v255 = vunpack.c.l.b16 %v80
  %v256 = vunpack.c.l.b16 %v81
  %v257 = vunpack.c.l.b16 %v82
  %v258 = vunpack.c.l.b16 %v83
  %v259 = vunpack.c.l.b16 %v84
  %v260 = vunpack.c.l.b16 %v85
  %v261 = vunpack.c.l.b16 %v86
  %v262 = vpack.c.b16 %v199, %v198
  %v263 = vpack.c.b16 %v201, %v200
  %v264 = vpack.c.b16 %v203, %v202
  %v265 = vpack.c.b16 %v205, %v204
  %v266 = vpack.c.b16 %v207, %v206
  %v267 = vpack.c.b16 %v209, %v208
  %v268 = vpack.c.b16 %v211, %v210
  %v269 = vpack.c.b16 %v213, %v212
  %v270 = vpack.c.b16 %v215, %v214
  %v271 = vpack.c.b16 %v217, %v216
  %v272 = vpack.c.b16 %v219, %v218
  %v273 = vpack.c.b16 %v221, %v220
  %v274 = vpack.c.b16 %v223, %v222
  %v275 = vpack.c.b16 %v225, %v224
  %v276 = vpack.c.b16 %v227, %v226
  %v277 = vpack.c.b16 %v229, %v228
  %v278 = vpack.c.b16 %v231, %v230
  %v279 = vpack.c.b16 %v233, %v232
  %v280 = vpack.c.b16 %v235, %v234
  %v281 = vpack.c.b16 %v237, %v236
  %v282 = vpack.c.b16 %v239, %v238
  %v283 = vpack.c.b16 %v241, %v240
  %v284 = vpack.c.b16 %v243, %v242
  %v285 = vpack.c.b16 %v245, %v244
  %v286 = vpack.c.b16 %v247, %v246
  %v287 = vpack.c.b16 %v249, %v248
  %v288 = vpack.c.b16 %v251, %v250
  %v289 = vpack.c.b16 %v253, %v252
  %v290 = vpack.c.b16 %v255, %v254
  %v291 = vpack.c.b16 %v257, %v256
  %v292 = vpack.c.b16 %v259, %v258
  %v293 = vpack.c.b16 %v261, %v260
  %326 = vmatprep.subr.bf16.mxu0 0
  %327 = vmatpush1.bf16.msra.mxu0 %v262
  %328 = vmatprep.subr.bf16.mxu0 0
  %329 = vmatpush1.bf16.msra.mxu0 %v263
  %330 = vmatprep.subr.bf16.mxu0 0
  %331 = vmatpush1.bf16.msra.mxu0 %v264
  %332 = vmatprep.subr.bf16.mxu0 0
  %333 = vmatpush1.bf16.msra.mxu0 %v265
  %334 = vmatprep.subr.bf16.mxu0 0
  %335 = vmatpush1.bf16.msra.mxu0 %v266
  %336 = vmatprep.subr.bf16.mxu0 0
  %337 = vmatpush1.bf16.msra.mxu0 %v267
  %338 = vmatprep.subr.bf16.mxu0 0
  %339 = vmatpush1.bf16.msra.mxu0 %v268
  %340 = vmatprep.subr.bf16.mxu0 0
  %341 = vmatpush1.bf16.msra.mxu0 %v269
  %342 = vmatprep.subr.bf16.mxu0 0
  %343 = vmatpush1.bf16.msra.mxu0 %v270
  %344 = vmatprep.subr.bf16.mxu0 0
  %345 = vmatpush1.bf16.msra.mxu0 %v271
  %346 = vmatprep.subr.bf16.mxu0 0
  %347 = vmatpush1.bf16.msra.mxu0 %v272
  %348 = vmatprep.subr.bf16.mxu0 0
  %349 = vmatpush1.bf16.msra.mxu0 %v273
  %350 = vmatprep.subr.bf16.mxu0 0
  %351 = vmatpush1.bf16.msra.mxu0 %v274
  %352 = vmatprep.subr.bf16.mxu0 0
  %353 = vmatpush1.bf16.msra.mxu0 %v275
  %354 = vmatprep.subr.bf16.mxu0 0
  %355 = vmatpush1.bf16.msra.mxu0 %v276
  %356 = vmatprep.subr.bf16.mxu0 0
  %357 = vmatpush1.bf16.msra.mxu0 %v277
  %358 = vmatprep.mubr.bf16.mxu0 %v119
  %359 = vmatmul.mubr.bf16.gmra.mrb[0].mxu0 %v118
  %v360 = vpop.f32.mrb[0].mxu0
  %v361 = vadd.f32 %v92, %v360
  %v362 = vpop.f32.mrb[0].mxu0
  %v363 = vpop.f32.mrb[0].mxu0
  %v364 = vadd.f32 %v92, %v363
  %v365 = vpop.f32.mrb[0].mxu0
  %366 = vmatprep.mubr.bf16.mxu0 %v123
  %367 = vmatmul.mubr.bf16.gmra.mrb[0].mxu0 %v122
  %v368 = vpop.f32.mrb[0].mxu0
  %v369 = vadd.f32 %v92, %v368
  %v370 = vpop.f32.mrb[0].mxu0
  %v371 = vpop.f32.mrb[0].mxu0
  %v372 = vadd.f32 %v92, %v371
  %v373 = vpop.f32.mrb[0].mxu0
  %374 = vdwg.mxu0
  %375 = vmatprep.subr.bf16.mxu0 0
  %376 = vmatpush1.bf16.msra.mxu0 %v278
  %377 = vmatprep.subr.bf16.mxu0 0
  %378 = vmatpush1.bf16.msra.mxu0 %v279
  %379 = vmatprep.subr.bf16.mxu0 0
  %380 = vmatpush1.bf16.msra.mxu0 %v280
  %381 = vmatprep.subr.bf16.mxu0 0
  %382 = vmatpush1.bf16.msra.mxu0 %v281
  %383 = vmatprep.subr.bf16.mxu0 0
  %384 = vmatpush1.bf16.msra.mxu0 %v282
  %385 = vmatprep.subr.bf16.mxu0 0
  %386 = vmatpush1.bf16.msra.mxu0 %v283
  %387 = vmatprep.subr.bf16.mxu0 0
  %388 = vmatpush1.bf16.msra.mxu0 %v284
  %389 = vmatprep.subr.bf16.mxu0 0
  %390 = vmatpush1.bf16.msra.mxu0 %v285
  %391 = vmatprep.subr.bf16.mxu0 0
  %392 = vmatpush1.bf16.msra.mxu0 %v286
  %393 = vmatprep.subr.bf16.mxu0 0
  %394 = vmatpush1.bf16.msra.mxu0 %v287
  %395 = vmatprep.subr.bf16.mxu0 0
  %396 = vmatpush1.bf16.msra.mxu0 %v288
  %397 = vmatprep.subr.bf16.mxu0 0
  %398 = vmatpush1.bf16.msra.mxu0 %v289
  %399 = vmatprep.subr.bf16.mxu0 0
  %400 = vmatpush1.bf16.msra.mxu0 %v290
  %401 = vmatprep.subr.bf16.mxu0 0
  %402 = vmatpush1.bf16.msra.mxu0 %v291
  %403 = vmatprep.subr.bf16.mxu0 0
  %404 = vmatpush1.bf16.msra.mxu0 %v292
  %405 = vmatprep.subr.bf16.mxu0 0
  %406 = vmatpush1.bf16.msra.mxu0 %v293
  %407 = vmatprep.mubr.bf16.mxu0 %v121
  %408 = vmatmul.mubr.bf16.gmra.mrb[0].mxu0 %v120
  %v409 = vpop.f32.mrb[0].mxu0
  %v410 = vadd.f32 %v361, %v409
  %v411 = vpop.f32.mrb[0].mxu0
  %v412 = vpop.f32.mrb[0].mxu0
  %v413 = vadd.f32 %v364, %v412
  %v414 = vpop.f32.mrb[0].mxu0
  %415 = vmatprep.mubr.bf16.mxu0 %v125
  %416 = vmatmul.mubr.bf16.gmra.mrb[0].mxu0 %v124
  %v417 = vpop.f32.mrb[0].mxu0
  %v418 = vadd.f32 %v369, %v417
  %v419 = vpop.f32.mrb[0].mxu0
  %v420 = vpop.f32.mrb[0].mxu0
  %v421 = vadd.f32 %v372, %v420
  %v422 = vpop.f32.mrb[0].mxu0
  %423 = vdwg.mxu0
  %v424 = vadd.f32 %v410, %v413
  %v425 = vadd.f32 %v424, %v418
  %v426 = vadd.f32 %v425, %v421
  %v427 = vrot.slane %v426, 4
  %v428 = vadd.f32 %v426, %v427
  %v429 = vrot.slane %v428, 2
  %v430 = vadd.f32 %v428, %v429
  %v431 = vrot.slane %v430, 1
  %v432 = vadd.f32 %v430, %v431
  %v433 = vmul.f32 %v432, 0.03125
  %v434 = vmul.f32 %v410, %v410
  %v435 = vmul.f32 %v413, %v413
  %v436 = vmul.f32 %v418, %v418
  %v437 = vmul.f32 %v421, %v421
  %v438 = vadd.f32 %v434, %v435
  %v439 = vadd.f32 %v438, %v436
  %v440 = vadd.f32 %v439, %v437
  %v441 = vrot.slane %v440, 4
  %v442 = vadd.f32 %v440, %v441
  %v443 = vrot.slane %v442, 2
  %v444 = vadd.f32 %v442, %v443
  %v445 = vrot.slane %v444, 1
  %v446 = vadd.f32 %v444, %v445
  %v447 = vmul.f32 %v446, 0.03125
  %v448 = vmul.f32 %v433, %v433
  %v449 = vsub.f32 %v447, %v448
  %v450 = vsub.f32 %v410, %v433
  %v451 = vsub.f32 %v413, %v433
  %v452 = vsub.f32 %v418, %v433
  %v453 = vsub.f32 %v421, %v433
  %v454 = vadd.f32 %v449, 1e-05
  %v455 = vrsqrt.pop %v454
  %v456 = vmul.f32 %v450, %v455
  %v457 = vmul.f32 %v451, %v455
  %v458 = vmul.f32 %v452, %v455
  %v459 = vmul.f32 %v453, %v455
  %v460 = vmax.f32 %v456, 0.0
  %v461 = vmax.f32 %v457, 0.0
  %v462 = vmax.f32 %v458, 0.0
  %v463 = vmax.f32 %v459, 0.0
  %464 = vst [vmem:[%s3] sm:$0xff] %v460
  %465 = vst [vmem:[%s3 + $0x8] sm:$0xff] %v461
  %466 = vst [vmem:[%s3 + $0x10] sm:$0xff] %v462
  %467 = vst [vmem:[%s3 + $0x18] sm:$0xff] %v463
  // Predicated region
  $region14: #{generator_forward.16} parent=0 // pred_check
    _
  $region15: #{generator_forward.16} parent=0 // pred_check_branch
    %469 = sbr.rel (0) target = $region17
  $region16: #{generator_forward.16} parent=0 // pred_region
    _
  $region17: #{generator_forward.16} parent=0 // pred_fallthru
    _
  // Predicated region
  $region18: #{generator_forward.16} parent=0 // pred_check
    _
  $region19: #{generator_forward.16} parent=0 // pred_check_branch
    %471 = sbr.rel (0) target = $region21
  $region20: #{generator_forward.16} parent=0 // pred_region
    _
  $region21: #{generator_forward.16} parent=0 // pred_fallthru
    _

// kernel: generator_forward.17
$region0: #{generator_forward.17}
  #allocation0 [shape = 'u32[]', space=smem, size = 0x4, offset = 0x4, fixed_abs, tag = 'smem constant byte address 0x4 - core index']
  #allocation1 [shape = 'u32[144,128]{1,0:T(1,128)}', space=vmem, size = 0x12000, scoped, tag = 'internal scratch']
  %s0 = inlined_call_operand.vmem [shape: bf16[128,512], index: 0, kind: input, shape index: {}]
  %s1 = inlined_call_operand.vmem [shape: bf16[512,128], index: 1, kind: input, shape index: {}]
  %s2 = inlined_call_operand.vmem [shape: f32[1,128], index: 2, kind: input, shape index: {}]
  %s3 = inlined_call_operand.vmem [shape: f32[128,128], index: 3, kind: output, shape index: {}]
  %s4 = sld [smem:[#allocation0]]
  $region22: #{generator_forward.17} parent=0
    _
  %s6 = ssub.s32 1, %s4
  %s7 = scalar_select 0, %s6, %s4
  // Predicated region
  $region2: #{generator_forward.17} parent=0 // pred_check
    _
  $region3: #{generator_forward.17} parent=0 // pred_check_branch
    %9 = sbr.rel (0) target = $region5
  $region4: #{generator_forward.17} parent=0 // pred_region
    _
  $region5: #{generator_forward.17} parent=0 // pred_fallthru
    _
  // Predicated region
  $region6: #{generator_forward.17} parent=0 // pred_check
    _
  $region7: #{generator_forward.17} parent=0 // pred_check_branch
    %11 = sbr.rel (0) target = $region9
  $region8: #{generator_forward.17} parent=0 // pred_region
    _
  $region9: #{generator_forward.17} parent=0 // pred_fallthru
    _
  // Predicated region
  $region10: #{generator_forward.17} parent=0 // pred_check
    _
  $region11: #{generator_forward.17} parent=0 // pred_check_branch
    %13 = sbr.rel (0) target = $region13
  $region12: #{generator_forward.17} parent=0 // pred_region
    _
  $region13: #{generator_forward.17} parent=0 // pred_fallthru
    _
  %v15 = vld [vmem:[%s0] sm:$0xff]
  %v16 = vld [vmem:[%s0 + $0x8] sm:$0xff]
  %v17 = vld [vmem:[%s0 + $0x10] sm:$0xff]
  %v18 = vld [vmem:[%s0 + $0x18] sm:$0xff]
  %v19 = vld [vmem:[%s0 + $0x20] sm:$0xff]
  %v20 = vld [vmem:[%s0 + $0x28] sm:$0xff]
  %v21 = vld [vmem:[%s0 + $0x30] sm:$0xff]
  %v22 = vld [vmem:[%s0 + $0x38] sm:$0xff]
  %v23 = vld [vmem:[%s0 + $0x40] sm:$0xff]
  %v24 = vld [vmem:[%s0 + $0x48] sm:$0xff]
  %v25 = vld [vmem:[%s0 + $0x50] sm:$0xff]
  %v26 = vld [vmem:[%s0 + $0x58] sm:$0xff]
  %v27 = vld [vmem:[%s0 + $0x60] sm:$0xff]
  %v28 = vld [vmem:[%s0 + $0x68] sm:$0xff]
  %v29 = vld [vmem:[%s0 + $0x70] sm:$0xff]
  %v30 = vld [vmem:[%s0 + $0x78] sm:$0xff]
  %v31 = vld [vmem:[%s0 + $0x80] sm:$0xff]
  %v32 = vld [vmem:[%s0 + $0x88] sm:$0xff]
  %v33 = vld [vmem:[%s0 + $0x90] sm:$0xff]
  %v34 = vld [vmem:[%s0 + $0x98] sm:$0xff]
  %v35 = vld [vmem:[%s0 + $0xa0] sm:$0xff]
  %v36 = vld [vmem:[%s0 + $0xa8] sm:$0xff]
  %v37 = vld [vmem:[%s0 + $0xb0] sm:$0xff]
  %v38 = vld [vmem:[%s0 + $0xb8] sm:$0xff]
  %v39 = vld [vmem:[%s0 + $0xc0] sm:$0xff]
  %v40 = vld [vmem:[%s0 + $0xc8] sm:$0xff]
  %v41 = vld [vmem:[%s0 + $0xd0] sm:$0xff]
  %v42 = vld [vmem:[%s0 + $0xd8] sm:$0xff]
  %v43 = vld [vmem:[%s0 + $0xe0] sm:$0xff]
  %v44 = vld [vmem:[%s0 + $0xe8] sm:$0xff]
  %v45 = vld [vmem:[%s0 + $0xf0] sm:$0xff]
  %v46 = vld [vmem:[%s0 + $0xf8] sm:$0xff]
  %v47 = vld [vmem:[%s1] sm:$0xf]
  %v48 = vld [vmem:[%s1 + $0x4] sm:$0xf]
  %v49 = vld [vmem:[%s1 + $0x8] sm:$0xf]
  %v50 = vld [vmem:[%s1 + $0xc] sm:$0xf]
  %v51 = vld [vmem:[%s1 + $0x10] sm:$0xf]
  %v52 = vld [vmem:[%s1 + $0x14] sm:$0xf]
  %v53 = vld [vmem:[%s1 + $0x18] sm:$0xf]
  %v54 = vld [vmem:[%s1 + $0x1c] sm:$0xf]
  %v55 = vld [vmem:[%s1 + $0x20] sm:$0xf]
  %v56 = vld [vmem:[%s1 + $0x24] sm:$0xf]
  %v57 = vld [vmem:[%s1 + $0x28] sm:$0xf]
  %v58 = vld [vmem:[%s1 + $0x2c] sm:$0xf]
  %v59 = vld [vmem:[%s1 + $0x30] sm:$0xf]
  %v60 = vld [vmem:[%s1 + $0x34] sm:$0xf]
  %v61 = vld [vmem:[%s1 + $0x38] sm:$0xf]
  %v62 = vld [vmem:[%s1 + $0x3c] sm:$0xf]
  %v63 = vld [vmem:[%s1 + $0x40] sm:$0xf]
  %v64 = vld [vmem:[%s1 + $0x44] sm:$0xf]
  %v65 = vld [vmem:[%s1 + $0x48] sm:$0xf]
  %v66 = vld [vmem:[%s1 + $0x4c] sm:$0xf]
  %v67 = vld [vmem:[%s1 + $0x50] sm:$0xf]
  %v68 = vld [vmem:[%s1 + $0x54] sm:$0xf]
  %v69 = vld [vmem:[%s1 + $0x58] sm:$0xf]
  %v70 = vld [vmem:[%s1 + $0x5c] sm:$0xf]
  %v71 = vld [vmem:[%s1 + $0x60] sm:$0xf]
  %v72 = vld [vmem:[%s1 + $0x64] sm:$0xf]
  %v73 = vld [vmem:[%s1 + $0x68] sm:$0xf]
  %v74 = vld [vmem:[%s1 + $0x6c] sm:$0xf]
  %v75 = vld [vmem:[%s1 + $0x70] sm:$0xf]
  %v76 = vld [vmem:[%s1 + $0x74] sm:$0xf]
  %v77 = vld [vmem:[%s1 + $0x78] sm:$0xf]
  %v78 = vld [vmem:[%s1 + $0x7c] sm:$0xf]
  %v79 = vld [vmem:[%s1 + $0x80] sm:$0xf]
  %v80 = vld [vmem:[%s1 + $0x84] sm:$0xf]
  %v81 = vld [vmem:[%s1 + $0x88] sm:$0xf]
  %v82 = vld [vmem:[%s1 + $0x8c] sm:$0xf]
  %v83 = vld [vmem:[%s1 + $0x90] sm:$0xf]
  %v84 = vld [vmem:[%s1 + $0x94] sm:$0xf]
  %v85 = vld [vmem:[%s1 + $0x98] sm:$0xf]
  %v86 = vld [vmem:[%s1 + $0x9c] sm:$0xf]
  %v87 = vld [vmem:[%s1 + $0xa0] sm:$0xf]
  %v88 = vld [vmem:[%s1 + $0xa4] sm:$0xf]
  %v89 = vld [vmem:[%s1 + $0xa8] sm:$0xf]
  %v90 = vld [vmem:[%s1 + $0xac] sm:$0xf]
  %v91 = vld [vmem:[%s1 + $0xb0] sm:$0xf]
  %v92 = vld [vmem:[%s1 + $0xb4] sm:$0xf]
  %v93 = vld [vmem:[%s1 + $0xb8] sm:$0xf]
  %v94 = vld [vmem:[%s1 + $0xbc] sm:$0xf]
  %v95 = vld [vmem:[%s1 + $0xc0] sm:$0xf]
  %v96 = vld [vmem:[%s1 + $0xc4] sm:$0xf]
  %v97 = vld [vmem:[%s1 + $0xc8] sm:$0xf]
  %v98 = vld [vmem:[%s1 + $0xcc] sm:$0xf]
  %v99 = vld [vmem:[%s1 + $0xd0] sm:$0xf]
  %v100 = vld [vmem:[%s1 + $0xd4] sm:$0xf]
  %v101 = vld [vmem:[%s1 + $0xd8] sm:$0xf]
  %v102 = vld [vmem:[%s1 + $0xdc] sm:$0xf]
  %v103 = vld [vmem:[%s1 + $0xe0] sm:$0xf]
  %v104 = vld [vmem:[%s1 + $0xe4] sm:$0xf]
  %v105 = vld [vmem:[%s1 + $0xe8] sm:$0xf]
  %v106 = vld [vmem:[%s1 + $0xec] sm:$0xf]
  %v107 = vld [vmem:[%s1 + $0xf0] sm:$0xf]
  %v108 = vld [vmem:[%s1 + $0xf4] sm:$0xf]
  %v109 = vld [vmem:[%s1 + $0xf8] sm:$0xf]
  %v110 = vld [vmem:[%s1 + $0xfc] sm:$0xf]
  %v111 = vld [vmem:[%s2] sm:$0x1]
  %v113 = vlaneseq
  %v114 = vshrl.u32 %v113, 7
  %v115 = vsub.s32 0, %v114
  %v116 = vrot.slane %v111, %v115
  %v150 = vunpack.c.l.b16 %v15
  %v151 = vunpack.c.h.b16 %v15
  %v152 = vunpack.c.l.b16 %v16
  %v153 = vunpack.c.h.b16 %v16
  %v154 = vunpack.c.l.b16 %v17
  %v155 = vunpack.c.h.b16 %v17
  %v156 = vunpack.c.l.b16 %v18
  %v157 = vunpack.c.h.b16 %v18
  %v158 = vunpack.c.l.b16 %v19
  %v159 = vunpack.c.h.b16 %v19
  %v160 = vunpack.c.l.b16 %v20
  %v161 = vunpack.c.h.b16 %v20
  %v162 = vunpack.c.l.b16 %v21
  %v163 = vunpack.c.h.b16 %v21
  %v164 = vunpack.c.l.b16 %v22
  %v165 = vunpack.c.h.b16 %v22
  %v166 = vunpack.c.l.b16 %v23
  %v167 = vunpack.c.h.b16 %v23
  %v168 = vunpack.c.l.b16 %v24
  %v169 = vunpack.c.h.b16 %v24
  %v170 = vunpack.c.l.b16 %v25
  %v171 = vunpack.c.h.b16 %v25
  %v172 = vunpack.c.l.b16 %v26
  %v173 = vunpack.c.h.b16 %v26
  %v174 = vunpack.c.l.b16 %v27
  %v175 = vunpack.c.h.b16 %v27
  %v176 = vunpack.c.l.b16 %v28
  %v177 = vunpack.c.h.b16 %v28
  %v178 = vunpack.c.l.b16 %v29
  %v179 = vunpack.c.h.b16 %v29
  %v180 = vunpack.c.l.b16 %v30
  %v181 = vunpack.c.h.b16 %v30
  %v182 = vunpack.c.l.b16 %v31
  %v183 = vunpack.c.h.b16 %v31
  %v184 = vunpack.c.l.b16 %v32
  %v185 = vunpack.c.h.b16 %v32
  %v186 = vunpack.c.l.b16 %v33
  %v187 = vunpack.c.h.b16 %v33
  %v188 = vunpack.c.l.b16 %v34
  %v189 = vunpack.c.h.b16 %v34
  %v190 = vunpack.c.l.b16 %v35
  %v191 = vunpack.c.h.b16 %v35
  %v192 = vunpack.c.l.b16 %v36
  %v193 = vunpack.c.h.b16 %v36
  %v194 = vunpack.c.l.b16 %v37
  %v195 = vunpack.c.h.b16 %v37
  %v196 = vunpack.c.l.b16 %v38
  %v197 = vunpack.c.h.b16 %v38
  %v198 = vunpack.c.l.b16 %v39
  %v199 = vunpack.c.h.b16 %v39
  %v200 = vunpack.c.l.b16 %v40
  %v201 = vunpack.c.h.b16 %v40
  %v202 = vunpack.c.l.b16 %v41
  %v203 = vunpack.c.h.b16 %v41
  %v204 = vunpack.c.l.b16 %v42
  %v205 = vunpack.c.h.b16 %v42
  %v206 = vunpack.c.l.b16 %v43
  %v207 = vunpack.c.h.b16 %v43
  %v208 = vunpack.c.l.b16 %v44
  %v209 = vunpack.c.h.b16 %v44
  %v210 = vunpack.c.l.b16 %v45
  %v211 = vunpack.c.h.b16 %v45
  %v212 = vunpack.c.l.b16 %v46
  %v213 = vunpack.c.h.b16 %v46
  %v214 = vpack.c.b16 %v154, %v150
  %v215 = vpack.c.b16 %v155, %v151
  %v216 = vpack.c.b16 %v156, %v152
  %v217 = vpack.c.b16 %v157, %v153
  %v218 = vpack.c.b16 %v162, %v158
  %v219 = vpack.c.b16 %v163, %v159
  %v220 = vpack.c.b16 %v164, %v160
  %v221 = vpack.c.b16 %v165, %v161
  %v222 = vpack.c.b16 %v170, %v166
  %v223 = vpack.c.b16 %v171, %v167
  %v224 = vpack.c.b16 %v172, %v168
  %v225 = vpack.c.b16 %v173, %v169
  %v226 = vpack.c.b16 %v178, %v174
  %v227 = vpack.c.b16 %v179, %v175
  %v228 = vpack.c.b16 %v180, %v176
  %v229 = vpack.c.b16 %v181, %v177
  %v230 = vpack.c.b16 %v186, %v182
  %v231 = vpack.c.b16 %v187, %v183
  %v232 = vpack.c.b16 %v188, %v184
  %v233 = vpack.c.b16 %v189, %v185
  %v234 = vpack.c.b16 %v194, %v190
  %v235 = vpack.c.b16 %v195, %v191
  %v236 = vpack.c.b16 %v196, %v192
  %v237 = vpack.c.b16 %v197, %v193
  %v238 = vpack.c.b16 %v202, %v198
  %v239 = vpack.c.b16 %v203, %v199
  %v240 = vpack.c.b16 %v204, %v200
  %v241 = vpack.c.b16 %v205, %v201
  %v242 = vpack.c.b16 %v210, %v206
  %v243 = vpack.c.b16 %v211, %v207
  %v244 = vpack.c.b16 %v212, %v208
  %v245 = vpack.c.b16 %v213, %v209
  %v342 = vunpack.c.l.b16 %v47
  %v343 = vunpack.c.l.b16 %v48
  %v344 = vunpack.c.l.b16 %v49
  %v345 = vunpack.c.l.b16 %v50
  %v346 = vunpack.c.l.b16 %v51
  %v347 = vunpack.c.l.b16 %v52
  %v348 = vunpack.c.l.b16 %v53
  %v349 = vunpack.c.l.b16 %v54
  %v350 = vunpack.c.l.b16 %v55
  %v351 = vunpack.c.l.b16 %v56
  %v352 = vunpack.c.l.b16 %v57
  %v353 = vunpack.c.l.b16 %v58
  %v354 = vunpack.c.l.b16 %v59
  %v355 = vunpack.c.l.b16 %v60
  %v356 = vunpack.c.l.b16 %v61
  %v357 = vunpack.c.l.b16 %v62
  %v358 = vunpack.c.l.b16 %v63
  %v359 = vunpack.c.l.b16 %v64
  %v360 = vunpack.c.l.b16 %v65
  %v361 = vunpack.c.l.b16 %v66
  %v362 = vunpack.c.l.b16 %v67
  %v363 = vunpack.c.l.b16 %v68
  %v364 = vunpack.c.l.b16 %v69
  %v365 = vunpack.c.l.b16 %v70
  %v366 = vunpack.c.l.b16 %v71
  %v367 = vunpack.c.l.b16 %v72
  %v368 = vunpack.c.l.b16 %v73
  %v369 = vunpack.c.l.b16 %v74
  %v370 = vunpack.c.l.b16 %v75
  %v371 = vunpack.c.l.b16 %v76
  %v372 = vunpack.c.l.b16 %v77
  %v373 = vunpack.c.l.b16 %v78
  %v374 = vunpack.c.l.b16 %v79
  %v375 = vunpack.c.l.b16 %v80
  %v376 = vunpack.c.l.b16 %v81
  %v377 = vunpack.c.l.b16 %v82
  %v378 = vunpack.c.l.b16 %v83
  %v379 = vunpack.c.l.b16 %v84
  %v380 = vunpack.c.l.b16 %v85
  %v381 = vunpack.c.l.b16 %v86
  %v382 = vunpack.c.l.b16 %v87
  %v383 = vunpack.c.l.b16 %v88
  %v384 = vunpack.c.l.b16 %v89
  %v385 = vunpack.c.l.b16 %v90
  %v386 = vunpack.c.l.b16 %v91
  %v387 = vunpack.c.l.b16 %v92
  %v388 = vunpack.c.l.b16 %v93
  %v389 = vunpack.c.l.b16 %v94
  %v390 = vunpack.c.l.b16 %v95
  %v391 = vunpack.c.l.b16 %v96
  %v392 = vunpack.c.l.b16 %v97
  %v393 = vunpack.c.l.b16 %v98
  %v394 = vunpack.c.l.b16 %v99
  %v395 = vunpack.c.l.b16 %v100
  %v396 = vunpack.c.l.b16 %v101
  %v397 = vunpack.c.l.b16 %v102
  %v398 = vunpack.c.l.b16 %v103
  %v399 = vunpack.c.l.b16 %v104
  %v400 = vunpack.c.l.b16 %v105
  %v401 = vunpack.c.l.b16 %v106
  %v402 = vunpack.c.l.b16 %v107
  %v403 = vunpack.c.l.b16 %v108
  %v404 = vunpack.c.l.b16 %v109
  %v405 = vunpack.c.l.b16 %v110
  %v406 = vpack.c.b16 %v343, %v342
  %v407 = vpack.c.b16 %v345, %v344
  %v408 = vpack.c.b16 %v347, %v346
  %v409 = vpack.c.b16 %v349, %v348
  %v410 = vpack.c.b16 %v351, %v350
  %v411 = vpack.c.b16 %v353, %v352
  %v412 = vpack.c.b16 %v355, %v354
  %v413 = vpack.c.b16 %v357, %v356
  %v414 = vpack.c.b16 %v359, %v358
  %v415 = vpack.c.b16 %v361, %v360
  %v416 = vpack.c.b16 %v363, %v362
  %v417 = vpack.c.b16 %v365, %v364
  %v418 = vpack.c.b16 %v367, %v366
  %v419 = vpack.c.b16 %v369, %v368
  %v420 = vpack.c.b16 %v371, %v370
  %v421 = vpack.c.b16 %v373, %v372
  %v422 = vpack.c.b16 %v375, %v374
  %v423 = vpack.c.b16 %v377, %v376
  %v424 = vpack.c.b16 %v379, %v378
  %v425 = vpack.c.b16 %v381, %v380
  %v426 = vpack.c.b16 %v383, %v382
  %v427 = vpack.c.b16 %v385, %v384
  %v428 = vpack.c.b16 %v387, %v386
  %v429 = vpack.c.b16 %v389, %v388
  %v430 = vpack.c.b16 %v391, %v390
  %v431 = vpack.c.b16 %v393, %v392
  %v432 = vpack.c.b16 %v395, %v394
  %v433 = vpack.c.b16 %v397, %v396
  %v434 = vpack.c.b16 %v399, %v398
  %v435 = vpack.c.b16 %v401, %v400
  %v436 = vpack.c.b16 %v403, %v402
  %v437 = vpack.c.b16 %v405, %v404
  %470 = vmatprep.subr.bf16.mxu0 0
  %471 = vmatpush1.bf16.msra.mxu0 %v406
  %472 = vmatprep.subr.bf16.mxu0 0
  %473 = vmatpush1.bf16.msra.mxu0 %v407
  %474 = vmatprep.subr.bf16.mxu0 0
  %475 = vmatpush1.bf16.msra.mxu0 %v408
  %476 = vmatprep.subr.bf16.mxu0 0
  %477 = vmatpush1.bf16.msra.mxu0 %v409
  %478 = vmatprep.subr.bf16.mxu0 0
  %479 = vmatpush1.bf16.msra.mxu0 %v410
  %480 = vmatprep.subr.bf16.mxu0 0
  %481 = vmatpush1.bf16.msra.mxu0 %v411
  %482 = vmatprep.subr.bf16.mxu0 0
  %483 = vmatpush1.bf16.msra.mxu0 %v412
  %484 = vmatprep.subr.bf16.mxu0 0
  %485 = vmatpush1.bf16.msra.mxu0 %v413
  %486 = vmatprep.subr.bf16.mxu0 0
  %487 = vmatpush1.bf16.msra.mxu0 %v414
  %488 = vmatprep.subr.bf16.mxu0 0
  %489 = vmatpush1.bf16.msra.mxu0 %v415
  %490 = vmatprep.subr.bf16.mxu0 0
  %491 = vmatpush1.bf16.msra.mxu0 %v416
  %492 = vmatprep.subr.bf16.mxu0 0
  %493 = vmatpush1.bf16.msra.mxu0 %v417
  %494 = vmatprep.subr.bf16.mxu0 0
  %495 = vmatpush1.bf16.msra.mxu0 %v418
  %496 = vmatprep.subr.bf16.mxu0 0
  %497 = vmatpush1.bf16.msra.mxu0 %v419
  %498 = vmatprep.subr.bf16.mxu0 0
  %499 = vmatpush1.bf16.msra.mxu0 %v420
  %500 = vmatprep.subr.bf16.mxu0 0
  %501 = vmatpush1.bf16.msra.mxu0 %v421
  %502 = vmatprep.mubr.bf16.mxu0 %v215
  %503 = vmatmul.mubr.bf16.gmra.mrb[0].mxu0 %v214
  %v504 = vpop.f32.mrb[0].mxu0
  %v505 = vadd.f32 %v116, %v504
  %v506 = vpop.f32.mrb[0].mxu0
  %v507 = vpop.f32.mrb[0].mxu0
  %v508 = vadd.f32 %v116, %v507
  %v509 = vpop.f32.mrb[0].mxu0
  %510 = vmatprep.mubr.bf16.mxu0 %v219
  %511 = vmatmul.mubr.bf16.gmra.mrb[0].mxu0 %v218
  %v512 = vpop.f32.mrb[0].mxu0
  %v513 = vadd.f32 %v116, %v512
  %v514 = vpop.f32.mrb[0].mxu0
  %v515 = vpop.f32.mrb[0].mxu0
  %v516 = vadd.f32 %v116, %v515
  %v517 = vpop.f32.mrb[0].mxu0
  %518 = vmatprep.mubr.bf16.mxu0 %v223
  %519 = vmatmul.mubr.bf16.gmra.mrb[0].mxu0 %v222
  %v520 = vpop.f32.mrb[0].mxu0
  %v521 = vadd.f32 %v116, %v520
  %v522 = vpop.f32.mrb[0].mxu0
  %v523 = vpop.f32.mrb[0].mxu0
  %v524 = vadd.f32 %v116, %v523
  %v525 = vpop.f32.mrb[0].mxu0
  %526 = vmatprep.mubr.bf16.mxu0 %v227
  %527 = vmatmul.mubr.bf16.gmra.mrb[0].mxu0 %v226
  %v528 = vpop.f32.mrb[0].mxu0
  %v529 = vadd.f32 %v116, %v528
  %v530 = vpop.f32.mrb[0].mxu0
  %v531 = vpop.f32.mrb[0].mxu0
  %v532 = vadd.f32 %v116, %v531
  %v533 = vpop.f32.mrb[0].mxu0
  %534 = vmatprep.mubr.bf16.mxu0 %v231
  %535 = vmatmul.mubr.bf16.gmra.mrb[0].mxu0 %v230
  %v536 = vpop.f32.mrb[0].mxu0
  %v537 = vadd.f32 %v116, %v536
  %v538 = vpop.f32.mrb[0].mxu0
  %v539 = vpop.f32.mrb[0].mxu0
  %v540 = vadd.f32 %v116, %v539
  %v541 = vpop.f32.mrb[0].mxu0
  %542 = vmatprep.mubr.bf16.mxu0 %v235
  %543 = vmatmul.mubr.bf16.gmra.mrb[0].mxu0 %v234
  %v544 = vpop.f32.mrb[0].mxu0
  %v545 = vadd.f32 %v116, %v544
  %v546 = vpop.f32.mrb[0].mxu0
  %v547 = vpop.f32.mrb[0].mxu0
  %v548 = vadd.f32 %v116, %v547
  %v549 = vpop.f32.mrb[0].mxu0
  %550 = vmatprep.mubr.bf16.mxu0 %v239
  %551 = vmatmul.mubr.bf16.gmra.mrb[0].mxu0 %v238
  %v552 = vpop.f32.mrb[0].mxu0
  %v553 = vadd.f32 %v116, %v552
  %v554 = vpop.f32.mrb[0].mxu0
  %v555 = vpop.f32.mrb[0].mxu0
  %v556 = vadd.f32 %v116, %v555
  %v557 = vpop.f32.mrb[0].mxu0
  %558 = vmatprep.mubr.bf16.mxu0 %v243
  %559 = vmatmul.mubr.bf16.gmra.mrb[0].mxu0 %v242
  %v560 = vpop.f32.mrb[0].mxu0
  %v561 = vadd.f32 %v116, %v560
  %v562 = vpop.f32.mrb[0].mxu0
  %v563 = vpop.f32.mrb[0].mxu0
  %v564 = vadd.f32 %v116, %v563
  %v565 = vpop.f32.mrb[0].mxu0
  %566 = vdwg.mxu0
  %567 = vmatprep.subr.bf16.mxu0 0
  %568 = vmatpush1.bf16.msra.mxu0 %v422
  %569 = vmatprep.subr.bf16.mxu0 0
  %570 = vmatpush1.bf16.msra.mxu0 %v423
  %571 = vmatprep.subr.bf16.mxu0 0
  %572 = vmatpush1.bf16.msra.mxu0 %v424
  %573 = vmatprep.subr.bf16.mxu0 0
  %574 = vmatpush1.bf16.msra.mxu0 %v425
  %575 = vmatprep.subr.bf16.mxu0 0
  %576 = vmatpush1.bf16.msra.mxu0 %v426
  %577 = vmatprep.subr.bf16.mxu0 0
  %578 = vmatpush1.bf16.msra.mxu0 %v427
  %579 = vmatprep.subr.bf16.mxu0 0
  %580 = vmatpush1.bf16.msra.mxu0 %v428
  %581 = vmatprep.subr.bf16.mxu0 0
  %582 = vmatpush1.bf16.msra.mxu0 %v429
  %583 = vmatprep.subr.bf16.mxu0 0
  %584 = vmatpush1.bf16.msra.mxu0 %v430
  %585 = vmatprep.subr.bf16.mxu0 0
  %586 = vmatpush1.bf16.msra.mxu0 %v431
  %587 = vmatprep.subr.bf16.mxu0 0
  %588 = vmatpush1.bf16.msra.mxu0 %v432
  %589 = vmatprep.subr.bf16.mxu0 0
  %590 = vmatpush1.bf16.msra.mxu0 %v433
  %591 = vmatprep.subr.bf16.mxu0 0
  %592 = vmatpush1.bf16.msra.mxu0 %v434
  %593 = vmatprep.subr.bf16.mxu0 0
  %594 = vmatpush1.bf16.msra.mxu0 %v435
  %595 = vmatprep.subr.bf16.mxu0 0
  %596 = vmatpush1.bf16.msra.mxu0 %v436
  %597 = vmatprep.subr.bf16.mxu0 0
  %598 = vmatpush1.bf16.msra.mxu0 %v437
  %599 = vmatprep.mubr.bf16.mxu0 %v217
  %600 = vmatmul.mubr.bf16.gmra.mrb[0].mxu0 %v216
  %v601 = vpop.f32.mrb[0].mxu0
  %v602 = vadd.f32 %v505, %v601
  %v603 = vpop.f32.mrb[0].mxu0
  %v604 = vpop.f32.mrb[0].mxu0
  %v605 = vadd.f32 %v508, %v604
  %v606 = vpop.f32.mrb[0].mxu0
  %607 = vmatprep.mubr.bf16.mxu0 %v221
  %608 = vmatmul.mubr.bf16.gmra.mrb[0].mxu0 %v220
  %v609 = vpop.f32.mrb[0].mxu0
  %v610 = vadd.f32 %v513, %v609
  %v611 = vpop.f32.mrb[0].mxu0
  %v612 = vpop.f32.mrb[0].mxu0
  %v613 = vadd.f32 %v516, %v612
  %v614 = vpop.f32.mrb[0].mxu0
  %615 = vmatprep.mubr.bf16.mxu0 %v225
  %616 = vmatmul.mubr.bf16.gmra.mrb[0].mxu0 %v224
  %v617 = vpop.f32.mrb[0].mxu0
  %v618 = vadd.f32 %v521, %v617
  %v619 = vpop.f32.mrb[0].mxu0
  %v620 = vpop.f32.mrb[0].mxu0
  %v621 = vadd.f32 %v524, %v620
  %v622 = vpop.f32.mrb[0].mxu0
  %623 = vmatprep.mubr.bf16.mxu0 %v229
  %624 = vmatmul.mubr.bf16.gmra.mrb[0].mxu0 %v228
  %v625 = vpop.f32.mrb[0].mxu0
  %v626 = vadd.f32 %v529, %v625
  %v627 = vpop.f32.mrb[0].mxu0
  %v628 = vpop.f32.mrb[0].mxu0
  %v629 = vadd.f32 %v532, %v628
  %v630 = vpop.f32.mrb[0].mxu0
  %631 = vmatprep.mubr.bf16.mxu0 %v233
  %632 = vmatmul.mubr.bf16.gmra.mrb[0].mxu0 %v232
  %v633 = vpop.f32.mrb[0].mxu0
  %v634 = vadd.f32 %v537, %v633
  %v635 = vpop.f32.mrb[0].mxu0
  %v636 = vpop.f32.mrb[0].mxu0
  %v637 = vadd.f32 %v540, %v636
  %v638 = vpop.f32.mrb[0].mxu0
  %639 = vmatprep.mubr.bf16.mxu0 %v237
  %640 = vmatmul.mubr.bf16.gmra.mrb[0].mxu0 %v236
  %v641 = vpop.f32.mrb[0].mxu0
  %v642 = vadd.f32 %v545, %v641
  %v643 = vpop.f32.mrb[0].mxu0
  %v644 = vpop.f32.mrb[0].mxu0
  %v645 = vadd.f32 %v548, %v644
  %v646 = vpop.f32.mrb[0].mxu0
  %647 = vmatprep.mubr.bf16.mxu0 %v241
  %648 = vmatmul.mubr.bf16.gmra.mrb[0].mxu0 %v240
  %v649 = vpop.f32.mrb[0].mxu0
  %v650 = vadd.f32 %v553, %v649
  %v651 = vpop.f32.mrb[0].mxu0
  %v652 = vpop.f32.mrb[0].mxu0
  %v653 = vadd.f32 %v556, %v652
  %v654 = vpop.f32.mrb[0].mxu0
  %655 = vmatprep.mubr.bf16.mxu0 %v245
  %656 = vmatmul.mubr.bf16.gmra.mrb[0].mxu0 %v244
  %v657 = vpop.f32.mrb[0].mxu0
  %v658 = vadd.f32 %v561, %v657
  %v659 = vpop.f32.mrb[0].mxu0
  %v660 = vpop.f32.mrb[0].mxu0
  %v661 = vadd.f32 %v564, %v660
  %v662 = vpop.f32.mrb[0].mxu0
  %663 = vdwg.mxu0
  %v664 = vadd.f32 %v602, %v605
  %v665 = vadd.f32 %v664, %v610
  %v666 = vadd.f32 %v665, %v613
  %v667 = vadd.f32 %v666, %v618
  %v668 = vadd.f32 %v667, %v621
  %v669 = vadd.f32 %v668, %v626
  %v670 = vadd.f32 %v669, %v629
  %v671 = vadd.f32 %v670, %v634
  %v672 = vadd.f32 %v671, %v637
  %v673 = vadd.f32 %v672, %v642
  %v674 = vadd.f32 %v673, %v645
  %v675 = vadd.f32 %v674, %v650
  %v676 = vadd.f32 %v675, %v653
  %v677 = vadd.f32 %v676, %v658
  %v678 = vadd.f32 %v677, %v661
  %v679 = vrot.slane %v678, 4
  %v680 = vadd.f32 %v678, %v679
  %v681 = vrot.slane %v680, 2
  %v682 = vadd.f32 %v680, %v681
  %v683 = vrot.slane %v682, 1
  %v684 = vadd.f32 %v682, %v683
  %v685 = vmul.f32 %v684, 0.0078125
  %v686 = vmul.f32 %v602, %v602
  %v687 = vmul.f32 %v605, %v605
  %v688 = vmul.f32 %v610, %v610
  %v689 = vmul.f32 %v613, %v613
  %v690 = vmul.f32 %v618, %v618
  %v691 = vmul.f32 %v621, %v621
  %v692 = vmul.f32 %v626, %v626
  %v693 = vmul.f32 %v629, %v629
  %v694 = vmul.f32 %v634, %v634
  %v695 = vmul.f32 %v637, %v637
  %v696 = vmul.f32 %v642, %v642
  %v697 = vmul.f32 %v645, %v645
  %v698 = vmul.f32 %v650, %v650
  %v699 = vmul.f32 %v653, %v653
  %v700 = vmul.f32 %v658, %v658
  %v701 = vmul.f32 %v661, %v661
  %v702 = vadd.f32 %v686, %v687
  %v703 = vadd.f32 %v702, %v688
  %v704 = vadd.f32 %v703, %v689
  %v705 = vadd.f32 %v704, %v690
  %v706 = vadd.f32 %v705, %v691
  %v707 = vadd.f32 %v706, %v692
  %v708 = vadd.f32 %v707, %v693
  %v709 = vadd.f32 %v708, %v694
  %v710 = vadd.f32 %v709, %v695
  %v711 = vadd.f32 %v710, %v696
  %v712 = vadd.f32 %v711, %v697
  %v713 = vadd.f32 %v712, %v698
  %v714 = vadd.f32 %v713, %v699
  %v715 = vadd.f32 %v714, %v700
  %v716 = vadd.f32 %v715, %v701
  %v717 = vrot.slane %v716, 4
  %v718 = vadd.f32 %v716, %v717
  %v719 = vrot.slane %v718, 2
  %v720 = vadd.f32 %v718, %v719
  %v721 = vrot.slane %v720, 1
  %v722 = vadd.f32 %v720, %v721
  %v723 = vmul.f32 %v722, 0.0078125
  %v724 = vmul.f32 %v685, %v685
  %v725 = vsub.f32 %v723, %v724
  %v726 = vsub.f32 %v602, %v685
  %v727 = vsub.f32 %v605, %v685
  %v728 = vsub.f32 %v610, %v685
  %v729 = vsub.f32 %v613, %v685
  %v730 = vsub.f32 %v618, %v685
  %v731 = vsub.f32 %v621, %v685
  %v732 = vsub.f32 %v626, %v685
  %v733 = vsub.f32 %v629, %v685
  %v734 = vsub.f32 %v634, %v685
  %v735 = vsub.f32 %v637, %v685
  %v736 = vsub.f32 %v642, %v685
  %v737 = vsub.f32 %v645, %v685
  %v738 = vsub.f32 %v650, %v685
  %v739 = vsub.f32 %v653, %v685
  %v740 = vsub.f32 %v658, %v685
  %v741 = vsub.f32 %v661, %v685
  %v742 = vadd.f32 %v725, 1e-05
  %v743 = vrsqrt.pop %v742
  %v744 = vmul.f32 %v726, %v743
  %v745 = vmul.f32 %v727, %v743
  %v746 = vmul.f32 %v728, %v743
  %v747 = vmul.f32 %v729, %v743
  %v748 = vmul.f32 %v730, %v743
  %v749 = vmul.f32 %v731, %v743
  %v750 = vmul.f32 %v732, %v743
  %v751 = vmul.f32 %v733, %v743
  %v752 = vmul.f32 %v734, %v743
  %v753 = vmul.f32 %v735, %v743
  %v754 = vmul.f32 %v736, %v743
  %v755 = vmul.f32 %v737, %v743
  %v756 = vmul.f32 %v738, %v743
  %v757 = vmul.f32 %v739, %v743
  %v758 = vmul.f32 %v740, %v743
  %v759 = vmul.f32 %v741, %v743
  %v760 = vmax.f32 %v744, 0.0
  %v761 = vmax.f32 %v745, 0.0
  %v762 = vmax.f32 %v746, 0.0
  %v763 = vmax.f32 %v747, 0.0
  %v764 = vmax.f32 %v748, 0.0
  %v765 = vmax.f32 %v749, 0.0
  %v766 = vmax.f32 %v750, 0.0
  %v767 = vmax.f32 %v751, 0.0
  %v768 = vmax.f32 %v752, 0.0
  %v769 = vmax.f32 %v753, 0.0
  %v770 = vmax.f32 %v754, 0.0
  %v771 = vmax.f32 %v755, 0.0
  %v772 = vmax.f32 %v756, 0.0
  %v773 = vmax.f32 %v757, 0.0
  %v774 = vmax.f32 %v758, 0.0
  %v775 = vmax.f32 %v759, 0.0
  %776 = vst [vmem:[%s3] sm:$0xff] %v760
  %777 = vst [vmem:[%s3 + $0x8] sm:$0xff] %v761
  %778 = vst [vmem:[%s3 + $0x10] sm:$0xff] %v762
  %779 = vst [vmem:[%s3 + $0x18] sm:$0xff] %v763
  %780 = vst [vmem:[%s3 + $0x20] sm:$0xff] %v764
  %781 = vst [vmem:[%s3 + $0x28] sm:$0xff] %v765
  %782 = vst [vmem:[%s3 + $0x30] sm:$0xff] %v766
  %783 = vst [vmem:[%s3 + $0x38] sm:$0xff] %v767
  %784 = vst [vmem:[%s3 + $0x40] sm:$0xff] %v768
  %785 = vst [vmem:[%s3 + $0x48] sm:$0xff] %v769
  %786 = vst [vmem:[%s3 + $0x50] sm:$0xff] %v770
  %787 = vst [vmem:[%s3 + $0x58] sm:$0xff] %v771
  %788 = vst [vmem:[%s3 + $0x60] sm:$0xff] %v772
  %789 = vst [vmem:[%s3 + $0x68] sm:$0xff] %v773
  %790 = vst [vmem:[%s3 + $0x70] sm:$0xff] %v774
  %791 = vst [vmem:[%s3 + $0x78] sm:$0xff] %v775
  // Predicated region
  $region14: #{generator_forward.17} parent=0 // pred_check
    _
  $region15: #{generator_forward.17} parent=0 // pred_check_branch
    %793 = sbr.rel (0) target = $region17
  $region16: #{generator_forward.17} parent=0 // pred_region
    _
  $region17: #{generator_forward.17} parent=0 // pred_fallthru
    _
  // Predicated region
  $region18: #{generator_forward.17} parent=0 // pred_check
    _
  $region19: #{generator_forward.17} parent=0 // pred_check_branch
    %795 = sbr.rel (0) target = $region21
  $region20: #{generator_forward.17} parent=0 // pred_region
    _
  $region21: #{generator_forward.17} parent=0 // pred_fallthru
    _

// kernel: generator_forward.18
$region0: #{generator_forward.18}
  #allocation0 [shape = 'u32[]', space=smem, size = 0x4, offset = 0x4, fixed_abs, tag = 'smem constant byte address 0x4 - core index']
  #allocation1 [shape = 'u32[144,128]{1,0:T(1,128)}', space=vmem, size = 0x12000, scoped, tag = 'internal scratch']
  %s0 = inlined_call_operand.vmem [shape: bf16[512,256], index: 0, kind: input, shape index: {}]
  %s1 = inlined_call_operand.vmem [shape: bf16[256,128], index: 1, kind: input, shape index: {}]
  %s2 = inlined_call_operand.vmem [shape: f32[1,128], index: 2, kind: input, shape index: {}]
  %s3 = inlined_call_operand.vmem [shape: f32[512,128], index: 3, kind: output, shape index: {}]
  %s4 = sld [smem:[#allocation0]]
  $region22: #{generator_forward.18} parent=0
    _
  %s6 = ssub.s32 1, %s4
  %s7 = scalar_select 0, %s6, %s4
  // Predicated region
  $region2: #{generator_forward.18} parent=0 // pred_check
    _
  $region3: #{generator_forward.18} parent=0 // pred_check_branch
    %9 = sbr.rel (0) target = $region5
  $region4: #{generator_forward.18} parent=0 // pred_region
    _
  $region5: #{generator_forward.18} parent=0 // pred_fallthru
    _
  // Predicated region
  $region6: #{generator_forward.18} parent=0 // pred_check
    _
  $region7: #{generator_forward.18} parent=0 // pred_check_branch
    %11 = sbr.rel (0) target = $region9
  $region8: #{generator_forward.18} parent=0 // pred_region
    _
  $region9: #{generator_forward.18} parent=0 // pred_fallthru
    _
  // Predicated region
  $region10: #{generator_forward.18} parent=0 // pred_check
    _
  $region11: #{generator_forward.18} parent=0 // pred_check_branch
    %13 = sbr.rel (0) target = $region13
  $region12: #{generator_forward.18} parent=0 // pred_region
    _
  $region13: #{generator_forward.18} parent=0 // pred_fallthru
    _
  %v15 = vld [vmem:[%s0] sm:$0xff]
  %v16 = vld [vmem:[%s0 + $0x8] sm:$0xff]
  %v17 = vld [vmem:[%s0 + $0x10] sm:$0xff]
  %v18 = vld [vmem:[%s0 + $0x18] sm:$0xff]
  %v19 = vld [vmem:[%s0 + $0x20] sm:$0xff]
  %v20 = vld [vmem:[%s0 + $0x28] sm:$0xff]
  %v21 = vld [vmem:[%s0 + $0x30] sm:$0xff]
  %v22 = vld [vmem:[%s0 + $0x38] sm:$0xff]
  %v23 = vld [vmem:[%s0 + $0x40] sm:$0xff]
  %v24 = vld [vmem:[%s0 + $0x48] sm:$0xff]
  %v25 = vld [vmem:[%s0 + $0x50] sm:$0xff]
  %v26 = vld [vmem:[%s0 + $0x58] sm:$0xff]
  %v27 = vld [vmem:[%s0 + $0x60] sm:$0xff]
  %v28 = vld [vmem:[%s0 + $0x68] sm:$0xff]
  %v29 = vld [vmem:[%s0 + $0x70] sm:$0xff]
  %v30 = vld [vmem:[%s0 + $0x78] sm:$0xff]
  %v31 = vld [vmem:[%s0 + $0x80] sm:$0xff]
  %v32 = vld [vmem:[%s0 + $0x88] sm:$0xff]
  %v33 = vld [vmem:[%s0 + $0x90] sm:$0xff]
  %v34 = vld [vmem:[%s0 + $0x98] sm:$0xff]
  %v35 = vld [vmem:[%s0 + $0xa0] sm:$0xff]
  %v36 = vld [vmem:[%s0 + $0xa8] sm:$0xff]
  %v37 = vld [vmem:[%s0 + $0xb0] sm:$0xff]
  %v38 = vld [vmem:[%s0 + $0xb8] sm:$0xff]
  %v39 = vld [vmem:[%s0 + $0xc0] sm:$0xff]
  %v40 = vld [vmem:[%s0 + $0xc8] sm:$0xff]
  %v41 = vld [vmem:[%s0 + $0xd0] sm:$0xff]
  %v42 = vld [vmem:[%s0 + $0xd8] sm:$0xff]
  %v43 = vld [vmem:[%s0 + $0xe0] sm:$0xff]
  %v44 = vld [vmem:[%s0 + $0xe8] sm:$0xff]
  %v45 = vld [vmem:[%s0 + $0xf0] sm:$0xff]
  %v46 = vld [vmem:[%s0 + $0xf8] sm:$0xff]
  %v47 = vld [vmem:[%s0 + $0x100] sm:$0xff]
  %v48 = vld [vmem:[%s0 + $0x108] sm:$0xff]
  %v49 = vld [vmem:[%s0 + $0x110] sm:$0xff]
  %v50 = vld [vmem:[%s0 + $0x118] sm:$0xff]
  %v51 = vld [vmem:[%s0 + $0x120] sm:$0xff]
  %v52 = vld [vmem:[%s0 + $0x128] sm:$0xff]
  %v53 = vld [vmem:[%s0 + $0x130] sm:$0xff]
  %v54 = vld [vmem:[%s0 + $0x138] sm:$0xff]
  %v55 = vld [vmem:[%s0 + $0x140] sm:$0xff]
  %v56 = vld [vmem:[%s0 + $0x148] sm:$0xff]
  %v57 = vld [vmem:[%s0 + $0x150] sm:$0xff]
  %v58 = vld [vmem:[%s0 + $0x158] sm:$0xff]
  %v59 = vld [vmem:[%s0 + $0x160] sm:$0xff]
  %v60 = vld [vmem:[%s0 + $0x168] sm:$0xff]
  %v61 = vld [vmem:[%s0 + $0x170] sm:$0xff]
  %v62 = vld [vmem:[%s0 + $0x178] sm:$0xff]
  %v63 = vld [vmem:[%s0 + $0x180] sm:$0xff]
  %v64 = vld [vmem:[%s0 + $0x188] sm:$0xff]
  %v65 = vld [vmem:[%s0 + $0x190] sm:$0xff]
  %v66 = vld [vmem:[%s0 + $0x198] sm:$0xff]
  %v67 = vld [vmem:[%s0 + $0x1a0] sm:$0xff]
  %v68 = vld [vmem:[%s0 + $0x1a8] sm:$0xff]
  %v69 = vld [vmem:[%s0 + $0x1b0] sm:$0xff]
  %v70 = vld [vmem:[%s0 + $0x1b8] sm:$0xff]
  %v71 = vld [vmem:[%s0 + $0x1c0] sm:$0xff]
  %v72 = vld [vmem:[%s0 + $0x1c8] sm:$0xff]
  %v73 = vld [vmem:[%s0 + $0x1d0] sm:$0xff]
  %v74 = vld [vmem:[%s0 + $0x1d8] sm:$0xff]
  %v75 = vld [vmem:[%s0 + $0x1e0] sm:$0xff]
  %v76 = vld [vmem:[%s0 + $0x1e8] sm:$0xff]
  %v77 = vld [vmem:[%s0 + $0x1f0] sm:$0xff]
  %v78 = vld [vmem:[%s0 + $0x1f8] sm:$0xff]
  %v79 = vld [vmem:[%s1] sm:$0xf]
  %v80 = vld [vmem:[%s1 + $0x4] sm:$0xf]
  %v81 = vld [vmem:[%s1 + $0x8] sm:$0xf]
  %v82 = vld [vmem:[%s1 + $0xc] sm:$0xf]
  %v83 = vld [vmem:[%s1 + $0x10] sm:$0xf]
  %v84 = vld [vmem:[%s1 + $0x14] sm:$0xf]
  %v85 = vld [vmem:[%s1 + $0x18] sm:$0xf]
  %v86 = vld [vmem:[%s1 + $0x1c] sm:$0xf]
  %v87 = vld [vmem:[%s1 + $0x20] sm:$0xf]
  %v88 = vld [vmem:[%s1 + $0x24] sm:$0xf]
  %v89 = vld [vmem:[%s1 + $0x28] sm:$0xf]
  %v90 = vld [vmem:[%s1 + $0x2c] sm:$0xf]
  %v91 = vld [vmem:[%s1 + $0x30] sm:$0xf]
  %v92 = vld [vmem:[%s1 + $0x34] sm:$0xf]
  %v93 = vld [vmem:[%s1 + $0x38] sm:$0xf]
  %v94 = vld [vmem:[%s1 + $0x3c] sm:$0xf]
  %v95 = vld [vmem:[%s1 + $0x40] sm:$0xf]
  %v96 = vld [vmem:[%s1 + $0x44] sm:$0xf]
  %v97 = vld [vmem:[%s1 + $0x48] sm:$0xf]
  %v98 = vld [vmem:[%s1 + $0x4c] sm:$0xf]
  %v99 = vld [vmem:[%s1 + $0x50] sm:$0xf]
  %v100 = vld [vmem:[%s1 + $0x54] sm:$0xf]
  %v101 = vld [vmem:[%s1 + $0x58] sm:$0xf]
  %v102 = vld [vmem:[%s1 + $0x5c] sm:$0xf]
  %v103 = vld [vmem:[%s1 + $0x60] sm:$0xf]
  %v104 = vld [vmem:[%s1 + $0x64] sm:$0xf]
  %v105 = vld [vmem:[%s1 + $0x68] sm:$0xf]
  %v106 = vld [vmem:[%s1 + $0x6c] sm:$0xf]
  %v107 = vld [vmem:[%s1 + $0x70] sm:$0xf]
  %v108 = vld [vmem:[%s1 + $0x74] sm:$0xf]
  %v109 = vld [vmem:[%s1 + $0x78] sm:$0xf]
  %v110 = vld [vmem:[%s1 + $0x7c] sm:$0xf]
  %v111 = vld [vmem:[%s2] sm:$0x1]
  %v113 = vlaneseq
  %v114 = vshrl.u32 %v113, 7
  %v115 = vsub.s32 0, %v114
  %v116 = vrot.slane %v111, %v115
  %v182 = vunpack.c.l.b16 %v15
  %v183 = vunpack.c.h.b16 %v15
  %v184 = vunpack.c.l.b16 %v16
  %v185 = vunpack.c.h.b16 %v16
  %v186 = vunpack.c.l.b16 %v17
  %v187 = vunpack.c.h.b16 %v17
  %v188 = vunpack.c.l.b16 %v18
  %v189 = vunpack.c.h.b16 %v18
  %v190 = vunpack.c.l.b16 %v19
  %v191 = vunpack.c.h.b16 %v19
  %v192 = vunpack.c.l.b16 %v20
  %v193 = vunpack.c.h.b16 %v20
  %v194 = vunpack.c.l.b16 %v21
  %v195 = vunpack.c.h.b16 %v21
  %v196 = vunpack.c.l.b16 %v22
  %v197 = vunpack.c.h.b16 %v22
  %v198 = vunpack.c.l.b16 %v23
  %v199 = vunpack.c.h.b16 %v23
  %v200 = vunpack.c.l.b16 %v24
  %v201 = vunpack.c.h.b16 %v24
  %v202 = vunpack.c.l.b16 %v25
  %v203 = vunpack.c.h.b16 %v25
  %v204 = vunpack.c.l.b16 %v26
  %v205 = vunpack.c.h.b16 %v26
  %v206 = vunpack.c.l.b16 %v27
  %v207 = vunpack.c.h.b16 %v27
  %v208 = vunpack.c.l.b16 %v28
  %v209 = vunpack.c.h.b16 %v28
  %v210 = vunpack.c.l.b16 %v29
  %v211 = vunpack.c.h.b16 %v29
  %v212 = vunpack.c.l.b16 %v30
  %v213 = vunpack.c.h.b16 %v30
  %v214 = vunpack.c.l.b16 %v31
  %v215 = vunpack.c.h.b16 %v31
  %v216 = vunpack.c.l.b16 %v32
  %v217 = vunpack.c.h.b16 %v32
  %v218 = vunpack.c.l.b16 %v33
  %v219 = vunpack.c.h.b16 %v33
  %v220 = vunpack.c.l.b16 %v34
  %v221 = vunpack.c.h.b16 %v34
  %v222 = vunpack.c.l.b16 %v35
  %v223 = vunpack.c.h.b16 %v35
  %v224 = vunpack.c.l.b16 %v36
  %v225 = vunpack.c.h.b16 %v36
  %v226 = vunpack.c.l.b16 %v37
  %v227 = vunpack.c.h.b16 %v37
  %v228 = vunpack.c.l.b16 %v38
  %v229 = vunpack.c.h.b16 %v38
  %v230 = vunpack.c.l.b16 %v39
  %v231 = vunpack.c.h.b16 %v39
  %v232 = vunpack.c.l.b16 %v40
  %v233 = vunpack.c.h.b16 %v40
  %v234 = vunpack.c.l.b16 %v41
  %v235 = vunpack.c.h.b16 %v41
  %v236 = vunpack.c.l.b16 %v42
  %v237 = vunpack.c.h.b16 %v42
  %v238 = vunpack.c.l.b16 %v43
  %v239 = vunpack.c.h.b16 %v43
  %v240 = vunpack.c.l.b16 %v44
  %v241 = vunpack.c.h.b16 %v44
  %v242 = vunpack.c.l.b16 %v45
  %v243 = vunpack.c.h.b16 %v45
  %v244 = vunpack.c.l.b16 %v46
  %v245 = vunpack.c.h.b16 %v46
  %v246 = vunpack.c.l.b16 %v47
  %v247 = vunpack.c.h.b16 %v47
  %v248 = vunpack.c.l.b16 %v48
  %v249 = vunpack.c.h.b16 %v48
  %v250 = vunpack.c.l.b16 %v49
  %v251 = vunpack.c.h.b16 %v49
  %v252 = vunpack.c.l.b16 %v50
  %v253 = vunpack.c.h.b16 %v50
  %v254 = vunpack.c.l.b16 %v51
  %v255 = vunpack.c.h.b16 %v51
  %v256 = vunpack.c.l.b16 %v52
  %v257 = vunpack.c.h.b16 %v52
  %v258 = vunpack.c.l.b16 %v53
  %v259 = vunpack.c.h.b16 %v53
  %v260 = vunpack.c.l.b16 %v54
  %v261 = vunpack.c.h.b16 %v54
  %v262 = vunpack.c.l.b16 %v55
  %v263 = vunpack.c.h.b16 %v55
  %v264 = vunpack.c.l.b16 %v56
  %v265 = vunpack.c.h.b16 %v56
  %v266 = vunpack.c.l.b16 %v57
  %v267 = vunpack.c.h.b16 %v57
  %v268 = vunpack.c.l.b16 %v58
  %v269 = vunpack.c.h.b16 %v58
  %v270 = vunpack.c.l.b16 %v59
  %v271 = vunpack.c.h.b16 %v59
  %v272 = vunpack.c.l.b16 %v60
  %v273 = vunpack.c.h.b16 %v60
  %v274 = vunpack.c.l.b16 %v61
  %v275 = vunpack.c.h.b16 %v61
  %v276 = vunpack.c.l.b16 %v62
  %v277 = vunpack.c.h.b16 %v62
  %v278 = vunpack.c.l.b16 %v63
  %v279 = vunpack.c.h.b16 %v63
  %v280 = vunpack.c.l.b16 %v64
  %v281 = vunpack.c.h.b16 %v64
  %v282 = vunpack.c.l.b16 %v65
  %v283 = vunpack.c.h.b16 %v65
  %v284 = vunpack.c.l.b16 %v66
  %v285 = vunpack.c.h.b16 %v66
  %v286 = vunpack.c.l.b16 %v67
  %v287 = vunpack.c.h.b16 %v67
  %v288 = vunpack.c.l.b16 %v68
  %v289 = vunpack.c.h.b16 %v68
  %v290 = vunpack.c.l.b16 %v69
  %v291 = vunpack.c.h.b16 %v69
  %v292 = vunpack.c.l.b16 %v70
  %v293 = vunpack.c.h.b16 %v70
  %v294 = vunpack.c.l.b16 %v71
  %v295 = vunpack.c.h.b16 %v71
  %v296 = vunpack.c.l.b16 %v72
  %v297 = vunpack.c.h.b16 %v72
  %v298 = vunpack.c.l.b16 %v73
  %v299 = vunpack.c.h.b16 %v73
  %v300 = vunpack.c.l.b16 %v74
  %v301 = vunpack.c.h.b16 %v74
  %v302 = vunpack.c.l.b16 %v75
  %v303 = vunpack.c.h.b16 %v75
  %v304 = vunpack.c.l.b16 %v76
  %v305 = vunpack.c.h.b16 %v76
  %v306 = vunpack.c.l.b16 %v77
  %v307 = vunpack.c.h.b16 %v77
  %v308 = vunpack.c.l.b16 %v78
  %v309 = vunpack.c.h.b16 %v78
  %v310 = vpack.c.b16 %v184, %v182
  %v311 = vpack.c.b16 %v185, %v183
  %v312 = vpack.c.b16 %v188, %v186
  %v313 = vpack.c.b16 %v189, %v187
  %v314 = vpack.c.b16 %v192, %v190
  %v315 = vpack.c.b16 %v193, %v191
  %v316 = vpack.c.b16 %v196, %v194
  %v317 = vpack.c.b16 %v197, %v195
  %v318 = vpack.c.b16 %v200, %v198
  %v319 = vpack.c.b16 %v201, %v199
  %v320 = vpack.c.b16 %v204, %v202
  %v321 = vpack.c.b16 %v205, %v203
  %v322 = vpack.c.b16 %v208, %v206
  %v323 = vpack.c.b16 %v209, %v207
  %v324 = vpack.c.b16 %v212, %v210
  %v325 = vpack.c.b16 %v213, %v211
  %v326 = vpack.c.b16 %v216, %v214
  %v327 = vpack.c.b16 %v217, %v215
  %v328 = vpack.c.b16 %v220, %v218
  %v329 = vpack.c.b16 %v221, %v219
  %v330 = vpack.c.b16 %v224, %v222
  %v331 = vpack.c.b16 %v225, %v223
  %v332 = vpack.c.b16 %v228, %v226
  %v333 = vpack.c.b16 %v229, %v227
  %v334 = vpack.c.b16 %v232, %v230
  %v335 = vpack.c.b16 %v233, %v231
  %v336 = vpack.c.b16 %v236, %v234
  %v337 = vpack.c.b16 %v237, %v235
  %v338 = vpack.c.b16 %v240, %v238
  %v339 = vpack.c.b16 %v241, %v239
  %v340 = vpack.c.b16 %v244, %v242
  %v341 = vpack.c.b16 %v245, %v243
  %v342 = vpack.c.b16 %v248, %v246
  %v343 = vpack.c.b16 %v249, %v247
  %v344 = vpack.c.b16 %v252, %v250
  %v345 = vpack.c.b16 %v253, %v251
  %v346 = vpack.c.b16 %v256, %v254
  %v347 = vpack.c.b16 %v257, %v255
  %v348 = vpack.c.b16 %v260, %v258
  %v349 = vpack.c.b16 %v261, %v259
  %v350 = vpack.c.b16 %v264, %v262
  %v351 = vpack.c.b16 %v265, %v263
  %v352 = vpack.c.b16 %v268, %v266
  %v353 = vpack.c.b16 %v269, %v267
  %v354 = vpack.c.b16 %v272, %v270
  %v355 = vpack.c.b16 %v273, %v271
  %v356 = vpack.c.b16 %v276, %v274
  %v357 = vpack.c.b16 %v277, %v275
  %v358 = vpack.c.b16 %v280, %v278
  %v359 = vpack.c.b16 %v281, %v279
  %v360 = vpack.c.b16 %v284, %v282
  %v361 = vpack.c.b16 %v285, %v283
  %v362 = vpack.c.b16 %v288, %v286
  %v363 = vpack.c.b16 %v289, %v287
  %v364 = vpack.c.b16 %v292, %v290
  %v365 = vpack.c.b16 %v293, %v291
  %v366 = vpack.c.b16 %v296, %v294
  %v367 = vpack.c.b16 %v297, %v295
  %v368 = vpack.c.b16 %v300, %v298
  %v369 = vpack.c.b16 %v301, %v299
  %v370 = vpack.c.b16 %v304, %v302
  %v371 = vpack.c.b16 %v305, %v303
  %v372 = vpack.c.b16 %v308, %v306
  %v373 = vpack.c.b16 %v309, %v307
  %v470 = vunpack.c.l.b16 %v79
  %v471 = vunpack.c.l.b16 %v80
  %v472 = vunpack.c.l.b16 %v81
  %v473 = vunpack.c.l.b16 %v82
  %v474 = vunpack.c.l.b16 %v83
  %v475 = vunpack.c.l.b16 %v84
  %v476 = vunpack.c.l.b16 %v85
  %v477 = vunpack.c.l.b16 %v86
  %v478 = vunpack.c.l.b16 %v87
  %v479 = vunpack.c.l.b16 %v88
  %v480 = vunpack.c.l.b16 %v89
  %v481 = vunpack.c.l.b16 %v90
  %v482 = vunpack.c.l.b16 %v91
  %v483 = vunpack.c.l.b16 %v92
  %v484 = vunpack.c.l.b16 %v93
  %v485 = vunpack.c.l.b16 %v94
  %v486 = vunpack.c.l.b16 %v95
  %v487 = vunpack.c.l.b16 %v96
  %v488 = vunpack.c.l.b16 %v97
  %v489 = vunpack.c.l.b16 %v98
  %v490 = vunpack.c.l.b16 %v99
  %v491 = vunpack.c.l.b16 %v100
  %v492 = vunpack.c.l.b16 %v101
  %v493 = vunpack.c.l.b16 %v102
  %v494 = vunpack.c.l.b16 %v103
  %v495 = vunpack.c.l.b16 %v104
  %v496 = vunpack.c.l.b16 %v105
  %v497 = vunpack.c.l.b16 %v106
  %v498 = vunpack.c.l.b16 %v107
  %v499 = vunpack.c.l.b16 %v108
  %v500 = vunpack.c.l.b16 %v109
  %v501 = vunpack.c.l.b16 %v110
  %v502 = vpack.c.b16 %v471, %v470
  %v503 = vpack.c.b16 %v473, %v472
  %v504 = vpack.c.b16 %v475, %v474
  %v505 = vpack.c.b16 %v477, %v476
  %v506 = vpack.c.b16 %v479, %v478
  %v507 = vpack.c.b16 %v481, %v480
  %v508 = vpack.c.b16 %v483, %v482
  %v509 = vpack.c.b16 %v485, %v484
  %v510 = vpack.c.b16 %v487, %v486
  %v511 = vpack.c.b16 %v489, %v488
  %v512 = vpack.c.b16 %v491, %v490
  %v513 = vpack.c.b16 %v493, %v492
  %v514 = vpack.c.b16 %v495, %v494
  %v515 = vpack.c.b16 %v497, %v496
  %v516 = vpack.c.b16 %v499, %v498
  %v517 = vpack.c.b16 %v501, %v500
  %534 = vmatprep.subr.bf16.mxu0 0
  %535 = vmatpush1.bf16.msra.mxu0 %v502
  %536 = vmatprep.subr.bf16.mxu0 0
  %537 = vmatpush1.bf16.msra.mxu0 %v503
  %538 = vmatprep.subr.bf16.mxu0 0
  %539 = vmatpush1.bf16.msra.mxu0 %v504
  %540 = vmatprep.subr.bf16.mxu0 0
  %541 = vmatpush1.bf16.msra.mxu0 %v505
  %542 = vmatprep.subr.bf16.mxu0 0
  %543 = vmatpush1.bf16.msra.mxu0 %v506
  %544 = vmatprep.subr.bf16.mxu0 0
  %545 = vmatpush1.bf16.msra.mxu0 %v507
  %546 = vmatprep.subr.bf16.mxu0 0
  %547 = vmatpush1.bf16.msra.mxu0 %v508
  %548 = vmatprep.subr.bf16.mxu0 0
  %549 = vmatpush1.bf16.msra.mxu0 %v509
  %550 = vmatprep.subr.bf16.mxu0 0
  %551 = vmatpush1.bf16.msra.mxu0 %v510
  %552 = vmatprep.subr.bf16.mxu0 0
  %553 = vmatpush1.bf16.msra.mxu0 %v511
  %554 = vmatprep.subr.bf16.mxu0 0
  %555 = vmatpush1.bf16.msra.mxu0 %v512
  %556 = vmatprep.subr.bf16.mxu0 0
  %557 = vmatpush1.bf16.msra.mxu0 %v513
  %558 = vmatprep.subr.bf16.mxu0 0
  %559 = vmatpush1.bf16.msra.mxu0 %v514
  %560 = vmatprep.subr.bf16.mxu0 0
  %561 = vmatpush1.bf16.msra.mxu0 %v515
  %562 = vmatprep.subr.bf16.mxu0 0
  %563 = vmatpush1.bf16.msra.mxu0 %v516
  %564 = vmatprep.subr.bf16.mxu0 0
  %565 = vmatpush1.bf16.msra.mxu0 %v517
  %566 = vmatprep.mubr.bf16.mxu0 %v311
  %567 = vmatmul.mubr.bf16.gmra.mrb[0].mxu0 %v310
  %v568 = vpop.f32.mrb[0].mxu0
  %v569 = vadd.f32 %v116, %v568
  %v570 = vpop.f32.mrb[0].mxu0
  %v571 = vpop.f32.mrb[0].mxu0
  %v572 = vadd.f32 %v116, %v571
  %v573 = vpop.f32.mrb[0].mxu0
  %574 = vmatprep.mubr.bf16.mxu0 %v313
  %575 = vmatmul.mubr.bf16.gmra.mrb[0].mxu0 %v312
  %v576 = vpop.f32.mrb[0].mxu0
  %v577 = vadd.f32 %v116, %v576
  %v578 = vpop.f32.mrb[0].mxu0
  %v579 = vpop.f32.mrb[0].mxu0
  %v580 = vadd.f32 %v116, %v579
  %v581 = vpop.f32.mrb[0].mxu0
  %582 = vmatprep.mubr.bf16.mxu0 %v315
  %583 = vmatmul.mubr.bf16.gmra.mrb[0].mxu0 %v314
  %v584 = vpop.f32.mrb[0].mxu0
  %v585 = vadd.f32 %v116, %v584
  %v586 = vpop.f32.mrb[0].mxu0
  %v587 = vpop.f32.mrb[0].mxu0
  %v588 = vadd.f32 %v116, %v587
  %v589 = vpop.f32.mrb[0].mxu0
  %590 = vmatprep.mubr.bf16.mxu0 %v317
  %591 = vmatmul.mubr.bf16.gmra.mrb[0].mxu0 %v316
  %v592 = vpop.f32.mrb[0].mxu0
  %v593 = vadd.f32 %v116, %v592
  %v594 = vpop.f32.mrb[0].mxu0
  %v595 = vpop.f32.mrb[0].mxu0
  %v596 = vadd.f32 %v116, %v595
  %v597 = vpop.f32.mrb[0].mxu0
  %598 = vmatprep.mubr.bf16.mxu0 %v319
  %599 = vmatmul.mubr.bf16.gmra.mrb[0].mxu0 %v318
  %v600 = vpop.f32.mrb[0].mxu0
  %v601 = vadd.f32 %v116, %v600
  %v602 = vpop.f32.mrb[0].mxu0
  %v603 = vpop.f32.mrb[0].mxu0
  %v604 = vadd.f32 %v116, %v603
  %v605 = vpop.f32.mrb[0].mxu0
  %606 = vmatprep.mubr.bf16.mxu0 %v321
  %607 = vmatmul.mubr.bf16.gmra.mrb[0].mxu0 %v320
  %v608 = vpop.f32.mrb[0].mxu0
  %v609 = vadd.f32 %v116, %v608
  %v610 = vpop.f32.mrb[0].mxu0
  %v611 = vpop.f32.mrb[0].mxu0
  %v612 = vadd.f32 %v116, %v611
  %v613 = vpop.f32.mrb[0].mxu0
  %614 = vmatprep.mubr.bf16.mxu0 %v323
  %615 = vmatmul.mubr.bf16.gmra.mrb[0].mxu0 %v322
  %v616 = vpop.f32.mrb[0].mxu0
  %v617 = vadd.f32 %v116, %v616
  %v618 = vpop.f32.mrb[0].mxu0
  %v619 = vpop.f32.mrb[0].mxu0
  %v620 = vadd.f32 %v116, %v619
  %v621 = vpop.f32.mrb[0].mxu0
  %622 = vmatprep.mubr.bf16.mxu0 %v325
  %623 = vmatmul.mubr.bf16.gmra.mrb[0].mxu0 %v324
  %v624 = vpop.f32.mrb[0].mxu0
  %v625 = vadd.f32 %v116, %v624
  %v626 = vpop.f32.mrb[0].mxu0
  %v627 = vpop.f32.mrb[0].mxu0
  %v628 = vadd.f32 %v116, %v627
  %v629 = vpop.f32.mrb[0].mxu0
  %630 = vmatprep.mubr.bf16.mxu0 %v327
  %631 = vmatmul.mubr.bf16.gmra.mrb[0].mxu0 %v326
  %v632 = vpop.f32.mrb[0].mxu0
  %v633 = vadd.f32 %v116, %v632
  %v634 = vpop.f32.mrb[0].mxu0
  %v635 = vpop.f32.mrb[0].mxu0
  %v636 = vadd.f32 %v116, %v635
  %v637 = vpop.f32.mrb[0].mxu0
  %638 = vmatprep.mubr.bf16.mxu0 %v329
  %639 = vmatmul.mubr.bf16.gmra.mrb[0].mxu0 %v328
  %v640 = vpop.f32.mrb[0].mxu0
  %v641 = vadd.f32 %v116, %v640
  %v642 = vpop.f32.mrb[0].mxu0
  %v643 = vpop.f32.mrb[0].mxu0
  %v644 = vadd.f32 %v116, %v643
  %v645 = vpop.f32.mrb[0].mxu0
  %646 = vmatprep.mubr.bf16.mxu0 %v331
  %647 = vmatmul.mubr.bf16.gmra.mrb[0].mxu0 %v330
  %v648 = vpop.f32.mrb[0].mxu0
  %v649 = vadd.f32 %v116, %v648
  %v650 = vpop.f32.mrb[0].mxu0
  %v651 = vpop.f32.mrb[0].mxu0
  %v652 = vadd.f32 %v116, %v651
  %v653 = vpop.f32.mrb[0].mxu0
  %654 = vmatprep.mubr.bf16.mxu0 %v333
  %655 = vmatmul.mubr.bf16.gmra.mrb[0].mxu0 %v332
  %v656 = vpop.f32.mrb[0].mxu0
  %v657 = vadd.f32 %v116, %v656
  %v658 = vpop.f32.mrb[0].mxu0
  %v659 = vpop.f32.mrb[0].mxu0
  %v660 = vadd.f32 %v116, %v659
  %v661 = vpop.f32.mrb[0].mxu0
  %662 = vmatprep.mubr.bf16.mxu0 %v335
  %663 = vmatmul.mubr.bf16.gmra.mrb[0].mxu0 %v334
  %v664 = vpop.f32.mrb[0].mxu0
  %v665 = vadd.f32 %v116, %v664
  %v666 = vpop.f32.mrb[0].mxu0
  %v667 = vpop.f32.mrb[0].mxu0
  %v668 = vadd.f32 %v116, %v667
  %v669 = vpop.f32.mrb[0].mxu0
  %670 = vmatprep.mubr.bf16.mxu0 %v337
  %671 = vmatmul.mubr.bf16.gmra.mrb[0].mxu0 %v336
  %v672 = vpop.f32.mrb[0].mxu0
  %v673 = vadd.f32 %v116, %v672
  %v674 = vpop.f32.mrb[0].mxu0
  %v675 = vpop.f32.mrb[0].mxu0
  %v676 = vadd.f32 %v116, %v675
  %v677 = vpop.f32.mrb[0].mxu0
  %678 = vmatprep.mubr.bf16.mxu0 %v339
  %679 = vmatmul.mubr.bf16.gmra.mrb[0].mxu0 %v338
  %v680 = vpop.f32.mrb[0].mxu0
  %v681 = vadd.f32 %v116, %v680
  %v682 = vpop.f32.mrb[0].mxu0
  %v683 = vpop.f32.mrb[0].mxu0
  %v684 = vadd.f32 %v116, %v683
  %v685 = vpop.f32.mrb[0].mxu0
  %686 = vmatprep.mubr.bf16.mxu0 %v341
  %687 = vmatmul.mubr.bf16.gmra.mrb[0].mxu0 %v340
  %v688 = vpop.f32.mrb[0].mxu0
  %v689 = vadd.f32 %v116, %v688
  %v690 = vpop.f32.mrb[0].mxu0
  %v691 = vpop.f32.mrb[0].mxu0
  %v692 = vadd.f32 %v116, %v691
  %v693 = vpop.f32.mrb[0].mxu0
  %694 = vmatprep.mubr.bf16.mxu0 %v343
  %695 = vmatmul.mubr.bf16.gmra.mrb[0].mxu0 %v342
  %v696 = vpop.f32.mrb[0].mxu0
  %v697 = vadd.f32 %v116, %v696
  %v698 = vpop.f32.mrb[0].mxu0
  %v699 = vpop.f32.mrb[0].mxu0
  %v700 = vadd.f32 %v116, %v699
  %v701 = vpop.f32.mrb[0].mxu0
  %702 = vmatprep.mubr.bf16.mxu0 %v345
  %703 = vmatmul.mubr.bf16.gmra.mrb[0].mxu0 %v344
  %v704 = vpop.f32.mrb[0].mxu0
  %v705 = vadd.f32 %v116, %v704
  %v706 = vpop.f32.mrb[0].mxu0
  %v707 = vpop.f32.mrb[0].mxu0
  %v708 = vadd.f32 %v116, %v707
  %v709 = vpop.f32.mrb[0].mxu0
  %710 = vmatprep.mubr.bf16.mxu0 %v347
  %711 = vmatmul.mubr.bf16.gmra.mrb[0].mxu0 %v346
  %v712 = vpop.f32.mrb[0].mxu0
  %v713 = vadd.f32 %v116, %v712
  %v714 = vpop.f32.mrb[0].mxu0
  %v715 = vpop.f32.mrb[0].mxu0
  %v716 = vadd.f32 %v116, %v715
  %v717 = vpop.f32.mrb[0].mxu0
  %718 = vmatprep.mubr.bf16.mxu0 %v349
  %719 = vmatmul.mubr.bf16.gmra.mrb[0].mxu0 %v348
  %v720 = vpop.f32.mrb[0].mxu0
  %v721 = vadd.f32 %v116, %v720
  %v722 = vpop.f32.mrb[0].mxu0
  %v723 = vpop.f32.mrb[0].mxu0
  %v724 = vadd.f32 %v116, %v723
  %v725 = vpop.f32.mrb[0].mxu0
  %726 = vmatprep.mubr.bf16.mxu0 %v351
  %727 = vmatmul.mubr.bf16.gmra.mrb[0].mxu0 %v350
  %v728 = vpop.f32.mrb[0].mxu0
  %v729 = vadd.f32 %v116, %v728
  %v730 = vpop.f32.mrb[0].mxu0
  %v731 = vpop.f32.mrb[0].mxu0
  %v732 = vadd.f32 %v116, %v731
  %v733 = vpop.f32.mrb[0].mxu0
  %734 = vmatprep.mubr.bf16.mxu0 %v353
  %735 = vmatmul.mubr.bf16.gmra.mrb[0].mxu0 %v352
  %v736 = vpop.f32.mrb[0].mxu0
  %v737 = vadd.f32 %v116, %v736
  %v738 = vpop.f32.mrb[0].mxu0
  %v739 = vpop.f32.mrb[0].mxu0
  %v740 = vadd.f32 %v116, %v739
  %v741 = vpop.f32.mrb[0].mxu0
  %742 = vmatprep.mubr.bf16.mxu0 %v355
  %743 = vmatmul.mubr.bf16.gmra.mrb[0].mxu0 %v354
  %v744 = vpop.f32.mrb[0].mxu0
  %v745 = vadd.f32 %v116, %v744
  %v746 = vpop.f32.mrb[0].mxu0
  %v747 = vpop.f32.mrb[0].mxu0
  %v748 = vadd.f32 %v116, %v747
  %v749 = vpop.f32.mrb[0].mxu0
  %750 = vmatprep.mubr.bf16.mxu0 %v357
  %751 = vmatmul.mubr.bf16.gmra.mrb[0].mxu0 %v356
  %v752 = vpop.f32.mrb[0].mxu0
  %v753 = vadd.f32 %v116, %v752
  %v754 = vpop.f32.mrb[0].mxu0
  %v755 = vpop.f32.mrb[0].mxu0
  %v756 = vadd.f32 %v116, %v755
  %v757 = vpop.f32.mrb[0].mxu0
  %758 = vmatprep.mubr.bf16.mxu0 %v359
  %759 = vmatmul.mubr.bf16.gmra.mrb[0].mxu0 %v358
  %v760 = vpop.f32.mrb[0].mxu0
  %v761 = vadd.f32 %v116, %v760
  %v762 = vpop.f32.mrb[0].mxu0
  %v763 = vpop.f32.mrb[0].mxu0
  %v764 = vadd.f32 %v116, %v763
  %v765 = vpop.f32.mrb[0].mxu0
  %766 = vmatprep.mubr.bf16.mxu0 %v361
  %767 = vmatmul.mubr.bf16.gmra.mrb[0].mxu0 %v360
  %v768 = vpop.f32.mrb[0].mxu0
  %v769 = vadd.f32 %v116, %v768
  %v770 = vpop.f32.mrb[0].mxu0
  %v771 = vpop.f32.mrb[0].mxu0
  %v772 = vadd.f32 %v116, %v771
  %v773 = vpop.f32.mrb[0].mxu0
  %774 = vmatprep.mubr.bf16.mxu0 %v363
  %775 = vmatmul.mubr.bf16.gmra.mrb[0].mxu0 %v362
  %v776 = vpop.f32.mrb[0].mxu0
  %v777 = vadd.f32 %v116, %v776
  %v778 = vpop.f32.mrb[0].mxu0
  %v779 = vpop.f32.mrb[0].mxu0
  %v780 = vadd.f32 %v116, %v779
  %v781 = vpop.f32.mrb[0].mxu0
  %782 = vmatprep.mubr.bf16.mxu0 %v365
  %783 = vmatmul.mubr.bf16.gmra.mrb[0].mxu0 %v364
  %v784 = vpop.f32.mrb[0].mxu0
  %v785 = vadd.f32 %v116, %v784
  %v786 = vpop.f32.mrb[0].mxu0
  %v787 = vpop.f32.mrb[0].mxu0
  %v788 = vadd.f32 %v116, %v787
  %v789 = vpop.f32.mrb[0].mxu0
  %790 = vmatprep.mubr.bf16.mxu0 %v367
  %791 = vmatmul.mubr.bf16.gmra.mrb[0].mxu0 %v366
  %v792 = vpop.f32.mrb[0].mxu0
  %v793 = vadd.f32 %v116, %v792
  %v794 = vpop.f32.mrb[0].mxu0
  %v795 = vpop.f32.mrb[0].mxu0
  %v796 = vadd.f32 %v116, %v795
  %v797 = vpop.f32.mrb[0].mxu0
  %798 = vmatprep.mubr.bf16.mxu0 %v369
  %799 = vmatmul.mubr.bf16.gmra.mrb[0].mxu0 %v368
  %v800 = vpop.f32.mrb[0].mxu0
  %v801 = vadd.f32 %v116, %v800
  %v802 = vpop.f32.mrb[0].mxu0
  %v803 = vpop.f32.mrb[0].mxu0
  %v804 = vadd.f32 %v116, %v803
  %v805 = vpop.f32.mrb[0].mxu0
  %806 = vmatprep.mubr.bf16.mxu0 %v371
  %807 = vmatmul.mubr.bf16.gmra.mrb[0].mxu0 %v370
  %v808 = vpop.f32.mrb[0].mxu0
  %v809 = vadd.f32 %v116, %v808
  %v810 = vpop.f32.mrb[0].mxu0
  %v811 = vpop.f32.mrb[0].mxu0
  %v812 = vadd.f32 %v116, %v811
  %v813 = vpop.f32.mrb[0].mxu0
  %814 = vmatprep.mubr.bf16.mxu0 %v373
  %815 = vmatmul.mubr.bf16.gmra.mrb[0].mxu0 %v372
  %v816 = vpop.f32.mrb[0].mxu0
  %v817 = vadd.f32 %v116, %v816
  %v818 = vpop.f32.mrb[0].mxu0
  %v819 = vpop.f32.mrb[0].mxu0
  %v820 = vadd.f32 %v116, %v819
  %v821 = vpop.f32.mrb[0].mxu0
  %822 = vdwg.mxu0
  %v823 = vadd.f32 %v569, %v572
  %v824 = vadd.f32 %v823, %v577
  %v825 = vadd.f32 %v824, %v580
  %v826 = vadd.f32 %v825, %v585
  %v827 = vadd.f32 %v826, %v588
  %v828 = vadd.f32 %v827, %v593
  %v829 = vadd.f32 %v828, %v596
  %v830 = vadd.f32 %v829, %v601
  %v831 = vadd.f32 %v830, %v604
  %v832 = vadd.f32 %v831, %v609
  %v833 = vadd.f32 %v832, %v612
  %v834 = vadd.f32 %v833, %v617
  %v835 = vadd.f32 %v834, %v620
  %v836 = vadd.f32 %v835, %v625
  %v837 = vadd.f32 %v836, %v628
  %v838 = vadd.f32 %v837, %v633
  %v839 = vadd.f32 %v838, %v636
  %v840 = vadd.f32 %v839, %v641
  %v841 = vadd.f32 %v840, %v644
  %v842 = vadd.f32 %v841, %v649
  %v843 = vadd.f32 %v842, %v652
  %v844 = vadd.f32 %v843, %v657
  %v845 = vadd.f32 %v844, %v660
  %v846 = vadd.f32 %v845, %v665
  %v847 = vadd.f32 %v846, %v668
  %v848 = vadd.f32 %v847, %v673
  %v849 = vadd.f32 %v848, %v676
  %v850 = vadd.f32 %v849, %v681
  %v851 = vadd.f32 %v850, %v684
  %v852 = vadd.f32 %v851, %v689
  %v853 = vadd.f32 %v852, %v692
  %v854 = vadd.f32 %v853, %v697
  %v855 = vadd.f32 %v854, %v700
  %v856 = vadd.f32 %v855, %v705
  %v857 = vadd.f32 %v856, %v708
  %v858 = vadd.f32 %v857, %v713
  %v859 = vadd.f32 %v858, %v716
  %v860 = vadd.f32 %v859, %v721
  %v861 = vadd.f32 %v860, %v724
  %v862 = vadd.f32 %v861, %v729
  %v863 = vadd.f32 %v862, %v732
  %v864 = vadd.f32 %v863, %v737
  %v865 = vadd.f32 %v864, %v740
  %v866 = vadd.f32 %v865, %v745
  %v867 = vadd.f32 %v866, %v748
  %v868 = vadd.f32 %v867, %v753
  %v869 = vadd.f32 %v868, %v756
  %v870 = vadd.f32 %v869, %v761
  %v871 = vadd.f32 %v870, %v764
  %v872 = vadd.f32 %v871, %v769
  %v873 = vadd.f32 %v872, %v772
  %v874 = vadd.f32 %v873, %v777
  %v875 = vadd.f32 %v874, %v780
  %v876 = vadd.f32 %v875, %v785
  %v877 = vadd.f32 %v876, %v788
  %v878 = vadd.f32 %v877, %v793
  %v879 = vadd.f32 %v878, %v796
  %v880 = vadd.f32 %v879, %v801
  %v881 = vadd.f32 %v880, %v804
  %v882 = vadd.f32 %v881, %v809
  %v883 = vadd.f32 %v882, %v812
  %v884 = vadd.f32 %v883, %v817
  %v885 = vadd.f32 %v884, %v820
  %v886 = vrot.slane %v885, 4
  %v887 = vadd.f32 %v885, %v886
  %v888 = vrot.slane %v887, 2
  %v889 = vadd.f32 %v887, %v888
  %v890 = vrot.slane %v889, 1
  %v891 = vadd.f32 %v889, %v890
  %v892 = vmul.f32 %v891, 0.001953125
  %v893 = vmul.f32 %v569, %v569
  %v894 = vmul.f32 %v572, %v572
  %v895 = vmul.f32 %v577, %v577
  %v896 = vmul.f32 %v580, %v580
  %v897 = vmul.f32 %v585, %v585
  %v898 = vmul.f32 %v588, %v588
  %v899 = vmul.f32 %v593, %v593
  %v900 = vmul.f32 %v596, %v596
  %v901 = vmul.f32 %v601, %v601
  %v902 = vmul.f32 %v604, %v604
  %v903 = vmul.f32 %v609, %v609
  %v904 = vmul.f32 %v612, %v612
  %v905 = vmul.f32 %v617, %v617
  %v906 = vmul.f32 %v620, %v620
  %v907 = vmul.f32 %v625, %v625
  %v908 = vmul.f32 %v628, %v628
  %v909 = vmul.f32 %v633, %v633
  %v910 = vmul.f32 %v636, %v636
  %v911 = vmul.f32 %v641, %v641
  %v912 = vmul.f32 %v644, %v644
  %v913 = vmul.f32 %v649, %v649
  %v914 = vmul.f32 %v652, %v652
  %v915 = vmul.f32 %v657, %v657
  %v916 = vmul.f32 %v660, %v660
  %v917 = vmul.f32 %v665, %v665
  %v918 = vmul.f32 %v668, %v668
  %v919 = vmul.f32 %v673, %v673
  %v920 = vmul.f32 %v676, %v676
  %v921 = vmul.f32 %v681, %v681
  %v922 = vmul.f32 %v684, %v684
  %v923 = vmul.f32 %v689, %v689
  %v924 = vmul.f32 %v692, %v692
  %v925 = vmul.f32 %v697, %v697
  %v926 = vmul.f32 %v700, %v700
  %v927 = vmul.f32 %v705, %v705
  %v928 = vmul.f32 %v708, %v708
  %v929 = vmul.f32 %v713, %v713
  %v930 = vmul.f32 %v716, %v716
  %v931 = vmul.f32 %v721, %v721
  %v932 = vmul.f32 %v724, %v724
  %v933 = vmul.f32 %v729, %v729
  %v934 = vmul.f32 %v732, %v732
  %v935 = vmul.f32 %v737, %v737
  %v936 = vmul.f32 %v740, %v740
  %v937 = vmul.f32 %v745, %v745
  %v938 = vmul.f32 %v748, %v748
  %v939 = vmul.f32 %v753, %v753
  %v940 = vmul.f32 %v756, %v756
  %v941 = vmul.f32 %v761, %v761
  %v942 = vmul.f32 %v764, %v764
  %v943 = vmul.f32 %v769, %v769
  %v944 = vmul.f32 %v772, %v772
  %v945 = vmul.f32 %v777, %v777
  %v946 = vmul.f32 %v780, %v780
  %v947 = vmul.f32 %v785, %v785
  %v948 = vmul.f32 %v788, %v788
  %v949 = vmul.f32 %v793, %v793
  %v950 = vmul.f32 %v796, %v796
  %v951 = vmul.f32 %v801, %v801
  %v952 = vmul.f32 %v804, %v804
  %v953 = vmul.f32 %v809, %v809
  %v954 = vmul.f32 %v812, %v812
  %v955 = vmul.f32 %v817, %v817
  %v956 = vmul.f32 %v820, %v820
  %v957 = vadd.f32 %v893, %v894
  %v958 = vadd.f32 %v957, %v895
  %v959 = vadd.f32 %v958, %v896
  %v960 = vadd.f32 %v959, %v897
  %v961 = vadd.f32 %v960, %v898
  %v962 = vadd.f32 %v961, %v899
  %v963 = vadd.f32 %v962, %v900
  %v964 = vadd.f32 %v963, %v901
  %v965 = vadd.f32 %v964, %v902
  %v966 = vadd.f32 %v965, %v903
  %v967 = vadd.f32 %v966, %v904
  %v968 = vadd.f32 %v967, %v905
  %v969 = vadd.f32 %v968, %v906
  %v970 = vadd.f32 %v969, %v907
  %v971 = vadd.f32 %v970, %v908
  %v972 = vadd.f32 %v971, %v909
  %v973 = vadd.f32 %v972, %v910
  %v974 = vadd.f32 %v973, %v911
  %v975 = vadd.f32 %v974, %v912
  %v976 = vadd.f32 %v975, %v913
  %v977 = vadd.f32 %v976, %v914
  %v978 = vadd.f32 %v977, %v915
  %v979 = vadd.f32 %v978, %v916
  %v980 = vadd.f32 %v979, %v917
  %v981 = vadd.f32 %v980, %v918
  %v982 = vadd.f32 %v981, %v919
  %v983 = vadd.f32 %v982, %v920
  %v984 = vadd.f32 %v983, %v921
  %v985 = vadd.f32 %v984, %v922
  %v986 = vadd.f32 %v985, %v923
  %v987 = vadd.f32 %v986, %v924
  %v988 = vadd.f32 %v987, %v925
  %v989 = vadd.f32 %v988, %v926
  %v990 = vadd.f32 %v989, %v927
  %v991 = vadd.f32 %v990, %v928
  %v992 = vadd.f32 %v991, %v929
  %v993 = vadd.f32 %v992, %v930
  %v994 = vadd.f32 %v993, %v931
  %v995 = vadd.f32 %v994, %v932
  %v996 = vadd.f32 %v995, %v933
  %v997 = vadd.f32 %v996, %v934
  %v998 = vadd.f32 %v997, %v935
  %v999 = vadd.f32 %v998, %v936
  %v1000 = vadd.f32 %v999, %v937
  %v1001 = vadd.f32 %v1000, %v938
  %v1002 = vadd.f32 %v1001, %v939
  %v1003 = vadd.f32 %v1002, %v940
  %v1004 = vadd.f32 %v1003, %v941
  %v1005 = vadd.f32 %v1004, %v942
  %v1006 = vadd.f32 %v1005, %v943
  %v1007 = vadd.f32 %v1006, %v944
  %v1008 = vadd.f32 %v1007, %v945
  %v1009 = vadd.f32 %v1008, %v946
  %v1010 = vadd.f32 %v1009, %v947
  %v1011 = vadd.f32 %v1010, %v948
  %v1012 = vadd.f32 %v1011, %v949
  %v1013 = vadd.f32 %v1012, %v950
  %v1014 = vadd.f32 %v1013, %v951
  %v1015 = vadd.f32 %v1014, %v952
  %v1016 = vadd.f32 %v1015, %v953
  %v1017 = vadd.f32 %v1016, %v954
  %v1018 = vadd.f32 %v1017, %v955
  %v1019 = vadd.f32 %v1018, %v956
  %v1020 = vrot.slane %v1019, 4
  %v1021 = vadd.f32 %v1019, %v1020
  %v1022 = vrot.slane %v1021, 2
  %v1023 = vadd.f32 %v1021, %v1022
  %v1024 = vrot.slane %v1023, 1
  %v1025 = vadd.f32 %v1023, %v1024
  %v1026 = vmul.f32 %v1025, 0.001953125
  %v1027 = vmul.f32 %v892, %v892
  %v1028 = vsub.f32 %v1026, %v1027
  %v1029 = vsub.f32 %v569, %v892
  %v1030 = vsub.f32 %v572, %v892
  %v1031 = vsub.f32 %v577, %v892
  %v1032 = vsub.f32 %v580, %v892
  %v1033 = vsub.f32 %v585, %v892
  %v1034 = vsub.f32 %v588, %v892
  %v1035 = vsub.f32 %v593, %v892
  %v1036 = vsub.f32 %v596, %v892
  %v1037 = vsub.f32 %v601, %v892
  %v1038 = vsub.f32 %v604, %v892
  %v1039 = vsub.f32 %v609, %v892
  %v1040 = vsub.f32 %v612, %v892
  %v1041 = vsub.f32 %v617, %v892
  %v1042 = vsub.f32 %v620, %v892
  %v1043 = vsub.f32 %v625, %v892
  %v1044 = vsub.f32 %v628, %v892
  %v1045 = vsub.f32 %v633, %v892
  %v1046 = vsub.f32 %v636, %v892
  %v1047 = vsub.f32 %v641, %v892
  %v1048 = vsub.f32 %v644, %v892
  %v1049 = vsub.f32 %v649, %v892
  %v1050 = vsub.f32 %v652, %v892
  %v1051 = vsub.f32 %v657, %v892
  %v1052 = vsub.f32 %v660, %v892
  %v1053 = vsub.f32 %v665, %v892
  %v1054 = vsub.f32 %v668, %v892
  %v1055 = vsub.f32 %v673, %v892
  %v1056 = vsub.f32 %v676, %v892
  %v1057 = vsub.f32 %v681, %v892
  %v1058 = vsub.f32 %v684, %v892
  %v1059 = vsub.f32 %v689, %v892
  %v1060 = vsub.f32 %v692, %v892
  %v1061 = vsub.f32 %v697, %v892
  %v1062 = vsub.f32 %v700, %v892
  %v1063 = vsub.f32 %v705, %v892
  %v1064 = vsub.f32 %v708, %v892
  %v1065 = vsub.f32 %v713, %v892
  %v1066 = vsub.f32 %v716, %v892
  %v1067 = vsub.f32 %v721, %v892
  %v1068 = vsub.f32 %v724, %v892
  %v1069 = vsub.f32 %v729, %v892
  %v1070 = vsub.f32 %v732, %v892
  %v1071 = vsub.f32 %v737, %v892
  %v1072 = vsub.f32 %v740, %v892
  %v1073 = vsub.f32 %v745, %v892
  %v1074 = vsub.f32 %v748, %v892
  %v1075 = vsub.f32 %v753, %v892
  %v1076 = vsub.f32 %v756, %v892
  %v1077 = vsub.f32 %v761, %v892
  %v1078 = vsub.f32 %v764, %v892
  %v1079 = vsub.f32 %v769, %v892
  %v1080 = vsub.f32 %v772, %v892
  %v1081 = vsub.f32 %v777, %v892
  %v1082 = vsub.f32 %v780, %v892
  %v1083 = vsub.f32 %v785, %v892
  %v1084 = vsub.f32 %v788, %v892
  %v1085 = vsub.f32 %v793, %v892
  %v1086 = vsub.f32 %v796, %v892
  %v1087 = vsub.f32 %v801, %v892
  %v1088 = vsub.f32 %v804, %v892
  %v1089 = vsub.f32 %v809, %v892
  %v1090 = vsub.f32 %v812, %v892
  %v1091 = vsub.f32 %v817, %v892
  %v1092 = vsub.f32 %v820, %v892
  %v1093 = vadd.f32 %v1028, 1e-05
  %v1094 = vrsqrt.pop %v1093
  %v1095 = vmul.f32 %v1029, %v1094
  %v1096 = vmul.f32 %v1030, %v1094
  %v1097 = vmul.f32 %v1031, %v1094
  %v1098 = vmul.f32 %v1032, %v1094
  %v1099 = vmul.f32 %v1033, %v1094
  %v1100 = vmul.f32 %v1034, %v1094
  %v1101 = vmul.f32 %v1035, %v1094
  %v1102 = vmul.f32 %v1036, %v1094
  %v1103 = vmul.f32 %v1037, %v1094
  %v1104 = vmul.f32 %v1038, %v1094
  %v1105 = vmul.f32 %v1039, %v1094
  %v1106 = vmul.f32 %v1040, %v1094
  %v1107 = vmul.f32 %v1041, %v1094
  %v1108 = vmul.f32 %v1042, %v1094
  %v1109 = vmul.f32 %v1043, %v1094
  %v1110 = vmul.f32 %v1044, %v1094
  %v1111 = vmul.f32 %v1045, %v1094
  %v1112 = vmul.f32 %v1046, %v1094
  %v1113 = vmul.f32 %v1047, %v1094
  %v1114 = vmul.f32 %v1048, %v1094
  %v1115 = vmul.f32 %v1049, %v1094
  %v1116 = vmul.f32 %v1050, %v1094
  %v1117 = vmul.f32 %v1051, %v1094
  %v1118 = vmul.f32 %v1052, %v1094
  %v1119 = vmul.f32 %v1053, %v1094
  %v1120 = vmul.f32 %v1054, %v1094
  %v1121 = vmul.f32 %v1055, %v1094
  %v1122 = vmul.f32 %v1056, %v1094
  %v1123 = vmul.f32 %v1057, %v1094
  %v1124 = vmul.f32 %v1058, %v1094
  %v1125 = vmul.f32 %v1059, %v1094
  %v1126 = vmul.f32 %v1060, %v1094
  %v1127 = vmul.f32 %v1061, %v1094
  %v1128 = vmul.f32 %v1062, %v1094
  %v1129 = vmul.f32 %v1063, %v1094
  %v1130 = vmul.f32 %v1064, %v1094
  %v1131 = vmul.f32 %v1065, %v1094
  %v1132 = vmul.f32 %v1066, %v1094
  %v1133 = vmul.f32 %v1067, %v1094
  %v1134 = vmul.f32 %v1068, %v1094
  %v1135 = vmul.f32 %v1069, %v1094
  %v1136 = vmul.f32 %v1070, %v1094
  %v1137 = vmul.f32 %v1071, %v1094
  %v1138 = vmul.f32 %v1072, %v1094
  %v1139 = vmul.f32 %v1073, %v1094
  %v1140 = vmul.f32 %v1074, %v1094
  %v1141 = vmul.f32 %v1075, %v1094
  %v1142 = vmul.f32 %v1076, %v1094
  %v1143 = vmul.f32 %v1077, %v1094
  %v1144 = vmul.f32 %v1078, %v1094
  %v1145 = vmul.f32 %v1079, %v1094
  %v1146 = vmul.f32 %v1080, %v1094
  %v1147 = vmul.f32 %v1081, %v1094
  %v1148 = vmul.f32 %v1082, %v1094
  %v1149 = vmul.f32 %v1083, %v1094
  %v1150 = vmul.f32 %v1084, %v1094
  %v1151 = vmul.f32 %v1085, %v1094
  %v1152 = vmul.f32 %v1086, %v1094
  %v1153 = vmul.f32 %v1087, %v1094
  %v1154 = vmul.f32 %v1088, %v1094
  %v1155 = vmul.f32 %v1089, %v1094
  %v1156 = vmul.f32 %v1090, %v1094
  %v1157 = vmul.f32 %v1091, %v1094
  %v1158 = vmul.f32 %v1092, %v1094
  %v1159 = vmax.f32 %v1095, 0.0
  %v1160 = vmax.f32 %v1096, 0.0
  %v1161 = vmax.f32 %v1097, 0.0
  %v1162 = vmax.f32 %v1098, 0.0
  %v1163 = vmax.f32 %v1099, 0.0
  %v1164 = vmax.f32 %v1100, 0.0
  %v1165 = vmax.f32 %v1101, 0.0
  %v1166 = vmax.f32 %v1102, 0.0
  %v1167 = vmax.f32 %v1103, 0.0
  %v1168 = vmax.f32 %v1104, 0.0
  %v1169 = vmax.f32 %v1105, 0.0
  %v1170 = vmax.f32 %v1106, 0.0
  %v1171 = vmax.f32 %v1107, 0.0
  %v1172 = vmax.f32 %v1108, 0.0
  %v1173 = vmax.f32 %v1109, 0.0
  %v1174 = vmax.f32 %v1110, 0.0
  %v1175 = vmax.f32 %v1111, 0.0
  %v1176 = vmax.f32 %v1112, 0.0
  %v1177 = vmax.f32 %v1113, 0.0
  %v1178 = vmax.f32 %v1114, 0.0
  %v1179 = vmax.f32 %v1115, 0.0
  %v1180 = vmax.f32 %v1116, 0.0
  %v1181 = vmax.f32 %v1117, 0.0
  %v1182 = vmax.f32 %v1118, 0.0
  %v1183 = vmax.f32 %v1119, 0.0
  %v1184 = vmax.f32 %v1120, 0.0
  %v1185 = vmax.f32 %v1121, 0.0
  %v1186 = vmax.f32 %v1122, 0.0
  %v1187 = vmax.f32 %v1123, 0.0
  %v1188 = vmax.f32 %v1124, 0.0
  %v1189 = vmax.f32 %v1125, 0.0
  %v1190 = vmax.f32 %v1126, 0.0
  %v1191 = vmax.f32 %v1127, 0.0
  %v1192 = vmax.f32 %v1128, 0.0
  %v1193 = vmax.f32 %v1129, 0.0
  %v1194 = vmax.f32 %v1130, 0.0
  %v1195 = vmax.f32 %v1131, 0.0
  %v1196 = vmax.f32 %v1132, 0.0
  %v1197 = vmax.f32 %v1133, 0.0
  %v1198 = vmax.f32 %v1134, 0.0
  %v1199 = vmax.f32 %v1135, 0.0
  %v1200 = vmax.f32 %v1136, 0.0
  %v1201 = vmax.f32 %v1137, 0.0
  %v1202 = vmax.f32 %v1138, 0.0
  %v1203 = vmax.f32 %v1139, 0.0
  %v1204 = vmax.f32 %v1140, 0.0
  %v1205 = vmax.f32 %v1141, 0.0
  %v1206 = vmax.f32 %v1142, 0.0
  %v1207 = vmax.f32 %v1143, 0.0
  %v1208 = vmax.f32 %v1144, 0.0
  %v1209 = vmax.f32 %v1145, 0.0
  %v1210 = vmax.f32 %v1146, 0.0
  %v1211 = vmax.f32 %v1147, 0.0
  %v1212 = vmax.f32 %v1148, 0.0
  %v1213 = vmax.f32 %v1149, 0.0
  %v1214 = vmax.f32 %v1150, 0.0
  %v1215 = vmax.f32 %v1151, 0.0
  %v1216 = vmax.f32 %v1152, 0.0
  %v1217 = vmax.f32 %v1153, 0.0
  %v1218 = vmax.f32 %v1154, 0.0
  %v1219 = vmax.f32 %v1155, 0.0
  %v1220 = vmax.f32 %v1156, 0.0
  %v1221 = vmax.f32 %v1157, 0.0
  %v1222 = vmax.f32 %v1158, 0.0
  %1223 = vst [vmem:[%s3] sm:$0xff] %v1159
  %1224 = vst [vmem:[%s3 + $0x8] sm:$0xff] %v1160
  %1225 = vst [vmem:[%s3 + $0x10] sm:$0xff] %v1161
  %1226 = vst [vmem:[%s3 + $0x18] sm:$0xff] %v1162
  %1227 = vst [vmem:[%s3 + $0x20] sm:$0xff] %v1163
  %1228 = vst [vmem:[%s3 + $0x28] sm:$0xff] %v1164
  %1229 = vst [vmem:[%s3 + $0x30] sm:$0xff] %v1165
  %1230 = vst [vmem:[%s3 + $0x38] sm:$0xff] %v1166
  %1231 = vst [vmem:[%s3 + $0x40] sm:$0xff] %v1167
  %1232 = vst [vmem:[%s3 + $0x48] sm:$0xff] %v1168
  %1233 = vst [vmem:[%s3 + $0x50] sm:$0xff] %v1169
  %1234 = vst [vmem:[%s3 + $0x58] sm:$0xff] %v1170
  %1235 = vst [vmem:[%s3 + $0x60] sm:$0xff] %v1171
  %1236 = vst [vmem:[%s3 + $0x68] sm:$0xff] %v1172
  %1237 = vst [vmem:[%s3 + $0x70] sm:$0xff] %v1173
  %1238 = vst [vmem:[%s3 + $0x78] sm:$0xff] %v1174
  %1239 = vst [vmem:[%s3 + $0x80] sm:$0xff] %v1175
  %1240 = vst [vmem:[%s3 + $0x88] sm:$0xff] %v1176
  %1241 = vst [vmem:[%s3 + $0x90] sm:$0xff] %v1177
  %1242 = vst [vmem:[%s3 + $0x98] sm:$0xff] %v1178
  %1243 = vst [vmem:[%s3 + $0xa0] sm:$0xff] %v1179
  %1244 = vst [vmem:[%s3 + $0xa8] sm:$0xff] %v1180
  %1245 = vst [vmem:[%s3 + $0xb0] sm:$0xff] %v1181
  %1246 = vst [vmem:[%s3 + $0xb8] sm:$0xff] %v1182
  %1247 = vst [vmem:[%s3 + $0xc0] sm:$0xff] %v1183
  %1248 = vst [vmem:[%s3 + $0xc8] sm:$0xff] %v1184
  %1249 = vst [vmem:[%s3 + $0xd0] sm:$0xff] %v1185
  %1250 = vst [vmem:[%s3 + $0xd8] sm:$0xff] %v1186
  %1251 = vst [vmem:[%s3 + $0xe0] sm:$0xff] %v1187
  %1252 = vst [vmem:[%s3 + $0xe8] sm:$0xff] %v1188
  %1253 = vst [vmem:[%s3 + $0xf0] sm:$0xff] %v1189
  %1254 = vst [vmem:[%s3 + $0xf8] sm:$0xff] %v1190
  %1255 = vst [vmem:[%s3 + $0x100] sm:$0xff] %v1191
  %1256 = vst [vmem:[%s3 + $0x108] sm:$0xff] %v1192
  %1257 = vst [vmem:[%s3 + $0x110] sm:$0xff] %v1193
  %1258 = vst [vmem:[%s3 + $0x118] sm:$0xff] %v1194
  %1259 = vst [vmem:[%s3 + $0x120] sm:$0xff] %v1195
  %1260 = vst [vmem:[%s3 + $0x128] sm:$0xff] %v1196
  %1261 = vst [vmem:[%s3 + $0x130] sm:$0xff] %v1197
  %1262 = vst [vmem:[%s3 + $0x138] sm:$0xff] %v1198
  %1263 = vst [vmem:[%s3 + $0x140] sm:$0xff] %v1199
  %1264 = vst [vmem:[%s3 + $0x148] sm:$0xff] %v1200
  %1265 = vst [vmem:[%s3 + $0x150] sm:$0xff] %v1201
  %1266 = vst [vmem:[%s3 + $0x158] sm:$0xff] %v1202
  %1267 = vst [vmem:[%s3 + $0x160] sm:$0xff] %v1203
  %1268 = vst [vmem:[%s3 + $0x168] sm:$0xff] %v1204
  %1269 = vst [vmem:[%s3 + $0x170] sm:$0xff] %v1205
  %1270 = vst [vmem:[%s3 + $0x178] sm:$0xff] %v1206
  %1271 = vst [vmem:[%s3 + $0x180] sm:$0xff] %v1207
  %1272 = vst [vmem:[%s3 + $0x188] sm:$0xff] %v1208
  %1273 = vst [vmem:[%s3 + $0x190] sm:$0xff] %v1209
  %1274 = vst [vmem:[%s3 + $0x198] sm:$0xff] %v1210
  %1275 = vst [vmem:[%s3 + $0x1a0] sm:$0xff] %v1211
  %1276 = vst [vmem:[%s3 + $0x1a8] sm:$0xff] %v1212
  %1277 = vst [vmem:[%s3 + $0x1b0] sm:$0xff] %v1213
  %1278 = vst [vmem:[%s3 + $0x1b8] sm:$0xff] %v1214
  %1279 = vst [vmem:[%s3 + $0x1c0] sm:$0xff] %v1215
  %1280 = vst [vmem:[%s3 + $0x1c8] sm:$0xff] %v1216
  %1281 = vst [vmem:[%s3 + $0x1d0] sm:$0xff] %v1217
  %1282 = vst [vmem:[%s3 + $0x1d8] sm:$0xff] %v1218
  %1283 = vst [vmem:[%s3 + $0x1e0] sm:$0xff] %v1219
  %1284 = vst [vmem:[%s3 + $0x1e8] sm:$0xff] %v1220
  %1285 = vst [vmem:[%s3 + $0x1f0] sm:$0xff] %v1221
  %1286 = vst [vmem:[%s3 + $0x1f8] sm:$0xff] %v1222
  // Predicated region
  $region14: #{generator_forward.18} parent=0 // pred_check
    _
  $region15: #{generator_forward.18} parent=0 // pred_check_branch
    %1288 = sbr.rel (0) target = $region17
  $region16: #{generator_forward.18} parent=0 // pred_region
    _
  $region17: #{generator_forward.18} parent=0 // pred_fallthru
    _
  // Predicated region
  $region18: #{generator_forward.18} parent=0 // pred_check
    _
  $region19: #{generator_forward.18} parent=0 // pred_check_branch
    %1290 = sbr.rel (0) target = $region21
  $region20: #{generator_forward.18} parent=0 // pred_region
    _
  $region21: #{generator_forward.18} parent=0 // pred_fallthru
    _

// kernel: generator_forward.19
$region0: #{generator_forward.19}
  #allocation0 [shape = 'u32[]', space=smem, size = 0x4, offset = 0x4, fixed_abs, tag = 'smem constant byte address 0x4 - core index']
  #allocation1 [shape = 'u32[144,128]{1,0:T(1,128)}', space=vmem, size = 0x12000, scoped, tag = 'internal scratch']
  %s0 = inlined_call_operand.vmem [shape: bf16[2048,128], index: 0, kind: input, shape index: {}]
  %s1 = inlined_call_operand.vmem [shape: bf16[128,128], index: 1, kind: input, shape index: {}]
  %s2 = inlined_call_operand.vmem [shape: f32[1,128], index: 2, kind: input, shape index: {}]
  %s3 = inlined_call_operand.vmem [shape: f32[2048,128], index: 3, kind: output, shape index: {}]
  %s4 = sld [smem:[#allocation0]]
  $region22: #{generator_forward.19} parent=0
    _
  %s6 = ssub.s32 1, %s4
  %s7 = scalar_select 0, %s6, %s4
  // Predicated region
  $region2: #{generator_forward.19} parent=0 // pred_check
    _
  $region3: #{generator_forward.19} parent=0 // pred_check_branch
    %9 = sbr.rel (0) target = $region5
  $region4: #{generator_forward.19} parent=0 // pred_region
    _
  $region5: #{generator_forward.19} parent=0 // pred_fallthru
    _
  // Predicated region
  $region6: #{generator_forward.19} parent=0 // pred_check
    _
  $region7: #{generator_forward.19} parent=0 // pred_check_branch
    %11 = sbr.rel (0) target = $region9
  $region8: #{generator_forward.19} parent=0 // pred_region
    _
  $region9: #{generator_forward.19} parent=0 // pred_fallthru
    _
  // Predicated region
  $region10: #{generator_forward.19} parent=0 // pred_check
    _
  $region11: #{generator_forward.19} parent=0 // pred_check_branch
    %13 = sbr.rel (0) target = $region13
  $region12: #{generator_forward.19} parent=0 // pred_region
    _
  $region13: #{generator_forward.19} parent=0 // pred_fallthru
    _
  %v15 = vld [vmem:[%s0] sm:$0xf]
  %v16 = vld [vmem:[%s0 + $0x4] sm:$0xf]
  %v17 = vld [vmem:[%s0 + $0x8] sm:$0xf]
  %v18 = vld [vmem:[%s0 + $0xc] sm:$0xf]
  %v19 = vld [vmem:[%s0 + $0x10] sm:$0xf]
  %v20 = vld [vmem:[%s0 + $0x14] sm:$0xf]
  %v21 = vld [vmem:[%s0 + $0x18] sm:$0xf]
  %v22 = vld [vmem:[%s0 + $0x1c] sm:$0xf]
  %v23 = vld [vmem:[%s0 + $0x20] sm:$0xf]
  %v24 = vld [vmem:[%s0 + $0x24] sm:$0xf]
  %v25 = vld [vmem:[%s0 + $0x28] sm:$0xf]
  %v26 = vld [vmem:[%s0 + $0x2c] sm:$0xf]
  %v27 = vld [vmem:[%s0 + $0x30] sm:$0xf]
  %v28 = vld [vmem:[%s0 + $0x34] sm:$0xf]
  %v29 = vld [vmem:[%s0 + $0x38] sm:$0xf]
  %v30 = vld [vmem:[%s0 + $0x3c] sm:$0xf]
  %v31 = vld [vmem:[%s0 + $0x40] sm:$0xf]
  %v32 = vld [vmem:[%s0 + $0x44] sm:$0xf]
  %v33 = vld [vmem:[%s0 + $0x48] sm:$0xf]
  %v34 = vld [vmem:[%s0 + $0x4c] sm:$0xf]
  %v35 = vld [vmem:[%s0 + $0x50] sm:$0xf]
  %v36 = vld [vmem:[%s0 + $0x54] sm:$0xf]
  %v37 = vld [vmem:[%s0 + $0x58] sm:$0xf]
  %v38 = vld [vmem:[%s0 + $0x5c] sm:$0xf]
  %v39 = vld [vmem:[%s0 + $0x60] sm:$0xf]
  %v40 = vld [vmem:[%s0 + $0x64] sm:$0xf]
  %v41 = vld [vmem:[%s0 + $0x68] sm:$0xf]
  %v42 = vld [vmem:[%s0 + $0x6c] sm:$0xf]
  %v43 = vld [vmem:[%s0 + $0x70] sm:$0xf]
  %v44 = vld [vmem:[%s0 + $0x74] sm:$0xf]
  %v45 = vld [vmem:[%s0 + $0x78] sm:$0xf]
  %v46 = vld [vmem:[%s0 + $0x7c] sm:$0xf]
  %v47 = vld [vmem:[%s0 + $0x80] sm:$0xf]
  %v48 = vld [vmem:[%s0 + $0x84] sm:$0xf]
  %v49 = vld [vmem:[%s0 + $0x88] sm:$0xf]
  %v50 = vld [vmem:[%s0 + $0x8c] sm:$0xf]
  %v51 = vld [vmem:[%s0 + $0x90] sm:$0xf]
  %v52 = vld [vmem:[%s0 + $0x94] sm:$0xf]
  %v53 = vld [vmem:[%s0 + $0x98] sm:$0xf]
  %v54 = vld [vmem:[%s0 + $0x9c] sm:$0xf]
  %v55 = vld [vmem:[%s0 + $0xa0] sm:$0xf]
  %v56 = vld [vmem:[%s0 + $0xa4] sm:$0xf]
  %v57 = vld [vmem:[%s0 + $0xa8] sm:$0xf]
  %v58 = vld [vmem:[%s0 + $0xac] sm:$0xf]
  %v59 = vld [vmem:[%s0 + $0xb0] sm:$0xf]
  %v60 = vld [vmem:[%s0 + $0xb4] sm:$0xf]
  %v61 = vld [vmem:[%s0 + $0xb8] sm:$0xf]
  %v62 = vld [vmem:[%s0 + $0xbc] sm:$0xf]
  %v63 = vld [vmem:[%s0 + $0xc0] sm:$0xf]
  %v64 = vld [vmem:[%s0 + $0xc4] sm:$0xf]
  %v65 = vld [vmem:[%s0 + $0xc8] sm:$0xf]
  %v66 = vld [vmem:[%s0 + $0xcc] sm:$0xf]
  %v67 = vld [vmem:[%s0 + $0xd0] sm:$0xf]
  %v68 = vld [vmem:[%s0 + $0xd4] sm:$0xf]
  %v69 = vld [vmem:[%s0 + $0xd8] sm:$0xf]
  %v70 = vld [vmem:[%s0 + $0xdc] sm:$0xf]
  %v71 = vld [vmem:[%s0 + $0xe0] sm:$0xf]
  %v72 = vld [vmem:[%s0 + $0xe4] sm:$0xf]
  %v73 = vld [vmem:[%s0 + $0xe8] sm:$0xf]
  %v74 = vld [vmem:[%s0 + $0xec] sm:$0xf]
  %v75 = vld [vmem:[%s0 + $0xf0] sm:$0xf]
  %v76 = vld [vmem:[%s0 + $0xf4] sm:$0xf]
  %v77 = vld [vmem:[%s0 + $0xf8] sm:$0xf]
  %v78 = vld [vmem:[%s0 + $0xfc] sm:$0xf]
  %v79 = vld [vmem:[%s0 + $0x100] sm:$0xf]
  %v80 = vld [vmem:[%s0 + $0x104] sm:$0xf]
  %v81 = vld [vmem:[%s0 + $0x108] sm:$0xf]
  %v82 = vld [vmem:[%s0 + $0x10c] sm:$0xf]
  %v83 = vld [vmem:[%s0 + $0x110] sm:$0xf]
  %v84 = vld [vmem:[%s0 + $0x114] sm:$0xf]
  %v85 = vld [vmem:[%s0 + $0x118] sm:$0xf]
  %v86 = vld [vmem:[%s0 + $0x11c] sm:$0xf]
  %v87 = vld [vmem:[%s0 + $0x120] sm:$0xf]
  %v88 = vld [vmem:[%s0 + $0x124] sm:$0xf]
  %v89 = vld [vmem:[%s0 + $0x128] sm:$0xf]
  %v90 = vld [vmem:[%s0 + $0x12c] sm:$0xf]
  %v91 = vld [vmem:[%s0 + $0x130] sm:$0xf]
  %v92 = vld [vmem:[%s0 + $0x134] sm:$0xf]
  %v93 = vld [vmem:[%s0 + $0x138] sm:$0xf]
  %v94 = vld [vmem:[%s0 + $0x13c] sm:$0xf]
  %v95 = vld [vmem:[%s0 + $0x140] sm:$0xf]
  %v96 = vld [vmem:[%s0 + $0x144] sm:$0xf]
  %v97 = vld [vmem:[%s0 + $0x148] sm:$0xf]
  %v98 = vld [vmem:[%s0 + $0x14c] sm:$0xf]
  %v99 = vld [vmem:[%s0 + $0x150] sm:$0xf]
  %v100 = vld [vmem:[%s0 + $0x154] sm:$0xf]
  %v101 = vld [vmem:[%s0 + $0x158] sm:$0xf]
  %v102 = vld [vmem:[%s0 + $0x15c] sm:$0xf]
  %v103 = vld [vmem:[%s0 + $0x160] sm:$0xf]
  %v104 = vld [vmem:[%s0 + $0x164] sm:$0xf]
  %v105 = vld [vmem:[%s0 + $0x168] sm:$0xf]
  %v106 = vld [vmem:[%s0 + $0x16c] sm:$0xf]
  %v107 = vld [vmem:[%s0 + $0x170] sm:$0xf]
  %v108 = vld [vmem:[%s0 + $0x174] sm:$0xf]
  %v109 = vld [vmem:[%s0 + $0x178] sm:$0xf]
  %v110 = vld [vmem:[%s0 + $0x17c] sm:$0xf]
  %v111 = vld [vmem:[%s0 + $0x180] sm:$0xf]
  %v112 = vld [vmem:[%s0 + $0x184] sm:$0xf]
  %v113 = vld [vmem:[%s0 + $0x188] sm:$0xf]
  %v114 = vld [vmem:[%s0 + $0x18c] sm:$0xf]
  %v115 = vld [vmem:[%s0 + $0x190] sm:$0xf]
  %v116 = vld [vmem:[%s0 + $0x194] sm:$0xf]
  %v117 = vld [vmem:[%s0 + $0x198] sm:$0xf]
  %v118 = vld [vmem:[%s0 + $0x19c] sm:$0xf]
  %v119 = vld [vmem:[%s0 + $0x1a0] sm:$0xf]
  %v120 = vld [vmem:[%s0 + $0x1a4] sm:$0xf]
  %v121 = vld [vmem:[%s0 + $0x1a8] sm:$0xf]
  %v122 = vld [vmem:[%s0 + $0x1ac] sm:$0xf]
  %v123 = vld [vmem:[%s0 + $0x1b0] sm:$0xf]
  %v124 = vld [vmem:[%s0 + $0x1b4] sm:$0xf]
  %v125 = vld [vmem:[%s0 + $0x1b8] sm:$0xf]
  %v126 = vld [vmem:[%s0 + $0x1bc] sm:$0xf]
  %v127 = vld [vmem:[%s0 + $0x1c0] sm:$0xf]
  %v128 = vld [vmem:[%s0 + $0x1c4] sm:$0xf]
  %v129 = vld [vmem:[%s0 + $0x1c8] sm:$0xf]
  %v130 = vld [vmem:[%s0 + $0x1cc] sm:$0xf]
  %v131 = vld [vmem:[%s0 + $0x1d0] sm:$0xf]
  %v132 = vld [vmem:[%s0 + $0x1d4] sm:$0xf]
  %v133 = vld [vmem:[%s0 + $0x1d8] sm:$0xf]
  %v134 = vld [vmem:[%s0 + $0x1dc] sm:$0xf]
  %v135 = vld [vmem:[%s0 + $0x1e0] sm:$0xf]
  %v136 = vld [vmem:[%s0 + $0x1e4] sm:$0xf]
  %v137 = vld [vmem:[%s0 + $0x1e8] sm:$0xf]
  %v138 = vld [vmem:[%s0 + $0x1ec] sm:$0xf]
  %v139 = vld [vmem:[%s0 + $0x1f0] sm:$0xf]
  %v140 = vld [vmem:[%s0 + $0x1f4] sm:$0xf]
  %v141 = vld [vmem:[%s0 + $0x1f8] sm:$0xf]
  %v142 = vld [vmem:[%s0 + $0x1fc] sm:$0xf]
  %v143 = vld [vmem:[%s0 + $0x200] sm:$0xf]
  %v144 = vld [vmem:[%s0 + $0x204] sm:$0xf]
  %v145 = vld [vmem:[%s0 + $0x208] sm:$0xf]
  %v146 = vld [vmem:[%s0 + $0x20c] sm:$0xf]
  %v147 = vld [vmem:[%s0 + $0x210] sm:$0xf]
  %v148 = vld [vmem:[%s0 + $0x214] sm:$0xf]
  %v149 = vld [vmem:[%s0 + $0x218] sm:$0xf]
  %v150 = vld [vmem:[%s0 + $0x21c] sm:$0xf]
  %v151 = vld [vmem:[%s0 + $0x220] sm:$0xf]
  %v152 = vld [vmem:[%s0 + $0x224] sm:$0xf]
  %v153 = vld [vmem:[%s0 + $0x228] sm:$0xf]
  %v154 = vld [vmem:[%s0 + $0x22c] sm:$0xf]
  %v155 = vld [vmem:[%s0 + $0x230] sm:$0xf]
  %v156 = vld [vmem:[%s0 + $0x234] sm:$0xf]
  %v157 = vld [vmem:[%s0 + $0x238] sm:$0xf]
  %v158 = vld [vmem:[%s0 + $0x23c] sm:$0xf]
  %v159 = vld [vmem:[%s0 + $0x240] sm:$0xf]
  %v160 = vld [vmem:[%s0 + $0x244] sm:$0xf]
  %v161 = vld [vmem:[%s0 + $0x248] sm:$0xf]
  %v162 = vld [vmem:[%s0 + $0x24c] sm:$0xf]
  %v163 = vld [vmem:[%s0 + $0x250] sm:$0xf]
  %v164 = vld [vmem:[%s0 + $0x254] sm:$0xf]
  %v165 = vld [vmem:[%s0 + $0x258] sm:$0xf]
  %v166 = vld [vmem:[%s0 + $0x25c] sm:$0xf]
  %v167 = vld [vmem:[%s0 + $0x260] sm:$0xf]
  %v168 = vld [vmem:[%s0 + $0x264] sm:$0xf]
  %v169 = vld [vmem:[%s0 + $0x268] sm:$0xf]
  %v170 = vld [vmem:[%s0 + $0x26c] sm:$0xf]
  %v171 = vld [vmem:[%s0 + $0x270] sm:$0xf]
  %v172 = vld [vmem:[%s0 + $0x274] sm:$0xf]
  %v173 = vld [vmem:[%s0 + $0x278] sm:$0xf]
  %v174 = vld [vmem:[%s0 + $0x27c] sm:$0xf]
  %v175 = vld [vmem:[%s0 + $0x280] sm:$0xf]
  %v176 = vld [vmem:[%s0 + $0x284] sm:$0xf]
  %v177 = vld [vmem:[%s0 + $0x288] sm:$0xf]
  %v178 = vld [vmem:[%s0 + $0x28c] sm:$0xf]
  %v179 = vld [vmem:[%s0 + $0x290] sm:$0xf]
  %v180 = vld [vmem:[%s0 + $0x294] sm:$0xf]
  %v181 = vld [vmem:[%s0 + $0x298] sm:$0xf]
  %v182 = vld [vmem:[%s0 + $0x29c] sm:$0xf]
  %v183 = vld [vmem:[%s0 + $0x2a0] sm:$0xf]
  %v184 = vld [vmem:[%s0 + $0x2a4] sm:$0xf]
  %v185 = vld [vmem:[%s0 + $0x2a8] sm:$0xf]
  %v186 = vld [vmem:[%s0 + $0x2ac] sm:$0xf]
  %v187 = vld [vmem:[%s0 + $0x2b0] sm:$0xf]
  %v188 = vld [vmem:[%s0 + $0x2b4] sm:$0xf]
  %v189 = vld [vmem:[%s0 + $0x2b8] sm:$0xf]
  %v190 = vld [vmem:[%s0 + $0x2bc] sm:$0xf]
  %v191 = vld [vmem:[%s0 + $0x2c0] sm:$0xf]
  %v192 = vld [vmem:[%s0 + $0x2c4] sm:$0xf]
  %v193 = vld [vmem:[%s0 + $0x2c8] sm:$0xf]
  %v194 = vld [vmem:[%s0 + $0x2cc] sm:$0xf]
  %v195 = vld [vmem:[%s0 + $0x2d0] sm:$0xf]
  %v196 = vld [vmem:[%s0 + $0x2d4] sm:$0xf]
  %v197 = vld [vmem:[%s0 + $0x2d8] sm:$0xf]
  %v198 = vld [vmem:[%s0 + $0x2dc] sm:$0xf]
  %v199 = vld [vmem:[%s0 + $0x2e0] sm:$0xf]
  %v200 = vld [vmem:[%s0 + $0x2e4] sm:$0xf]
  %v201 = vld [vmem:[%s0 + $0x2e8] sm:$0xf]
  %v202 = vld [vmem:[%s0 + $0x2ec] sm:$0xf]
  %v203 = vld [vmem:[%s0 + $0x2f0] sm:$0xf]
  %v204 = vld [vmem:[%s0 + $0x2f4] sm:$0xf]
  %v205 = vld [vmem:[%s0 + $0x2f8] sm:$0xf]
  %v206 = vld [vmem:[%s0 + $0x2fc] sm:$0xf]
  %v207 = vld [vmem:[%s0 + $0x300] sm:$0xf]
  %v208 = vld [vmem:[%s0 + $0x304] sm:$0xf]
  %v209 = vld [vmem:[%s0 + $0x308] sm:$0xf]
  %v210 = vld [vmem:[%s0 + $0x30c] sm:$0xf]
  %v211 = vld [vmem:[%s0 + $0x310] sm:$0xf]
  %v212 = vld [vmem:[%s0 + $0x314] sm:$0xf]
  %v213 = vld [vmem:[%s0 + $0x318] sm:$0xf]
  %v214 = vld [vmem:[%s0 + $0x31c] sm:$0xf]
  %v215 = vld [vmem:[%s0 + $0x320] sm:$0xf]
  %v216 = vld [vmem:[%s0 + $0x324] sm:$0xf]
  %v217 = vld [vmem:[%s0 + $0x328] sm:$0xf]
  %v218 = vld [vmem:[%s0 + $0x32c] sm:$0xf]
  %v219 = vld [vmem:[%s0 + $0x330] sm:$0xf]
  %v220 = vld [vmem:[%s0 + $0x334] sm:$0xf]
  %v221 = vld [vmem:[%s0 + $0x338] sm:$0xf]
  %v222 = vld [vmem:[%s0 + $0x33c] sm:$0xf]
  %v223 = vld [vmem:[%s0 + $0x340] sm:$0xf]
  %v224 = vld [vmem:[%s0 + $0x344] sm:$0xf]
  %v225 = vld [vmem:[%s0 + $0x348] sm:$0xf]
  %v226 = vld [vmem:[%s0 + $0x34c] sm:$0xf]
  %v227 = vld [vmem:[%s0 + $0x350] sm:$0xf]
  %v228 = vld [vmem:[%s0 + $0x354] sm:$0xf]
  %v229 = vld [vmem:[%s0 + $0x358] sm:$0xf]
  %v230 = vld [vmem:[%s0 + $0x35c] sm:$0xf]
  %v231 = vld [vmem:[%s0 + $0x360] sm:$0xf]
  %v232 = vld [vmem:[%s0 + $0x364] sm:$0xf]
  %v233 = vld [vmem:[%s0 + $0x368] sm:$0xf]
  %v234 = vld [vmem:[%s0 + $0x36c] sm:$0xf]
  %v235 = vld [vmem:[%s0 + $0x370] sm:$0xf]
  %v236 = vld [vmem:[%s0 + $0x374] sm:$0xf]
  %v237 = vld [vmem:[%s0 + $0x378] sm:$0xf]
  %v238 = vld [vmem:[%s0 + $0x37c] sm:$0xf]
  %v239 = vld [vmem:[%s0 + $0x380] sm:$0xf]
  %v240 = vld [vmem:[%s0 + $0x384] sm:$0xf]
  %v241 = vld [vmem:[%s0 + $0x388] sm:$0xf]
  %v242 = vld [vmem:[%s0 + $0x38c] sm:$0xf]
  %v243 = vld [vmem:[%s0 + $0x390] sm:$0xf]
  %v244 = vld [vmem:[%s0 + $0x394] sm:$0xf]
  %v245 = vld [vmem:[%s0 + $0x398] sm:$0xf]
  %v246 = vld [vmem:[%s0 + $0x39c] sm:$0xf]
  %v247 = vld [vmem:[%s0 + $0x3a0] sm:$0xf]
  %v248 = vld [vmem:[%s0 + $0x3a4] sm:$0xf]
  %v249 = vld [vmem:[%s0 + $0x3a8] sm:$0xf]
  %v250 = vld [vmem:[%s0 + $0x3ac] sm:$0xf]
  %v251 = vld [vmem:[%s0 + $0x3b0] sm:$0xf]
  %v252 = vld [vmem:[%s0 + $0x3b4] sm:$0xf]
  %v253 = vld [vmem:[%s0 + $0x3b8] sm:$0xf]
  %v254 = vld [vmem:[%s0 + $0x3bc] sm:$0xf]
  %v255 = vld [vmem:[%s0 + $0x3c0] sm:$0xf]
  %v256 = vld [vmem:[%s0 + $0x3c4] sm:$0xf]
  %v257 = vld [vmem:[%s0 + $0x3c8] sm:$0xf]
  %v258 = vld [vmem:[%s0 + $0x3cc] sm:$0xf]
  %v259 = vld [vmem:[%s0 + $0x3d0] sm:$0xf]
  %v260 = vld [vmem:[%s0 + $0x3d4] sm:$0xf]
  %v261 = vld [vmem:[%s0 + $0x3d8] sm:$0xf]
  %v262 = vld [vmem:[%s0 + $0x3dc] sm:$0xf]
  %v263 = vld [vmem:[%s0 + $0x3e0] sm:$0xf]
  %v264 = vld [vmem:[%s0 + $0x3e4] sm:$0xf]
  %v265 = vld [vmem:[%s0 + $0x3e8] sm:$0xf]
  %v266 = vld [vmem:[%s0 + $0x3ec] sm:$0xf]
  %v267 = vld [vmem:[%s0 + $0x3f0] sm:$0xf]
  %v268 = vld [vmem:[%s0 + $0x3f4] sm:$0xf]
  %v269 = vld [vmem:[%s0 + $0x3f8] sm:$0xf]
  %v270 = vld [vmem:[%s0 + $0x3fc] sm:$0xf]
  %v271 = vld [vmem:[%s1] sm:$0xf]
  %v272 = vld [vmem:[%s1 + $0x4] sm:$0xf]
  %v273 = vld [vmem:[%s1 + $0x8] sm:$0xf]
  %v274 = vld [vmem:[%s1 + $0xc] sm:$0xf]
  %v275 = vld [vmem:[%s1 + $0x10] sm:$0xf]
  %v276 = vld [vmem:[%s1 + $0x14] sm:$0xf]
  %v277 = vld [vmem:[%s1 + $0x18] sm:$0xf]
  %v278 = vld [vmem:[%s1 + $0x1c] sm:$0xf]
  %v279 = vld [vmem:[%s1 + $0x20] sm:$0xf]
  %v280 = vld [vmem:[%s1 + $0x24] sm:$0xf]
  %v281 = vld [vmem:[%s1 + $0x28] sm:$0xf]
  %v282 = vld [vmem:[%s1 + $0x2c] sm:$0xf]
  %v283 = vld [vmem:[%s1 + $0x30] sm:$0xf]
  %v284 = vld [vmem:[%s1 + $0x34] sm:$0xf]
  %v285 = vld [vmem:[%s1 + $0x38] sm:$0xf]
  %v286 = vld [vmem:[%s1 + $0x3c] sm:$0xf]
  %v287 = vld [vmem:[%s2] sm:$0x1]
  %v289 = vlaneseq
  %v290 = vshrl.u32 %v289, 7
  %v291 = vsub.s32 0, %v290
  %v292 = vrot.slane %v287, %v291
  %v550 = vunpack.c.l.b16 %v15
  %v551 = vunpack.c.l.b16 %v16
  %v552 = vunpack.c.l.b16 %v17
  %v553 = vunpack.c.l.b16 %v18
  %v554 = vunpack.c.l.b16 %v19
  %v555 = vunpack.c.l.b16 %v20
  %v556 = vunpack.c.l.b16 %v21
  %v557 = vunpack.c.l.b16 %v22
  %v558 = vunpack.c.l.b16 %v23
  %v559 = vunpack.c.l.b16 %v24
  %v560 = vunpack.c.l.b16 %v25
  %v561 = vunpack.c.l.b16 %v26
  %v562 = vunpack.c.l.b16 %v27
  %v563 = vunpack.c.l.b16 %v28
  %v564 = vunpack.c.l.b16 %v29
  %v565 = vunpack.c.l.b16 %v30
  %v566 = vunpack.c.l.b16 %v31
  %v567 = vunpack.c.l.b16 %v32
  %v568 = vunpack.c.l.b16 %v33
  %v569 = vunpack.c.l.b16 %v34
  %v570 = vunpack.c.l.b16 %v35
  %v571 = vunpack.c.l.b16 %v36
  %v572 = vunpack.c.l.b16 %v37
  %v573 = vunpack.c.l.b16 %v38
  %v574 = vunpack.c.l.b16 %v39
  %v575 = vunpack.c.l.b16 %v40
  %v576 = vunpack.c.l.b16 %v41
  %v577 = vunpack.c.l.b16 %v42
  %v578 = vunpack.c.l.b16 %v43
  %v579 = vunpack.c.l.b16 %v44
  %v580 = vunpack.c.l.b16 %v45
  %v581 = vunpack.c.l.b16 %v46
  %v582 = vunpack.c.l.b16 %v47
  %v583 = vunpack.c.l.b16 %v48
  %v584 = vunpack.c.l.b16 %v49
  %v585 = vunpack.c.l.b16 %v50
  %v586 = vunpack.c.l.b16 %v51
  %v587 = vunpack.c.l.b16 %v52
  %v588 = vunpack.c.l.b16 %v53
  %v589 = vunpack.c.l.b16 %v54
  %v590 = vunpack.c.l.b16 %v55
  %v591 = vunpack.c.l.b16 %v56
  %v592 = vunpack.c.l.b16 %v57
  %v593 = vunpack.c.l.b16 %v58
  %v594 = vunpack.c.l.b16 %v59
  %v595 = vunpack.c.l.b16 %v60
  %v596 = vunpack.c.l.b16 %v61
  %v597 = vunpack.c.l.b16 %v62
  %v598 = vunpack.c.l.b16 %v63
  %v599 = vunpack.c.l.b16 %v64
  %v600 = vunpack.c.l.b16 %v65
  %v601 = vunpack.c.l.b16 %v66
  %v602 = vunpack.c.l.b16 %v67
  %v603 = vunpack.c.l.b16 %v68
  %v604 = vunpack.c.l.b16 %v69
  %v605 = vunpack.c.l.b16 %v70
  %v606 = vunpack.c.l.b16 %v71
  %v607 = vunpack.c.l.b16 %v72
  %v608 = vunpack.c.l.b16 %v73
  %v609 = vunpack.c.l.b16 %v74
  %v610 = vunpack.c.l.b16 %v75
  %v611 = vunpack.c.l.b16 %v76
  %v612 = vunpack.c.l.b16 %v77
  %v613 = vunpack.c.l.b16 %v78
  %v614 = vunpack.c.l.b16 %v79
  %v615 = vunpack.c.l.b16 %v80
  %v616 = vunpack.c.l.b16 %v81
  %v617 = vunpack.c.l.b16 %v82
  %v618 = vunpack.c.l.b16 %v83
  %v619 = vunpack.c.l.b16 %v84
  %v620 = vunpack.c.l.b16 %v85
  %v621 = vunpack.c.l.b16 %v86
  %v622 = vunpack.c.l.b16 %v87
  %v623 = vunpack.c.l.b16 %v88
  %v624 = vunpack.c.l.b16 %v89
  %v625 = vunpack.c.l.b16 %v90
  %v626 = vunpack.c.l.b16 %v91
  %v627 = vunpack.c.l.b16 %v92
  %v628 = vunpack.c.l.b16 %v93
  %v629 = vunpack.c.l.b16 %v94
  %v630 = vunpack.c.l.b16 %v95
  %v631 = vunpack.c.l.b16 %v96
  %v632 = vunpack.c.l.b16 %v97
  %v633 = vunpack.c.l.b16 %v98
  %v634 = vunpack.c.l.b16 %v99
  %v635 = vunpack.c.l.b16 %v100
  %v636 = vunpack.c.l.b16 %v101
  %v637 = vunpack.c.l.b16 %v102
  %v638 = vunpack.c.l.b16 %v103
  %v639 = vunpack.c.l.b16 %v104
  %v640 = vunpack.c.l.b16 %v105
  %v641 = vunpack.c.l.b16 %v106
  %v642 = vunpack.c.l.b16 %v107
  %v643 = vunpack.c.l.b16 %v108
  %v644 = vunpack.c.l.b16 %v109
  %v645 = vunpack.c.l.b16 %v110
  %v646 = vunpack.c.l.b16 %v111
  %v647 = vunpack.c.l.b16 %v112
  %v648 = vunpack.c.l.b16 %v113
  %v649 = vunpack.c.l.b16 %v114
  %v650 = vunpack.c.l.b16 %v115
  %v651 = vunpack.c.l.b16 %v116
  %v652 = vunpack.c.l.b16 %v117
  %v653 = vunpack.c.l.b16 %v118
  %v654 = vunpack.c.l.b16 %v119
  %v655 = vunpack.c.l.b16 %v120
  %v656 = vunpack.c.l.b16 %v121
  %v657 = vunpack.c.l.b16 %v122
  %v658 = vunpack.c.l.b16 %v123
  %v659 = vunpack.c.l.b16 %v124
  %v660 = vunpack.c.l.b16 %v125
  %v661 = vunpack.c.l.b16 %v126
  %v662 = vunpack.c.l.b16 %v127
  %v663 = vunpack.c.l.b16 %v128
  %v664 = vunpack.c.l.b16 %v129
  %v665 = vunpack.c.l.b16 %v130
  %v666 = vunpack.c.l.b16 %v131
  %v667 = vunpack.c.l.b16 %v132
  %v668 = vunpack.c.l.b16 %v133
  %v669 = vunpack.c.l.b16 %v134
  %v670 = vunpack.c.l.b16 %v135
  %v671 = vunpack.c.l.b16 %v136
  %v672 = vunpack.c.l.b16 %v137
  %v673 = vunpack.c.l.b16 %v138
  %v674 = vunpack.c.l.b16 %v139
  %v675 = vunpack.c.l.b16 %v140
  %v676 = vunpack.c.l.b16 %v141
  %v677 = vunpack.c.l.b16 %v142
  %v678 = vunpack.c.l.b16 %v143
  %v679 = vunpack.c.l.b16 %v144
  %v680 = vunpack.c.l.b16 %v145
  %v681 = vunpack.c.l.b16 %v146
  %v682 = vunpack.c.l.b16 %v147
  %v683 = vunpack.c.l.b16 %v148
  %v684 = vunpack.c.l.b16 %v149
  %v685 = vunpack.c.l.b16 %v150
  %v686 = vunpack.c.l.b16 %v151
  %v687 = vunpack.c.l.b16 %v152
  %v688 = vunpack.c.l.b16 %v153
  %v689 = vunpack.c.l.b16 %v154
  %v690 = vunpack.c.l.b16 %v155
  %v691 = vunpack.c.l.b16 %v156
  %v692 = vunpack.c.l.b16 %v157
  %v693 = vunpack.c.l.b16 %v158
  %v694 = vunpack.c.l.b16 %v159
  %v695 = vunpack.c.l.b16 %v160
  %v696 = vunpack.c.l.b16 %v161
  %v697 = vunpack.c.l.b16 %v162
  %v698 = vunpack.c.l.b16 %v163
  %v699 = vunpack.c.l.b16 %v164
  %v700 = vunpack.c.l.b16 %v165
  %v701 = vunpack.c.l.b16 %v166
  %v702 = vunpack.c.l.b16 %v167
  %v703 = vunpack.c.l.b16 %v168
  %v704 = vunpack.c.l.b16 %v169
  %v705 = vunpack.c.l.b16 %v170
  %v706 = vunpack.c.l.b16 %v171
  %v707 = vunpack.c.l.b16 %v172
  %v708 = vunpack.c.l.b16 %v173
  %v709 = vunpack.c.l.b16 %v174
  %v710 = vunpack.c.l.b16 %v175
  %v711 = vunpack.c.l.b16 %v176
  %v712 = vunpack.c.l.b16 %v177
  %v713 = vunpack.c.l.b16 %v178
  %v714 = vunpack.c.l.b16 %v179
  %v715 = vunpack.c.l.b16 %v180
  %v716 = vunpack.c.l.b16 %v181
  %v717 = vunpack.c.l.b16 %v182
  %v718 = vunpack.c.l.b16 %v183
  %v719 = vunpack.c.l.b16 %v184
  %v720 = vunpack.c.l.b16 %v185
  %v721 = vunpack.c.l.b16 %v186
  %v722 = vunpack.c.l.b16 %v187
  %v723 = vunpack.c.l.b16 %v188
  %v724 = vunpack.c.l.b16 %v189
  %v725 = vunpack.c.l.b16 %v190
  %v726 = vunpack.c.l.b16 %v191
  %v727 = vunpack.c.l.b16 %v192
  %v728 = vunpack.c.l.b16 %v193
  %v729 = vunpack.c.l.b16 %v194
  %v730 = vunpack.c.l.b16 %v195
  %v731 = vunpack.c.l.b16 %v196
  %v732 = vunpack.c.l.b16 %v197
  %v733 = vunpack.c.l.b16 %v198
  %v734 = vunpack.c.l.b16 %v199
  %v735 = vunpack.c.l.b16 %v200
  %v736 = vunpack.c.l.b16 %v201
  %v737 = vunpack.c.l.b16 %v202
  %v738 = vunpack.c.l.b16 %v203
  %v739 = vunpack.c.l.b16 %v204
  %v740 = vunpack.c.l.b16 %v205
  %v741 = vunpack.c.l.b16 %v206
  %v742 = vunpack.c.l.b16 %v207
  %v743 = vunpack.c.l.b16 %v208
  %v744 = vunpack.c.l.b16 %v209
  %v745 = vunpack.c.l.b16 %v210
  %v746 = vunpack.c.l.b16 %v211
  %v747 = vunpack.c.l.b16 %v212
  %v748 = vunpack.c.l.b16 %v213
  %v749 = vunpack.c.l.b16 %v214
  %v750 = vunpack.c.l.b16 %v215
  %v751 = vunpack.c.l.b16 %v216
  %v752 = vunpack.c.l.b16 %v217
  %v753 = vunpack.c.l.b16 %v218
  %v754 = vunpack.c.l.b16 %v219
  %v755 = vunpack.c.l.b16 %v220
  %v756 = vunpack.c.l.b16 %v221
  %v757 = vunpack.c.l.b16 %v222
  %v758 = vunpack.c.l.b16 %v223
  %v759 = vunpack.c.l.b16 %v224
  %v760 = vunpack.c.l.b16 %v225
  %v761 = vunpack.c.l.b16 %v226
  %v762 = vunpack.c.l.b16 %v227
  %v763 = vunpack.c.l.b16 %v228
  %v764 = vunpack.c.l.b16 %v229
  %v765 = vunpack.c.l.b16 %v230
  %v766 = vunpack.c.l.b16 %v231
  %v767 = vunpack.c.l.b16 %v232
  %v768 = vunpack.c.l.b16 %v233
  %v769 = vunpack.c.l.b16 %v234
  %v770 = vunpack.c.l.b16 %v235
  %v771 = vunpack.c.l.b16 %v236
  %v772 = vunpack.c.l.b16 %v237
  %v773 = vunpack.c.l.b16 %v238
  %v774 = vunpack.c.l.b16 %v239
  %v775 = vunpack.c.l.b16 %v240
  %v776 = vunpack.c.l.b16 %v241
  %v777 = vunpack.c.l.b16 %v242
  %v778 = vunpack.c.l.b16 %v243
  %v779 = vunpack.c.l.b16 %v244
  %v780 = vunpack.c.l.b16 %v245
  %v781 = vunpack.c.l.b16 %v246
  %v782 = vunpack.c.l.b16 %v247
  %v783 = vunpack.c.l.b16 %v248
  %v784 = vunpack.c.l.b16 %v249
  %v785 = vunpack.c.l.b16 %v250
  %v786 = vunpack.c.l.b16 %v251
  %v787 = vunpack.c.l.b16 %v252
  %v788 = vunpack.c.l.b16 %v253
  %v789 = vunpack.c.l.b16 %v254
  %v790 = vunpack.c.l.b16 %v255
  %v791 = vunpack.c.l.b16 %v256
  %v792 = vunpack.c.l.b16 %v257
  %v793 = vunpack.c.l.b16 %v258
  %v794 = vunpack.c.l.b16 %v259
  %v795 = vunpack.c.l.b16 %v260
  %v796 = vunpack.c.l.b16 %v261
  %v797 = vunpack.c.l.b16 %v262
  %v798 = vunpack.c.l.b16 %v263
  %v799 = vunpack.c.l.b16 %v264
  %v800 = vunpack.c.l.b16 %v265
  %v801 = vunpack.c.l.b16 %v266
  %v802 = vunpack.c.l.b16 %v267
  %v803 = vunpack.c.l.b16 %v268
  %v804 = vunpack.c.l.b16 %v269
  %v805 = vunpack.c.l.b16 %v270
  %v806 = vpack.c.b16 %v551, %v550
  %v807 = vpack.c.b16 %v553, %v552
  %v808 = vpack.c.b16 %v555, %v554
  %v809 = vpack.c.b16 %v557, %v556
  %v810 = vpack.c.b16 %v559, %v558
  %v811 = vpack.c.b16 %v561, %v560
  %v812 = vpack.c.b16 %v563, %v562
  %v813 = vpack.c.b16 %v565, %v564
  %v814 = vpack.c.b16 %v567, %v566
  %v815 = vpack.c.b16 %v569, %v568
  %v816 = vpack.c.b16 %v571, %v570
  %v817 = vpack.c.b16 %v573, %v572
  %v818 = vpack.c.b16 %v575, %v574
  %v819 = vpack.c.b16 %v577, %v576
  %v820 = vpack.c.b16 %v579, %v578
  %v821 = vpack.c.b16 %v581, %v580
  %v822 = vpack.c.b16 %v583, %v582
  %v823 = vpack.c.b16 %v585, %v584
  %v824 = vpack.c.b16 %v587, %v586
  %v825 = vpack.c.b16 %v589, %v588
  %v826 = vpack.c.b16 %v591, %v590
  %v827 = vpack.c.b16 %v593, %v592
  %v828 = vpack.c.b16 %v595, %v594
  %v829 = vpack.c.b16 %v597, %v596
  %v830 = vpack.c.b16 %v599, %v598
  %v831 = vpack.c.b16 %v601, %v600
  %v832 = vpack.c.b16 %v603, %v602
  %v833 = vpack.c.b16 %v605, %v604
  %v834 = vpack.c.b16 %v607, %v606
  %v835 = vpack.c.b16 %v609, %v608
  %v836 = vpack.c.b16 %v611, %v610
  %v837 = vpack.c.b16 %v613, %v612
  %v838 = vpack.c.b16 %v615, %v614
  %v839 = vpack.c.b16 %v617, %v616
  %v840 = vpack.c.b16 %v619, %v618
  %v841 = vpack.c.b16 %v621, %v620
  %v842 = vpack.c.b16 %v623, %v622
  %v843 = vpack.c.b16 %v625, %v624
  %v844 = vpack.c.b16 %v627, %v626
  %v845 = vpack.c.b16 %v629, %v628
  %v846 = vpack.c.b16 %v631, %v630
  %v847 = vpack.c.b16 %v633, %v632
  %v848 = vpack.c.b16 %v635, %v634
  %v849 = vpack.c.b16 %v637, %v636
  %v850 = vpack.c.b16 %v639, %v638
  %v851 = vpack.c.b16 %v641, %v640
  %v852 = vpack.c.b16 %v643, %v642
  %v853 = vpack.c.b16 %v645, %v644
  %v854 = vpack.c.b16 %v647, %v646
  %v855 = vpack.c.b16 %v649, %v648
  %v856 = vpack.c.b16 %v651, %v650
  %v857 = vpack.c.b16 %v653, %v652
  %v858 = vpack.c.b16 %v655, %v654
  %v859 = vpack.c.b16 %v657, %v656
  %v860 = vpack.c.b16 %v659, %v658
  %v861 = vpack.c.b16 %v661, %v660
  %v862 = vpack.c.b16 %v663, %v662
  %v863 = vpack.c.b16 %v665, %v664
  %v864 = vpack.c.b16 %v667, %v666
  %v865 = vpack.c.b16 %v669, %v668
  %v866 = vpack.c.b16 %v671, %v670
  %v867 = vpack.c.b16 %v673, %v672
  %v868 = vpack.c.b16 %v675, %v674
  %v869 = vpack.c.b16 %v677, %v676
  %v870 = vpack.c.b16 %v679, %v678
  %v871 = vpack.c.b16 %v681, %v680
  %v872 = vpack.c.b16 %v683, %v682
  %v873 = vpack.c.b16 %v685, %v684
  %v874 = vpack.c.b16 %v687, %v686
  %v875 = vpack.c.b16 %v689, %v688
  %v876 = vpack.c.b16 %v691, %v690
  %v877 = vpack.c.b16 %v693, %v692
  %v878 = vpack.c.b16 %v695, %v694
  %v879 = vpack.c.b16 %v697, %v696
  %v880 = vpack.c.b16 %v699, %v698
  %v881 = vpack.c.b16 %v701, %v700
  %v882 = vpack.c.b16 %v703, %v702
  %v883 = vpack.c.b16 %v705, %v704
  %v884 = vpack.c.b16 %v707, %v706
  %v885 = vpack.c.b16 %v709, %v708
  %v886 = vpack.c.b16 %v711, %v710
  %v887 = vpack.c.b16 %v713, %v712
  %v888 = vpack.c.b16 %v715, %v714
  %v889 = vpack.c.b16 %v717, %v716
  %v890 = vpack.c.b16 %v719, %v718
  %v891 = vpack.c.b16 %v721, %v720
  %v892 = vpack.c.b16 %v723, %v722
  %v893 = vpack.c.b16 %v725, %v724
  %v894 = vpack.c.b16 %v727, %v726
  %v895 = vpack.c.b16 %v729, %v728
  %v896 = vpack.c.b16 %v731, %v730
  %v897 = vpack.c.b16 %v733, %v732
  %v898 = vpack.c.b16 %v735, %v734
  %v899 = vpack.c.b16 %v737, %v736
  %v900 = vpack.c.b16 %v739, %v738
  %v901 = vpack.c.b16 %v741, %v740
  %v902 = vpack.c.b16 %v743, %v742
  %v903 = vpack.c.b16 %v745, %v744
  %v904 = vpack.c.b16 %v747, %v746
  %v905 = vpack.c.b16 %v749, %v748
  %v906 = vpack.c.b16 %v751, %v750
  %v907 = vpack.c.b16 %v753, %v752
  %v908 = vpack.c.b16 %v755, %v754
  %v909 = vpack.c.b16 %v757, %v756
  %v910 = vpack.c.b16 %v759, %v758
  %v911 = vpack.c.b16 %v761, %v760
  %v912 = vpack.c.b16 %v763, %v762
  %v913 = vpack.c.b16 %v765, %v764
  %v914 = vpack.c.b16 %v767, %v766
  %v915 = vpack.c.b16 %v769, %v768
  %v916 = vpack.c.b16 %v771, %v770
  %v917 = vpack.c.b16 %v773, %v772
  %v918 = vpack.c.b16 %v775, %v774
  %v919 = vpack.c.b16 %v777, %v776
  %v920 = vpack.c.b16 %v779, %v778
  %v921 = vpack.c.b16 %v781, %v780
  %v922 = vpack.c.b16 %v783, %v782
  %v923 = vpack.c.b16 %v785, %v784
  %v924 = vpack.c.b16 %v787, %v786
  %v925 = vpack.c.b16 %v789, %v788
  %v926 = vpack.c.b16 %v791, %v790
  %v927 = vpack.c.b16 %v793, %v792
  %v928 = vpack.c.b16 %v795, %v794
  %v929 = vpack.c.b16 %v797, %v796
  %v930 = vpack.c.b16 %v799, %v798
  %v931 = vpack.c.b16 %v801, %v800
  %v932 = vpack.c.b16 %v803, %v802
  %v933 = vpack.c.b16 %v805, %v804
  %v1078 = vunpack.c.l.b16 %v271
  %v1079 = vunpack.c.l.b16 %v272
  %v1080 = vunpack.c.l.b16 %v273
  %v1081 = vunpack.c.l.b16 %v274
  %v1082 = vunpack.c.l.b16 %v275
  %v1083 = vunpack.c.l.b16 %v276
  %v1084 = vunpack.c.l.b16 %v277
  %v1085 = vunpack.c.l.b16 %v278
  %v1086 = vunpack.c.l.b16 %v279
  %v1087 = vunpack.c.l.b16 %v280
  %v1088 = vunpack.c.l.b16 %v281
  %v1089 = vunpack.c.l.b16 %v282
  %v1090 = vunpack.c.l.b16 %v283
  %v1091 = vunpack.c.l.b16 %v284
  %v1092 = vunpack.c.l.b16 %v285
  %v1093 = vunpack.c.l.b16 %v286
  %v1094 = vpack.c.b16 %v1079, %v1078
  %v1095 = vpack.c.b16 %v1081, %v1080
  %v1096 = vpack.c.b16 %v1083, %v1082
  %v1097 = vpack.c.b16 %v1085, %v1084
  %v1098 = vpack.c.b16 %v1087, %v1086
  %v1099 = vpack.c.b16 %v1089, %v1088
  %v1100 = vpack.c.b16 %v1091, %v1090
  %v1101 = vpack.c.b16 %v1093, %v1092
  %1110 = vmatprep.subr.bf16.mxu0 0
  %1111 = vmatpush1.bf16.msra.mxu0 %v1094
  %1112 = vmatprep.subr.bf16.mxu0 0
  %1113 = vmatpush1.bf16.msra.mxu0 %v1095
  %1114 = vmatprep.subr.bf16.mxu0 0
  %1115 = vmatpush1.bf16.msra.mxu0 %v1096
  %1116 = vmatprep.subr.bf16.mxu0 0
  %1117 = vmatpush1.bf16.msra.mxu0 %v1097
  %1118 = vmatprep.subr.bf16.mxu0 0
  %1119 = vmatpush1.bf16.msra.mxu0 %v1098
  %1120 = vmatprep.subr.bf16.mxu0 0
  %1121 = vmatpush1.bf16.msra.mxu0 %v1099
  %1122 = vmatprep.subr.bf16.mxu0 0
  %1123 = vmatpush1.bf16.msra.mxu0 %v1100
  %1124 = vmatprep.subr.bf16.mxu0 0
  %1125 = vmatpush1.bf16.msra.mxu0 %v1101
  %1126 = vmatprep.subr.bf16.mxu0 0
  %1127 = vmatpush1.bf16.msra.mxu0 0
  %1128 = vmatprep.subr.bf16.mxu0 0
  %1129 = vmatpush1.bf16.msra.mxu0 0
  %1130 = vmatprep.subr.bf16.mxu0 0
  %1131 = vmatpush1.bf16.msra.mxu0 0
  %1132 = vmatprep.subr.bf16.mxu0 0
  %1133 = vmatpush1.bf16.msra.mxu0 0
  %1134 = vmatprep.subr.bf16.mxu0 0
  %1135 = vmatpush1.bf16.msra.mxu0 0
  %1136 = vmatprep.subr.bf16.mxu0 0
  %1137 = vmatpush1.bf16.msra.mxu0 0
  %1138 = vmatprep.subr.bf16.mxu0 0
  %1139 = vmatpush1.bf16.msra.mxu0 0
  %1140 = vmatprep.subr.bf16.mxu0 0
  %1141 = vmatpush1.bf16.msra.mxu0 0
  %1142 = vmatprep.mubr.bf16.mxu0 0
  %1143 = vmatmul.mubr.bf16.gmra.mrb[0].mxu0 %v806
  %v1144 = vpop.f32.mrb[0].mxu0
  %v1145 = vadd.f32 %v292, %v1144
  %v1146 = vpop.f32.mrb[0].mxu0
  %v1147 = vpop.f32.mrb[0].mxu0
  %v1148 = vadd.f32 %v292, %v1147
  %v1149 = vpop.f32.mrb[0].mxu0
  %1150 = vmatprep.mubr.bf16.mxu0 0
  %1151 = vmatmul.mubr.bf16.gmra.mrb[0].mxu0 %v807
  %v1152 = vpop.f32.mrb[0].mxu0
  %v1153 = vadd.f32 %v292, %v1152
  %v1154 = vpop.f32.mrb[0].mxu0
  %v1155 = vpop.f32.mrb[0].mxu0
  %v1156 = vadd.f32 %v292, %v1155
  %v1157 = vpop.f32.mrb[0].mxu0
  %1158 = vmatprep.mubr.bf16.mxu0 0
  %1159 = vmatmul.mubr.bf16.gmra.mrb[0].mxu0 %v808
  %v1160 = vpop.f32.mrb[0].mxu0
  %v1161 = vadd.f32 %v292, %v1160
  %v1162 = vpop.f32.mrb[0].mxu0
  %v1163 = vpop.f32.mrb[0].mxu0
  %v1164 = vadd.f32 %v292, %v1163
  %v1165 = vpop.f32.mrb[0].mxu0
  %1166 = vmatprep.mubr.bf16.mxu0 0
  %1167 = vmatmul.mubr.bf16.gmra.mrb[0].mxu0 %v809
  %v1168 = vpop.f32.mrb[0].mxu0
  %v1169 = vadd.f32 %v292, %v1168
  %v1170 = vpop.f32.mrb[0].mxu0
  %v1171 = vpop.f32.mrb[0].mxu0
  %v1172 = vadd.f32 %v292, %v1171
  %v1173 = vpop.f32.mrb[0].mxu0
  %1174 = vmatprep.mubr.bf16.mxu0 0
  %1175 = vmatmul.mubr.bf16.gmra.mrb[0].mxu0 %v810
  %v1176 = vpop.f32.mrb[0].mxu0
  %v1177 = vadd.f32 %v292, %v1176
  %v1178 = vpop.f32.mrb[0].mxu0
  %v1179 = vpop.f32.mrb[0].mxu0
  %v1180 = vadd.f32 %v292, %v1179
  %v1181 = vpop.f32.mrb[0].mxu0
  %1182 = vmatprep.mubr.bf16.mxu0 0
  %1183 = vmatmul.mubr.bf16.gmra.mrb[0].mxu0 %v811
  %v1184 = vpop.f32.mrb[0].mxu0
  %v1185 = vadd.f32 %v292, %v1184
  %v1186 = vpop.f32.mrb[0].mxu0
  %v1187 = vpop.f32.mrb[0].mxu0
  %v1188 = vadd.f32 %v292, %v1187
  %v1189 = vpop.f32.mrb[0].mxu0
  %1190 = vmatprep.mubr.bf16.mxu0 0
  %1191 = vmatmul.mubr.bf16.gmra.mrb[0].mxu0 %v812
  %v1192 = vpop.f32.mrb[0].mxu0
  %v1193 = vadd.f32 %v292, %v1192
  %v1194 = vpop.f32.mrb[0].mxu0
  %v1195 = vpop.f32.mrb[0].mxu0
  %v1196 = vadd.f32 %v292, %v1195
  %v1197 = vpop.f32.mrb[0].mxu0
  %1198 = vmatprep.mubr.bf16.mxu0 0
  %1199 = vmatmul.mubr.bf16.gmra.mrb[0].mxu0 %v813
  %v1200 = vpop.f32.mrb[0].mxu0
  %v1201 = vadd.f32 %v292, %v1200
  %v1202 = vpop.f32.mrb[0].mxu0
  %v1203 = vpop.f32.mrb[0].mxu0
  %v1204 = vadd.f32 %v292, %v1203
  %v1205 = vpop.f32.mrb[0].mxu0
  %1206 = vmatprep.mubr.bf16.mxu0 0
  %1207 = vmatmul.mubr.bf16.gmra.mrb[0].mxu0 %v814
  %v1208 = vpop.f32.mrb[0].mxu0
  %v1209 = vadd.f32 %v292, %v1208
  %v1210 = vpop.f32.mrb[0].mxu0
  %v1211 = vpop.f32.mrb[0].mxu0
  %v1212 = vadd.f32 %v292, %v1211
  %v1213 = vpop.f32.mrb[0].mxu0
  %1214 = vmatprep.mubr.bf16.mxu0 0
  %1215 = vmatmul.mubr.bf16.gmra.mrb[0].mxu0 %v815
  %v1216 = vpop.f32.mrb[0].mxu0
  %v1217 = vadd.f32 %v292, %v1216
  %v1218 = vpop.f32.mrb[0].mxu0
  %v1219 = vpop.f32.mrb[0].mxu0
  %v1220 = vadd.f32 %v292, %v1219
  %v1221 = vpop.f32.mrb[0].mxu0
  %1222 = vmatprep.mubr.bf16.mxu0 0
  %1223 = vmatmul.mubr.bf16.gmra.mrb[0].mxu0 %v816
  %v1224 = vpop.f32.mrb[0].mxu0
  %v1225 = vadd.f32 %v292, %v1224
  %v1226 = vpop.f32.mrb[0].mxu0
  %v1227 = vpop.f32.mrb[0].mxu0
  %v1228 = vadd.f32 %v292, %v1227
  %v1229 = vpop.f32.mrb[0].mxu0
  %1230 = vmatprep.mubr.bf16.mxu0 0
  %1231 = vmatmul.mubr.bf16.gmra.mrb[0].mxu0 %v817
  %v1232 = vpop.f32.mrb[0].mxu0
  %v1233 = vadd.f32 %v292, %v1232
  %v1234 = vpop.f32.mrb[0].mxu0
  %v1235 = vpop.f32.mrb[0].mxu0
  %v1236 = vadd.f32 %v292, %v1235
  %v1237 = vpop.f32.mrb[0].mxu0
  %1238 = vmatprep.mubr.bf16.mxu0 0
  %1239 = vmatmul.mubr.bf16.gmra.mrb[0].mxu0 %v818
  %v1240 = vpop.f32.mrb[0].mxu0
  %v1241 = vadd.f32 %v292, %v1240
  %v1242 = vpop.f32.mrb[0].mxu0
  %v1243 = vpop.f32.mrb[0].mxu0
  %v1244 = vadd.f32 %v292, %v1243
  %v1245 = vpop.f32.mrb[0].mxu0
  %1246 = vmatprep.mubr.bf16.mxu0 0
  %1247 = vmatmul.mubr.bf16.gmra.mrb[0].mxu0 %v819
  %v1248 = vpop.f32.mrb[0].mxu0
  %v1249 = vadd.f32 %v292, %v1248
  %v1250 = vpop.f32.mrb[0].mxu0
  %v1251 = vpop.f32.mrb[0].mxu0
  %v1252 = vadd.f32 %v292, %v1251
  %v1253 = vpop.f32.mrb[0].mxu0
  %1254 = vmatprep.mubr.bf16.mxu0 0
  %1255 = vmatmul.mubr.bf16.gmra.mrb[0].mxu0 %v820
  %v1256 = vpop.f32.mrb[0].mxu0
  %v1257 = vadd.f32 %v292, %v1256
  %v1258 = vpop.f32.mrb[0].mxu0
  %v1259 = vpop.f32.mrb[0].mxu0
  %v1260 = vadd.f32 %v292, %v1259
  %v1261 = vpop.f32.mrb[0].mxu0
  %1262 = vmatprep.mubr.bf16.mxu0 0
  %1263 = vmatmul.mubr.bf16.gmra.mrb[0].mxu0 %v821
  %v1264 = vpop.f32.mrb[0].mxu0
  %v1265 = vadd.f32 %v292, %v1264
  %v1266 = vpop.f32.mrb[0].mxu0
  %v1267 = vpop.f32.mrb[0].mxu0
  %v1268 = vadd.f32 %v292, %v1267
  %v1269 = vpop.f32.mrb[0].mxu0
  %1270 = vmatprep.mubr.bf16.mxu0 0
  %1271 = vmatmul.mubr.bf16.gmra.mrb[0].mxu0 %v822
  %v1272 = vpop.f32.mrb[0].mxu0
  %v1273 = vadd.f32 %v292, %v1272
  %v1274 = vpop.f32.mrb[0].mxu0
  %v1275 = vpop.f32.mrb[0].mxu0
  %v1276 = vadd.f32 %v292, %v1275
  %v1277 = vpop.f32.mrb[0].mxu0
  %1278 = vmatprep.mubr.bf16.mxu0 0
  %1279 = vmatmul.mubr.bf16.gmra.mrb[0].mxu0 %v823
  %v1280 = vpop.f32.mrb[0].mxu0
  %v1281 = vadd.f32 %v292, %v1280
  %v1282 = vpop.f32.mrb[0].mxu0
  %v1283 = vpop.f32.mrb[0].mxu0
  %v1284 = vadd.f32 %v292, %v1283
  %v1285 = vpop.f32.mrb[0].mxu0
  %1286 = vmatprep.mubr.bf16.mxu0 0
  %1287 = vmatmul.mubr.bf16.gmra.mrb[0].mxu0 %v824
  %v1288 = vpop.f32.mrb[0].mxu0
  %v1289 = vadd.f32 %v292, %v1288
  %v1290 = vpop.f32.mrb[0].mxu0
  %v1291 = vpop.f32.mrb[0].mxu0
  %v1292 = vadd.f32 %v292, %v1291
  %v1293 = vpop.f32.mrb[0].mxu0
  %1294 = vmatprep.mubr.bf16.mxu0 0
  %1295 = vmatmul.mubr.bf16.gmra.mrb[0].mxu0 %v825
  %v1296 = vpop.f32.mrb[0].mxu0
  %v1297 = vadd.f32 %v292, %v1296
  %v1298 = vpop.f32.mrb[0].mxu0
  %v1299 = vpop.f32.mrb[0].mxu0
  %v1300 = vadd.f32 %v292, %v1299
  %v1301 = vpop.f32.mrb[0].mxu0
  %1302 = vmatprep.mubr.bf16.mxu0 0
  %1303 = vmatmul.mubr.bf16.gmra.mrb[0].mxu0 %v826
  %v1304 = vpop.f32.mrb[0].mxu0
  %v1305 = vadd.f32 %v292, %v1304
  %v1306 = vpop.f32.mrb[0].mxu0
  %v1307 = vpop.f32.mrb[0].mxu0
  %v1308 = vadd.f32 %v292, %v1307
  %v1309 = vpop.f32.mrb[0].mxu0
  %1310 = vmatprep.mubr.bf16.mxu0 0
  %1311 = vmatmul.mubr.bf16.gmra.mrb[0].mxu0 %v827
  %v1312 = vpop.f32.mrb[0].mxu0
  %v1313 = vadd.f32 %v292, %v1312
  %v1314 = vpop.f32.mrb[0].mxu0
  %v1315 = vpop.f32.mrb[0].mxu0
  %v1316 = vadd.f32 %v292, %v1315
  %v1317 = vpop.f32.mrb[0].mxu0
  %1318 = vmatprep.mubr.bf16.mxu0 0
  %1319 = vmatmul.mubr.bf16.gmra.mrb[0].mxu0 %v828
  %v1320 = vpop.f32.mrb[0].mxu0
  %v1321 = vadd.f32 %v292, %v1320
  %v1322 = vpop.f32.mrb[0].mxu0
  %v1323 = vpop.f32.mrb[0].mxu0
  %v1324 = vadd.f32 %v292, %v1323
  %v1325 = vpop.f32.mrb[0].mxu0
  %1326 = vmatprep.mubr.bf16.mxu0 0
  %1327 = vmatmul.mubr.bf16.gmra.mrb[0].mxu0 %v829
  %v1328 = vpop.f32.mrb[0].mxu0
  %v1329 = vadd.f32 %v292, %v1328
  %v1330 = vpop.f32.mrb[0].mxu0
  %v1331 = vpop.f32.mrb[0].mxu0
  %v1332 = vadd.f32 %v292, %v1331
  %v1333 = vpop.f32.mrb[0].mxu0
  %1334 = vmatprep.mubr.bf16.mxu0 0
  %1335 = vmatmul.mubr.bf16.gmra.mrb[0].mxu0 %v830
  %v1336 = vpop.f32.mrb[0].mxu0
  %v1337 = vadd.f32 %v292, %v1336
  %v1338 = vpop.f32.mrb[0].mxu0
  %v1339 = vpop.f32.mrb[0].mxu0
  %v1340 = vadd.f32 %v292, %v1339
  %v1341 = vpop.f32.mrb[0].mxu0
  %1342 = vmatprep.mubr.bf16.mxu0 0
  %1343 = vmatmul.mubr.bf16.gmra.mrb[0].mxu0 %v831
  %v1344 = vpop.f32.mrb[0].mxu0
  %v1345 = vadd.f32 %v292, %v1344
  %v1346 = vpop.f32.mrb[0].mxu0
  %v1347 = vpop.f32.mrb[0].mxu0
  %v1348 = vadd.f32 %v292, %v1347
  %v1349 = vpop.f32.mrb[0].mxu0
  %1350 = vmatprep.mubr.bf16.mxu0 0
  %1351 = vmatmul.mubr.bf16.gmra.mrb[0].mxu0 %v832
  %v1352 = vpop.f32.mrb[0].mxu0
  %v1353 = vadd.f32 %v292, %v1352
  %v1354 = vpop.f32.mrb[0].mxu0
  %v1355 = vpop.f32.mrb[0].mxu0
  %v1356 = vadd.f32 %v292, %v1355
  %v1357 = vpop.f32.mrb[0].mxu0
  %1358 = vmatprep.mubr.bf16.mxu0 0
  %1359 = vmatmul.mubr.bf16.gmra.mrb[0].mxu0 %v833
  %v1360 = vpop.f32.mrb[0].mxu0
  %v1361 = vadd.f32 %v292, %v1360
  %v1362 = vpop.f32.mrb[0].mxu0
  %v1363 = vpop.f32.mrb[0].mxu0
  %v1364 = vadd.f32 %v292, %v1363
  %v1365 = vpop.f32.mrb[0].mxu0
  %1366 = vmatprep.mubr.bf16.mxu0 0
  %1367 = vmatmul.mubr.bf16.gmra.mrb[0].mxu0 %v834
  %v1368 = vpop.f32.mrb[0].mxu0
  %v1369 = vadd.f32 %v292, %v1368
  %v1370 = vpop.f32.mrb[0].mxu0
  %v1371 = vpop.f32.mrb[0].mxu0
  %v1372 = vadd.f32 %v292, %v1371
  %v1373 = vpop.f32.mrb[0].mxu0
  %1374 = vmatprep.mubr.bf16.mxu0 0
  %1375 = vmatmul.mubr.bf16.gmra.mrb[0].mxu0 %v835
  %v1376 = vpop.f32.mrb[0].mxu0
  %v1377 = vadd.f32 %v292, %v1376
  %v1378 = vpop.f32.mrb[0].mxu0
  %v1379 = vpop.f32.mrb[0].mxu0
  %v1380 = vadd.f32 %v292, %v1379
  %v1381 = vpop.f32.mrb[0].mxu0
  %1382 = vmatprep.mubr.bf16.mxu0 0
  %1383 = vmatmul.mubr.bf16.gmra.mrb[0].mxu0 %v836
  %v1384 = vpop.f32.mrb[0].mxu0
  %v1385 = vadd.f32 %v292, %v1384
  %v1386 = vpop.f32.mrb[0].mxu0
  %v1387 = vpop.f32.mrb[0].mxu0
  %v1388 = vadd.f32 %v292, %v1387
  %v1389 = vpop.f32.mrb[0].mxu0
  %1390 = vmatprep.mubr.bf16.mxu0 0
  %1391 = vmatmul.mubr.bf16.gmra.mrb[0].mxu0 %v837
  %v1392 = vpop.f32.mrb[0].mxu0
  %v1393 = vadd.f32 %v292, %v1392
  %v1394 = vpop.f32.mrb[0].mxu0
  %v1395 = vpop.f32.mrb[0].mxu0
  %v1396 = vadd.f32 %v292, %v1395
  %v1397 = vpop.f32.mrb[0].mxu0
  %1398 = vmatprep.mubr.bf16.mxu0 0
  %1399 = vmatmul.mubr.bf16.gmra.mrb[0].mxu0 %v838
  %v1400 = vpop.f32.mrb[0].mxu0
  %v1401 = vadd.f32 %v292, %v1400
  %v1402 = vpop.f32.mrb[0].mxu0
  %v1403 = vpop.f32.mrb[0].mxu0
  %v1404 = vadd.f32 %v292, %v1403
  %v1405 = vpop.f32.mrb[0].mxu0
  %1406 = vmatprep.mubr.bf16.mxu0 0
  %1407 = vmatmul.mubr.bf16.gmra.mrb[0].mxu0 %v839
  %v1408 = vpop.f32.mrb[0].mxu0
  %v1409 = vadd.f32 %v292, %v1408
  %v1410 = vpop.f32.mrb[0].mxu0
  %v1411 = vpop.f32.mrb[0].mxu0
  %v1412 = vadd.f32 %v292, %v1411
  %v1413 = vpop.f32.mrb[0].mxu0
  %1414 = vmatprep.mubr.bf16.mxu0 0
  %1415 = vmatmul.mubr.bf16.gmra.mrb[0].mxu0 %v840
  %v1416 = vpop.f32.mrb[0].mxu0
  %v1417 = vadd.f32 %v292, %v1416
  %v1418 = vpop.f32.mrb[0].mxu0
  %v1419 = vpop.f32.mrb[0].mxu0
  %v1420 = vadd.f32 %v292, %v1419
  %v1421 = vpop.f32.mrb[0].mxu0
  %1422 = vmatprep.mubr.bf16.mxu0 0
  %1423 = vmatmul.mubr.bf16.gmra.mrb[0].mxu0 %v841
  %v1424 = vpop.f32.mrb[0].mxu0
  %v1425 = vadd.f32 %v292, %v1424
  %v1426 = vpop.f32.mrb[0].mxu0
  %v1427 = vpop.f32.mrb[0].mxu0
  %v1428 = vadd.f32 %v292, %v1427
  %v1429 = vpop.f32.mrb[0].mxu0
  %1430 = vmatprep.mubr.bf16.mxu0 0
  %1431 = vmatmul.mubr.bf16.gmra.mrb[0].mxu0 %v842
  %v1432 = vpop.f32.mrb[0].mxu0
  %v1433 = vadd.f32 %v292, %v1432
  %v1434 = vpop.f32.mrb[0].mxu0
  %v1435 = vpop.f32.mrb[0].mxu0
  %v1436 = vadd.f32 %v292, %v1435
  %v1437 = vpop.f32.mrb[0].mxu0
  %1438 = vmatprep.mubr.bf16.mxu0 0
  %1439 = vmatmul.mubr.bf16.gmra.mrb[0].mxu0 %v843
  %v1440 = vpop.f32.mrb[0].mxu0
  %v1441 = vadd.f32 %v292, %v1440
  %v1442 = vpop.f32.mrb[0].mxu0
  %v1443 = vpop.f32.mrb[0].mxu0
  %v1444 = vadd.f32 %v292, %v1443
  %v1445 = vpop.f32.mrb[0].mxu0
  %1446 = vmatprep.mubr.bf16.mxu0 0
  %1447 = vmatmul.mubr.bf16.gmra.mrb[0].mxu0 %v844
  %v1448 = vpop.f32.mrb[0].mxu0
  %v1449 = vadd.f32 %v292, %v1448
  %v1450 = vpop.f32.mrb[0].mxu0
  %v1451 = vpop.f32.mrb[0].mxu0
  %v1452 = vadd.f32 %v292, %v1451
  %v1453 = vpop.f32.mrb[0].mxu0
  %1454 = vmatprep.mubr.bf16.mxu0 0
  %1455 = vmatmul.mubr.bf16.gmra.mrb[0].mxu0 %v845
  %v1456 = vpop.f32.mrb[0].mxu0
  %v1457 = vadd.f32 %v292, %v1456
  %v1458 = vpop.f32.mrb[0].mxu0
  %v1459 = vpop.f32.mrb[0].mxu0
  %v1460 = vadd.f32 %v292, %v1459
  %v1461 = vpop.f32.mrb[0].mxu0
  %1462 = vmatprep.mubr.bf16.mxu0 0
  %1463 = vmatmul.mubr.bf16.gmra.mrb[0].mxu0 %v846
  %v1464 = vpop.f32.mrb[0].mxu0
  %v1465 = vadd.f32 %v292, %v1464
  %v1466 = vpop.f32.mrb[0].mxu0
  %v1467 = vpop.f32.mrb[0].mxu0
  %v1468 = vadd.f32 %v292, %v1467
  %v1469 = vpop.f32.mrb[0].mxu0
  %1470 = vmatprep.mubr.bf16.mxu0 0
  %1471 = vmatmul.mubr.bf16.gmra.mrb[0].mxu0 %v847
  %v1472 = vpop.f32.mrb[0].mxu0
  %v1473 = vadd.f32 %v292, %v1472
  %v1474 = vpop.f32.mrb[0].mxu0
  %v1475 = vpop.f32.mrb[0].mxu0
  %v1476 = vadd.f32 %v292, %v1475
  %v1477 = vpop.f32.mrb[0].mxu0
  %1478 = vmatprep.mubr.bf16.mxu0 0
  %1479 = vmatmul.mubr.bf16.gmra.mrb[0].mxu0 %v848
  %v1480 = vpop.f32.mrb[0].mxu0
  %v1481 = vadd.f32 %v292, %v1480
  %v1482 = vpop.f32.mrb[0].mxu0
  %v1483 = vpop.f32.mrb[0].mxu0
  %v1484 = vadd.f32 %v292, %v1483
  %v1485 = vpop.f32.mrb[0].mxu0
  %1486 = vmatprep.mubr.bf16.mxu0 0
  %1487 = vmatmul.mubr.bf16.gmra.mrb[0].mxu0 %v849
  %v1488 = vpop.f32.mrb[0].mxu0
  %v1489 = vadd.f32 %v292, %v1488
  %v1490 = vpop.f32.mrb[0].mxu0
  %v1491 = vpop.f32.mrb[0].mxu0
  %v1492 = vadd.f32 %v292, %v1491
  %v1493 = vpop.f32.mrb[0].mxu0
  %1494 = vmatprep.mubr.bf16.mxu0 0
  %1495 = vmatmul.mubr.bf16.gmra.mrb[0].mxu0 %v850
  %v1496 = vpop.f32.mrb[0].mxu0
  %v1497 = vadd.f32 %v292, %v1496
  %v1498 = vpop.f32.mrb[0].mxu0
  %v1499 = vpop.f32.mrb[0].mxu0
  %v1500 = vadd.f32 %v292, %v1499
  %v1501 = vpop.f32.mrb[0].mxu0
  %1502 = vmatprep.mubr.bf16.mxu0 0
  %1503 = vmatmul.mubr.bf16.gmra.mrb[0].mxu0 %v851
  %v1504 = vpop.f32.mrb[0].mxu0
  %v1505 = vadd.f32 %v292, %v1504
  %v1506 = vpop.f32.mrb[0].mxu0
  %v1507 = vpop.f32.mrb[0].mxu0
  %v1508 = vadd.f32 %v292, %v1507
  %v1509 = vpop.f32.mrb[0].mxu0
  %1510 = vmatprep.mubr.bf16.mxu0 0
  %1511 = vmatmul.mubr.bf16.gmra.mrb[0].mxu0 %v852
  %v1512 = vpop.f32.mrb[0].mxu0
  %v1513 = vadd.f32 %v292, %v1512
  %v1514 = vpop.f32.mrb[0].mxu0
  %v1515 = vpop.f32.mrb[0].mxu0
  %v1516 = vadd.f32 %v292, %v1515
  %v1517 = vpop.f32.mrb[0].mxu0
  %1518 = vmatprep.mubr.bf16.mxu0 0
  %1519 = vmatmul.mubr.bf16.gmra.mrb[0].mxu0 %v853
  %v1520 = vpop.f32.mrb[0].mxu0
  %v1521 = vadd.f32 %v292, %v1520
  %v1522 = vpop.f32.mrb[0].mxu0
  %v1523 = vpop.f32.mrb[0].mxu0
  %v1524 = vadd.f32 %v292, %v1523
  %v1525 = vpop.f32.mrb[0].mxu0
  %1526 = vmatprep.mubr.bf16.mxu0 0
  %1527 = vmatmul.mubr.bf16.gmra.mrb[0].mxu0 %v854
  %v1528 = vpop.f32.mrb[0].mxu0
  %v1529 = vadd.f32 %v292, %v1528
  %v1530 = vpop.f32.mrb[0].mxu0
  %v1531 = vpop.f32.mrb[0].mxu0
  %v1532 = vadd.f32 %v292, %v1531
  %v1533 = vpop.f32.mrb[0].mxu0
  %1534 = vmatprep.mubr.bf16.mxu0 0
  %1535 = vmatmul.mubr.bf16.gmra.mrb[0].mxu0 %v855
  %v1536 = vpop.f32.mrb[0].mxu0
  %v1537 = vadd.f32 %v292, %v1536
  %v1538 = vpop.f32.mrb[0].mxu0
  %v1539 = vpop.f32.mrb[0].mxu0
  %v1540 = vadd.f32 %v292, %v1539
  %v1541 = vpop.f32.mrb[0].mxu0
  %1542 = vmatprep.mubr.bf16.mxu0 0
  %1543 = vmatmul.mubr.bf16.gmra.mrb[0].mxu0 %v856
  %v1544 = vpop.f32.mrb[0].mxu0
  %v1545 = vadd.f32 %v292, %v1544
  %v1546 = vpop.f32.mrb[0].mxu0
  %v1547 = vpop.f32.mrb[0].mxu0
  %v1548 = vadd.f32 %v292, %v1547
  %v1549 = vpop.f32.mrb[0].mxu0
  %1550 = vmatprep.mubr.bf16.mxu0 0
  %1551 = vmatmul.mubr.bf16.gmra.mrb[0].mxu0 %v857
  %v1552 = vpop.f32.mrb[0].mxu0
  %v1553 = vadd.f32 %v292, %v1552
  %v1554 = vpop.f32.mrb[0].mxu0
  %v1555 = vpop.f32.mrb[0].mxu0
  %v1556 = vadd.f32 %v292, %v1555
  %v1557 = vpop.f32.mrb[0].mxu0
  %1558 = vmatprep.mubr.bf16.mxu0 0
  %1559 = vmatmul.mubr.bf16.gmra.mrb[0].mxu0 %v858
  %v1560 = vpop.f32.mrb[0].mxu0
  %v1561 = vadd.f32 %v292, %v1560
  %v1562 = vpop.f32.mrb[0].mxu0
  %v1563 = vpop.f32.mrb[0].mxu0
  %v1564 = vadd.f32 %v292, %v1563
  %v1565 = vpop.f32.mrb[0].mxu0
  %1566 = vmatprep.mubr.bf16.mxu0 0
  %1567 = vmatmul.mubr.bf16.gmra.mrb[0].mxu0 %v859
  %v1568 = vpop.f32.mrb[0].mxu0
  %v1569 = vadd.f32 %v292, %v1568
  %v1570 = vpop.f32.mrb[0].mxu0
  %v1571 = vpop.f32.mrb[0].mxu0
  %v1572 = vadd.f32 %v292, %v1571
  %v1573 = vpop.f32.mrb[0].mxu0
  %1574 = vmatprep.mubr.bf16.mxu0 0
  %1575 = vmatmul.mubr.bf16.gmra.mrb[0].mxu0 %v860
  %v1576 = vpop.f32.mrb[0].mxu0
  %v1577 = vadd.f32 %v292, %v1576
  %v1578 = vpop.f32.mrb[0].mxu0
  %v1579 = vpop.f32.mrb[0].mxu0
  %v1580 = vadd.f32 %v292, %v1579
  %v1581 = vpop.f32.mrb[0].mxu0
  %1582 = vmatprep.mubr.bf16.mxu0 0
  %1583 = vmatmul.mubr.bf16.gmra.mrb[0].mxu0 %v861
  %v1584 = vpop.f32.mrb[0].mxu0
  %v1585 = vadd.f32 %v292, %v1584
  %v1586 = vpop.f32.mrb[0].mxu0
  %v1587 = vpop.f32.mrb[0].mxu0
  %v1588 = vadd.f32 %v292, %v1587
  %v1589 = vpop.f32.mrb[0].mxu0
  %1590 = vmatprep.mubr.bf16.mxu0 0
  %1591 = vmatmul.mubr.bf16.gmra.mrb[0].mxu0 %v862
  %v1592 = vpop.f32.mrb[0].mxu0
  %v1593 = vadd.f32 %v292, %v1592
  %v1594 = vpop.f32.mrb[0].mxu0
  %v1595 = vpop.f32.mrb[0].mxu0
  %v1596 = vadd.f32 %v292, %v1595
  %v1597 = vpop.f32.mrb[0].mxu0
  %1598 = vmatprep.mubr.bf16.mxu0 0
  %1599 = vmatmul.mubr.bf16.gmra.mrb[0].mxu0 %v863
  %v1600 = vpop.f32.mrb[0].mxu0
  %v1601 = vadd.f32 %v292, %v1600
  %v1602 = vpop.f32.mrb[0].mxu0
  %v1603 = vpop.f32.mrb[0].mxu0
  %v1604 = vadd.f32 %v292, %v1603
  %v1605 = vpop.f32.mrb[0].mxu0
  %1606 = vmatprep.mubr.bf16.mxu0 0
  %1607 = vmatmul.mubr.bf16.gmra.mrb[0].mxu0 %v864
  %v1608 = vpop.f32.mrb[0].mxu0
  %v1609 = vadd.f32 %v292, %v1608
  %v1610 = vpop.f32.mrb[0].mxu0
  %v1611 = vpop.f32.mrb[0].mxu0
  %v1612 = vadd.f32 %v292, %v1611
  %v1613 = vpop.f32.mrb[0].mxu0
  %1614 = vmatprep.mubr.bf16.mxu0 0
  %1615 = vmatmul.mubr.bf16.gmra.mrb[0].mxu0 %v865
  %v1616 = vpop.f32.mrb[0].mxu0
  %v1617 = vadd.f32 %v292, %v1616
  %v1618 = vpop.f32.mrb[0].mxu0
  %v1619 = vpop.f32.mrb[0].mxu0
  %v1620 = vadd.f32 %v292, %v1619
  %v1621 = vpop.f32.mrb[0].mxu0
  %1622 = vmatprep.mubr.bf16.mxu0 0
  %1623 = vmatmul.mubr.bf16.gmra.mrb[0].mxu0 %v866
  %v1624 = vpop.f32.mrb[0].mxu0
  %v1625 = vadd.f32 %v292, %v1624
  %v1626 = vpop.f32.mrb[0].mxu0
  %v1627 = vpop.f32.mrb[0].mxu0
  %v1628 = vadd.f32 %v292, %v1627
  %v1629 = vpop.f32.mrb[0].mxu0
  %1630 = vmatprep.mubr.bf16.mxu0 0
  %1631 = vmatmul.mubr.bf16.gmra.mrb[0].mxu0 %v867
  %v1632 = vpop.f32.mrb[0].mxu0
  %v1633 = vadd.f32 %v292, %v1632
  %v1634 = vpop.f32.mrb[0].mxu0
  %v1635 = vpop.f32.mrb[0].mxu0
  %v1636 = vadd.f32 %v292, %v1635
  %v1637 = vpop.f32.mrb[0].mxu0
  %1638 = vmatprep.mubr.bf16.mxu0 0
  %1639 = vmatmul.mubr.bf16.gmra.mrb[0].mxu0 %v868
  %v1640 = vpop.f32.mrb[0].mxu0
  %v1641 = vadd.f32 %v292, %v1640
  %v1642 = vpop.f32.mrb[0].mxu0
  %v1643 = vpop.f32.mrb[0].mxu0
  %v1644 = vadd.f32 %v292, %v1643
  %v1645 = vpop.f32.mrb[0].mxu0
  %1646 = vmatprep.mubr.bf16.mxu0 0
  %1647 = vmatmul.mubr.bf16.gmra.mrb[0].mxu0 %v869
  %v1648 = vpop.f32.mrb[0].mxu0
  %v1649 = vadd.f32 %v292, %v1648
  %v1650 = vpop.f32.mrb[0].mxu0
  %v1651 = vpop.f32.mrb[0].mxu0
  %v1652 = vadd.f32 %v292, %v1651
  %v1653 = vpop.f32.mrb[0].mxu0
  %1654 = vmatprep.mubr.bf16.mxu0 0
  %1655 = vmatmul.mubr.bf16.gmra.mrb[0].mxu0 %v870
  %v1656 = vpop.f32.mrb[0].mxu0
  %v1657 = vadd.f32 %v292, %v1656
  %v1658 = vpop.f32.mrb[0].mxu0
  %v1659 = vpop.f32.mrb[0].mxu0
  %v1660 = vadd.f32 %v292, %v1659
  %v1661 = vpop.f32.mrb[0].mxu0
  %1662 = vmatprep.mubr.bf16.mxu0 0
  %1663 = vmatmul.mubr.bf16.gmra.mrb[0].mxu0 %v871
  %v1664 = vpop.f32.mrb[0].mxu0
  %v1665 = vadd.f32 %v292, %v1664
  %v1666 = vpop.f32.mrb[0].mxu0
  %v1667 = vpop.f32.mrb[0].mxu0
  %v1668 = vadd.f32 %v292, %v1667
  %v1669 = vpop.f32.mrb[0].mxu0
  %1670 = vmatprep.mubr.bf16.mxu0 0
  %1671 = vmatmul.mubr.bf16.gmra.mrb[0].mxu0 %v872
  %v1672 = vpop.f32.mrb[0].mxu0
  %v1673 = vadd.f32 %v292, %v1672
  %v1674 = vpop.f32.mrb[0].mxu0
  %v1675 = vpop.f32.mrb[0].mxu0
  %v1676 = vadd.f32 %v292, %v1675
  %v1677 = vpop.f32.mrb[0].mxu0
  %1678 = vmatprep.mubr.bf16.mxu0 0
  %1679 = vmatmul.mubr.bf16.gmra.mrb[0].mxu0 %v873
  %v1680 = vpop.f32.mrb[0].mxu0
  %v1681 = vadd.f32 %v292, %v1680
  %v1682 = vpop.f32.mrb[0].mxu0
  %v1683 = vpop.f32.mrb[0].mxu0
  %v1684 = vadd.f32 %v292, %v1683
  %v1685 = vpop.f32.mrb[0].mxu0
  %1686 = vmatprep.mubr.bf16.mxu0 0
  %1687 = vmatmul.mubr.bf16.gmra.mrb[0].mxu0 %v874
  %v1688 = vpop.f32.mrb[0].mxu0
  %v1689 = vadd.f32 %v292, %v1688
  %v1690 = vpop.f32.mrb[0].mxu0
  %v1691 = vpop.f32.mrb[0].mxu0
  %v1692 = vadd.f32 %v292, %v1691
  %v1693 = vpop.f32.mrb[0].mxu0
  %1694 = vmatprep.mubr.bf16.mxu0 0
  %1695 = vmatmul.mubr.bf16.gmra.mrb[0].mxu0 %v875
  %v1696 = vpop.f32.mrb[0].mxu0
  %v1697 = vadd.f32 %v292, %v1696
  %v1698 = vpop.f32.mrb[0].mxu0
  %v1699 = vpop.f32.mrb[0].mxu0
  %v1700 = vadd.f32 %v292, %v1699
  %v1701 = vpop.f32.mrb[0].mxu0
  %1702 = vmatprep.mubr.bf16.mxu0 0
  %1703 = vmatmul.mubr.bf16.gmra.mrb[0].mxu0 %v876
  %v1704 = vpop.f32.mrb[0].mxu0
  %v1705 = vadd.f32 %v292, %v1704
  %v1706 = vpop.f32.mrb[0].mxu0
  %v1707 = vpop.f32.mrb[0].mxu0
  %v1708 = vadd.f32 %v292, %v1707
  %v1709 = vpop.f32.mrb[0].mxu0
  %1710 = vmatprep.mubr.bf16.mxu0 0
  %1711 = vmatmul.mubr.bf16.gmra.mrb[0].mxu0 %v877
  %v1712 = vpop.f32.mrb[0].mxu0
  %v1713 = vadd.f32 %v292, %v1712
  %v1714 = vpop.f32.mrb[0].mxu0
  %v1715 = vpop.f32.mrb[0].mxu0
  %v1716 = vadd.f32 %v292, %v1715
  %v1717 = vpop.f32.mrb[0].mxu0
  %1718 = vmatprep.mubr.bf16.mxu0 0
  %1719 = vmatmul.mubr.bf16.gmra.mrb[0].mxu0 %v878
  %v1720 = vpop.f32.mrb[0].mxu0
  %v1721 = vadd.f32 %v292, %v1720
  %v1722 = vpop.f32.mrb[0].mxu0
  %v1723 = vpop.f32.mrb[0].mxu0
  %v1724 = vadd.f32 %v292, %v1723
  %v1725 = vpop.f32.mrb[0].mxu0
  %1726 = vmatprep.mubr.bf16.mxu0 0
  %1727 = vmatmul.mubr.bf16.gmra.mrb[0].mxu0 %v879
  %v1728 = vpop.f32.mrb[0].mxu0
  %v1729 = vadd.f32 %v292, %v1728
  %v1730 = vpop.f32.mrb[0].mxu0
  %v1731 = vpop.f32.mrb[0].mxu0
  %v1732 = vadd.f32 %v292, %v1731
  %v1733 = vpop.f32.mrb[0].mxu0
  %1734 = vmatprep.mubr.bf16.mxu0 0
  %1735 = vmatmul.mubr.bf16.gmra.mrb[0].mxu0 %v880
  %v1736 = vpop.f32.mrb[0].mxu0
  %v1737 = vadd.f32 %v292, %v1736
  %v1738 = vpop.f32.mrb[0].mxu0
  %v1739 = vpop.f32.mrb[0].mxu0
  %v1740 = vadd.f32 %v292, %v1739
  %v1741 = vpop.f32.mrb[0].mxu0
  %1742 = vmatprep.mubr.bf16.mxu0 0
  %1743 = vmatmul.mubr.bf16.gmra.mrb[0].mxu0 %v881
  %v1744 = vpop.f32.mrb[0].mxu0
  %v1745 = vadd.f32 %v292, %v1744
  %v1746 = vpop.f32.mrb[0].mxu0
  %v1747 = vpop.f32.mrb[0].mxu0
  %v1748 = vadd.f32 %v292, %v1747
  %v1749 = vpop.f32.mrb[0].mxu0
  %1750 = vmatprep.mubr.bf16.mxu0 0
  %1751 = vmatmul.mubr.bf16.gmra.mrb[0].mxu0 %v882
  %v1752 = vpop.f32.mrb[0].mxu0
  %v1753 = vadd.f32 %v292, %v1752
  %v1754 = vpop.f32.mrb[0].mxu0
  %v1755 = vpop.f32.mrb[0].mxu0
  %v1756 = vadd.f32 %v292, %v1755
  %v1757 = vpop.f32.mrb[0].mxu0
  %1758 = vmatprep.mubr.bf16.mxu0 0
  %1759 = vmatmul.mubr.bf16.gmra.mrb[0].mxu0 %v883
  %v1760 = vpop.f32.mrb[0].mxu0
  %v1761 = vadd.f32 %v292, %v1760
  %v1762 = vpop.f32.mrb[0].mxu0
  %v1763 = vpop.f32.mrb[0].mxu0
  %v1764 = vadd.f32 %v292, %v1763
  %v1765 = vpop.f32.mrb[0].mxu0
  %1766 = vmatprep.mubr.bf16.mxu0 0
  %1767 = vmatmul.mubr.bf16.gmra.mrb[0].mxu0 %v884
  %v1768 = vpop.f32.mrb[0].mxu0
  %v1769 = vadd.f32 %v292, %v1768
  %v1770 = vpop.f32.mrb[0].mxu0
  %v1771 = vpop.f32.mrb[0].mxu0
  %v1772 = vadd.f32 %v292, %v1771
  %v1773 = vpop.f32.mrb[0].mxu0
  %1774 = vmatprep.mubr.bf16.mxu0 0
  %1775 = vmatmul.mubr.bf16.gmra.mrb[0].mxu0 %v885
  %v1776 = vpop.f32.mrb[0].mxu0
  %v1777 = vadd.f32 %v292, %v1776
  %v1778 = vpop.f32.mrb[0].mxu0
  %v1779 = vpop.f32.mrb[0].mxu0
  %v1780 = vadd.f32 %v292, %v1779
  %v1781 = vpop.f32.mrb[0].mxu0
  %1782 = vmatprep.mubr.bf16.mxu0 0
  %1783 = vmatmul.mubr.bf16.gmra.mrb[0].mxu0 %v886
  %v1784 = vpop.f32.mrb[0].mxu0
  %v1785 = vadd.f32 %v292, %v1784
  %v1786 = vpop.f32.mrb[0].mxu0
  %v1787 = vpop.f32.mrb[0].mxu0
  %v1788 = vadd.f32 %v292, %v1787
  %v1789 = vpop.f32.mrb[0].mxu0
  %1790 = vmatprep.mubr.bf16.mxu0 0
  %1791 = vmatmul.mubr.bf16.gmra.mrb[0].mxu0 %v887
  %v1792 = vpop.f32.mrb[0].mxu0
  %v1793 = vadd.f32 %v292, %v1792
  %v1794 = vpop.f32.mrb[0].mxu0
  %v1795 = vpop.f32.mrb[0].mxu0
  %v1796 = vadd.f32 %v292, %v1795
  %v1797 = vpop.f32.mrb[0].mxu0
  %1798 = vmatprep.mubr.bf16.mxu0 0
  %1799 = vmatmul.mubr.bf16.gmra.mrb[0].mxu0 %v888
  %v1800 = vpop.f32.mrb[0].mxu0
  %v1801 = vadd.f32 %v292, %v1800
  %v1802 = vpop.f32.mrb[0].mxu0
  %v1803 = vpop.f32.mrb[0].mxu0
  %v1804 = vadd.f32 %v292, %v1803
  %v1805 = vpop.f32.mrb[0].mxu0
  %1806 = vmatprep.mubr.bf16.mxu0 0
  %1807 = vmatmul.mubr.bf16.gmra.mrb[0].mxu0 %v889
  %v1808 = vpop.f32.mrb[0].mxu0
  %v1809 = vadd.f32 %v292, %v1808
  %v1810 = vpop.f32.mrb[0].mxu0
  %v1811 = vpop.f32.mrb[0].mxu0
  %v1812 = vadd.f32 %v292, %v1811
  %v1813 = vpop.f32.mrb[0].mxu0
  %1814 = vmatprep.mubr.bf16.mxu0 0
  %1815 = vmatmul.mubr.bf16.gmra.mrb[0].mxu0 %v890
  %v1816 = vpop.f32.mrb[0].mxu0
  %v1817 = vadd.f32 %v292, %v1816
  %v1818 = vpop.f32.mrb[0].mxu0
  %v1819 = vpop.f32.mrb[0].mxu0
  %v1820 = vadd.f32 %v292, %v1819
  %v1821 = vpop.f32.mrb[0].mxu0
  %1822 = vmatprep.mubr.bf16.mxu0 0
  %1823 = vmatmul.mubr.bf16.gmra.mrb[0].mxu0 %v891
  %v1824 = vpop.f32.mrb[0].mxu0
  %v1825 = vadd.f32 %v292, %v1824
  %v1826 = vpop.f32.mrb[0].mxu0
  %v1827 = vpop.f32.mrb[0].mxu0
  %v1828 = vadd.f32 %v292, %v1827
  %v1829 = vpop.f32.mrb[0].mxu0
  %1830 = vmatprep.mubr.bf16.mxu0 0
  %1831 = vmatmul.mubr.bf16.gmra.mrb[0].mxu0 %v892
  %v1832 = vpop.f32.mrb[0].mxu0
  %v1833 = vadd.f32 %v292, %v1832
  %v1834 = vpop.f32.mrb[0].mxu0
  %v1835 = vpop.f32.mrb[0].mxu0
  %v1836 = vadd.f32 %v292, %v1835
  %v1837 = vpop.f32.mrb[0].mxu0
  %1838 = vmatprep.mubr.bf16.mxu0 0
  %1839 = vmatmul.mubr.bf16.gmra.mrb[0].mxu0 %v893
  %v1840 = vpop.f32.mrb[0].mxu0
  %v1841 = vadd.f32 %v292, %v1840
  %v1842 = vpop.f32.mrb[0].mxu0
  %v1843 = vpop.f32.mrb[0].mxu0
  %v1844 = vadd.f32 %v292, %v1843
  %v1845 = vpop.f32.mrb[0].mxu0
  %1846 = vmatprep.mubr.bf16.mxu0 0
  %1847 = vmatmul.mubr.bf16.gmra.mrb[0].mxu0 %v894
  %v1848 = vpop.f32.mrb[0].mxu0
  %v1849 = vadd.f32 %v292, %v1848
  %v1850 = vpop.f32.mrb[0].mxu0
  %v1851 = vpop.f32.mrb[0].mxu0
  %v1852 = vadd.f32 %v292, %v1851
  %v1853 = vpop.f32.mrb[0].mxu0
  %1854 = vmatprep.mubr.bf16.mxu0 0
  %1855 = vmatmul.mubr.bf16.gmra.mrb[0].mxu0 %v895
  %v1856 = vpop.f32.mrb[0].mxu0
  %v1857 = vadd.f32 %v292, %v1856
  %v1858 = vpop.f32.mrb[0].mxu0
  %v1859 = vpop.f32.mrb[0].mxu0
  %v1860 = vadd.f32 %v292, %v1859
  %v1861 = vpop.f32.mrb[0].mxu0
  %1862 = vmatprep.mubr.bf16.mxu0 0
  %1863 = vmatmul.mubr.bf16.gmra.mrb[0].mxu0 %v896
  %v1864 = vpop.f32.mrb[0].mxu0
  %v1865 = vadd.f32 %v292, %v1864
  %v1866 = vpop.f32.mrb[0].mxu0
  %v1867 = vpop.f32.mrb[0].mxu0
  %v1868 = vadd.f32 %v292, %v1867
  %v1869 = vpop.f32.mrb[0].mxu0
  %1870 = vmatprep.mubr.bf16.mxu0 0
  %1871 = vmatmul.mubr.bf16.gmra.mrb[0].mxu0 %v897
  %v1872 = vpop.f32.mrb[0].mxu0
  %v1873 = vadd.f32 %v292, %v1872
  %v1874 = vpop.f32.mrb[0].mxu0
  %v1875 = vpop.f32.mrb[0].mxu0
  %v1876 = vadd.f32 %v292, %v1875
  %v1877 = vpop.f32.mrb[0].mxu0
  %1878 = vmatprep.mubr.bf16.mxu0 0
  %1879 = vmatmul.mubr.bf16.gmra.mrb[0].mxu0 %v898
  %v1880 = vpop.f32.mrb[0].mxu0
  %v1881 = vadd.f32 %v292, %v1880
  %v1882 = vpop.f32.mrb[0].mxu0
  %v1883 = vpop.f32.mrb[0].mxu0
  %v1884 = vadd.f32 %v292, %v1883
  %v1885 = vpop.f32.mrb[0].mxu0
  %1886 = vmatprep.mubr.bf16.mxu0 0
  %1887 = vmatmul.mubr.bf16.gmra.mrb[0].mxu0 %v899
  %v1888 = vpop.f32.mrb[0].mxu0
  %v1889 = vadd.f32 %v292, %v1888
  %v1890 = vpop.f32.mrb[0].mxu0
  %v1891 = vpop.f32.mrb[0].mxu0
  %v1892 = vadd.f32 %v292, %v1891
  %v1893 = vpop.f32.mrb[0].mxu0
  %1894 = vmatprep.mubr.bf16.mxu0 0
  %1895 = vmatmul.mubr.bf16.gmra.mrb[0].mxu0 %v900
  %v1896 = vpop.f32.mrb[0].mxu0
  %v1897 = vadd.f32 %v292, %v1896
  %v1898 = vpop.f32.mrb[0].mxu0
  %v1899 = vpop.f32.mrb[0].mxu0
  %v1900 = vadd.f32 %v292, %v1899
  %v1901 = vpop.f32.mrb[0].mxu0
  %1902 = vmatprep.mubr.bf16.mxu0 0
  %1903 = vmatmul.mubr.bf16.gmra.mrb[0].mxu0 %v901
  %v1904 = vpop.f32.mrb[0].mxu0
  %v1905 = vadd.f32 %v292, %v1904
  %v1906 = vpop.f32.mrb[0].mxu0
  %v1907 = vpop.f32.mrb[0].mxu0
  %v1908 = vadd.f32 %v292, %v1907
  %v1909 = vpop.f32.mrb[0].mxu0
  %1910 = vmatprep.mubr.bf16.mxu0 0
  %1911 = vmatmul.mubr.bf16.gmra.mrb[0].mxu0 %v902
  %v1912 = vpop.f32.mrb[0].mxu0
  %v1913 = vadd.f32 %v292, %v1912
  %v1914 = vpop.f32.mrb[0].mxu0
  %v1915 = vpop.f32.mrb[0].mxu0
  %v1916 = vadd.f32 %v292, %v1915
  %v1917 = vpop.f32.mrb[0].mxu0
  %1918 = vmatprep.mubr.bf16.mxu0 0
  %1919 = vmatmul.mubr.bf16.gmra.mrb[0].mxu0 %v903
  %v1920 = vpop.f32.mrb[0].mxu0
  %v1921 = vadd.f32 %v292, %v1920
  %v1922 = vpop.f32.mrb[0].mxu0
  %v1923 = vpop.f32.mrb[0].mxu0
  %v1924 = vadd.f32 %v292, %v1923
  %v1925 = vpop.f32.mrb[0].mxu0
  %1926 = vmatprep.mubr.bf16.mxu0 0
  %1927 = vmatmul.mubr.bf16.gmra.mrb[0].mxu0 %v904
  %v1928 = vpop.f32.mrb[0].mxu0
  %v1929 = vadd.f32 %v292, %v1928
  %v1930 = vpop.f32.mrb[0].mxu0
  %v1931 = vpop.f32.mrb[0].mxu0
  %v1932 = vadd.f32 %v292, %v1931
  %v1933 = vpop.f32.mrb[0].mxu0
  %1934 = vmatprep.mubr.bf16.mxu0 0
  %1935 = vmatmul.mubr.bf16.gmra.mrb[0].mxu0 %v905
  %v1936 = vpop.f32.mrb[0].mxu0
  %v1937 = vadd.f32 %v292, %v1936
  %v1938 = vpop.f32.mrb[0].mxu0
  %v1939 = vpop.f32.mrb[0].mxu0
  %v1940 = vadd.f32 %v292, %v1939
  %v1941 = vpop.f32.mrb[0].mxu0
  %1942 = vmatprep.mubr.bf16.mxu0 0
  %1943 = vmatmul.mubr.bf16.gmra.mrb[0].mxu0 %v906
  %v1944 = vpop.f32.mrb[0].mxu0
  %v1945 = vadd.f32 %v292, %v1944
  %v1946 = vpop.f32.mrb[0].mxu0
  %v1947 = vpop.f32.mrb[0].mxu0
  %v1948 = vadd.f32 %v292, %v1947
  %v1949 = vpop.f32.mrb[0].mxu0
  %1950 = vmatprep.mubr.bf16.mxu0 0
  %1951 = vmatmul.mubr.bf16.gmra.mrb[0].mxu0 %v907
  %v1952 = vpop.f32.mrb[0].mxu0
  %v1953 = vadd.f32 %v292, %v1952
  %v1954 = vpop.f32.mrb[0].mxu0
  %v1955 = vpop.f32.mrb[0].mxu0
  %v1956 = vadd.f32 %v292, %v1955
  %v1957 = vpop.f32.mrb[0].mxu0
  %1958 = vmatprep.mubr.bf16.mxu0 0
  %1959 = vmatmul.mubr.bf16.gmra.mrb[0].mxu0 %v908
  %v1960 = vpop.f32.mrb[0].mxu0
  %v1961 = vadd.f32 %v292, %v1960
  %v1962 = vpop.f32.mrb[0].mxu0
  %v1963 = vpop.f32.mrb[0].mxu0
  %v1964 = vadd.f32 %v292, %v1963
  %v1965 = vpop.f32.mrb[0].mxu0
  %1966 = vmatprep.mubr.bf16.mxu0 0
  %1967 = vmatmul.mubr.bf16.gmra.mrb[0].mxu0 %v909
  %v1968 = vpop.f32.mrb[0].mxu0
  %v1969 = vadd.f32 %v292, %v1968
  %v1970 = vpop.f32.mrb[0].mxu0
  %v1971 = vpop.f32.mrb[0].mxu0
  %v1972 = vadd.f32 %v292, %v1971
  %v1973 = vpop.f32.mrb[0].mxu0
  %1974 = vmatprep.mubr.bf16.mxu0 0
  %1975 = vmatmul.mubr.bf16.gmra.mrb[0].mxu0 %v910
  %v1976 = vpop.f32.mrb[0].mxu0
  %v1977 = vadd.f32 %v292, %v1976
  %v1978 = vpop.f32.mrb[0].mxu0
  %v1979 = vpop.f32.mrb[0].mxu0
  %v1980 = vadd.f32 %v292, %v1979
  %v1981 = vpop.f32.mrb[0].mxu0
  %1982 = vmatprep.mubr.bf16.mxu0 0
  %1983 = vmatmul.mubr.bf16.gmra.mrb[0].mxu0 %v911
  %v1984 = vpop.f32.mrb[0].mxu0
  %v1985 = vadd.f32 %v292, %v1984
  %v1986 = vpop.f32.mrb[0].mxu0
  %v1987 = vpop.f32.mrb[0].mxu0
  %v1988 = vadd.f32 %v292, %v1987
  %v1989 = vpop.f32.mrb[0].mxu0
  %1990 = vmatprep.mubr.bf16.mxu0 0
  %1991 = vmatmul.mubr.bf16.gmra.mrb[0].mxu0 %v912
  %v1992 = vpop.f32.mrb[0].mxu0
  %v1993 = vadd.f32 %v292, %v1992
  %v1994 = vpop.f32.mrb[0].mxu0
  %v1995 = vpop.f32.mrb[0].mxu0
  %v1996 = vadd.f32 %v292, %v1995
  %v1997 = vpop.f32.mrb[0].mxu0
  %1998 = vmatprep.mubr.bf16.mxu0 0
  %1999 = vmatmul.mubr.bf16.gmra.mrb[0].mxu0 %v913
  %v2000 = vpop.f32.mrb[0].mxu0
  %v2001 = vadd.f32 %v292, %v2000
  %v2002 = vpop.f32.mrb[0].mxu0
  %v2003 = vpop.f32.mrb[0].mxu0
  %v2004 = vadd.f32 %v292, %v2003
  %v2005 = vpop.f32.mrb[0].mxu0
  %2006 = vmatprep.mubr.bf16.mxu0 0
  %2007 = vmatmul.mubr.bf16.gmra.mrb[0].mxu0 %v914
  %v2008 = vpop.f32.mrb[0].mxu0
  %v2009 = vadd.f32 %v292, %v2008
  %v2010 = vpop.f32.mrb[0].mxu0
  %v2011 = vpop.f32.mrb[0].mxu0
  %v2012 = vadd.f32 %v292, %v2011
  %v2013 = vpop.f32.mrb[0].mxu0
  %2014 = vmatprep.mubr.bf16.mxu0 0
  %2015 = vmatmul.mubr.bf16.gmra.mrb[0].mxu0 %v915
  %v2016 = vpop.f32.mrb[0].mxu0
  %v2017 = vadd.f32 %v292, %v2016
  %v2018 = vpop.f32.mrb[0].mxu0
  %v2019 = vpop.f32.mrb[0].mxu0
  %v2020 = vadd.f32 %v292, %v2019
  %v2021 = vpop.f32.mrb[0].mxu0
  %2022 = vmatprep.mubr.bf16.mxu0 0
  %2023 = vmatmul.mubr.bf16.gmra.mrb[0].mxu0 %v916
  %v2024 = vpop.f32.mrb[0].mxu0
  %v2025 = vadd.f32 %v292, %v2024
  %v2026 = vpop.f32.mrb[0].mxu0
  %v2027 = vpop.f32.mrb[0].mxu0
  %v2028 = vadd.f32 %v292, %v2027
  %v2029 = vpop.f32.mrb[0].mxu0
  %2030 = vmatprep.mubr.bf16.mxu0 0
  %2031 = vmatmul.mubr.bf16.gmra.mrb[0].mxu0 %v917
  %v2032 = vpop.f32.mrb[0].mxu0
  %v2033 = vadd.f32 %v292, %v2032
  %v2034 = vpop.f32.mrb[0].mxu0
  %v2035 = vpop.f32.mrb[0].mxu0
  %v2036 = vadd.f32 %v292, %v2035
  %v2037 = vpop.f32.mrb[0].mxu0
  %2038 = vmatprep.mubr.bf16.mxu0 0
  %2039 = vmatmul.mubr.bf16.gmra.mrb[0].mxu0 %v918
  %v2040 = vpop.f32.mrb[0].mxu0
  %v2041 = vadd.f32 %v292, %v2040
  %v2042 = vpop.f32.mrb[0].mxu0
  %v2043 = vpop.f32.mrb[0].mxu0
  %v2044 = vadd.f32 %v292, %v2043
  %v2045 = vpop.f32.mrb[0].mxu0
  %2046 = vmatprep.mubr.bf16.mxu0 0
  %2047 = vmatmul.mubr.bf16.gmra.mrb[0].mxu0 %v919
  %v2048 = vpop.f32.mrb[0].mxu0
  %v2049 = vadd.f32 %v292, %v2048
  %v2050 = vpop.f32.mrb[0].mxu0
  %v2051 = vpop.f32.mrb[0].mxu0
  %v2052 = vadd.f32 %v292, %v2051
  %v2053 = vpop.f32.mrb[0].mxu0
  %2054 = vmatprep.mubr.bf16.mxu0 0
  %2055 = vmatmul.mubr.bf16.gmra.mrb[0].mxu0 %v920
  %v2056 = vpop.f32.mrb[0].mxu0
  %v2057 = vadd.f32 %v292, %v2056
  %v2058 = vpop.f32.mrb[0].mxu0
  %v2059 = vpop.f32.mrb[0].mxu0
  %v2060 = vadd.f32 %v292, %v2059
  %v2061 = vpop.f32.mrb[0].mxu0
  %2062 = vmatprep.mubr.bf16.mxu0 0
  %2063 = vmatmul.mubr.bf16.gmra.mrb[0].mxu0 %v921
  %v2064 = vpop.f32.mrb[0].mxu0
  %v2065 = vadd.f32 %v292, %v2064
  %v2066 = vpop.f32.mrb[0].mxu0
  %v2067 = vpop.f32.mrb[0].mxu0
  %v2068 = vadd.f32 %v292, %v2067
  %v2069 = vpop.f32.mrb[0].mxu0
  %2070 = vmatprep.mubr.bf16.mxu0 0
  %2071 = vmatmul.mubr.bf16.gmra.mrb[0].mxu0 %v922
  %v2072 = vpop.f32.mrb[0].mxu0
  %v2073 = vadd.f32 %v292, %v2072
  %v2074 = vpop.f32.mrb[0].mxu0
  %v2075 = vpop.f32.mrb[0].mxu0
  %v2076 = vadd.f32 %v292, %v2075
  %v2077 = vpop.f32.mrb[0].mxu0
  %2078 = vmatprep.mubr.bf16.mxu0 0
  %2079 = vmatmul.mubr.bf16.gmra.mrb[0].mxu0 %v923
  %v2080 = vpop.f32.mrb[0].mxu0
  %v2081 = vadd.f32 %v292, %v2080
  %v2082 = vpop.f32.mrb[0].mxu0
  %v2083 = vpop.f32.mrb[0].mxu0
  %v2084 = vadd.f32 %v292, %v2083
  %v2085 = vpop.f32.mrb[0].mxu0
  %2086 = vmatprep.mubr.bf16.mxu0 0
  %2087 = vmatmul.mubr.bf16.gmra.mrb[0].mxu0 %v924
  %v2088 = vpop.f32.mrb[0].mxu0
  %v2089 = vadd.f32 %v292, %v2088
  %v2090 = vpop.f32.mrb[0].mxu0
  %v2091 = vpop.f32.mrb[0].mxu0
  %v2092 = vadd.f32 %v292, %v2091
  %v2093 = vpop.f32.mrb[0].mxu0
  %2094 = vmatprep.mubr.bf16.mxu0 0
  %2095 = vmatmul.mubr.bf16.gmra.mrb[0].mxu0 %v925
  %v2096 = vpop.f32.mrb[0].mxu0
  %v2097 = vadd.f32 %v292, %v2096
  %v2098 = vpop.f32.mrb[0].mxu0
  %v2099 = vpop.f32.mrb[0].mxu0
  %v2100 = vadd.f32 %v292, %v2099
  %v2101 = vpop.f32.mrb[0].mxu0
  %2102 = vmatprep.mubr.bf16.mxu0 0
  %2103 = vmatmul.mubr.bf16.gmra.mrb[0].mxu0 %v926
  %v2104 = vpop.f32.mrb[0].mxu0
  %v2105 = vadd.f32 %v292, %v2104
  %v2106 = vpop.f32.mrb[0].mxu0
  %v2107 = vpop.f32.mrb[0].mxu0
  %v2108 = vadd.f32 %v292, %v2107
  %v2109 = vpop.f32.mrb[0].mxu0
  %2110 = vmatprep.mubr.bf16.mxu0 0
  %2111 = vmatmul.mubr.bf16.gmra.mrb[0].mxu0 %v927
  %v2112 = vpop.f32.mrb[0].mxu0
  %v2113 = vadd.f32 %v292, %v2112
  %v2114 = vpop.f32.mrb[0].mxu0
  %v2115 = vpop.f32.mrb[0].mxu0
  %v2116 = vadd.f32 %v292, %v2115
  %v2117 = vpop.f32.mrb[0].mxu0
  %2118 = vmatprep.mubr.bf16.mxu0 0
  %2119 = vmatmul.mubr.bf16.gmra.mrb[0].mxu0 %v928
  %v2120 = vpop.f32.mrb[0].mxu0
  %v2121 = vadd.f32 %v292, %v2120
  %v2122 = vpop.f32.mrb[0].mxu0
  %v2123 = vpop.f32.mrb[0].mxu0
  %v2124 = vadd.f32 %v292, %v2123
  %v2125 = vpop.f32.mrb[0].mxu0
  %2126 = vmatprep.mubr.bf16.mxu0 0
  %2127 = vmatmul.mubr.bf16.gmra.mrb[0].mxu0 %v929
  %v2128 = vpop.f32.mrb[0].mxu0
  %v2129 = vadd.f32 %v292, %v2128
  %v2130 = vpop.f32.mrb[0].mxu0
  %v2131 = vpop.f32.mrb[0].mxu0
  %v2132 = vadd.f32 %v292, %v2131
  %v2133 = vpop.f32.mrb[0].mxu0
  %2134 = vmatprep.mubr.bf16.mxu0 0
  %2135 = vmatmul.mubr.bf16.gmra.mrb[0].mxu0 %v930
  %v2136 = vpop.f32.mrb[0].mxu0
  %v2137 = vadd.f32 %v292, %v2136
  %v2138 = vpop.f32.mrb[0].mxu0
  %v2139 = vpop.f32.mrb[0].mxu0
  %v2140 = vadd.f32 %v292, %v2139
  %v2141 = vpop.f32.mrb[0].mxu0
  %2142 = vmatprep.mubr.bf16.mxu0 0
  %2143 = vmatmul.mubr.bf16.gmra.mrb[0].mxu0 %v931
  %v2144 = vpop.f32.mrb[0].mxu0
  %v2145 = vadd.f32 %v292, %v2144
  %v2146 = vpop.f32.mrb[0].mxu0
  %v2147 = vpop.f32.mrb[0].mxu0
  %v2148 = vadd.f32 %v292, %v2147
  %v2149 = vpop.f32.mrb[0].mxu0
  %2150 = vmatprep.mubr.bf16.mxu0 0
  %2151 = vmatmul.mubr.bf16.gmra.mrb[0].mxu0 %v932
  %v2152 = vpop.f32.mrb[0].mxu0
  %v2153 = vadd.f32 %v292, %v2152
  %v2154 = vpop.f32.mrb[0].mxu0
  %v2155 = vpop.f32.mrb[0].mxu0
  %v2156 = vadd.f32 %v292, %v2155
  %v2157 = vpop.f32.mrb[0].mxu0
  %2158 = vmatprep.mubr.bf16.mxu0 0
  %2159 = vmatmul.mubr.bf16.gmra.mrb[0].mxu0 %v933
  %v2160 = vpop.f32.mrb[0].mxu0
  %v2161 = vadd.f32 %v292, %v2160
  %v2162 = vpop.f32.mrb[0].mxu0
  %v2163 = vpop.f32.mrb[0].mxu0
  %v2164 = vadd.f32 %v292, %v2163
  %v2165 = vpop.f32.mrb[0].mxu0
  %2166 = vdwg.mxu0
  %v2167 = vtanh.pop %v1145
  %v2168 = vtanh.pop %v1148
  %v2169 = vtanh.pop %v1153
  %v2170 = vtanh.pop %v1156
  %v2171 = vtanh.pop %v1161
  %v2172 = vtanh.pop %v1164
  %v2173 = vtanh.pop %v1169
  %v2174 = vtanh.pop %v1172
  %v2175 = vtanh.pop %v1177
  %v2176 = vtanh.pop %v1180
  %v2177 = vtanh.pop %v1185
  %v2178 = vtanh.pop %v1188
  %v2179 = vtanh.pop %v1193
  %v2180 = vtanh.pop %v1196
  %v2181 = vtanh.pop %v1201
  %v2182 = vtanh.pop %v1204
  %v2183 = vtanh.pop %v1209
  %v2184 = vtanh.pop %v1212
  %v2185 = vtanh.pop %v1217
  %v2186 = vtanh.pop %v1220
  %v2187 = vtanh.pop %v1225
  %v2188 = vtanh.pop %v1228
  %v2189 = vtanh.pop %v1233
  %v2190 = vtanh.pop %v1236
  %v2191 = vtanh.pop %v1241
  %v2192 = vtanh.pop %v1244
  %v2193 = vtanh.pop %v1249
  %v2194 = vtanh.pop %v1252
  %v2195 = vtanh.pop %v1257
  %v2196 = vtanh.pop %v1260
  %v2197 = vtanh.pop %v1265
  %v2198 = vtanh.pop %v1268
  %v2199 = vtanh.pop %v1273
  %v2200 = vtanh.pop %v1276
  %v2201 = vtanh.pop %v1281
  %v2202 = vtanh.pop %v1284
  %v2203 = vtanh.pop %v1289
  %v2204 = vtanh.pop %v1292
  %v2205 = vtanh.pop %v1297
  %v2206 = vtanh.pop %v1300
  %v2207 = vtanh.pop %v1305
  %v2208 = vtanh.pop %v1308
  %v2209 = vtanh.pop %v1313
  %v2210 = vtanh.pop %v1316
  %v2211 = vtanh.pop %v1321
  %v2212 = vtanh.pop %v1324
  %v2213 = vtanh.pop %v1329
  %v2214 = vtanh.pop %v1332
  %v2215 = vtanh.pop %v1337
  %v2216 = vtanh.pop %v1340
  %v2217 = vtanh.pop %v1345
  %v2218 = vtanh.pop %v1348
  %v2219 = vtanh.pop %v1353
  %v2220 = vtanh.pop %v1356
  %v2221 = vtanh.pop %v1361
  %v2222 = vtanh.pop %v1364
  %v2223 = vtanh.pop %v1369
  %v2224 = vtanh.pop %v1372
  %v2225 = vtanh.pop %v1377
  %v2226 = vtanh.pop %v1380
  %v2227 = vtanh.pop %v1385
  %v2228 = vtanh.pop %v1388
  %v2229 = vtanh.pop %v1393
  %v2230 = vtanh.pop %v1396
  %v2231 = vtanh.pop %v1401
  %v2232 = vtanh.pop %v1404
  %v2233 = vtanh.pop %v1409
  %v2234 = vtanh.pop %v1412
  %v2235 = vtanh.pop %v1417
  %v2236 = vtanh.pop %v1420
  %v2237 = vtanh.pop %v1425
  %v2238 = vtanh.pop %v1428
  %v2239 = vtanh.pop %v1433
  %v2240 = vtanh.pop %v1436
  %v2241 = vtanh.pop %v1441
  %v2242 = vtanh.pop %v1444
  %v2243 = vtanh.pop %v1449
  %v2244 = vtanh.pop %v1452
  %v2245 = vtanh.pop %v1457
  %v2246 = vtanh.pop %v1460
  %v2247 = vtanh.pop %v1465
  %v2248 = vtanh.pop %v1468
  %v2249 = vtanh.pop %v1473
  %v2250 = vtanh.pop %v1476
  %v2251 = vtanh.pop %v1481
  %v2252 = vtanh.pop %v1484
  %v2253 = vtanh.pop %v1489
  %v2254 = vtanh.pop %v1492
  %v2255 = vtanh.pop %v1497
  %v2256 = vtanh.pop %v1500
  %v2257 = vtanh.pop %v1505
  %v2258 = vtanh.pop %v1508
  %v2259 = vtanh.pop %v1513
  %v2260 = vtanh.pop %v1516
  %v2261 = vtanh.pop %v1521
  %v2262 = vtanh.pop %v1524
  %v2263 = vtanh.pop %v1529
  %v2264 = vtanh.pop %v1532
  %v2265 = vtanh.pop %v1537
  %v2266 = vtanh.pop %v1540
  %v2267 = vtanh.pop %v1545
  %v2268 = vtanh.pop %v1548
  %v2269 = vtanh.pop %v1553
  %v2270 = vtanh.pop %v1556
  %v2271 = vtanh.pop %v1561
  %v2272 = vtanh.pop %v1564
  %v2273 = vtanh.pop %v1569
  %v2274 = vtanh.pop %v1572
  %v2275 = vtanh.pop %v1577
  %v2276 = vtanh.pop %v1580
  %v2277 = vtanh.pop %v1585
  %v2278 = vtanh.pop %v1588
  %v2279 = vtanh.pop %v1593
  %v2280 = vtanh.pop %v1596
  %v2281 = vtanh.pop %v1601
  %v2282 = vtanh.pop %v1604
  %v2283 = vtanh.pop %v1609
  %v2284 = vtanh.pop %v1612
  %v2285 = vtanh.pop %v1617
  %v2286 = vtanh.pop %v1620
  %v2287 = vtanh.pop %v1625
  %v2288 = vtanh.pop %v1628
  %v2289 = vtanh.pop %v1633
  %v2290 = vtanh.pop %v1636
  %v2291 = vtanh.pop %v1641
  %v2292 = vtanh.pop %v1644
  %v2293 = vtanh.pop %v1649
  %v2294 = vtanh.pop %v1652
  %v2295 = vtanh.pop %v1657
  %v2296 = vtanh.pop %v1660
  %v2297 = vtanh.pop %v1665
  %v2298 = vtanh.pop %v1668
  %v2299 = vtanh.pop %v1673
  %v2300 = vtanh.pop %v1676
  %v2301 = vtanh.pop %v1681
  %v2302 = vtanh.pop %v1684
  %v2303 = vtanh.pop %v1689
  %v2304 = vtanh.pop %v1692
  %v2305 = vtanh.pop %v1697
  %v2306 = vtanh.pop %v1700
  %v2307 = vtanh.pop %v1705
  %v2308 = vtanh.pop %v1708
  %v2309 = vtanh.pop %v1713
  %v2310 = vtanh.pop %v1716
  %v2311 = vtanh.pop %v1721
  %v2312 = vtanh.pop %v1724
  %v2313 = vtanh.pop %v1729
  %v2314 = vtanh.pop %v1732
  %v2315 = vtanh.pop %v1737
  %v2316 = vtanh.pop %v1740
  %v2317 = vtanh.pop %v1745
  %v2318 = vtanh.pop %v1748
  %v2319 = vtanh.pop %v1753
  %v2320 = vtanh.pop %v1756
  %v2321 = vtanh.pop %v1761
  %v2322 = vtanh.pop %v1764
  %v2323 = vtanh.pop %v1769
  %v2324 = vtanh.pop %v1772
  %v2325 = vtanh.pop %v1777
  %v2326 = vtanh.pop %v1780
  %v2327 = vtanh.pop %v1785
  %v2328 = vtanh.pop %v1788
  %v2329 = vtanh.pop %v1793
  %v2330 = vtanh.pop %v1796
  %v2331 = vtanh.pop %v1801
  %v2332 = vtanh.pop %v1804
  %v2333 = vtanh.pop %v1809
  %v2334 = vtanh.pop %v1812
  %v2335 = vtanh.pop %v1817
  %v2336 = vtanh.pop %v1820
  %v2337 = vtanh.pop %v1825
  %v2338 = vtanh.pop %v1828
  %v2339 = vtanh.pop %v1833
  %v2340 = vtanh.pop %v1836
  %v2341 = vtanh.pop %v1841
  %v2342 = vtanh.pop %v1844
  %v2343 = vtanh.pop %v1849
  %v2344 = vtanh.pop %v1852
  %v2345 = vtanh.pop %v1857
  %v2346 = vtanh.pop %v1860
  %v2347 = vtanh.pop %v1865
  %v2348 = vtanh.pop %v1868
  %v2349 = vtanh.pop %v1873
  %v2350 = vtanh.pop %v1876
  %v2351 = vtanh.pop %v1881
  %v2352 = vtanh.pop %v1884
  %v2353 = vtanh.pop %v1889
  %v2354 = vtanh.pop %v1892
  %v2355 = vtanh.pop %v1897
  %v2356 = vtanh.pop %v1900
  %v2357 = vtanh.pop %v1905
  %v2358 = vtanh.pop %v1908
  %v2359 = vtanh.pop %v1913
  %v2360 = vtanh.pop %v1916
  %v2361 = vtanh.pop %v1921
  %v2362 = vtanh.pop %v1924
  %v2363 = vtanh.pop %v1929
  %v2364 = vtanh.pop %v1932
  %v2365 = vtanh.pop %v1937
  %v2366 = vtanh.pop %v1940
  %v2367 = vtanh.pop %v1945
  %v2368 = vtanh.pop %v1948
  %v2369 = vtanh.pop %v1953
  %v2370 = vtanh.pop %v1956
  %v2371 = vtanh.pop %v1961
  %v2372 = vtanh.pop %v1964
  %v2373 = vtanh.pop %v1969
  %v2374 = vtanh.pop %v1972
  %v2375 = vtanh.pop %v1977
  %v2376 = vtanh.pop %v1980
  %v2377 = vtanh.pop %v1985
  %v2378 = vtanh.pop %v1988
  %v2379 = vtanh.pop %v1993
  %v2380 = vtanh.pop %v1996
  %v2381 = vtanh.pop %v2001
  %v2382 = vtanh.pop %v2004
  %v2383 = vtanh.pop %v2009
  %v2384 = vtanh.pop %v2012
  %v2385 = vtanh.pop %v2017
  %v2386 = vtanh.pop %v2020
  %v2387 = vtanh.pop %v2025
  %v2388 = vtanh.pop %v2028
  %v2389 = vtanh.pop %v2033
  %v2390 = vtanh.pop %v2036
  %v2391 = vtanh.pop %v2041
  %v2392 = vtanh.pop %v2044
  %v2393 = vtanh.pop %v2049
  %v2394 = vtanh.pop %v2052
  %v2395 = vtanh.pop %v2057
  %v2396 = vtanh.pop %v2060
  %v2397 = vtanh.pop %v2065
  %v2398 = vtanh.pop %v2068
  %v2399 = vtanh.pop %v2073
  %v2400 = vtanh.pop %v2076
  %v2401 = vtanh.pop %v2081
  %v2402 = vtanh.pop %v2084
  %v2403 = vtanh.pop %v2089
  %v2404 = vtanh.pop %v2092
  %v2405 = vtanh.pop %v2097
  %v2406 = vtanh.pop %v2100
  %v2407 = vtanh.pop %v2105
  %v2408 = vtanh.pop %v2108
  %v2409 = vtanh.pop %v2113
  %v2410 = vtanh.pop %v2116
  %v2411 = vtanh.pop %v2121
  %v2412 = vtanh.pop %v2124
  %v2413 = vtanh.pop %v2129
  %v2414 = vtanh.pop %v2132
  %v2415 = vtanh.pop %v2137
  %v2416 = vtanh.pop %v2140
  %v2417 = vtanh.pop %v2145
  %v2418 = vtanh.pop %v2148
  %v2419 = vtanh.pop %v2153
  %v2420 = vtanh.pop %v2156
  %v2421 = vtanh.pop %v2161
  %v2422 = vtanh.pop %v2164
  %2423 = vst [vmem:[%s3] sm:$0xff] %v2167
  %2424 = vst [vmem:[%s3 + $0x8] sm:$0xff] %v2168
  %2425 = vst [vmem:[%s3 + $0x10] sm:$0xff] %v2169
  %2426 = vst [vmem:[%s3 + $0x18] sm:$0xff] %v2170
  %2427 = vst [vmem:[%s3 + $0x20] sm:$0xff] %v2171
  %2428 = vst [vmem:[%s3 + $0x28] sm:$0xff] %v2172
  %2429 = vst [vmem:[%s3 + $0x30] sm:$0xff] %v2173
  %2430 = vst [vmem:[%s3 + $0x38] sm:$0xff] %v2174
  %2431 = vst [vmem:[%s3 + $0x40] sm:$0xff] %v2175
  %2432 = vst [vmem:[%s3 + $0x48] sm:$0xff] %v2176
  %2433 = vst [vmem:[%s3 + $0x50] sm:$0xff] %v2177
  %2434 = vst [vmem:[%s3 + $0x58] sm:$0xff] %v2178
  %2435 = vst [vmem:[%s3 + $0x60] sm:$0xff] %v2179
  %2436 = vst [vmem:[%s3 + $0x68] sm:$0xff] %v2180
  %2437 = vst [vmem:[%s3 + $0x70] sm:$0xff] %v2181
  %2438 = vst [vmem:[%s3 + $0x78] sm:$0xff] %v2182
  %2439 = vst [vmem:[%s3 + $0x80] sm:$0xff] %v2183
  %2440 = vst [vmem:[%s3 + $0x88] sm:$0xff] %v2184
  %2441 = vst [vmem:[%s3 + $0x90] sm:$0xff] %v2185
  %2442 = vst [vmem:[%s3 + $0x98] sm:$0xff] %v2186
  %2443 = vst [vmem:[%s3 + $0xa0] sm:$0xff] %v2187
  %2444 = vst [vmem:[%s3 + $0xa8] sm:$0xff] %v2188
  %2445 = vst [vmem:[%s3 + $0xb0] sm:$0xff] %v2189
  %2446 = vst [vmem:[%s3 + $0xb8] sm:$0xff] %v2190
  %2447 = vst [vmem:[%s3 + $0xc0] sm:$0xff] %v2191
  %2448 = vst [vmem:[%s3 + $0xc8] sm:$0xff] %v2192
  %2449 = vst [vmem:[%s3 + $0xd0] sm:$0xff] %v2193
  %2450 = vst [vmem:[%s3 + $0xd8] sm:$0xff] %v2194
  %2451 = vst [vmem:[%s3 + $0xe0] sm:$0xff] %v2195
  %2452 = vst [vmem:[%s3 + $0xe8] sm:$0xff] %v2196
  %2453 = vst [vmem:[%s3 + $0xf0] sm:$0xff] %v2197
  %2454 = vst [vmem:[%s3 + $0xf8] sm:$0xff] %v2198
  %2455 = vst [vmem:[%s3 + $0x100] sm:$0xff] %v2199
  %2456 = vst [vmem:[%s3 + $0x108] sm:$0xff] %v2200
  %2457 = vst [vmem:[%s3 + $0x110] sm:$0xff] %v2201
  %2458 = vst [vmem:[%s3 + $0x118] sm:$0xff] %v2202
  %2459 = vst [vmem:[%s3 + $0x120] sm:$0xff] %v2203
  %2460 = vst [vmem:[%s3 + $0x128] sm:$0xff] %v2204
  %2461 = vst [vmem:[%s3 + $0x130] sm:$0xff] %v2205
  %2462 = vst [vmem:[%s3 + $0x138] sm:$0xff] %v2206
  %2463 = vst [vmem:[%s3 + $0x140] sm:$0xff] %v2207
  %2464 = vst [vmem:[%s3 + $0x148] sm:$0xff] %v2208
  %2465 = vst [vmem:[%s3 + $0x150] sm:$0xff] %v2209
  %2466 = vst [vmem:[%s3 + $0x158] sm:$0xff] %v2210
  %2467 = vst [vmem:[%s3 + $0x160] sm:$0xff] %v2211
  %2468 = vst [vmem:[%s3 + $0x168] sm:$0xff] %v2212
  %2469 = vst [vmem:[%s3 + $0x170] sm:$0xff] %v2213
  %2470 = vst [vmem:[%s3 + $0x178] sm:$0xff] %v2214
  %2471 = vst [vmem:[%s3 + $0x180] sm:$0xff] %v2215
  %2472 = vst [vmem:[%s3 + $0x188] sm:$0xff] %v2216
  %2473 = vst [vmem:[%s3 + $0x190] sm:$0xff] %v2217
  %2474 = vst [vmem:[%s3 + $0x198] sm:$0xff] %v2218
  %2475 = vst [vmem:[%s3 + $0x1a0] sm:$0xff] %v2219
  %2476 = vst [vmem:[%s3 + $0x1a8] sm:$0xff] %v2220
  %2477 = vst [vmem:[%s3 + $0x1b0] sm:$0xff] %v2221
  %2478 = vst [vmem:[%s3 + $0x1b8] sm:$0xff] %v2222
  %2479 = vst [vmem:[%s3 + $0x1c0] sm:$0xff] %v2223
  %2480 = vst [vmem:[%s3 + $0x1c8] sm:$0xff] %v2224
  %2481 = vst [vmem:[%s3 + $0x1d0] sm:$0xff] %v2225
  %2482 = vst [vmem:[%s3 + $0x1d8] sm:$0xff] %v2226
  %2483 = vst [vmem:[%s3 + $0x1e0] sm:$0xff] %v2227
  %2484 = vst [vmem:[%s3 + $0x1e8] sm:$0xff] %v2228
  %2485 = vst [vmem:[%s3 + $0x1f0] sm:$0xff] %v2229
  %2486 = vst [vmem:[%s3 + $0x1f8] sm:$0xff] %v2230
  %2487 = vst [vmem:[%s3 + $0x200] sm:$0xff] %v2231
  %2488 = vst [vmem:[%s3 + $0x208] sm:$0xff] %v2232
  %2489 = vst [vmem:[%s3 + $0x210] sm:$0xff] %v2233
  %2490 = vst [vmem:[%s3 + $0x218] sm:$0xff] %v2234
  %2491 = vst [vmem:[%s3 + $0x220] sm:$0xff] %v2235
  %2492 = vst [vmem:[%s3 + $0x228] sm:$0xff] %v2236
  %2493 = vst [vmem:[%s3 + $0x230] sm:$0xff] %v2237
  %2494 = vst [vmem:[%s3 + $0x238] sm:$0xff] %v2238
  %2495 = vst [vmem:[%s3 + $0x240] sm:$0xff] %v2239
  %2496 = vst [vmem:[%s3 + $0x248] sm:$0xff] %v2240
  %2497 = vst [vmem:[%s3 + $0x250] sm:$0xff] %v2241
  %2498 = vst [vmem:[%s3 + $0x258] sm:$0xff] %v2242
  %2499 = vst [vmem:[%s3 + $0x260] sm:$0xff] %v2243
  %2500 = vst [vmem:[%s3 + $0x268] sm:$0xff] %v2244
  %2501 = vst [vmem:[%s3 + $0x270] sm:$0xff] %v2245
  %2502 = vst [vmem:[%s3 + $0x278] sm:$0xff] %v2246
  %2503 = vst [vmem:[%s3 + $0x280] sm:$0xff] %v2247
  %2504 = vst [vmem:[%s3 + $0x288] sm:$0xff] %v2248
  %2505 = vst [vmem:[%s3 + $0x290] sm:$0xff] %v2249
  %2506 = vst [vmem:[%s3 + $0x298] sm:$0xff] %v2250
  %2507 = vst [vmem:[%s3 + $0x2a0] sm:$0xff] %v2251
  %2508 = vst [vmem:[%s3 + $0x2a8] sm:$0xff] %v2252
  %2509 = vst [vmem:[%s3 + $0x2b0] sm:$0xff] %v2253
  %2510 = vst [vmem:[%s3 + $0x2b8] sm:$0xff] %v2254
  %2511 = vst [vmem:[%s3 + $0x2c0] sm:$0xff] %v2255
  %2512 = vst [vmem:[%s3 + $0x2c8] sm:$0xff] %v2256
  %2513 = vst [vmem:[%s3 + $0x2d0] sm:$0xff] %v2257
  %2514 = vst [vmem:[%s3 + $0x2d8] sm:$0xff] %v2258
  %2515 = vst [vmem:[%s3 + $0x2e0] sm:$0xff] %v2259
  %2516 = vst [vmem:[%s3 + $0x2e8] sm:$0xff] %v2260
  %2517 = vst [vmem:[%s3 + $0x2f0] sm:$0xff] %v2261
  %2518 = vst [vmem:[%s3 + $0x2f8] sm:$0xff] %v2262
  %2519 = vst [vmem:[%s3 + $0x300] sm:$0xff] %v2263
  %2520 = vst [vmem:[%s3 + $0x308] sm:$0xff] %v2264
  %2521 = vst [vmem:[%s3 + $0x310] sm:$0xff] %v2265
  %2522 = vst [vmem:[%s3 + $0x318] sm:$0xff] %v2266
  %2523 = vst [vmem:[%s3 + $0x320] sm:$0xff] %v2267
  %2524 = vst [vmem:[%s3 + $0x328] sm:$0xff] %v2268
  %2525 = vst [vmem:[%s3 + $0x330] sm:$0xff] %v2269
  %2526 = vst [vmem:[%s3 + $0x338] sm:$0xff] %v2270
  %2527 = vst [vmem:[%s3 + $0x340] sm:$0xff] %v2271
  %2528 = vst [vmem:[%s3 + $0x348] sm:$0xff] %v2272
  %2529 = vst [vmem:[%s3 + $0x350] sm:$0xff] %v2273
  %2530 = vst [vmem:[%s3 + $0x358] sm:$0xff] %v2274
  %2531 = vst [vmem:[%s3 + $0x360] sm:$0xff] %v2275
  %2532 = vst [vmem:[%s3 + $0x368] sm:$0xff] %v2276
  %2533 = vst [vmem:[%s3 + $0x370] sm:$0xff] %v2277
  %2534 = vst [vmem:[%s3 + $0x378] sm:$0xff] %v2278
  %2535 = vst [vmem:[%s3 + $0x380] sm:$0xff] %v2279
  %2536 = vst [vmem:[%s3 + $0x388] sm:$0xff] %v2280
  %2537 = vst [vmem:[%s3 + $0x390] sm:$0xff] %v2281
  %2538 = vst [vmem:[%s3 + $0x398] sm:$0xff] %v2282
  %2539 = vst [vmem:[%s3 + $0x3a0] sm:$0xff] %v2283
  %2540 = vst [vmem:[%s3 + $0x3a8] sm:$0xff] %v2284
  %2541 = vst [vmem:[%s3 + $0x3b0] sm:$0xff] %v2285
  %2542 = vst [vmem:[%s3 + $0x3b8] sm:$0xff] %v2286
  %2543 = vst [vmem:[%s3 + $0x3c0] sm:$0xff] %v2287
  %2544 = vst [vmem:[%s3 + $0x3c8] sm:$0xff] %v2288
  %2545 = vst [vmem:[%s3 + $0x3d0] sm:$0xff] %v2289
  %2546 = vst [vmem:[%s3 + $0x3d8] sm:$0xff] %v2290
  %2547 = vst [vmem:[%s3 + $0x3e0] sm:$0xff] %v2291
  %2548 = vst [vmem:[%s3 + $0x3e8] sm:$0xff] %v2292
  %2549 = vst [vmem:[%s3 + $0x3f0] sm:$0xff] %v2293
  %2550 = vst [vmem:[%s3 + $0x3f8] sm:$0xff] %v2294
  %2551 = vst [vmem:[%s3 + $0x400] sm:$0xff] %v2295
  %2552 = vst [vmem:[%s3 + $0x408] sm:$0xff] %v2296
  %2553 = vst [vmem:[%s3 + $0x410] sm:$0xff] %v2297
  %2554 = vst [vmem:[%s3 + $0x418] sm:$0xff] %v2298
  %2555 = vst [vmem:[%s3 + $0x420] sm:$0xff] %v2299
  %2556 = vst [vmem:[%s3 + $0x428] sm:$0xff] %v2300
  %2557 = vst [vmem:[%s3 + $0x430] sm:$0xff] %v2301
  %2558 = vst [vmem:[%s3 + $0x438] sm:$0xff] %v2302
  %2559 = vst [vmem:[%s3 + $0x440] sm:$0xff] %v2303
  %2560 = vst [vmem:[%s3 + $0x448] sm:$0xff] %v2304
  %2561 = vst [vmem:[%s3 + $0x450] sm:$0xff] %v2305
  %2562 = vst [vmem:[%s3 + $0x458] sm:$0xff] %v2306
  %2563 = vst [vmem:[%s3 + $0x460] sm:$0xff] %v2307
  %2564 = vst [vmem:[%s3 + $0x468] sm:$0xff] %v2308
  %2565 = vst [vmem:[%s3 + $0x470] sm:$0xff] %v2309
  %2566 = vst [vmem:[%s3 + $0x478] sm:$0xff] %v2310
  %2567 = vst [vmem:[%s3 + $0x480] sm:$0xff] %v2311
  %2568 = vst [vmem:[%s3 + $0x488] sm:$0xff] %v2312
  %2569 = vst [vmem:[%s3 + $0x490] sm:$0xff] %v2313
  %2570 = vst [vmem:[%s3 + $0x498] sm:$0xff] %v2314
  %2571 = vst [vmem:[%s3 + $0x4a0] sm:$0xff] %v2315
  %2572 = vst [vmem:[%s3 + $0x4a8] sm:$0xff] %v2316
  %2573 = vst [vmem:[%s3 + $0x4b0] sm:$0xff] %v2317
  %2574 = vst [vmem:[%s3 + $0x4b8] sm:$0xff] %v2318
  %2575 = vst [vmem:[%s3 + $0x4c0] sm:$0xff] %v2319
  %2576 = vst [vmem:[%s3 + $0x4c8] sm:$0xff] %v2320
  %2577 = vst [vmem:[%s3 + $0x4d0] sm:$0xff] %v2321
  %2578 = vst [vmem:[%s3 + $0x4d8] sm:$0xff] %v2322
  %2579 = vst [vmem:[%s3 + $0x4e0] sm:$0xff] %v2323
  %2580 = vst [vmem:[%s3 + $0x4e8] sm:$0xff] %v2324
  %2581 = vst [vmem:[%s3 + $0x4f0] sm:$0xff] %v2325
  %2582 = vst [vmem:[%s3 + $0x4f8] sm:$0xff] %v2326
  %2583 = vst [vmem:[%s3 + $0x500] sm:$0xff] %v2327
  %2584 = vst [vmem:[%s3 + $0x508] sm:$0xff] %v2328
  %2585 = vst [vmem:[%s3 + $0x510] sm:$0xff] %v2329
  %2586 = vst [vmem:[%s3 + $0x518] sm:$0xff] %v2330
  %2587 = vst [vmem:[%s3 + $0x520] sm:$0xff] %v2331
  %2588 = vst [vmem:[%s3 + $0x528] sm:$0xff] %v2332
  %2589 = vst [vmem:[%s3 + $0x530] sm:$0xff] %v2333
  %2590 = vst [vmem:[%s3 + $0x538] sm:$0xff] %v2334
  %2591 = vst [vmem:[%s3 + $0x540] sm:$0xff] %v2335
  %2592 = vst [vmem:[%s3 + $0x548] sm:$0xff] %v2336
  %2593 = vst [vmem:[%s3 + $0x550] sm:$0xff] %v2337
  %2594 = vst [vmem:[%s3 + $0x558] sm:$0xff] %v2338
  %2595 = vst [vmem:[%s3 + $0x560] sm:$0xff] %v2339
  %2596 = vst [vmem:[%s3 + $0x568] sm:$0xff] %v2340
  %2597 = vst [vmem:[%s3 + $0x570] sm:$0xff] %v2341
  %2598 = vst [vmem:[%s3 + $0x578] sm:$0xff] %v2342
  %2599 = vst [vmem:[%s3 + $0x580] sm:$0xff] %v2343
  %2600 = vst [vmem:[%s3 + $0x588] sm:$0xff] %v2344
  %2601 = vst [vmem:[%s3 + $0x590] sm:$0xff] %v2345
  %2602 = vst [vmem:[%s3 + $0x598] sm:$0xff] %v2346
  %2603 = vst [vmem:[%s3 + $0x5a0] sm:$0xff] %v2347
  %2604 = vst [vmem:[%s3 + $0x5a8] sm:$0xff] %v2348
  %2605 = vst [vmem:[%s3 + $0x5b0] sm:$0xff] %v2349
  %2606 = vst [vmem:[%s3 + $0x5b8] sm:$0xff] %v2350
  %2607 = vst [vmem:[%s3 + $0x5c0] sm:$0xff] %v2351
  %2608 = vst [vmem:[%s3 + $0x5c8] sm:$0xff] %v2352
  %2609 = vst [vmem:[%s3 + $0x5d0] sm:$0xff] %v2353
  %2610 = vst [vmem:[%s3 + $0x5d8] sm:$0xff] %v2354
  %2611 = vst [vmem:[%s3 + $0x5e0] sm:$0xff] %v2355
  %2612 = vst [vmem:[%s3 + $0x5e8] sm:$0xff] %v2356
  %2613 = vst [vmem:[%s3 + $0x5f0] sm:$0xff] %v2357
  %2614 = vst [vmem:[%s3 + $0x5f8] sm:$0xff] %v2358
  %2615 = vst [vmem:[%s3 + $0x600] sm:$0xff] %v2359
  %2616 = vst [vmem:[%s3 + $0x608] sm:$0xff] %v2360
  %2617 = vst [vmem:[%s3 + $0x610] sm:$0xff] %v2361
  %2618 = vst [vmem:[%s3 + $0x618] sm:$0xff] %v2362
  %2619 = vst [vmem:[%s3 + $0x620] sm:$0xff] %v2363
  %2620 = vst [vmem:[%s3 + $0x628] sm:$0xff] %v2364
  %2621 = vst [vmem:[%s3 + $0x630] sm:$0xff] %v2365
  %2622 = vst [vmem:[%s3 + $0x638] sm:$0xff] %v2366
  %2623 = vst [vmem:[%s3 + $0x640] sm:$0xff] %v2367
  %2624 = vst [vmem:[%s3 + $0x648] sm:$0xff] %v2368
  %2625 = vst [vmem:[%s3 + $0x650] sm:$0xff] %v2369
  %2626 = vst [vmem:[%s3 + $0x658] sm:$0xff] %v2370
  %2627 = vst [vmem:[%s3 + $0x660] sm:$0xff] %v2371
  %2628 = vst [vmem:[%s3 + $0x668] sm:$0xff] %v2372
  %2629 = vst [vmem:[%s3 + $0x670] sm:$0xff] %v2373
  %2630 = vst [vmem:[%s3 + $0x678] sm:$0xff] %v2374
  %2631 = vst [vmem:[%s3 + $0x680] sm:$0xff] %v2375
  %2632 = vst [vmem:[%s3 + $0x688] sm:$0xff] %v2376
  %2633 = vst [vmem:[%s3 + $0x690] sm:$0xff] %v2377
  %2634 = vst [vmem:[%s3 + $0x698] sm:$0xff] %v2378
  %2635 = vst [vmem:[%s3 + $0x6a0] sm:$0xff] %v2379
  %2636 = vst [vmem:[%s3 + $0x6a8] sm:$0xff] %v2380
  %2637 = vst [vmem:[%s3 + $0x6b0] sm:$0xff] %v2381
  %2638 = vst [vmem:[%s3 + $0x6b8] sm:$0xff] %v2382
  %2639 = vst [vmem:[%s3 + $0x6c0] sm:$0xff] %v2383
  %2640 = vst [vmem:[%s3 + $0x6c8] sm:$0xff] %v2384
  %2641 = vst [vmem:[%s3 + $0x6d0] sm:$0xff] %v2385
  %2642 = vst [vmem:[%s3 + $0x6d8] sm:$0xff] %v2386
  %2643 = vst [vmem:[%s3 + $0x6e0] sm:$0xff] %v2387
  %2644 = vst [vmem:[%s3 + $0x6e8] sm:$0xff] %v2388
  %2645 = vst [vmem:[%s3 + $0x6f0] sm:$0xff] %v2389
  %2646 = vst [vmem:[%s3 + $0x6f8] sm:$0xff] %v2390
  %2647 = vst [vmem:[%s3 + $0x700] sm:$0xff] %v2391
  %2648 = vst [vmem:[%s3 + $0x708] sm:$0xff] %v2392
  %2649 = vst [vmem:[%s3 + $0x710] sm:$0xff] %v2393
  %2650 = vst [vmem:[%s3 + $0x718] sm:$0xff] %v2394
  %2651 = vst [vmem:[%s3 + $0x720] sm:$0xff] %v2395
  %2652 = vst [vmem:[%s3 + $0x728] sm:$0xff] %v2396
  %2653 = vst [vmem:[%s3 + $0x730] sm:$0xff] %v2397
  %2654 = vst [vmem:[%s3 + $0x738] sm:$0xff] %v2398
  %2655 = vst [vmem:[%s3 + $0x740] sm:$0xff] %v2399
  %2656 = vst [vmem:[%s3 + $0x748] sm:$0xff] %v2400
  %2657 = vst [vmem:[%s3 + $0x750] sm:$0xff] %v2401
  %2658 = vst [vmem:[%s3 + $0x758] sm:$0xff] %v2402
  %2659 = vst [vmem:[%s3 + $0x760] sm:$0xff] %v2403
  %2660 = vst [vmem:[%s3 + $0x768] sm:$0xff] %v2404
  %2661 = vst [vmem:[%s3 + $0x770] sm:$0xff] %v2405
  %2662 = vst [vmem:[%s3 + $0x778] sm:$0xff] %v2406
  %2663 = vst [vmem:[%s3 + $0x780] sm:$0xff] %v2407
  %2664 = vst [vmem:[%s3 + $0x788] sm:$0xff] %v2408
  %2665 = vst [vmem:[%s3 + $0x790] sm:$0xff] %v2409
  %2666 = vst [vmem:[%s3 + $0x798] sm:$0xff] %v2410
  %2667 = vst [vmem:[%s3 + $0x7a0] sm:$0xff] %v2411
  %2668 = vst [vmem:[%s3 + $0x7a8] sm:$0xff] %v2412
  %2669 = vst [vmem:[%s3 + $0x7b0] sm:$0xff] %v2413
  %2670 = vst [vmem:[%s3 + $0x7b8] sm:$0xff] %v2414
  %2671 = vst [vmem:[%s3 + $0x7c0] sm:$0xff] %v2415
  %2672 = vst [vmem:[%s3 + $0x7c8] sm:$0xff] %v2416
  %2673 = vst [vmem:[%s3 + $0x7d0] sm:$0xff] %v2417
  %2674 = vst [vmem:[%s3 + $0x7d8] sm:$0xff] %v2418
  %2675 = vst [vmem:[%s3 + $0x7e0] sm:$0xff] %v2419
  %2676 = vst [vmem:[%s3 + $0x7e8] sm:$0xff] %v2420
  %2677 = vst [vmem:[%s3 + $0x7f0] sm:$0xff] %v2421
  %2678 = vst [vmem:[%s3 + $0x7f8] sm:$0xff] %v2422
  // Predicated region
  $region14: #{generator_forward.19} parent=0 // pred_check
    _
  $region15: #{generator_forward.19} parent=0 // pred_check_branch
    %2680 = sbr.rel (0) target = $region17
  $region16: #{generator_forward.19} parent=0 // pred_region
    _
  $region17: #{generator_forward.19} parent=0 // pred_fallthru
    _
  // Predicated region
  $region18: #{generator_forward.19} parent=0 // pred_check
    _
  $region19: #{generator_forward.19} parent=0 // pred_check_branch
    %2682 = sbr.rel (0) target = $region21
  $region20: #{generator_forward.19} parent=0 // pred_region
    _
  $region21: #{generator_forward.19} parent=0 // pred_fallthru
    _

</llo_original>
